<compile_context>
chip_gen: v7x
topology: tpu7x:2x2x1
jax: 0.10.0
libtpu: 0.0.40
codegen_flags: <defaults>
</compile_context>

<pallas_src>
import functools

import jax
import jax.numpy as jnp
from jax.experimental import pallas as pl
from jax.experimental.pallas import tpu as pltpu


def _vmem_spec():
    return pl.BlockSpec(memory_space=pltpu.MemorySpace.VMEM)


# ----------------------------------------------------------------------------
# Pallas kernels
# ----------------------------------------------------------------------------
def _matmul_bias_act_kernel(x_ref, w_ref, b_ref, o_ref, *, act):
    # bf16 MXU operands, f32 accumulation; bias/activation in f32; cast on store.
    acc = jnp.dot(x_ref[...], w_ref[...], preferred_element_type=jnp.float32)
    acc = acc + b_ref[...]
    if act == "relu":
        acc = jnp.maximum(acc, 0.0)
    elif act == "sigmoid":
        # exp on the EUP + approximate reciprocal (also EUP / free slot);
        # clamp to keep the mathematically guaranteed [0, 1] range.
        acc = pl.reciprocal(1.0 + jnp.exp(-acc), approx=True)
        acc = jnp.clip(acc, 0.0, 1.0)
    o_ref[...] = acc.astype(o_ref.dtype)


def matmul_bias_act(x, w, b, act, out_dtype):
    """act(x @ w + b).  x:[M,K] bf16, w:[K,N] bf16, b:[1,N] f32 -> [M,N]."""
    M, K = x.shape
    K2, N = w.shape
    assert K == K2
    flops = int(2 * M * K * N + 2 * M * N)
    transcendentals = int(M * N) if act == "sigmoid" else 0
    bytes_accessed = int(x.size * x.dtype.itemsize + w.size * w.dtype.itemsize
                         + b.size * b.dtype.itemsize
                         + M * N * jnp.dtype(out_dtype).itemsize)
    return pl.pallas_call(
        functools.partial(_matmul_bias_act_kernel, act=act),
        out_shape=jax.ShapeDtypeStruct((M, N), out_dtype),
        in_specs=[_vmem_spec(), _vmem_spec(), _vmem_spec()],
        out_specs=_vmem_spec(),
        cost_estimate=pl.CostEstimate(flops=flops,
                                      transcendentals=transcendentals,
                                      bytes_accessed=bytes_accessed),
    )(x, w, b)


def _latent_chain_kernel(h_ref, eps_ref,
                         el1w_ref, el1b_ref, el2w_ref, el2b_ref,
                         fc21w_ref, fc21b_ref,
                         dl1w_ref, dl1b_ref, dl2w_ref, dl2b_ref,
                         d_ref, mu_ref):
    """encoder_lin -> fc21 -> reparametrize -> decoder_lin, fully in-VMEM."""
    bf16 = jnp.bfloat16

    def dense(v, w_ref, b_ref):
        return jnp.dot(v.astype(bf16), w_ref[...],
                       preferred_element_type=jnp.float32) + b_ref[...]

    h = h_ref[...]                                            # [B, 288] bf16
    h1 = jnp.maximum(dense(h, el1w_ref, el1b_ref), 0.0)       # Linear(288,64)+ReLU
    h2 = dense(h1, el2w_ref, el2b_ref)                        # Linear(64,32)
    mu = dense(h2, fc21w_ref, fc21b_ref)                      # fc21 (computed once)
    mu_ref[...] = mu
    logvar = mu                        # reference bug: encode() returns fc21(x) twice
    z = eps_ref[...] * jnp.exp(0.5 * logvar) + mu             # reparametrize
    d1 = jnp.maximum(dense(z, dl1w_ref, dl1b_ref), 0.0)       # Linear(z,64)+ReLU
    d2 = jnp.maximum(dense(d1, dl2w_ref, dl2b_ref), 0.0)      # Linear(64,288)+ReLU
    d_ref[...] = d2.astype(d_ref.dtype)


def latent_chain(h, eps, p):
    B = h.shape[0]
    z_dim = p["fc21b"].shape[1]
    layer_dims = [(288, 64), (64, 32), (32, z_dim), (z_dim, 64), (64, 288)]
    flops = int(sum(2 * B * k * n + 2 * B * n for k, n in layer_dims))
    operands = (h, eps, p["el1w"], p["el1b"], p["el2w"], p["el2b"],
                p["fc21w"], p["fc21b"], p["dl1w"], p["dl1b"],
                p["dl2w"], p["dl2b"])
    bytes_accessed = int(sum(a.size * a.dtype.itemsize for a in operands)
                         + B * 288 * 2 + B * z_dim * 4)
    d2, mu = pl.pallas_call(
        _latent_chain_kernel,
        out_shape=(jax.ShapeDtypeStruct((B, 3 * 3 * 32), jnp.bfloat16),
                   jax.ShapeDtypeStruct((B, z_dim), jnp.float32)),
        in_specs=[_vmem_spec() for _ in operands],
        out_specs=(_vmem_spec(), _vmem_spec()),
        cost_estimate=pl.CostEstimate(flops=flops,
                                      transcendentals=int(B * z_dim),
                                      bytes_accessed=bytes_accessed),
    )(*operands)
    return d2, mu


# ----------------------------------------------------------------------------
# Conv glue (NHWC patch extraction only; matmuls run in the Pallas kernels)
# ----------------------------------------------------------------------------
def _im2col_nhwc(x, kh, kw, stride, pad_t, pad_b, pad_l, pad_r):
    """x:[B,H,W,C] NHWC -> ([B*Ho*Wo, kh*kw*C], Ho, Wo); column order (i,j,c)."""
    B, H, W, C = x.shape
    xp = jnp.pad(x, ((0, 0), (pad_t, pad_b), (pad_l, pad_r), (0, 0)))
    Hp, Wp = H + pad_t + pad_b, W + pad_l + pad_r
    Ho = (Hp - kh) // stride + 1
    Wo = (Wp - kw) // stride + 1
    patches = [xp[:, i:i + stride * Ho:stride, j:j + stride * Wo:stride, :]
               for i in range(kh) for j in range(kw)]
    cols = jnp.concatenate(patches, axis=-1)         # [B, Ho, Wo, kh*kw*C]
    return cols.reshape(B * Ho * Wo, kh * kw * C), Ho, Wo


def conv2d_nhwc(x, w_mat, b, *, stride, padding, act, kh=3, kw=3,
                out_dtype=jnp.bfloat16):
    """PyTorch-semantics Conv2d in NHWC.  w_mat:[kh*kw*Cin, Cout] bf16."""
    B = x.shape[0]
    cols, Ho, Wo = _im2col_nhwc(x, kh, kw, stride,
                                padding, padding, padding, padding)
    out = matmul_bias_act(cols, w_mat, b, act, out_dtype)     # [B*Ho*Wo, Cout]
    return out.reshape(B, Ho, Wo, -1)                         # no transpose needed


def conv_transpose2d_nhwc(x, w_mat, b, *, stride, padding, output_padding,
                          act, kh=3, kw=3, out_dtype=jnp.bfloat16):
    """PyTorch-semantics ConvTranspose2d via zero-dilation + flipped kernel."""
    # TODO(synk): for large shapes, switch to the stride^2 sub-kernel
    # (pixel-shuffle) decomposition to avoid ~75% structurally-zero matmul rows;
    # at these toy sizes launch count dominates, so one matmul per layer wins.
    B, H, W, C = x.shape
    Hd, Wd = (H - 1) * stride + 1, (W - 1) * stride + 1
    xd = jnp.zeros((B, Hd, Wd, C), x.dtype).at[:, ::stride, ::stride, :].set(x)
    p_top = kh - 1 - padding
    p_bot = kh - 1 - padding + output_padding
    p_left = kw - 1 - padding
    p_right = kw - 1 - padding + output_padding
    cols, Ho, Wo = _im2col_nhwc(xd, kh, kw, 1, p_top, p_bot, p_left, p_right)
    out = matmul_bias_act(cols, w_mat, b, act, out_dtype)
    return out.reshape(B, Ho, Wo, -1)


# ----------------------------------------------------------------------------
# Parameters: synthetic init in PyTorch layouts, converted once to kernel layouts
# ----------------------------------------------------------------------------
def init_params_pytorch_layout(key, z_dim):
    """Conv2d: [Cout,Cin,kh,kw]; ConvTranspose2d: [Cin,Cout,kh,kw]; Linear: [out,in]."""
    keys = jax.random.split(key, 32)
    k = iter(keys)

    def w(shape):
        return (0.1 * jax.random.normal(next(k), shape)).astype(jnp.float32)

    def b(n):
        return (0.01 * jax.random.normal(next(k), (n,))).astype(jnp.float32)

    return dict(
        c1w=w((8, 1, 3, 3)),    c1b=b(8),
        c2w=w((16, 8, 3, 3)),   c2b=b(16),
        c3w=w((32, 16, 3, 3)),  c3b=b(32),
        el1w=w((64, 288)),      el1b=b(64),
        el2w=w((32, 64)),       el2b=b(32),
        fc21w=w((z_dim, 32)),   fc21b=b(z_dim),
        fc22w=w((z_dim, 32)),   fc22b=b(z_dim),   # present in module, unused in forward
        dl1w=w((64, z_dim)),    dl1b=b(64),
        dl2w=w((288, 64)),      dl2b=b(288),
        dc1w=w((32, 16, 3, 3)), dc1b=b(16),
        dc2w=w((16, 8, 3, 3)),  dc2b=b(8),
        dc3w=w((8, 1, 3, 3)),   dc3b=b(1),
    )


def convert_params(pt):
    """PyTorch layouts -> kernel layouts: matmul weights [K,N] bf16, biases [1,N] f32.
    Linear weights touching the 288-flatten are permuted from PyTorch's (c,h,w)
    flatten order to our NHWC (h,w,c) order, preserving exact semantics."""
    bf16 = jnp.bfloat16

    def conv_w(w):   # [Cout,Cin,kh,kw] -> [kh*kw*Cin, Cout]
        co, ci, kh, kw = w.shape
        return w.transpose(2, 3, 1, 0).reshape(kh * kw * ci, co).astype(bf16)

    def convT_w(w):  # [Cin,Cout,kh,kw] -> equivalent fwd-conv [kh*kw*Cin, Cout]
        ci, co, kh, kw = w.shape
        wf = jnp.flip(w, axis=(2, 3))
        return wf.transpose(2, 3, 0, 1).reshape(kh * kw * ci, co).astype(bf16)

    def lin_w(w):    # [out,in] -> [in,out]
        return w.T.astype(bf16)

    def bias(v):
        return v.reshape(1, -1).astype(jnp.float32)

    el1w = (pt["el1w"].reshape(64, 32, 3, 3)      # [out, c, h, w]
            .transpose(2, 3, 1, 0)                # [h, w, c, out]
            .reshape(288, 64).astype(bf16))
    dl2w = (pt["dl2w"].reshape(32, 3, 3, 64)      # [c, h, w, in]
            .transpose(1, 2, 0, 3)                # [h, w, c, in]
            .reshape(288, 64).T.astype(bf16))     # [in=64, out=288(h,w,c)]
    dl2b = (pt["dl2b"].reshape(32, 3, 3).transpose(1, 2, 0)
            .reshape(1, 288).astype(jnp.float32))

    return dict(
        c1w=conv_w(pt["c1w"]),   c1b=bias(pt["c1b"]),
        c2w=conv_w(pt["c2w"]),   c2b=bias(pt["c2b"]),
        c3w=conv_w(pt["c3w"]),   c3b=bias(pt["c3b"]),
        el1w=el1w,               el1b=bias(pt["el1b"]),
        el2w=lin_w(pt["el2w"]),  el2b=bias(pt["el2b"]),
        fc21w=lin_w(pt["fc21w"]), fc21b=bias(pt["fc21b"]),
        dl1w=lin_w(pt["dl1w"]),  dl1b=bias(pt["dl1b"]),
        dl2w=dl2w,               dl2b=dl2b,
        dc1w=convT_w(pt["dc1w"]), dc1b=bias(pt["dc1b"]),
        dc2w=convT_w(pt["dc2w"]), dc2b=bias(pt["dc2b"]),
        dc3w=convT_w(pt["dc3w"]), dc3b=bias(pt["dc3b"]),
    )


# ----------------------------------------------------------------------------
# Forward pass (mirrors CNN_VAE.forward)
# ----------------------------------------------------------------------------
def cnn_vae_forward(kp, x_nchw, eps):
    B = x_nchw.shape[0]
    # NCHW -> NHWC (free: C == 1), bf16 MXU operands.
    x = jnp.transpose(x_nchw, (0, 2, 3, 1)).astype(jnp.bfloat16)

    # ---- encoder_cnn ----
    h = conv2d_nhwc(x, kp["c1w"], kp["c1b"], stride=2, padding=1, act="relu")  # [B,14,14,8]
    h = conv2d_nhwc(h, kp["c2w"], kp["c2b"], stride=2, padding=1, act="relu")  # [B,7,7,16]
    h = conv2d_nhwc(h, kp["c3w"], kp["c3b"], stride=2, padding=0, act="relu")  # [B,3,3,32]

    # ---- encoder_lin + fc21 + reparametrize + decoder_lin: one pallas_call ----
    h = h.reshape(B, 3 * 3 * 32)            # NHWC flatten; weights permuted to match
    d2, mu = latent_chain(h, eps, kp)       # d2:[B,288] bf16, mu:[B,z] f32
    logvar = mu                             # reference returns fc21(x) for both

    # ---- decoder_conv ----
    d = d2.reshape(B, 3, 3, 32)
    d = conv_transpose2d_nhwc(d, kp["dc1w"], kp["dc1b"], stride=2, padding=0,
                              output_padding=0, act="relu")                    # [B,7,7,16]
    d = conv_transpose2d_nhwc(d, kp["dc2w"], kp["dc2b"], stride=2, padding=1,
                              output_padding=1, act="relu")                    # [B,14,14,8]
    d = conv_transpose2d_nhwc(d, kp["dc3w"], kp["dc3b"], stride=2, padding=1,
                              output_padding=1, act="sigmoid",
                              out_dtype=jnp.float32)                           # [B,28,28,1]
    recon = jnp.transpose(d, (0, 3, 1, 2))  # NHWC -> NCHW (free: C == 1)
    return recon, mu, logvar


# ----------------------------------------------------------------------------
if __name__ == "__main__":
    z_dim = 8
    B = 2
    key = jax.random.PRNGKey(0)
    k_param, k_x, k_eps = jax.random.split(key, 3)

    pt_params = init_params_pytorch_layout(k_param, z_dim)
    kparams = convert_params(pt_params)

    # the architecture's Linear(3*3*32, 64) pins the input to 28x28 spatially
    x = jax.random.uniform(k_x, (B, 1, 28, 28), dtype=jnp.float32)
    eps = jax.random.normal(k_eps, (B, z_dim), dtype=jnp.float32)

    fwd = jax.jit(cnn_vae_forward)
    recon, mu, logvar = fwd(kparams, x, eps)
    jax.block_until_ready((recon, mu, logvar))

    assert recon.shape == (B, 1, 28, 28)
    assert mu.shape == (B, z_dim)
    assert logvar.shape == (B, z_dim)
    assert bool(jnp.all(jnp.isfinite(recon)))
    assert bool(jnp.all((recon >= 0.0) & (recon <= 1.0)))

    print("KERNEL_OK")
</pallas_src>

<mosaic_0001>
module attributes {stable_mosaic.version = 11 : i64} {
  func.func @_matmul_bias_act_kernel(%arg0: memref<392x9xbf16, #tpu.memory_space<vmem>>, %arg1: memref<9x8xbf16, #tpu.memory_space<vmem>>, %arg2: memref<1x8xf32, #tpu.memory_space<vmem>>, %arg3: memref<392x8xbf16, #tpu.memory_space<vmem>>) attributes {dimension_semantics = [], scalar_prefetch = 0 : i64, scratch_operands = 0 : i64, tpu.core_type = #tpu.core_type<tc>} {
    %c0 = arith.constant 0 : index
    %c0_0 = arith.constant 0 : index
    %0 = vector.load %arg0[%c0, %c0_0] : memref<392x9xbf16, #tpu.memory_space<vmem>>, vector<392x9xbf16>
    %c0_1 = arith.constant 0 : index
    %c0_2 = arith.constant 0 : index
    %1 = vector.load %arg1[%c0_1, %c0_2] : memref<9x8xbf16, #tpu.memory_space<vmem>>, vector<9x8xbf16>
    %cst = arith.constant dense<0.000000e+00> : vector<392x8xf32>
    %2 = tpu.matmul %0, %1, %cst {dimension_numbers = #tpu.dot_dimension_numbers<[1], [0], [0], [1], [0, 0, 1, 1], [], []>} : vector<392x9xbf16>, vector<9x8xbf16>, vector<392x8xf32> -> vector<392x8xf32>
    %c0_3 = arith.constant 0 : index
    %c0_4 = arith.constant 0 : index
    %3 = vector.load %arg2[%c0_3, %c0_4] : memref<1x8xf32, #tpu.memory_space<vmem>>, vector<1x8xf32>
    %4 = vector.broadcast %3 : vector<1x8xf32> to vector<392x8xf32>
    %5 = arith.addf %2, %4 : vector<392x8xf32>
    %cst_5 = arith.constant 0.000000e+00 : f32
    %6 = vector.broadcast %cst_5 : f32 to vector<392x8xf32>
    %7 = arith.maximumf %5, %6 : vector<392x8xf32>
    %8 = arith.truncf %7 : vector<392x8xf32> to vector<392x8xbf16>
    %c0_6 = arith.constant 0 : index
    %c0_7 = arith.constant 0 : index
    %9 = vector.load %arg3[%c0_6, %c0_7] : memref<392x8xbf16, #tpu.memory_space<vmem>>, vector<392x8xbf16>
    tpu.vector_store %arg3[%c0_6, %c0_7], %8 {strides = array<i32>} : memref<392x8xbf16, #tpu.memory_space<vmem>>, vector<392x8xbf16>,
    return
  }
}

module attributes {stable_mosaic.version = 11 : i64} {
  func.func @_matmul_bias_act_kernel(%arg0: memref<98x72xbf16, #tpu.memory_space<vmem>>, %arg1: memref<72x16xbf16, #tpu.memory_space<vmem>>, %arg2: memref<1x16xf32, #tpu.memory_space<vmem>>, %arg3: memref<98x16xbf16, #tpu.memory_space<vmem>>) attributes {dimension_semantics = [], scalar_prefetch = 0 : i64, scratch_operands = 0 : i64, tpu.core_type = #tpu.core_type<tc>} {
    %c0 = arith.constant 0 : index
    %c0_0 = arith.constant 0 : index
    %0 = vector.load %arg0[%c0, %c0_0] : memref<98x72xbf16, #tpu.memory_space<vmem>>, vector<98x72xbf16>
    %c0_1 = arith.constant 0 : index
    %c0_2 = arith.constant 0 : index
    %1 = vector.load %arg1[%c0_1, %c0_2] : memref<72x16xbf16, #tpu.memory_space<vmem>>, vector<72x16xbf16>
    %cst = arith.constant dense<0.000000e+00> : vector<98x16xf32>
    %2 = tpu.matmul %0, %1, %cst {dimension_numbers = #tpu.dot_dimension_numbers<[1], [0], [0], [1], [0, 0, 1, 1], [], []>} : vector<98x72xbf16>, vector<72x16xbf16>, vector<98x16xf32> -> vector<98x16xf32>
    %c0_3 = arith.constant 0 : index
    %c0_4 = arith.constant 0 : index
    %3 = vector.load %arg2[%c0_3, %c0_4] : memref<1x16xf32, #tpu.memory_space<vmem>>, vector<1x16xf32>
    %4 = vector.broadcast %3 : vector<1x16xf32> to vector<98x16xf32>
    %5 = arith.addf %2, %4 : vector<98x16xf32>
    %cst_5 = arith.constant 0.000000e+00 : f32
    %6 = vector.broadcast %cst_5 : f32 to vector<98x16xf32>
    %7 = arith.maximumf %5, %6 : vector<98x16xf32>
    %8 = arith.truncf %7 : vector<98x16xf32> to vector<98x16xbf16>
    %c0_6 = arith.constant 0 : index
    %c0_7 = arith.constant 0 : index
    %9 = vector.load %arg3[%c0_6, %c0_7] : memref<98x16xbf16, #tpu.memory_space<vmem>>, vector<98x16xbf16>
    tpu.vector_store %arg3[%c0_6, %c0_7], %8 {strides = array<i32>} : memref<98x16xbf16, #tpu.memory_space<vmem>>, vector<98x16xbf16>,
    return
  }
}

module attributes {stable_mosaic.version = 11 : i64} {
  func.func @_matmul_bias_act_kernel(%arg0: memref<18x144xbf16, #tpu.memory_space<vmem>>, %arg1: memref<144x32xbf16, #tpu.memory_space<vmem>>, %arg2: memref<1x32xf32, #tpu.memory_space<vmem>>, %arg3: memref<18x32xbf16, #tpu.memory_space<vmem>>) attributes {dimension_semantics = [], scalar_prefetch = 0 : i64, scratch_operands = 0 : i64, tpu.core_type = #tpu.core_type<tc>} {
    %c0 = arith.constant 0 : index
    %c0_0 = arith.constant 0 : index
    %0 = vector.load %arg0[%c0, %c0_0] : memref<18x144xbf16, #tpu.memory_space<vmem>>, vector<18x144xbf16>
    %c0_1 = arith.constant 0 : index
    %c0_2 = arith.constant 0 : index
    %1 = vector.load %arg1[%c0_1, %c0_2] : memref<144x32xbf16, #tpu.memory_space<vmem>>, vector<144x32xbf16>
    %cst = arith.constant dense<0.000000e+00> : vector<18x32xf32>
    %2 = tpu.matmul %0, %1, %cst {dimension_numbers = #tpu.dot_dimension_numbers<[1], [0], [0], [1], [0, 0, 1, 1], [], []>} : vector<18x144xbf16>, vector<144x32xbf16>, vector<18x32xf32> -> vector<18x32xf32>
    %c0_3 = arith.constant 0 : index
    %c0_4 = arith.constant 0 : index
    %3 = vector.load %arg2[%c0_3, %c0_4] : memref<1x32xf32, #tpu.memory_space<vmem>>, vector<1x32xf32>
    %4 = vector.broadcast %3 : vector<1x32xf32> to vector<18x32xf32>
    %5 = arith.addf %2, %4 : vector<18x32xf32>
    %cst_5 = arith.constant 0.000000e+00 : f32
    %6 = vector.broadcast %cst_5 : f32 to vector<18x32xf32>
    %7 = arith.maximumf %5, %6 : vector<18x32xf32>
    %8 = arith.truncf %7 : vector<18x32xf32> to vector<18x32xbf16>
    %c0_6 = arith.constant 0 : index
    %c0_7 = arith.constant 0 : index
    %9 = vector.load %arg3[%c0_6, %c0_7] : memref<18x32xbf16, #tpu.memory_space<vmem>>, vector<18x32xbf16>
    tpu.vector_store %arg3[%c0_6, %c0_7], %8 {strides = array<i32>} : memref<18x32xbf16, #tpu.memory_space<vmem>>, vector<18x32xbf16>,
    return
  }
}

module attributes {stable_mosaic.version = 11 : i64} {
  func.func @_latent_chain_kernel(%arg0: memref<2x288xbf16, #tpu.memory_space<vmem>>, %arg1: memref<2x8xf32, #tpu.memory_space<vmem>>, %arg2: memref<288x64xbf16, #tpu.memory_space<vmem>>, %arg3: memref<1x64xf32, #tpu.memory_space<vmem>>, %arg4: memref<64x32xbf16, #tpu.memory_space<vmem>>, %arg5: memref<1x32xf32, #tpu.memory_space<vmem>>, %arg6: memref<32x8xbf16, #tpu.memory_space<vmem>>, %arg7: memref<1x8xf32, #tpu.memory_space<vmem>>, %arg8: memref<8x64xbf16, #tpu.memory_space<vmem>>, %arg9: memref<1x64xf32, #tpu.memory_space<vmem>>, %arg10: memref<64x288xbf16, #tpu.memory_space<vmem>>, %arg11: memref<1x288xf32, #tpu.memory_space<vmem>>, %arg12: memref<2x288xbf16, #tpu.memory_space<vmem>>, %arg13: memref<2x8xf32, #tpu.memory_space<vmem>>) attributes {dimension_semantics = [], scalar_prefetch = 0 : i64, scratch_operands = 0 : i64, tpu.core_type = #tpu.core_type<tc>} {
    %c0 = arith.constant 0 : index
    %c0_0 = arith.constant 0 : index
    %0 = vector.load %arg0[%c0, %c0_0] : memref<2x288xbf16, #tpu.memory_space<vmem>>, vector<2x288xbf16>
    %c0_1 = arith.constant 0 : index
    %c0_2 = arith.constant 0 : index
    %1 = vector.load %arg2[%c0_1, %c0_2] : memref<288x64xbf16, #tpu.memory_space<vmem>>, vector<288x64xbf16>
    %cst = arith.constant dense<0.000000e+00> : vector<2x64xf32>
    %2 = tpu.matmul %0, %1, %cst {dimension_numbers = #tpu.dot_dimension_numbers<[1], [0], [0], [1], [0, 0, 1, 1], [], []>} : vector<2x288xbf16>, vector<288x64xbf16>, vector<2x64xf32> -> vector<2x64xf32>
    %c0_3 = arith.constant 0 : index
    %c0_4 = arith.constant 0 : index
    %3 = vector.load %arg3[%c0_3, %c0_4] : memref<1x64xf32, #tpu.memory_space<vmem>>, vector<1x64xf32>
    %4 = vector.broadcast %3 : vector<1x64xf32> to vector<2x64xf32>
    %5 = arith.addf %2, %4 : vector<2x64xf32>
    %cst_5 = arith.constant 0.000000e+00 : f32
    %6 = vector.broadcast %cst_5 : f32 to vector<2x64xf32>
    %7 = arith.maximumf %5, %6 : vector<2x64xf32>
    %8 = arith.truncf %7 : vector<2x64xf32> to vector<2x64xbf16>
    %c0_6 = arith.constant 0 : index
    %c0_7 = arith.constant 0 : index
    %9 = vector.load %arg4[%c0_6, %c0_7] : memref<64x32xbf16, #tpu.memory_space<vmem>>, vector<64x32xbf16>
    %cst_8 = arith.constant dense<0.000000e+00> : vector<2x32xf32>
    %10 = tpu.matmul %8, %9, %cst_8 {dimension_numbers = #tpu.dot_dimension_numbers<[1], [0], [0], [1], [0, 0, 1, 1], [], []>} : vector<2x64xbf16>, vector<64x32xbf16>, vector<2x32xf32> -> vector<2x32xf32>
    %c0_9 = arith.constant 0 : index
    %c0_10 = arith.constant 0 : index
    %11 = vector.load %arg5[%c0_9, %c0_10] : memref<1x32xf32, #tpu.memory_space<vmem>>, vector<1x32xf32>
    %12 = vector.broadcast %11 : vector<1x32xf32> to vector<2x32xf32>
    %13 = arith.addf %10, %12 : vector<2x32xf32>
    %14 = arith.truncf %13 : vector<2x32xf32> to vector<2x32xbf16>
    %c0_11 = arith.constant 0 : index
    %c0_12 = arith.constant 0 : index
    %15 = vector.load %arg6[%c0_11, %c0_12] : memref<32x8xbf16, #tpu.memory_space<vmem>>, vector<32x8xbf16>
    %cst_13 = arith.constant dense<0.000000e+00> : vector<2x8xf32>
    %16 = tpu.matmul %14, %15, %cst_13 {dimension_numbers = #tpu.dot_dimension_numbers<[1], [0], [0], [1], [0, 0, 1, 1], [], []>} : vector<2x32xbf16>, vector<32x8xbf16>, vector<2x8xf32> -> vector<2x8xf32>
    %c0_14 = arith.constant 0 : index
    %c0_15 = arith.constant 0 : index
    %17 = vector.load %arg7[%c0_14, %c0_15] : memref<1x8xf32, #tpu.memory_space<vmem>>, vector<1x8xf32>
    %18 = vector.broadcast %17 : vector<1x8xf32> to vector<2x8xf32>
    %19 = arith.addf %16, %18 : vector<2x8xf32>
    %c0_16 = arith.constant 0 : index
    %c0_17 = arith.constant 0 : index
    %20 = vector.load %arg13[%c0_16, %c0_17] : memref<2x8xf32, #tpu.memory_space<vmem>>, vector<2x8xf32>
    tpu.vector_store %arg13[%c0_16, %c0_17], %19 {strides = array<i32>} : memref<2x8xf32, #tpu.memory_space<vmem>>, vector<2x8xf32>,
    %c0_18 = arith.constant 0 : index
    %c0_19 = arith.constant 0 : index
    %21 = vector.load %arg1[%c0_18, %c0_19] : memref<2x8xf32, #tpu.memory_space<vmem>>, vector<2x8xf32>
    %cst_20 = arith.constant 5.000000e-01 : f32
    %22 = vector.broadcast %cst_20 : f32 to vector<2x8xf32>
    %23 = arith.mulf %22, %19 : vector<2x8xf32>
    %24 = math.exp %23 : vector<2x8xf32>
    %25 = arith.mulf %21, %24 : vector<2x8xf32>
    %26 = arith.addf %25, %19 : vector<2x8xf32>
    %27 = arith.truncf %26 : vector<2x8xf32> to vector<2x8xbf16>
    %c0_21 = arith.constant 0 : index
    %c0_22 = arith.constant 0 : index
    %28 = vector.load %arg8[%c0_21, %c0_22] : memref<8x64xbf16, #tpu.memory_space<vmem>>, vector<8x64xbf16>
    %cst_23 = arith.constant dense<0.000000e+00> : vector<2x64xf32>
    %29 = tpu.matmul %27, %28, %cst_23 {dimension_numbers = #tpu.dot_dimension_numbers<[1], [0], [0], [1], [0, 0, 1, 1], [], []>} : vector<2x8xbf16>, vector<8x64xbf16>, vector<2x64xf32> -> vector<2x64xf32>
    %c0_24 = arith.constant 0 : index
    %c0_25 = arith.constant 0 : index
    %30 = vector.load %arg9[%c0_24, %c0_25] : memref<1x64xf32, #tpu.memory_space<vmem>>, vector<1x64xf32>
    %31 = vector.broadcast %30 : vector<1x64xf32> to vector<2x64xf32>
    %32 = arith.addf %29, %31 : vector<2x64xf32>
    %cst_26 = arith.constant 0.000000e+00 : f32
    %33 = vector.broadcast %cst_26 : f32 to vector<2x64xf32>
    %34 = arith.maximumf %32, %33 : vector<2x64xf32>
    %35 = arith.truncf %34 : vector<2x64xf32> to vector<2x64xbf16>
    %c0_27 = arith.constant 0 : index
    %c0_28 = arith.constant 0 : index
    %36 = vector.load %arg10[%c0_27, %c0_28] : memref<64x288xbf16, #tpu.memory_space<vmem>>, vector<64x288xbf16>
    %cst_29 = arith.constant dense<0.000000e+00> : vector<2x288xf32>
    %37 = tpu.matmul %35, %36, %cst_29 {dimension_numbers = #tpu.dot_dimension_numbers<[1], [0], [0], [1], [0, 0, 1, 1], [], []>} : vector<2x64xbf16>, vector<64x288xbf16>, vector<2x288xf32> -> vector<2x288xf32>
    %c0_30 = arith.constant 0 : index
    %c0_31 = arith.constant 0 : index
    %38 = vector.load %arg11[%c0_30, %c0_31] : memref<1x288xf32, #tpu.memory_space<vmem>>, vector<1x288xf32>
    %39 = vector.broadcast %38 : vector<1x288xf32> to vector<2x288xf32>
    %40 = arith.addf %37, %39 : vector<2x288xf32>
    %cst_32 = arith.constant 0.000000e+00 : f32
    %41 = vector.broadcast %cst_32 : f32 to vector<2x288xf32>
    %42 = arith.maximumf %40, %41 : vector<2x288xf32>
    %43 = arith.truncf %42 : vector<2x288xf32> to vector<2x288xbf16>
    %c0_33 = arith.constant 0 : index
    %c0_34 = arith.constant 0 : index
    %44 = vector.load %arg12[%c0_33, %c0_34] : memref<2x288xbf16, #tpu.memory_space<vmem>>, vector<2x288xbf16>
    tpu.vector_store %arg12[%c0_33, %c0_34], %43 {strides = array<i32>} : memref<2x288xbf16, #tpu.memory_space<vmem>>, vector<2x288xbf16>,
    return
  }
}

module attributes {stable_mosaic.version = 11 : i64} {
  func.func @_matmul_bias_act_kernel(%arg0: memref<98x288xbf16, #tpu.memory_space<vmem>>, %arg1: memref<288x16xbf16, #tpu.memory_space<vmem>>, %arg2: memref<1x16xf32, #tpu.memory_space<vmem>>, %arg3: memref<98x16xbf16, #tpu.memory_space<vmem>>) attributes {dimension_semantics = [], scalar_prefetch = 0 : i64, scratch_operands = 0 : i64, tpu.core_type = #tpu.core_type<tc>} {
    %c0 = arith.constant 0 : index
    %c0_0 = arith.constant 0 : index
    %0 = vector.load %arg0[%c0, %c0_0] : memref<98x288xbf16, #tpu.memory_space<vmem>>, vector<98x288xbf16>
    %c0_1 = arith.constant 0 : index
    %c0_2 = arith.constant 0 : index
    %1 = vector.load %arg1[%c0_1, %c0_2] : memref<288x16xbf16, #tpu.memory_space<vmem>>, vector<288x16xbf16>
    %cst = arith.constant dense<0.000000e+00> : vector<98x16xf32>
    %2 = tpu.matmul %0, %1, %cst {dimension_numbers = #tpu.dot_dimension_numbers<[1], [0], [0], [1], [0, 0, 1, 1], [], []>} : vector<98x288xbf16>, vector<288x16xbf16>, vector<98x16xf32> -> vector<98x16xf32>
    %c0_3 = arith.constant 0 : index
    %c0_4 = arith.constant 0 : index
    %3 = vector.load %arg2[%c0_3, %c0_4] : memref<1x16xf32, #tpu.memory_space<vmem>>, vector<1x16xf32>
    %4 = vector.broadcast %3 : vector<1x16xf32> to vector<98x16xf32>
    %5 = arith.addf %2, %4 : vector<98x16xf32>
    %cst_5 = arith.constant 0.000000e+00 : f32
    %6 = vector.broadcast %cst_5 : f32 to vector<98x16xf32>
    %7 = arith.maximumf %5, %6 : vector<98x16xf32>
    %8 = arith.truncf %7 : vector<98x16xf32> to vector<98x16xbf16>
    %c0_6 = arith.constant 0 : index
    %c0_7 = arith.constant 0 : index
    %9 = vector.load %arg3[%c0_6, %c0_7] : memref<98x16xbf16, #tpu.memory_space<vmem>>, vector<98x16xbf16>
    tpu.vector_store %arg3[%c0_6, %c0_7], %8 {strides = array<i32>} : memref<98x16xbf16, #tpu.memory_space<vmem>>, vector<98x16xbf16>,
    return
  }
}

module attributes {stable_mosaic.version = 11 : i64} {
  func.func @_matmul_bias_act_kernel(%arg0: memref<392x144xbf16, #tpu.memory_space<vmem>>, %arg1: memref<144x8xbf16, #tpu.memory_space<vmem>>, %arg2: memref<1x8xf32, #tpu.memory_space<vmem>>, %arg3: memref<392x8xbf16, #tpu.memory_space<vmem>>) attributes {dimension_semantics = [], scalar_prefetch = 0 : i64, scratch_operands = 0 : i64, tpu.core_type = #tpu.core_type<tc>} {
    %c0 = arith.constant 0 : index
    %c0_0 = arith.constant 0 : index
    %0 = vector.load %arg0[%c0, %c0_0] : memref<392x144xbf16, #tpu.memory_space<vmem>>, vector<392x144xbf16>
    %c0_1 = arith.constant 0 : index
    %c0_2 = arith.constant 0 : index
    %1 = vector.load %arg1[%c0_1, %c0_2] : memref<144x8xbf16, #tpu.memory_space<vmem>>, vector<144x8xbf16>
    %cst = arith.constant dense<0.000000e+00> : vector<392x8xf32>
    %2 = tpu.matmul %0, %1, %cst {dimension_numbers = #tpu.dot_dimension_numbers<[1], [0], [0], [1], [0, 0, 1, 1], [], []>} : vector<392x144xbf16>, vector<144x8xbf16>, vector<392x8xf32> -> vector<392x8xf32>
    %c0_3 = arith.constant 0 : index
    %c0_4 = arith.constant 0 : index
    %3 = vector.load %arg2[%c0_3, %c0_4] : memref<1x8xf32, #tpu.memory_space<vmem>>, vector<1x8xf32>
    %4 = vector.broadcast %3 : vector<1x8xf32> to vector<392x8xf32>
    %5 = arith.addf %2, %4 : vector<392x8xf32>
    %cst_5 = arith.constant 0.000000e+00 : f32
    %6 = vector.broadcast %cst_5 : f32 to vector<392x8xf32>
    %7 = arith.maximumf %5, %6 : vector<392x8xf32>
    %8 = arith.truncf %7 : vector<392x8xf32> to vector<392x8xbf16>
    %c0_6 = arith.constant 0 : index
    %c0_7 = arith.constant 0 : index
    %9 = vector.load %arg3[%c0_6, %c0_7] : memref<392x8xbf16, #tpu.memory_space<vmem>>, vector<392x8xbf16>
    tpu.vector_store %arg3[%c0_6, %c0_7], %8 {strides = array<i32>} : memref<392x8xbf16, #tpu.memory_space<vmem>>, vector<392x8xbf16>,
    return
  }
}

module attributes {stable_mosaic.version = 11 : i64} {
  func.func @_matmul_bias_act_kernel(%arg0: memref<1568x72xbf16, #tpu.memory_space<vmem>>, %arg1: memref<72x1xbf16, #tpu.memory_space<vmem>>, %arg2: memref<1x1xf32, #tpu.memory_space<vmem>>, %arg3: memref<1568x1xf32, #tpu.memory_space<vmem>>) attributes {dimension_semantics = [], scalar_prefetch = 0 : i64, scratch_operands = 0 : i64, tpu.core_type = #tpu.core_type<tc>} {
    %c0 = arith.constant 0 : index
    %c0_0 = arith.constant 0 : index
    %0 = vector.load %arg0[%c0, %c0_0] : memref<1568x72xbf16, #tpu.memory_space<vmem>>, vector<1568x72xbf16>
    %c0_1 = arith.constant 0 : index
    %c0_2 = arith.constant 0 : index
    %1 = vector.load %arg1[%c0_1, %c0_2] : memref<72x1xbf16, #tpu.memory_space<vmem>>, vector<72x1xbf16>
    %cst = arith.constant dense<0.000000e+00> : vector<1568x1xf32>
    %2 = tpu.matmul %0, %1, %cst {dimension_numbers = #tpu.dot_dimension_numbers<[1], [0], [0], [1], [0, 0, 1, 1], [], []>} : vector<1568x72xbf16>, vector<72x1xbf16>, vector<1568x1xf32> -> vector<1568x1xf32>
    %c0_3 = arith.constant 0 : index
    %c0_4 = arith.constant 0 : index
    %3 = vector.load %arg2[%c0_3, %c0_4] : memref<1x1xf32, #tpu.memory_space<vmem>>, vector<1x1xf32>
    %4 = vector.broadcast %3 : vector<1x1xf32> to vector<1568x1xf32>
    %5 = arith.addf %2, %4 : vector<1568x1xf32>
    %cst_5 = arith.constant 0.000000e+00 : f32
    %6 = vector.broadcast %cst_5 : f32 to vector<1568x1xf32>
    %7 = arith.subf %6, %5 : vector<1568x1xf32>
    %8 = math.exp %7 : vector<1568x1xf32>
    %cst_6 = arith.constant 1.000000e+00 : f32
    %9 = vector.broadcast %cst_6 : f32 to vector<1568x1xf32>
    %10 = arith.addf %9, %8 : vector<1568x1xf32>
    %11 = tpu.reciprocal %10 {approx = true} : vector<1568x1xf32> -> vector<1568x1xf32>
    %cst_7 = arith.constant 0.000000e+00 : f32
    %cst_8 = arith.constant 1.000000e+00 : f32
    %12 = vector.broadcast %cst_7 : f32 to vector<1568x1xf32>
    %13 = arith.maximumf %12, %11 : vector<1568x1xf32>
    %14 = vector.broadcast %cst_8 : f32 to vector<1568x1xf32>
    %15 = arith.minimumf %14, %13 : vector<1568x1xf32>
    %c0_9 = arith.constant 0 : index
    %c0_10 = arith.constant 0 : index
    %16 = vector.load %arg3[%c0_9, %c0_10] : memref<1568x1xf32, #tpu.memory_space<vmem>>, vector<1568x1xf32>
    tpu.vector_store %arg3[%c0_9, %c0_10], %15 {strides = array<i32>} : memref<1568x1xf32, #tpu.memory_space<vmem>>, vector<1568x1xf32>,
    return
  }
}

</mosaic_0001>

<llo_original>
// kernel: cnn_vae_forward.7
$region0: #{cnn_vae_forward.7}
  #allocation0 [shape = 'u32[]', space=smem, size = 0x4, offset = 0x4, fixed_abs, tag = 'smem constant byte address 0x4 - core index']
  #allocation1 [shape = 'u32[144,128]{1,0:T(1,128)}', space=vmem, size = 0x12000, scoped, tag = 'internal scratch']
  %s0 = inlined_call_operand.vmem [shape: bf16[392,9], index: 0, kind: input, shape index: {}]
  %s1 = inlined_call_operand.vmem [shape: bf16[9,8], index: 1, kind: input, shape index: {}]
  %s2 = inlined_call_operand.vmem [shape: f32[1,8], index: 2, kind: input, shape index: {}]
  %s3 = inlined_call_operand.vmem [shape: bf16[392,8], index: 3, kind: output, shape index: {}]
  %s4 = sld [smem:[#allocation0]]
  $region22: #{cnn_vae_forward.7} parent=0
    _
  %s6 = ssub.s32 1, %s4
  %s7 = scalar_select 0, %s6, %s4
  // Predicated region
  $region2: #{cnn_vae_forward.7} parent=0 // pred_check
    _
  $region3: #{cnn_vae_forward.7} parent=0 // pred_check_branch
    %9 = sbr.rel (0) target = $region5
  $region4: #{cnn_vae_forward.7} parent=0 // pred_region
    _
  $region5: #{cnn_vae_forward.7} parent=0 // pred_fallthru
    _
  // Predicated region
  $region6: #{cnn_vae_forward.7} parent=0 // pred_check
    _
  $region7: #{cnn_vae_forward.7} parent=0 // pred_check_branch
    %11 = sbr.rel (0) target = $region9
  $region8: #{cnn_vae_forward.7} parent=0 // pred_region
    _
  $region9: #{cnn_vae_forward.7} parent=0 // pred_fallthru
    _
  // Predicated region
  $region10: #{cnn_vae_forward.7} parent=0 // pred_check
    _
  $region11: #{cnn_vae_forward.7} parent=0 // pred_check_branch
    %13 = sbr.rel (0) target = $region13
  $region12: #{cnn_vae_forward.7} parent=0 // pred_region
    _
  $region13: #{cnn_vae_forward.7} parent=0 // pred_fallthru
    _
  %v15 = vld [vmem:[%s0] sm:$0xf]
  %v16 = vld [vmem:[%s0 + $0x4] sm:$0xf]
  %v17 = vld [vmem:[%s0 + $0x8] sm:$0xf]
  %v18 = vld [vmem:[%s0 + $0xc] sm:$0xf]
  %v19 = vld [vmem:[%s0 + $0x10] sm:$0xf]
  %v20 = vld [vmem:[%s0 + $0x14] sm:$0xf]
  %v21 = vld [vmem:[%s0 + $0x18] sm:$0xf]
  %v22 = vld [vmem:[%s0 + $0x1c] sm:$0xf]
  %v23 = vld [vmem:[%s0 + $0x20] sm:$0xf]
  %v24 = vld [vmem:[%s0 + $0x24] sm:$0xf]
  %v25 = vld [vmem:[%s0 + $0x28] sm:$0xf]
  %v26 = vld [vmem:[%s0 + $0x2c] sm:$0xf]
  %v27 = vld [vmem:[%s0 + $0x30] sm:$0xf]
  %v28 = vld [vmem:[%s0 + $0x34] sm:$0xf]
  %v29 = vld [vmem:[%s0 + $0x38] sm:$0xf]
  %v30 = vld [vmem:[%s0 + $0x3c] sm:$0xf]
  %v31 = vld [vmem:[%s0 + $0x40] sm:$0xf]
  %v32 = vld [vmem:[%s0 + $0x44] sm:$0xf]
  %v33 = vld [vmem:[%s0 + $0x48] sm:$0xf]
  %v34 = vld [vmem:[%s0 + $0x4c] sm:$0xf]
  %v35 = vld [vmem:[%s0 + $0x50] sm:$0xf]
  %v36 = vld [vmem:[%s0 + $0x54] sm:$0xf]
  %v37 = vld [vmem:[%s0 + $0x58] sm:$0xf]
  %v38 = vld [vmem:[%s0 + $0x5c] sm:$0xf]
  %v39 = vld [vmem:[%s0 + $0x60] sm:$0xf]
  %v40 = vld [vmem:[%s0 + $0x64] sm:$0xf]
  %v41 = vld [vmem:[%s0 + $0x68] sm:$0xf]
  %v42 = vld [vmem:[%s0 + $0x6c] sm:$0xf]
  %v43 = vld [vmem:[%s0 + $0x70] sm:$0xf]
  %v44 = vld [vmem:[%s0 + $0x74] sm:$0xf]
  %v45 = vld [vmem:[%s0 + $0x78] sm:$0xf]
  %v46 = vld [vmem:[%s0 + $0x7c] sm:$0xf]
  %v47 = vld [vmem:[%s0 + $0x80] sm:$0xf]
  %v48 = vld [vmem:[%s0 + $0x84] sm:$0xf]
  %v49 = vld [vmem:[%s0 + $0x88] sm:$0xf]
  %v50 = vld [vmem:[%s0 + $0x8c] sm:$0xf]
  %v51 = vld [vmem:[%s0 + $0x90] sm:$0xf]
  %v52 = vld [vmem:[%s0 + $0x94] sm:$0xf]
  %v53 = vld [vmem:[%s0 + $0x98] sm:$0xf]
  %v54 = vld [vmem:[%s0 + $0x9c] sm:$0xf]
  %v55 = vld [vmem:[%s0 + $0xa0] sm:$0xf]
  %v56 = vld [vmem:[%s0 + $0xa4] sm:$0xf]
  %v57 = vld [vmem:[%s0 + $0xa8] sm:$0xf]
  %v58 = vld [vmem:[%s0 + $0xac] sm:$0xf]
  %v59 = vld [vmem:[%s0 + $0xb0] sm:$0xf]
  %v60 = vld [vmem:[%s0 + $0xb4] sm:$0xf]
  %v61 = vld [vmem:[%s0 + $0xb8] sm:$0xf]
  %v62 = vld [vmem:[%s0 + $0xbc] sm:$0xf]
  %v63 = vld [vmem:[%s0 + $0xc0] sm:$0xf]
  %v64 = vld [vmem:[%s1] sm:$0xf]
  %v65 = vld [vmem:[%s1 + $0x4] sm:$0x1]
  %v66 = vld [vmem:[%s2] sm:$0x1]
  %v68 = vlaneseq
  %v69 = vshrl.u32 %v68, 7
  %v70 = vsub.s32 0, %v69
  %v71 = vrot.slane %v66, %v70
  %v122 = vunpack.c.l.b16 %v15
  %v123 = vunpack.c.l.b16 %v16
  %v124 = vunpack.c.l.b16 %v17
  %v125 = vunpack.c.l.b16 %v18
  %v126 = vunpack.c.l.b16 %v19
  %v127 = vunpack.c.l.b16 %v20
  %v128 = vunpack.c.l.b16 %v21
  %v129 = vunpack.c.l.b16 %v22
  %v130 = vunpack.c.l.b16 %v23
  %v131 = vunpack.c.l.b16 %v24
  %v132 = vunpack.c.l.b16 %v25
  %v133 = vunpack.c.l.b16 %v26
  %v134 = vunpack.c.l.b16 %v27
  %v135 = vunpack.c.l.b16 %v28
  %v136 = vunpack.c.l.b16 %v29
  %v137 = vunpack.c.l.b16 %v30
  %v138 = vunpack.c.l.b16 %v31
  %v139 = vunpack.c.l.b16 %v32
  %v140 = vunpack.c.l.b16 %v33
  %v141 = vunpack.c.l.b16 %v34
  %v142 = vunpack.c.l.b16 %v35
  %v143 = vunpack.c.l.b16 %v36
  %v144 = vunpack.c.l.b16 %v37
  %v145 = vunpack.c.l.b16 %v38
  %v146 = vunpack.c.l.b16 %v39
  %v147 = vunpack.c.l.b16 %v40
  %v148 = vunpack.c.l.b16 %v41
  %v149 = vunpack.c.l.b16 %v42
  %v150 = vunpack.c.l.b16 %v43
  %v151 = vunpack.c.l.b16 %v44
  %v152 = vunpack.c.l.b16 %v45
  %v153 = vunpack.c.l.b16 %v46
  %v154 = vunpack.c.l.b16 %v47
  %v155 = vunpack.c.l.b16 %v48
  %v156 = vunpack.c.l.b16 %v49
  %v157 = vunpack.c.l.b16 %v50
  %v158 = vunpack.c.l.b16 %v51
  %v159 = vunpack.c.l.b16 %v52
  %v160 = vunpack.c.l.b16 %v53
  %v161 = vunpack.c.l.b16 %v54
  %v162 = vunpack.c.l.b16 %v55
  %v163 = vunpack.c.l.b16 %v56
  %v164 = vunpack.c.l.b16 %v57
  %v165 = vunpack.c.l.b16 %v58
  %v166 = vunpack.c.l.b16 %v59
  %v167 = vunpack.c.l.b16 %v60
  %v168 = vunpack.c.l.b16 %v61
  %v169 = vunpack.c.l.b16 %v62
  %v170 = vunpack.c.l.b16 %v63
  %v171 = vpack.c.b16 %v123, %v122
  %v172 = vpack.c.b16 %v125, %v124
  %v173 = vpack.c.b16 %v127, %v126
  %v174 = vpack.c.b16 %v129, %v128
  %v175 = vpack.c.b16 %v131, %v130
  %v176 = vpack.c.b16 %v133, %v132
  %v177 = vpack.c.b16 %v135, %v134
  %v178 = vpack.c.b16 %v137, %v136
  %v179 = vpack.c.b16 %v139, %v138
  %v180 = vpack.c.b16 %v141, %v140
  %v181 = vpack.c.b16 %v143, %v142
  %v182 = vpack.c.b16 %v145, %v144
  %v183 = vpack.c.b16 %v147, %v146
  %v184 = vpack.c.b16 %v149, %v148
  %v185 = vpack.c.b16 %v151, %v150
  %v186 = vpack.c.b16 %v153, %v152
  %v187 = vpack.c.b16 %v155, %v154
  %v188 = vpack.c.b16 %v157, %v156
  %v189 = vpack.c.b16 %v159, %v158
  %v190 = vpack.c.b16 %v161, %v160
  %v191 = vpack.c.b16 %v163, %v162
  %v192 = vpack.c.b16 %v165, %v164
  %v193 = vpack.c.b16 %v167, %v166
  %v194 = vpack.c.b16 %v169, %v168
  %v195 = vpack.c.b16 %v170, %v170
  %v198 = vunpack.c.l.b16 %v64
  %v199 = vunpack.c.l.b16 %v65
  %v200 = vpack.c.b16 %v199, %v198
  %vm201 = vcmask 72704
  %v203 = vsel %vm201, %v171, 0
  %v206 = vsel %vm201, %v172, 0
  %v209 = vsel %vm201, %v173, 0
  %v212 = vsel %vm201, %v174, 0
  %v215 = vsel %vm201, %v175, 0
  %v218 = vsel %vm201, %v176, 0
  %v221 = vsel %vm201, %v177, 0
  %v224 = vsel %vm201, %v178, 0
  %v227 = vsel %vm201, %v179, 0
  %v230 = vsel %vm201, %v180, 0
  %v233 = vsel %vm201, %v181, 0
  %v236 = vsel %vm201, %v182, 0
  %v239 = vsel %vm201, %v183, 0
  %v242 = vsel %vm201, %v184, 0
  %v245 = vsel %vm201, %v185, 0
  %v248 = vsel %vm201, %v186, 0
  %v251 = vsel %vm201, %v187, 0
  %v254 = vsel %vm201, %v188, 0
  %v257 = vsel %vm201, %v189, 0
  %v260 = vsel %vm201, %v190, 0
  %v263 = vsel %vm201, %v191, 0
  %v266 = vsel %vm201, %v192, 0
  %v269 = vsel %vm201, %v193, 0
  %v272 = vsel %vm201, %v194, 0
  %v275 = vsel %vm201, %v195, 0
  %vm277 = vcmask 1043456
  %vm278 = vcmask 1044480
  %v279 = vsel %vm277, 4294967295, 65535
  %v280 = vsel %vm278, %v279, 0
  %v282 = vand.u32 %v200, %v280
  %284 = vmatprep.subr.bf16.mxu0 0
  %285 = vmatpush1.bf16.msra.mxu0 %v282
  %286 = vmatprep.subr.bf16.mxu0 0
  %287 = vmatpush1.bf16.msra.mxu0 0
  %288 = vmatprep.subr.bf16.mxu0 0
  %289 = vmatpush1.bf16.msra.mxu0 0
  %290 = vmatprep.subr.bf16.mxu0 0
  %291 = vmatpush1.bf16.msra.mxu0 0
  %292 = vmatprep.subr.bf16.mxu0 0
  %293 = vmatpush1.bf16.msra.mxu0 0
  %294 = vmatprep.subr.bf16.mxu0 0
  %295 = vmatpush1.bf16.msra.mxu0 0
  %296 = vmatprep.subr.bf16.mxu0 0
  %297 = vmatpush1.bf16.msra.mxu0 0
  %298 = vmatprep.subr.bf16.mxu0 0
  %299 = vmatpush1.bf16.msra.mxu0 0
  %300 = vmatprep.subr.bf16.mxu0 0
  %301 = vmatpush1.bf16.msra.mxu0 0
  %302 = vmatprep.subr.bf16.mxu0 0
  %303 = vmatpush1.bf16.msra.mxu0 0
  %304 = vmatprep.subr.bf16.mxu0 0
  %305 = vmatpush1.bf16.msra.mxu0 0
  %306 = vmatprep.subr.bf16.mxu0 0
  %307 = vmatpush1.bf16.msra.mxu0 0
  %308 = vmatprep.subr.bf16.mxu0 0
  %309 = vmatpush1.bf16.msra.mxu0 0
  %310 = vmatprep.subr.bf16.mxu0 0
  %311 = vmatpush1.bf16.msra.mxu0 0
  %312 = vmatprep.subr.bf16.mxu0 0
  %313 = vmatpush1.bf16.msra.mxu0 0
  %314 = vmatprep.subr.bf16.mxu0 0
  %315 = vmatpush1.bf16.msra.mxu0 0
  %316 = vmatprep.mubr.bf16.mxu0 0
  %317 = vmatmul.mubr.bf16.gmra.mrb[0].mxu0 %v203
  %v318 = vpop.f32.mrb[0].mxu0
  %v319 = vadd.f32 %v71, %v318
  %v320 = vpop.f32.mrb[0].mxu0
  %v321 = vpop.f32.mrb[0].mxu0
  %v322 = vadd.f32 %v71, %v321
  %v323 = vpop.f32.mrb[0].mxu0
  %324 = vmatprep.mubr.bf16.mxu0 0
  %325 = vmatmul.mubr.bf16.gmra.mrb[0].mxu0 %v206
  %v326 = vpop.f32.mrb[0].mxu0
  %v327 = vadd.f32 %v71, %v326
  %v328 = vpop.f32.mrb[0].mxu0
  %v329 = vpop.f32.mrb[0].mxu0
  %v330 = vadd.f32 %v71, %v329
  %v331 = vpop.f32.mrb[0].mxu0
  %332 = vmatprep.mubr.bf16.mxu0 0
  %333 = vmatmul.mubr.bf16.gmra.mrb[0].mxu0 %v209
  %v334 = vpop.f32.mrb[0].mxu0
  %v335 = vadd.f32 %v71, %v334
  %v336 = vpop.f32.mrb[0].mxu0
  %v337 = vpop.f32.mrb[0].mxu0
  %v338 = vadd.f32 %v71, %v337
  %v339 = vpop.f32.mrb[0].mxu0
  %340 = vmatprep.mubr.bf16.mxu0 0
  %341 = vmatmul.mubr.bf16.gmra.mrb[0].mxu0 %v212
  %v342 = vpop.f32.mrb[0].mxu0
  %v343 = vadd.f32 %v71, %v342
  %v344 = vpop.f32.mrb[0].mxu0
  %v345 = vpop.f32.mrb[0].mxu0
  %v346 = vadd.f32 %v71, %v345
  %v347 = vpop.f32.mrb[0].mxu0
  %348 = vmatprep.mubr.bf16.mxu0 0
  %349 = vmatmul.mubr.bf16.gmra.mrb[0].mxu0 %v215
  %v350 = vpop.f32.mrb[0].mxu0
  %v351 = vadd.f32 %v71, %v350
  %v352 = vpop.f32.mrb[0].mxu0
  %v353 = vpop.f32.mrb[0].mxu0
  %v354 = vadd.f32 %v71, %v353
  %v355 = vpop.f32.mrb[0].mxu0
  %356 = vmatprep.mubr.bf16.mxu0 0
  %357 = vmatmul.mubr.bf16.gmra.mrb[0].mxu0 %v218
  %v358 = vpop.f32.mrb[0].mxu0
  %v359 = vadd.f32 %v71, %v358
  %v360 = vpop.f32.mrb[0].mxu0
  %v361 = vpop.f32.mrb[0].mxu0
  %v362 = vadd.f32 %v71, %v361
  %v363 = vpop.f32.mrb[0].mxu0
  %364 = vmatprep.mubr.bf16.mxu0 0
  %365 = vmatmul.mubr.bf16.gmra.mrb[0].mxu0 %v221
  %v366 = vpop.f32.mrb[0].mxu0
  %v367 = vadd.f32 %v71, %v366
  %v368 = vpop.f32.mrb[0].mxu0
  %v369 = vpop.f32.mrb[0].mxu0
  %v370 = vadd.f32 %v71, %v369
  %v371 = vpop.f32.mrb[0].mxu0
  %372 = vmatprep.mubr.bf16.mxu0 0
  %373 = vmatmul.mubr.bf16.gmra.mrb[0].mxu0 %v224
  %v374 = vpop.f32.mrb[0].mxu0
  %v375 = vadd.f32 %v71, %v374
  %v376 = vpop.f32.mrb[0].mxu0
  %v377 = vpop.f32.mrb[0].mxu0
  %v378 = vadd.f32 %v71, %v377
  %v379 = vpop.f32.mrb[0].mxu0
  %380 = vmatprep.mubr.bf16.mxu0 0
  %381 = vmatmul.mubr.bf16.gmra.mrb[0].mxu0 %v227
  %v382 = vpop.f32.mrb[0].mxu0
  %v383 = vadd.f32 %v71, %v382
  %v384 = vpop.f32.mrb[0].mxu0
  %v385 = vpop.f32.mrb[0].mxu0
  %v386 = vadd.f32 %v71, %v385
  %v387 = vpop.f32.mrb[0].mxu0
  %388 = vmatprep.mubr.bf16.mxu0 0
  %389 = vmatmul.mubr.bf16.gmra.mrb[0].mxu0 %v230
  %v390 = vpop.f32.mrb[0].mxu0
  %v391 = vadd.f32 %v71, %v390
  %v392 = vpop.f32.mrb[0].mxu0
  %v393 = vpop.f32.mrb[0].mxu0
  %v394 = vadd.f32 %v71, %v393
  %v395 = vpop.f32.mrb[0].mxu0
  %396 = vmatprep.mubr.bf16.mxu0 0
  %397 = vmatmul.mubr.bf16.gmra.mrb[0].mxu0 %v233
  %v398 = vpop.f32.mrb[0].mxu0
  %v399 = vadd.f32 %v71, %v398
  %v400 = vpop.f32.mrb[0].mxu0
  %v401 = vpop.f32.mrb[0].mxu0
  %v402 = vadd.f32 %v71, %v401
  %v403 = vpop.f32.mrb[0].mxu0
  %404 = vmatprep.mubr.bf16.mxu0 0
  %405 = vmatmul.mubr.bf16.gmra.mrb[0].mxu0 %v236
  %v406 = vpop.f32.mrb[0].mxu0
  %v407 = vadd.f32 %v71, %v406
  %v408 = vpop.f32.mrb[0].mxu0
  %v409 = vpop.f32.mrb[0].mxu0
  %v410 = vadd.f32 %v71, %v409
  %v411 = vpop.f32.mrb[0].mxu0
  %412 = vmatprep.mubr.bf16.mxu0 0
  %413 = vmatmul.mubr.bf16.gmra.mrb[0].mxu0 %v239
  %v414 = vpop.f32.mrb[0].mxu0
  %v415 = vadd.f32 %v71, %v414
  %v416 = vpop.f32.mrb[0].mxu0
  %v417 = vpop.f32.mrb[0].mxu0
  %v418 = vadd.f32 %v71, %v417
  %v419 = vpop.f32.mrb[0].mxu0
  %420 = vmatprep.mubr.bf16.mxu0 0
  %421 = vmatmul.mubr.bf16.gmra.mrb[0].mxu0 %v242
  %v422 = vpop.f32.mrb[0].mxu0
  %v423 = vadd.f32 %v71, %v422
  %v424 = vpop.f32.mrb[0].mxu0
  %v425 = vpop.f32.mrb[0].mxu0
  %v426 = vadd.f32 %v71, %v425
  %v427 = vpop.f32.mrb[0].mxu0
  %428 = vmatprep.mubr.bf16.mxu0 0
  %429 = vmatmul.mubr.bf16.gmra.mrb[0].mxu0 %v245
  %v430 = vpop.f32.mrb[0].mxu0
  %v431 = vadd.f32 %v71, %v430
  %v432 = vpop.f32.mrb[0].mxu0
  %v433 = vpop.f32.mrb[0].mxu0
  %v434 = vadd.f32 %v71, %v433
  %v435 = vpop.f32.mrb[0].mxu0
  %436 = vmatprep.mubr.bf16.mxu0 0
  %437 = vmatmul.mubr.bf16.gmra.mrb[0].mxu0 %v248
  %v438 = vpop.f32.mrb[0].mxu0
  %v439 = vadd.f32 %v71, %v438
  %v440 = vpop.f32.mrb[0].mxu0
  %v441 = vpop.f32.mrb[0].mxu0
  %v442 = vadd.f32 %v71, %v441
  %v443 = vpop.f32.mrb[0].mxu0
  %444 = vmatprep.mubr.bf16.mxu0 0
  %445 = vmatmul.mubr.bf16.gmra.mrb[0].mxu0 %v251
  %v446 = vpop.f32.mrb[0].mxu0
  %v447 = vadd.f32 %v71, %v446
  %v448 = vpop.f32.mrb[0].mxu0
  %v449 = vpop.f32.mrb[0].mxu0
  %v450 = vadd.f32 %v71, %v449
  %v451 = vpop.f32.mrb[0].mxu0
  %452 = vmatprep.mubr.bf16.mxu0 0
  %453 = vmatmul.mubr.bf16.gmra.mrb[0].mxu0 %v254
  %v454 = vpop.f32.mrb[0].mxu0
  %v455 = vadd.f32 %v71, %v454
  %v456 = vpop.f32.mrb[0].mxu0
  %v457 = vpop.f32.mrb[0].mxu0
  %v458 = vadd.f32 %v71, %v457
  %v459 = vpop.f32.mrb[0].mxu0
  %460 = vmatprep.mubr.bf16.mxu0 0
  %461 = vmatmul.mubr.bf16.gmra.mrb[0].mxu0 %v257
  %v462 = vpop.f32.mrb[0].mxu0
  %v463 = vadd.f32 %v71, %v462
  %v464 = vpop.f32.mrb[0].mxu0
  %v465 = vpop.f32.mrb[0].mxu0
  %v466 = vadd.f32 %v71, %v465
  %v467 = vpop.f32.mrb[0].mxu0
  %468 = vmatprep.mubr.bf16.mxu0 0
  %469 = vmatmul.mubr.bf16.gmra.mrb[0].mxu0 %v260
  %v470 = vpop.f32.mrb[0].mxu0
  %v471 = vadd.f32 %v71, %v470
  %v472 = vpop.f32.mrb[0].mxu0
  %v473 = vpop.f32.mrb[0].mxu0
  %v474 = vadd.f32 %v71, %v473
  %v475 = vpop.f32.mrb[0].mxu0
  %476 = vmatprep.mubr.bf16.mxu0 0
  %477 = vmatmul.mubr.bf16.gmra.mrb[0].mxu0 %v263
  %v478 = vpop.f32.mrb[0].mxu0
  %v479 = vadd.f32 %v71, %v478
  %v480 = vpop.f32.mrb[0].mxu0
  %v481 = vpop.f32.mrb[0].mxu0
  %v482 = vadd.f32 %v71, %v481
  %v483 = vpop.f32.mrb[0].mxu0
  %484 = vmatprep.mubr.bf16.mxu0 0
  %485 = vmatmul.mubr.bf16.gmra.mrb[0].mxu0 %v266
  %v486 = vpop.f32.mrb[0].mxu0
  %v487 = vadd.f32 %v71, %v486
  %v488 = vpop.f32.mrb[0].mxu0
  %v489 = vpop.f32.mrb[0].mxu0
  %v490 = vadd.f32 %v71, %v489
  %v491 = vpop.f32.mrb[0].mxu0
  %492 = vmatprep.mubr.bf16.mxu0 0
  %493 = vmatmul.mubr.bf16.gmra.mrb[0].mxu0 %v269
  %v494 = vpop.f32.mrb[0].mxu0
  %v495 = vadd.f32 %v71, %v494
  %v496 = vpop.f32.mrb[0].mxu0
  %v497 = vpop.f32.mrb[0].mxu0
  %v498 = vadd.f32 %v71, %v497
  %v499 = vpop.f32.mrb[0].mxu0
  %500 = vmatprep.mubr.bf16.mxu0 0
  %501 = vmatmul.mubr.bf16.gmra.mrb[0].mxu0 %v272
  %v502 = vpop.f32.mrb[0].mxu0
  %v503 = vadd.f32 %v71, %v502
  %v504 = vpop.f32.mrb[0].mxu0
  %v505 = vpop.f32.mrb[0].mxu0
  %v506 = vadd.f32 %v71, %v505
  %v507 = vpop.f32.mrb[0].mxu0
  %508 = vmatprep.mubr.bf16.mxu0 0
  %509 = vmatmul.mubr.bf16.gmra.mrb[0].mxu0 %v275
  %v510 = vpop.f32.mrb[0].mxu0
  %v511 = vadd.f32 %v71, %v510
  %v512 = vpop.f32.mrb[0].mxu0
  %v513 = vpop.f32.mrb[0].mxu0
  %v514 = vpop.f32.mrb[0].mxu0
  %515 = vdwg.mxu0
  %v516 = vmax.f32 %v319, 0.0
  %v517 = vmax.f32 %v322, 0.0
  %v518 = vmax.f32 %v327, 0.0
  %v519 = vmax.f32 %v330, 0.0
  %v520 = vmax.f32 %v335, 0.0
  %v521 = vmax.f32 %v338, 0.0
  %v522 = vmax.f32 %v343, 0.0
  %v523 = vmax.f32 %v346, 0.0
  %v524 = vmax.f32 %v351, 0.0
  %v525 = vmax.f32 %v354, 0.0
  %v526 = vmax.f32 %v359, 0.0
  %v527 = vmax.f32 %v362, 0.0
  %v528 = vmax.f32 %v367, 0.0
  %v529 = vmax.f32 %v370, 0.0
  %v530 = vmax.f32 %v375, 0.0
  %v531 = vmax.f32 %v378, 0.0
  %v532 = vmax.f32 %v383, 0.0
  %v533 = vmax.f32 %v386, 0.0
  %v534 = vmax.f32 %v391, 0.0
  %v535 = vmax.f32 %v394, 0.0
  %v536 = vmax.f32 %v399, 0.0
  %v537 = vmax.f32 %v402, 0.0
  %v538 = vmax.f32 %v407, 0.0
  %v539 = vmax.f32 %v410, 0.0
  %v540 = vmax.f32 %v415, 0.0
  %v541 = vmax.f32 %v418, 0.0
  %v542 = vmax.f32 %v423, 0.0
  %v543 = vmax.f32 %v426, 0.0
  %v544 = vmax.f32 %v431, 0.0
  %v545 = vmax.f32 %v434, 0.0
  %v546 = vmax.f32 %v439, 0.0
  %v547 = vmax.f32 %v442, 0.0
  %v548 = vmax.f32 %v447, 0.0
  %v549 = vmax.f32 %v450, 0.0
  %v550 = vmax.f32 %v455, 0.0
  %v551 = vmax.f32 %v458, 0.0
  %v552 = vmax.f32 %v463, 0.0
  %v553 = vmax.f32 %v466, 0.0
  %v554 = vmax.f32 %v471, 0.0
  %v555 = vmax.f32 %v474, 0.0
  %v556 = vmax.f32 %v479, 0.0
  %v557 = vmax.f32 %v482, 0.0
  %v558 = vmax.f32 %v487, 0.0
  %v559 = vmax.f32 %v490, 0.0
  %v560 = vmax.f32 %v495, 0.0
  %v561 = vmax.f32 %v498, 0.0
  %v562 = vmax.f32 %v503, 0.0
  %v563 = vmax.f32 %v506, 0.0
  %v564 = vmax.f32 %v511, 0.0
  %v565 = vpack.c.bf16 %v517, %v516
  %v566 = vpack.c.bf16 %v519, %v518
  %v567 = vpack.c.bf16 %v521, %v520
  %v568 = vpack.c.bf16 %v523, %v522
  %v569 = vpack.c.bf16 %v525, %v524
  %v570 = vpack.c.bf16 %v527, %v526
  %v571 = vpack.c.bf16 %v529, %v528
  %v572 = vpack.c.bf16 %v531, %v530
  %v573 = vpack.c.bf16 %v533, %v532
  %v574 = vpack.c.bf16 %v535, %v534
  %v575 = vpack.c.bf16 %v537, %v536
  %v576 = vpack.c.bf16 %v539, %v538
  %v577 = vpack.c.bf16 %v541, %v540
  %v578 = vpack.c.bf16 %v543, %v542
  %v579 = vpack.c.bf16 %v545, %v544
  %v580 = vpack.c.bf16 %v547, %v546
  %v581 = vpack.c.bf16 %v549, %v548
  %v582 = vpack.c.bf16 %v551, %v550
  %v583 = vpack.c.bf16 %v553, %v552
  %v584 = vpack.c.bf16 %v555, %v554
  %v585 = vpack.c.bf16 %v557, %v556
  %v586 = vpack.c.bf16 %v559, %v558
  %v587 = vpack.c.bf16 %v561, %v560
  %v588 = vpack.c.bf16 %v563, %v562
  %v589 = vpack.c.bf16 %v564, %v564
  %v615 = vunpack.c.l.b16 %v565
  %v616 = vunpack.c.h.b16 %v565
  %v617 = vunpack.c.l.b16 %v566
  %v618 = vunpack.c.h.b16 %v566
  %v619 = vunpack.c.l.b16 %v567
  %v620 = vunpack.c.h.b16 %v567
  %v621 = vunpack.c.l.b16 %v568
  %v622 = vunpack.c.h.b16 %v568
  %v623 = vunpack.c.l.b16 %v569
  %v624 = vunpack.c.h.b16 %v569
  %v625 = vunpack.c.l.b16 %v570
  %v626 = vunpack.c.h.b16 %v570
  %v627 = vunpack.c.l.b16 %v571
  %v628 = vunpack.c.h.b16 %v571
  %v629 = vunpack.c.l.b16 %v572
  %v630 = vunpack.c.h.b16 %v572
  %v631 = vunpack.c.l.b16 %v573
  %v632 = vunpack.c.h.b16 %v573
  %v633 = vunpack.c.l.b16 %v574
  %v634 = vunpack.c.h.b16 %v574
  %v635 = vunpack.c.l.b16 %v575
  %v636 = vunpack.c.h.b16 %v575
  %v637 = vunpack.c.l.b16 %v576
  %v638 = vunpack.c.h.b16 %v576
  %v639 = vunpack.c.l.b16 %v577
  %v640 = vunpack.c.h.b16 %v577
  %v641 = vunpack.c.l.b16 %v578
  %v642 = vunpack.c.h.b16 %v578
  %v643 = vunpack.c.l.b16 %v579
  %v644 = vunpack.c.h.b16 %v579
  %v645 = vunpack.c.l.b16 %v580
  %v646 = vunpack.c.h.b16 %v580
  %v647 = vunpack.c.l.b16 %v581
  %v648 = vunpack.c.h.b16 %v581
  %v649 = vunpack.c.l.b16 %v582
  %v650 = vunpack.c.h.b16 %v582
  %v651 = vunpack.c.l.b16 %v583
  %v652 = vunpack.c.h.b16 %v583
  %v653 = vunpack.c.l.b16 %v584
  %v654 = vunpack.c.h.b16 %v584
  %v655 = vunpack.c.l.b16 %v585
  %v656 = vunpack.c.h.b16 %v585
  %v657 = vunpack.c.l.b16 %v586
  %v658 = vunpack.c.h.b16 %v586
  %v659 = vunpack.c.l.b16 %v587
  %v660 = vunpack.c.h.b16 %v587
  %v661 = vunpack.c.l.b16 %v588
  %v662 = vunpack.c.h.b16 %v588
  %v663 = vunpack.c.l.b16 %v589
  %v664 = vpack.c.b16 %v615, %v615
  %v665 = vpack.c.b16 %v616, %v616
  %v666 = vpack.c.b16 %v617, %v617
  %v667 = vpack.c.b16 %v618, %v618
  %v668 = vpack.c.b16 %v619, %v619
  %v669 = vpack.c.b16 %v620, %v620
  %v670 = vpack.c.b16 %v621, %v621
  %v671 = vpack.c.b16 %v622, %v622
  %v672 = vpack.c.b16 %v623, %v623
  %v673 = vpack.c.b16 %v624, %v624
  %v674 = vpack.c.b16 %v625, %v625
  %v675 = vpack.c.b16 %v626, %v626
  %v676 = vpack.c.b16 %v627, %v627
  %v677 = vpack.c.b16 %v628, %v628
  %v678 = vpack.c.b16 %v629, %v629
  %v679 = vpack.c.b16 %v630, %v630
  %v680 = vpack.c.b16 %v631, %v631
  %v681 = vpack.c.b16 %v632, %v632
  %v682 = vpack.c.b16 %v633, %v633
  %v683 = vpack.c.b16 %v634, %v634
  %v684 = vpack.c.b16 %v635, %v635
  %v685 = vpack.c.b16 %v636, %v636
  %v686 = vpack.c.b16 %v637, %v637
  %v687 = vpack.c.b16 %v638, %v638
  %v688 = vpack.c.b16 %v639, %v639
  %v689 = vpack.c.b16 %v640, %v640
  %v690 = vpack.c.b16 %v641, %v641
  %v691 = vpack.c.b16 %v642, %v642
  %v692 = vpack.c.b16 %v643, %v643
  %v693 = vpack.c.b16 %v644, %v644
  %v694 = vpack.c.b16 %v645, %v645
  %v695 = vpack.c.b16 %v646, %v646
  %v696 = vpack.c.b16 %v647, %v647
  %v697 = vpack.c.b16 %v648, %v648
  %v698 = vpack.c.b16 %v649, %v649
  %v699 = vpack.c.b16 %v650, %v650
  %v700 = vpack.c.b16 %v651, %v651
  %v701 = vpack.c.b16 %v652, %v652
  %v702 = vpack.c.b16 %v653, %v653
  %v703 = vpack.c.b16 %v654, %v654
  %v704 = vpack.c.b16 %v655, %v655
  %v705 = vpack.c.b16 %v656, %v656
  %v706 = vpack.c.b16 %v657, %v657
  %v707 = vpack.c.b16 %v658, %v658
  %v708 = vpack.c.b16 %v659, %v659
  %v709 = vpack.c.b16 %v660, %v660
  %v710 = vpack.c.b16 %v661, %v661
  %v711 = vpack.c.b16 %v662, %v662
  %v712 = vpack.c.b16 %v663, %v663
  %vm762 = vcmask 60416
  %763 = vst.msk [vmem:[%s3] sm:$0xf] %vm762, %v664
  %764 = vst.msk [vmem:[%s3 + $0x4] sm:$0xf] %vm762, %v665
  %765 = vst.msk [vmem:[%s3 + $0x8] sm:$0xf] %vm762, %v666
  %766 = vst.msk [vmem:[%s3 + $0xc] sm:$0xf] %vm762, %v667
  %767 = vst.msk [vmem:[%s3 + $0x10] sm:$0xf] %vm762, %v668
  %768 = vst.msk [vmem:[%s3 + $0x14] sm:$0xf] %vm762, %v669
  %769 = vst.msk [vmem:[%s3 + $0x18] sm:$0xf] %vm762, %v670
  %770 = vst.msk [vmem:[%s3 + $0x1c] sm:$0xf] %vm762, %v671
  %771 = vst.msk [vmem:[%s3 + $0x20] sm:$0xf] %vm762, %v672
  %772 = vst.msk [vmem:[%s3 + $0x24] sm:$0xf] %vm762, %v673
  %773 = vst.msk [vmem:[%s3 + $0x28] sm:$0xf] %vm762, %v674
  %774 = vst.msk [vmem:[%s3 + $0x2c] sm:$0xf] %vm762, %v675
  %775 = vst.msk [vmem:[%s3 + $0x30] sm:$0xf] %vm762, %v676
  %776 = vst.msk [vmem:[%s3 + $0x34] sm:$0xf] %vm762, %v677
  %777 = vst.msk [vmem:[%s3 + $0x38] sm:$0xf] %vm762, %v678
  %778 = vst.msk [vmem:[%s3 + $0x3c] sm:$0xf] %vm762, %v679
  %779 = vst.msk [vmem:[%s3 + $0x40] sm:$0xf] %vm762, %v680
  %780 = vst.msk [vmem:[%s3 + $0x44] sm:$0xf] %vm762, %v681
  %781 = vst.msk [vmem:[%s3 + $0x48] sm:$0xf] %vm762, %v682
  %782 = vst.msk [vmem:[%s3 + $0x4c] sm:$0xf] %vm762, %v683
  %783 = vst.msk [vmem:[%s3 + $0x50] sm:$0xf] %vm762, %v684
  %784 = vst.msk [vmem:[%s3 + $0x54] sm:$0xf] %vm762, %v685
  %785 = vst.msk [vmem:[%s3 + $0x58] sm:$0xf] %vm762, %v686
  %786 = vst.msk [vmem:[%s3 + $0x5c] sm:$0xf] %vm762, %v687
  %787 = vst.msk [vmem:[%s3 + $0x60] sm:$0xf] %vm762, %v688
  %788 = vst.msk [vmem:[%s3 + $0x64] sm:$0xf] %vm762, %v689
  %789 = vst.msk [vmem:[%s3 + $0x68] sm:$0xf] %vm762, %v690
  %790 = vst.msk [vmem:[%s3 + $0x6c] sm:$0xf] %vm762, %v691
  %791 = vst.msk [vmem:[%s3 + $0x70] sm:$0xf] %vm762, %v692
  %792 = vst.msk [vmem:[%s3 + $0x74] sm:$0xf] %vm762, %v693
  %793 = vst.msk [vmem:[%s3 + $0x78] sm:$0xf] %vm762, %v694
  %794 = vst.msk [vmem:[%s3 + $0x7c] sm:$0xf] %vm762, %v695
  %795 = vst.msk [vmem:[%s3 + $0x80] sm:$0xf] %vm762, %v696
  %796 = vst.msk [vmem:[%s3 + $0x84] sm:$0xf] %vm762, %v697
  %797 = vst.msk [vmem:[%s3 + $0x88] sm:$0xf] %vm762, %v698
  %798 = vst.msk [vmem:[%s3 + $0x8c] sm:$0xf] %vm762, %v699
  %799 = vst.msk [vmem:[%s3 + $0x90] sm:$0xf] %vm762, %v700
  %800 = vst.msk [vmem:[%s3 + $0x94] sm:$0xf] %vm762, %v701
  %801 = vst.msk [vmem:[%s3 + $0x98] sm:$0xf] %vm762, %v702
  %802 = vst.msk [vmem:[%s3 + $0x9c] sm:$0xf] %vm762, %v703
  %803 = vst.msk [vmem:[%s3 + $0xa0] sm:$0xf] %vm762, %v704
  %804 = vst.msk [vmem:[%s3 + $0xa4] sm:$0xf] %vm762, %v705
  %805 = vst.msk [vmem:[%s3 + $0xa8] sm:$0xf] %vm762, %v706
  %806 = vst.msk [vmem:[%s3 + $0xac] sm:$0xf] %vm762, %v707
  %807 = vst.msk [vmem:[%s3 + $0xb0] sm:$0xf] %vm762, %v708
  %808 = vst.msk [vmem:[%s3 + $0xb4] sm:$0xf] %vm762, %v709
  %809 = vst.msk [vmem:[%s3 + $0xb8] sm:$0xf] %vm762, %v710
  %810 = vst.msk [vmem:[%s3 + $0xbc] sm:$0xf] %vm762, %v711
  %811 = vst.msk [vmem:[%s3 + $0xc0] sm:$0xf] %vm762, %v712
  // Predicated region
  $region14: #{cnn_vae_forward.7} parent=0 // pred_check
    _
  $region15: #{cnn_vae_forward.7} parent=0 // pred_check_branch
    %813 = sbr.rel (0) target = $region17
  $region16: #{cnn_vae_forward.7} parent=0 // pred_region
    _
  $region17: #{cnn_vae_forward.7} parent=0 // pred_fallthru
    _
  // Predicated region
  $region18: #{cnn_vae_forward.7} parent=0 // pred_check
    _
  $region19: #{cnn_vae_forward.7} parent=0 // pred_check_branch
    %815 = sbr.rel (0) target = $region21
  $region20: #{cnn_vae_forward.7} parent=0 // pred_region
    _
  $region21: #{cnn_vae_forward.7} parent=0 // pred_fallthru
    _

// kernel: cnn_vae_forward.8
$region0: #{cnn_vae_forward.8}
  #allocation0 [shape = 'u32[]', space=smem, size = 0x4, offset = 0x4, fixed_abs, tag = 'smem constant byte address 0x4 - core index']
  #allocation1 [shape = 'u32[144,128]{1,0:T(1,128)}', space=vmem, size = 0x12000, scoped, tag = 'internal scratch']
  %s0 = inlined_call_operand.vmem [shape: bf16[98,72], index: 0, kind: input, shape index: {}]
  %s1 = inlined_call_operand.vmem [shape: bf16[72,16], index: 1, kind: input, shape index: {}]
  %s2 = inlined_call_operand.vmem [shape: f32[1,16], index: 2, kind: input, shape index: {}]
  %s3 = inlined_call_operand.vmem [shape: bf16[98,16], index: 3, kind: output, shape index: {}]
  %s4 = sld [smem:[#allocation0]]
  $region22: #{cnn_vae_forward.8} parent=0
    _
  %s6 = ssub.s32 1, %s4
  %s7 = scalar_select 0, %s6, %s4
  // Predicated region
  $region2: #{cnn_vae_forward.8} parent=0 // pred_check
    _
  $region3: #{cnn_vae_forward.8} parent=0 // pred_check_branch
    %9 = sbr.rel (0) target = $region5
  $region4: #{cnn_vae_forward.8} parent=0 // pred_region
    _
  $region5: #{cnn_vae_forward.8} parent=0 // pred_fallthru
    _
  // Predicated region
  $region6: #{cnn_vae_forward.8} parent=0 // pred_check
    _
  $region7: #{cnn_vae_forward.8} parent=0 // pred_check_branch
    %11 = sbr.rel (0) target = $region9
  $region8: #{cnn_vae_forward.8} parent=0 // pred_region
    _
  $region9: #{cnn_vae_forward.8} parent=0 // pred_fallthru
    _
  // Predicated region
  $region10: #{cnn_vae_forward.8} parent=0 // pred_check
    _
  $region11: #{cnn_vae_forward.8} parent=0 // pred_check_branch
    %13 = sbr.rel (0) target = $region13
  $region12: #{cnn_vae_forward.8} parent=0 // pred_region
    _
  $region13: #{cnn_vae_forward.8} parent=0 // pred_fallthru
    _
  %v15 = vld [vmem:[%s0] sm:$0xf]
  %v16 = vld [vmem:[%s0 + $0x4] sm:$0xf]
  %v17 = vld [vmem:[%s0 + $0x8] sm:$0xf]
  %v18 = vld [vmem:[%s0 + $0xc] sm:$0xf]
  %v19 = vld [vmem:[%s0 + $0x10] sm:$0xf]
  %v20 = vld [vmem:[%s0 + $0x14] sm:$0xf]
  %v21 = vld [vmem:[%s0 + $0x18] sm:$0xf]
  %v22 = vld [vmem:[%s0 + $0x1c] sm:$0xf]
  %v23 = vld [vmem:[%s0 + $0x20] sm:$0xf]
  %v24 = vld [vmem:[%s0 + $0x24] sm:$0xf]
  %v25 = vld [vmem:[%s0 + $0x28] sm:$0xf]
  %v26 = vld [vmem:[%s0 + $0x2c] sm:$0xf]
  %v27 = vld [vmem:[%s0 + $0x30] sm:$0x1]
  %v28 = vld [vmem:[%s1] sm:$0xf]
  %v29 = vld [vmem:[%s1 + $0x4] sm:$0xf]
  %v30 = vld [vmem:[%s1 + $0x8] sm:$0xf]
  %v31 = vld [vmem:[%s1 + $0xc] sm:$0xf]
  %v32 = vld [vmem:[%s1 + $0x10] sm:$0xf]
  %v33 = vld [vmem:[%s1 + $0x14] sm:$0xf]
  %v34 = vld [vmem:[%s1 + $0x18] sm:$0xf]
  %v35 = vld [vmem:[%s1 + $0x1c] sm:$0xf]
  %v36 = vld [vmem:[%s1 + $0x20] sm:$0xf]
  %v37 = vld [vmem:[%s2] sm:$0x1]
  %v39 = vlaneseq
  %v40 = vshrl.u32 %v39, 7
  %v41 = vsub.s32 0, %v40
  %v42 = vrot.slane %v37, %v41
  %v57 = vunpack.c.l.b16 %v15
  %v58 = vunpack.c.l.b16 %v16
  %v59 = vunpack.c.l.b16 %v17
  %v60 = vunpack.c.l.b16 %v18
  %v61 = vunpack.c.l.b16 %v19
  %v62 = vunpack.c.l.b16 %v20
  %v63 = vunpack.c.l.b16 %v21
  %v64 = vunpack.c.l.b16 %v22
  %v65 = vunpack.c.l.b16 %v23
  %v66 = vunpack.c.l.b16 %v24
  %v67 = vunpack.c.l.b16 %v25
  %v68 = vunpack.c.l.b16 %v26
  %v69 = vunpack.c.l.b16 %v27
  %v70 = vpack.c.b16 %v58, %v57
  %v71 = vpack.c.b16 %v60, %v59
  %v72 = vpack.c.b16 %v62, %v61
  %v73 = vpack.c.b16 %v64, %v63
  %v74 = vpack.c.b16 %v66, %v65
  %v75 = vpack.c.b16 %v68, %v67
  %v76 = vpack.c.b16 %v69, %v69
  %v86 = vunpack.c.l.b16 %v28
  %v87 = vunpack.c.l.b16 %v29
  %v88 = vunpack.c.l.b16 %v30
  %v89 = vunpack.c.l.b16 %v31
  %v90 = vunpack.c.l.b16 %v32
  %v91 = vunpack.c.l.b16 %v33
  %v92 = vunpack.c.l.b16 %v34
  %v93 = vunpack.c.l.b16 %v35
  %v94 = vunpack.c.l.b16 %v36
  %v95 = vpack.c.b16 %v87, %v86
  %v96 = vpack.c.b16 %v89, %v88
  %v97 = vpack.c.b16 %v91, %v90
  %v98 = vpack.c.b16 %v93, %v92
  %v99 = vpack.c.b16 %v94, %v94
  %vm104 = vcmask 588800
  %v106 = vsel %vm104, %v70, 0
  %v109 = vsel %vm104, %v71, 0
  %v112 = vsel %vm104, %v72, 0
  %v115 = vsel %vm104, %v73, 0
  %v118 = vsel %vm104, %v74, 0
  %v121 = vsel %vm104, %v75, 0
  %v124 = vsel %vm104, %v76, 0
  %vm126 = vcmask 1043456
  %v128 = vsel %vm126, %v99, 0
  %130 = vmatprep.subr.bf16.mxu0 0
  %131 = vmatpush1.bf16.msra.mxu0 %v95
  %132 = vmatprep.subr.bf16.mxu0 0
  %133 = vmatpush1.bf16.msra.mxu0 %v96
  %134 = vmatprep.subr.bf16.mxu0 0
  %135 = vmatpush1.bf16.msra.mxu0 %v97
  %136 = vmatprep.subr.bf16.mxu0 0
  %137 = vmatpush1.bf16.msra.mxu0 %v98
  %138 = vmatprep.subr.bf16.mxu0 0
  %139 = vmatpush1.bf16.msra.mxu0 %v128
  %140 = vmatprep.subr.bf16.mxu0 0
  %141 = vmatpush1.bf16.msra.mxu0 0
  %142 = vmatprep.subr.bf16.mxu0 0
  %143 = vmatpush1.bf16.msra.mxu0 0
  %144 = vmatprep.subr.bf16.mxu0 0
  %145 = vmatpush1.bf16.msra.mxu0 0
  %146 = vmatprep.subr.bf16.mxu0 0
  %147 = vmatpush1.bf16.msra.mxu0 0
  %148 = vmatprep.subr.bf16.mxu0 0
  %149 = vmatpush1.bf16.msra.mxu0 0
  %150 = vmatprep.subr.bf16.mxu0 0
  %151 = vmatpush1.bf16.msra.mxu0 0
  %152 = vmatprep.subr.bf16.mxu0 0
  %153 = vmatpush1.bf16.msra.mxu0 0
  %154 = vmatprep.subr.bf16.mxu0 0
  %155 = vmatpush1.bf16.msra.mxu0 0
  %156 = vmatprep.subr.bf16.mxu0 0
  %157 = vmatpush1.bf16.msra.mxu0 0
  %158 = vmatprep.subr.bf16.mxu0 0
  %159 = vmatpush1.bf16.msra.mxu0 0
  %160 = vmatprep.subr.bf16.mxu0 0
  %161 = vmatpush1.bf16.msra.mxu0 0
  %162 = vmatprep.mubr.bf16.mxu0 0
  %163 = vmatmul.mubr.bf16.gmra.mrb[0].mxu0 %v106
  %v164 = vpop.f32.mrb[0].mxu0
  %v165 = vadd.f32 %v42, %v164
  %v166 = vpop.f32.mrb[0].mxu0
  %v167 = vpop.f32.mrb[0].mxu0
  %v168 = vadd.f32 %v42, %v167
  %v169 = vpop.f32.mrb[0].mxu0
  %170 = vmatprep.mubr.bf16.mxu0 0
  %171 = vmatmul.mubr.bf16.gmra.mrb[0].mxu0 %v109
  %v172 = vpop.f32.mrb[0].mxu0
  %v173 = vadd.f32 %v42, %v172
  %v174 = vpop.f32.mrb[0].mxu0
  %v175 = vpop.f32.mrb[0].mxu0
  %v176 = vadd.f32 %v42, %v175
  %v177 = vpop.f32.mrb[0].mxu0
  %178 = vmatprep.mubr.bf16.mxu0 0
  %179 = vmatmul.mubr.bf16.gmra.mrb[0].mxu0 %v112
  %v180 = vpop.f32.mrb[0].mxu0
  %v181 = vadd.f32 %v42, %v180
  %v182 = vpop.f32.mrb[0].mxu0
  %v183 = vpop.f32.mrb[0].mxu0
  %v184 = vadd.f32 %v42, %v183
  %v185 = vpop.f32.mrb[0].mxu0
  %186 = vmatprep.mubr.bf16.mxu0 0
  %187 = vmatmul.mubr.bf16.gmra.mrb[0].mxu0 %v115
  %v188 = vpop.f32.mrb[0].mxu0
  %v189 = vadd.f32 %v42, %v188
  %v190 = vpop.f32.mrb[0].mxu0
  %v191 = vpop.f32.mrb[0].mxu0
  %v192 = vadd.f32 %v42, %v191
  %v193 = vpop.f32.mrb[0].mxu0
  %194 = vmatprep.mubr.bf16.mxu0 0
  %195 = vmatmul.mubr.bf16.gmra.mrb[0].mxu0 %v118
  %v196 = vpop.f32.mrb[0].mxu0
  %v197 = vadd.f32 %v42, %v196
  %v198 = vpop.f32.mrb[0].mxu0
  %v199 = vpop.f32.mrb[0].mxu0
  %v200 = vadd.f32 %v42, %v199
  %v201 = vpop.f32.mrb[0].mxu0
  %202 = vmatprep.mubr.bf16.mxu0 0
  %203 = vmatmul.mubr.bf16.gmra.mrb[0].mxu0 %v121
  %v204 = vpop.f32.mrb[0].mxu0
  %v205 = vadd.f32 %v42, %v204
  %v206 = vpop.f32.mrb[0].mxu0
  %v207 = vpop.f32.mrb[0].mxu0
  %v208 = vadd.f32 %v42, %v207
  %v209 = vpop.f32.mrb[0].mxu0
  %210 = vmatprep.mubr.bf16.mxu0 0
  %211 = vmatmul.mubr.bf16.gmra.mrb[0].mxu0 %v124
  %v212 = vpop.f32.mrb[0].mxu0
  %v213 = vadd.f32 %v42, %v212
  %v214 = vpop.f32.mrb[0].mxu0
  %v215 = vpop.f32.mrb[0].mxu0
  %v216 = vpop.f32.mrb[0].mxu0
  %217 = vdwg.mxu0
  %v218 = vmax.f32 %v165, 0.0
  %v219 = vmax.f32 %v168, 0.0
  %v220 = vmax.f32 %v173, 0.0
  %v221 = vmax.f32 %v176, 0.0
  %v222 = vmax.f32 %v181, 0.0
  %v223 = vmax.f32 %v184, 0.0
  %v224 = vmax.f32 %v189, 0.0
  %v225 = vmax.f32 %v192, 0.0
  %v226 = vmax.f32 %v197, 0.0
  %v227 = vmax.f32 %v200, 0.0
  %v228 = vmax.f32 %v205, 0.0
  %v229 = vmax.f32 %v208, 0.0
  %v230 = vmax.f32 %v213, 0.0
  %v231 = vpack.c.bf16 %v219, %v218
  %v232 = vpack.c.bf16 %v221, %v220
  %v233 = vpack.c.bf16 %v223, %v222
  %v234 = vpack.c.bf16 %v225, %v224
  %v235 = vpack.c.bf16 %v227, %v226
  %v236 = vpack.c.bf16 %v229, %v228
  %v237 = vpack.c.bf16 %v230, %v230
  %v245 = vunpack.c.l.b16 %v231
  %v246 = vunpack.c.h.b16 %v231
  %v247 = vunpack.c.l.b16 %v232
  %v248 = vunpack.c.h.b16 %v232
  %v249 = vunpack.c.l.b16 %v233
  %v250 = vunpack.c.h.b16 %v233
  %v251 = vunpack.c.l.b16 %v234
  %v252 = vunpack.c.h.b16 %v234
  %v253 = vunpack.c.l.b16 %v235
  %v254 = vunpack.c.h.b16 %v235
  %v255 = vunpack.c.l.b16 %v236
  %v256 = vunpack.c.h.b16 %v236
  %v257 = vunpack.c.l.b16 %v237
  %v258 = vpack.c.b16 %v245, %v245
  %v259 = vpack.c.b16 %v246, %v246
  %v260 = vpack.c.b16 %v247, %v247
  %v261 = vpack.c.b16 %v248, %v248
  %v262 = vpack.c.b16 %v249, %v249
  %v263 = vpack.c.b16 %v250, %v250
  %v264 = vpack.c.b16 %v251, %v251
  %v265 = vpack.c.b16 %v252, %v252
  %v266 = vpack.c.b16 %v253, %v253
  %v267 = vpack.c.b16 %v254, %v254
  %v268 = vpack.c.b16 %v255, %v255
  %v269 = vpack.c.b16 %v256, %v256
  %v270 = vpack.c.b16 %v257, %v257
  %vm284 = vcmask 125952
  %285 = vst.msk [vmem:[%s3] sm:$0xf] %vm284, %v258
  %286 = vst.msk [vmem:[%s3 + $0x4] sm:$0xf] %vm284, %v259
  %287 = vst.msk [vmem:[%s3 + $0x8] sm:$0xf] %vm284, %v260
  %288 = vst.msk [vmem:[%s3 + $0xc] sm:$0xf] %vm284, %v261
  %289 = vst.msk [vmem:[%s3 + $0x10] sm:$0xf] %vm284, %v262
  %290 = vst.msk [vmem:[%s3 + $0x14] sm:$0xf] %vm284, %v263
  %291 = vst.msk [vmem:[%s3 + $0x18] sm:$0xf] %vm284, %v264
  %292 = vst.msk [vmem:[%s3 + $0x1c] sm:$0xf] %vm284, %v265
  %293 = vst.msk [vmem:[%s3 + $0x20] sm:$0xf] %vm284, %v266
  %294 = vst.msk [vmem:[%s3 + $0x24] sm:$0xf] %vm284, %v267
  %295 = vst.msk [vmem:[%s3 + $0x28] sm:$0xf] %vm284, %v268
  %296 = vst.msk [vmem:[%s3 + $0x2c] sm:$0xf] %vm284, %v269
  %vm297 = vcmask 122880
  %298 = vst.msk [vmem:[%s3 + $0x30] sm:$0x1] %vm297, %v270
  // Predicated region
  $region14: #{cnn_vae_forward.8} parent=0 // pred_check
    _
  $region15: #{cnn_vae_forward.8} parent=0 // pred_check_branch
    %300 = sbr.rel (0) target = $region17
  $region16: #{cnn_vae_forward.8} parent=0 // pred_region
    _
  $region17: #{cnn_vae_forward.8} parent=0 // pred_fallthru
    _
  // Predicated region
  $region18: #{cnn_vae_forward.8} parent=0 // pred_check
    _
  $region19: #{cnn_vae_forward.8} parent=0 // pred_check_branch
    %302 = sbr.rel (0) target = $region21
  $region20: #{cnn_vae_forward.8} parent=0 // pred_region
    _
  $region21: #{cnn_vae_forward.8} parent=0 // pred_fallthru
    _

// kernel: cnn_vae_forward.9
$region0: #{cnn_vae_forward.9}
  #allocation0 [shape = 'u32[]', space=smem, size = 0x4, offset = 0x4, fixed_abs, tag = 'smem constant byte address 0x4 - core index']
  #allocation1 [shape = 'u32[144,128]{1,0:T(1,128)}', space=vmem, size = 0x12000, scoped, tag = 'internal scratch']
  %s0 = inlined_call_operand.vmem [shape: bf16[18,144], index: 0, kind: input, shape index: {}]
  %s1 = inlined_call_operand.vmem [shape: bf16[144,32], index: 1, kind: input, shape index: {}]
  %s2 = inlined_call_operand.vmem [shape: f32[1,32], index: 2, kind: input, shape index: {}]
  %s3 = inlined_call_operand.vmem [shape: bf16[18,32], index: 3, kind: output, shape index: {}]
  %s4 = sld [smem:[#allocation0]]
  $region22: #{cnn_vae_forward.9} parent=0
    _
  %s6 = ssub.s32 1, %s4
  %s7 = scalar_select 0, %s6, %s4
  // Predicated region
  $region2: #{cnn_vae_forward.9} parent=0 // pred_check
    _
  $region3: #{cnn_vae_forward.9} parent=0 // pred_check_branch
    %9 = sbr.rel (0) target = $region5
  $region4: #{cnn_vae_forward.9} parent=0 // pred_region
    _
  $region5: #{cnn_vae_forward.9} parent=0 // pred_fallthru
    _
  // Predicated region
  $region6: #{cnn_vae_forward.9} parent=0 // pred_check
    _
  $region7: #{cnn_vae_forward.9} parent=0 // pred_check_branch
    %11 = sbr.rel (0) target = $region9
  $region8: #{cnn_vae_forward.9} parent=0 // pred_region
    _
  $region9: #{cnn_vae_forward.9} parent=0 // pred_fallthru
    _
  // Predicated region
  $region10: #{cnn_vae_forward.9} parent=0 // pred_check
    _
  $region11: #{cnn_vae_forward.9} parent=0 // pred_check_branch
    %13 = sbr.rel (0) target = $region13
  $region12: #{cnn_vae_forward.9} parent=0 // pred_region
    _
  $region13: #{cnn_vae_forward.9} parent=0 // pred_fallthru
    _
  %v15 = vld [vmem:[%s0] sm:$0xff]
  %v16 = vld [vmem:[%s0 + $0x8] sm:$0xff]
  %v17 = vld [vmem:[%s0 + $0x10] sm:$0x11]
  %v18 = vld [vmem:[%s1] sm:$0xf]
  %v19 = vld [vmem:[%s1 + $0x4] sm:$0xf]
  %v20 = vld [vmem:[%s1 + $0x8] sm:$0xf]
  %v21 = vld [vmem:[%s1 + $0xc] sm:$0xf]
  %v22 = vld [vmem:[%s1 + $0x10] sm:$0xf]
  %v23 = vld [vmem:[%s1 + $0x14] sm:$0xf]
  %v24 = vld [vmem:[%s1 + $0x18] sm:$0xf]
  %v25 = vld [vmem:[%s1 + $0x1c] sm:$0xf]
  %v26 = vld [vmem:[%s1 + $0x20] sm:$0xf]
  %v27 = vld [vmem:[%s1 + $0x24] sm:$0xf]
  %v28 = vld [vmem:[%s1 + $0x28] sm:$0xf]
  %v29 = vld [vmem:[%s1 + $0x2c] sm:$0xf]
  %v30 = vld [vmem:[%s1 + $0x30] sm:$0xf]
  %v31 = vld [vmem:[%s1 + $0x34] sm:$0xf]
  %v32 = vld [vmem:[%s1 + $0x38] sm:$0xf]
  %v33 = vld [vmem:[%s1 + $0x3c] sm:$0xf]
  %v34 = vld [vmem:[%s1 + $0x40] sm:$0xf]
  %v35 = vld [vmem:[%s1 + $0x44] sm:$0xf]
  %v36 = vld [vmem:[%s2] sm:$0x1]
  %v38 = vlaneseq
  %v39 = vshrl.u32 %v38, 7
  %v40 = vsub.s32 0, %v39
  %v41 = vrot.slane %v36, %v40
  %v46 = vunpack.c.l.b16 %v15
  %v47 = vunpack.c.h.b16 %v15
  %v48 = vunpack.c.l.b16 %v16
  %v49 = vunpack.c.h.b16 %v16
  %v50 = vunpack.c.l.b16 %v17
  %v51 = vunpack.c.h.b16 %v17
  %v52 = vpack.c.b16 %v48, %v46
  %v53 = vpack.c.b16 %v49, %v47
  %v54 = vpack.c.b16 %v50, %v50
  %v55 = vpack.c.b16 %v51, %v51
  %v76 = vunpack.c.l.b16 %v18
  %v77 = vunpack.c.l.b16 %v19
  %v78 = vunpack.c.l.b16 %v20
  %v79 = vunpack.c.l.b16 %v21
  %v80 = vunpack.c.l.b16 %v22
  %v81 = vunpack.c.l.b16 %v23
  %v82 = vunpack.c.l.b16 %v24
  %v83 = vunpack.c.l.b16 %v25
  %v84 = vunpack.c.l.b16 %v26
  %v85 = vunpack.c.l.b16 %v27
  %v86 = vunpack.c.l.b16 %v28
  %v87 = vunpack.c.l.b16 %v29
  %v88 = vunpack.c.l.b16 %v30
  %v89 = vunpack.c.l.b16 %v31
  %v90 = vunpack.c.l.b16 %v32
  %v91 = vunpack.c.l.b16 %v33
  %v92 = vunpack.c.l.b16 %v34
  %v93 = vunpack.c.l.b16 %v35
  %v94 = vpack.c.b16 %v77, %v76
  %v95 = vpack.c.b16 %v79, %v78
  %v96 = vpack.c.b16 %v81, %v80
  %v97 = vpack.c.b16 %v83, %v82
  %v98 = vpack.c.b16 %v85, %v84
  %v99 = vpack.c.b16 %v87, %v86
  %v100 = vpack.c.b16 %v89, %v88
  %v101 = vpack.c.b16 %v91, %v90
  %v102 = vpack.c.b16 %v93, %v92
  %vm112 = vcmask 130048
  %v114 = vsel %vm112, %v53, 0
  %v117 = vsel %vm112, %v55, 0
  %119 = vmatprep.subr.bf16.mxu0 0
  %120 = vmatpush1.bf16.msra.mxu0 %v94
  %121 = vmatprep.subr.bf16.mxu0 0
  %122 = vmatpush1.bf16.msra.mxu0 %v95
  %123 = vmatprep.subr.bf16.mxu0 0
  %124 = vmatpush1.bf16.msra.mxu0 %v96
  %125 = vmatprep.subr.bf16.mxu0 0
  %126 = vmatpush1.bf16.msra.mxu0 %v97
  %127 = vmatprep.subr.bf16.mxu0 0
  %128 = vmatpush1.bf16.msra.mxu0 %v98
  %129 = vmatprep.subr.bf16.mxu0 0
  %130 = vmatpush1.bf16.msra.mxu0 %v99
  %131 = vmatprep.subr.bf16.mxu0 0
  %132 = vmatpush1.bf16.msra.mxu0 %v100
  %133 = vmatprep.subr.bf16.mxu0 0
  %134 = vmatpush1.bf16.msra.mxu0 %v101
  %135 = vmatprep.subr.bf16.mxu0 0
  %136 = vmatpush1.bf16.msra.mxu0 %v102
  %137 = vmatprep.subr.bf16.mxu0 0
  %138 = vmatpush1.bf16.msra.mxu0 0
  %139 = vmatprep.subr.bf16.mxu0 0
  %140 = vmatpush1.bf16.msra.mxu0 0
  %141 = vmatprep.subr.bf16.mxu0 0
  %142 = vmatpush1.bf16.msra.mxu0 0
  %143 = vmatprep.subr.bf16.mxu0 0
  %144 = vmatpush1.bf16.msra.mxu0 0
  %145 = vmatprep.subr.bf16.mxu0 0
  %146 = vmatpush1.bf16.msra.mxu0 0
  %147 = vmatprep.subr.bf16.mxu0 0
  %148 = vmatpush1.bf16.msra.mxu0 0
  %149 = vmatprep.subr.bf16.mxu0 0
  %150 = vmatpush1.bf16.msra.mxu0 0
  %151 = vmatprep.mubr.bf16.mxu0 %v114
  %152 = vmatmul.mubr.bf16.gmra.mrb[0].mxu0 %v52
  %v153 = vpop.f32.mrb[0].mxu0
  %v154 = vadd.f32 %v41, %v153
  %v155 = vpop.f32.mrb[0].mxu0
  %v156 = vpop.f32.mrb[0].mxu0
  %v157 = vadd.f32 %v41, %v156
  %v158 = vpop.f32.mrb[0].mxu0
  %159 = vmatprep.mubr.bf16.mxu0 %v117
  %160 = vmatmul.mubr.bf16.gmra.mrb[0].mxu0 %v54
  %v161 = vpop.f32.mrb[0].mxu0
  %v162 = vadd.f32 %v41, %v161
  %v163 = vpop.f32.mrb[0].mxu0
  %v164 = vpop.f32.mrb[0].mxu0
  %v165 = vpop.f32.mrb[0].mxu0
  %166 = vdwg.mxu0
  %v167 = vmax.f32 %v154, 0.0
  %v168 = vmax.f32 %v157, 0.0
  %v169 = vmax.f32 %v162, 0.0
  %v170 = vpack.c.bf16 %v168, %v167
  %v171 = vpack.c.bf16 %v169, %v169
  %v174 = vunpack.c.l.b16 %v170
  %v175 = vunpack.c.h.b16 %v170
  %v176 = vunpack.c.l.b16 %v171
  %v177 = vpack.c.b16 %v174, %v174
  %v178 = vpack.c.b16 %v175, %v175
  %v179 = vpack.c.b16 %v176, %v176
  %vm183 = vcmask 257024
  %184 = vst.msk [vmem:[%s3] sm:$0xf] %vm183, %v177
  %185 = vst.msk [vmem:[%s3 + $0x4] sm:$0xf] %vm183, %v178
  %vm186 = vcmask 253952
  %187 = vst.msk [vmem:[%s3 + $0x8] sm:$0x1] %vm186, %v179
  // Predicated region
  $region14: #{cnn_vae_forward.9} parent=0 // pred_check
    _
  $region15: #{cnn_vae_forward.9} parent=0 // pred_check_branch
    %189 = sbr.rel (0) target = $region17
  $region16: #{cnn_vae_forward.9} parent=0 // pred_region
    _
  $region17: #{cnn_vae_forward.9} parent=0 // pred_fallthru
    _
  // Predicated region
  $region18: #{cnn_vae_forward.9} parent=0 // pred_check
    _
  $region19: #{cnn_vae_forward.9} parent=0 // pred_check_branch
    %191 = sbr.rel (0) target = $region21
  $region20: #{cnn_vae_forward.9} parent=0 // pred_region
    _
  $region21: #{cnn_vae_forward.9} parent=0 // pred_fallthru
    _

// kernel: cnn_vae_forward.10
$region0: #{cnn_vae_forward.10}
  #allocation0 [shape = 'u32[]', space=smem, size = 0x4, offset = 0x4, fixed_abs, tag = 'smem constant byte address 0x4 - core index']
  #allocation1 [shape = 'u32[144,128]{1,0:T(1,128)}', space=vmem, size = 0x12000, scoped, tag = 'internal scratch']
  %s0 = inlined_call_operand.vmem [shape: bf16[2,288], index: 0, kind: input, shape index: {}]
  %s1 = inlined_call_operand.vmem [shape: f32[2,8], index: 1, kind: input, shape index: {}]
  %s2 = inlined_call_operand.vmem [shape: bf16[288,64], index: 2, kind: input, shape index: {}]
  %s3 = inlined_call_operand.vmem [shape: f32[1,64], index: 3, kind: input, shape index: {}]
  %s4 = inlined_call_operand.vmem [shape: bf16[64,32], index: 4, kind: input, shape index: {}]
  %s5 = inlined_call_operand.vmem [shape: f32[1,32], index: 5, kind: input, shape index: {}]
  %s6 = inlined_call_operand.vmem [shape: bf16[32,8], index: 6, kind: input, shape index: {}]
  %s7 = inlined_call_operand.vmem [shape: f32[1,8], index: 7, kind: input, shape index: {}]
  %s8 = inlined_call_operand.vmem [shape: bf16[8,64], index: 8, kind: input, shape index: {}]
  %s9 = inlined_call_operand.vmem [shape: f32[1,64], index: 9, kind: input, shape index: {}]
  %s10 = inlined_call_operand.vmem [shape: bf16[64,288], index: 10, kind: input, shape index: {}]
  %s11 = inlined_call_operand.vmem [shape: f32[1,288], index: 11, kind: input, shape index: {}]
  %s12 = inlined_call_operand.vmem [shape: bf16[2,288], index: 12, kind: output, shape index: {0}]
  %s13 = inlined_call_operand.vmem [shape: f32[2,8], index: 13, kind: output, shape index: {1}]
  %14 = xla_tuple %s12, %s13
  %s15 = sld [smem:[#allocation0]]
  $region66: #{cnn_vae_forward.10} parent=0
    _
  %s17 = ssub.s32 1, %s15
  %s18 = scalar_select 0, %s17, %s15
  // Predicated region
  $region2: #{cnn_vae_forward.10} parent=0 // pred_check
    _
  $region3: #{cnn_vae_forward.10} parent=0 // pred_check_branch
    %20 = sbr.rel (0) target = $region5
  $region4: #{cnn_vae_forward.10} parent=0 // pred_region
    _
  $region5: #{cnn_vae_forward.10} parent=0 // pred_fallthru
    _
  // Predicated region
  $region6: #{cnn_vae_forward.10} parent=0 // pred_check
    _
  $region7: #{cnn_vae_forward.10} parent=0 // pred_check_branch
    %22 = sbr.rel (0) target = $region9
  $region8: #{cnn_vae_forward.10} parent=0 // pred_region
    _
  $region9: #{cnn_vae_forward.10} parent=0 // pred_fallthru
    _
  // Predicated region
  $region10: #{cnn_vae_forward.10} parent=0 // pred_check
    _
  $region11: #{cnn_vae_forward.10} parent=0 // pred_check_branch
    %24 = sbr.rel (0) target = $region13
  $region12: #{cnn_vae_forward.10} parent=0 // pred_region
    _
  $region13: #{cnn_vae_forward.10} parent=0 // pred_fallthru
    _
  // Predicated region
  $region14: #{cnn_vae_forward.10} parent=0 // pred_check
    _
  $region15: #{cnn_vae_forward.10} parent=0 // pred_check_branch
    %26 = sbr.rel (0) target = $region17
  $region16: #{cnn_vae_forward.10} parent=0 // pred_region
    _
  $region17: #{cnn_vae_forward.10} parent=0 // pred_fallthru
    _
  // Predicated region
  $region18: #{cnn_vae_forward.10} parent=0 // pred_check
    _
  $region19: #{cnn_vae_forward.10} parent=0 // pred_check_branch
    %28 = sbr.rel (0) target = $region21
  $region20: #{cnn_vae_forward.10} parent=0 // pred_region
    _
  $region21: #{cnn_vae_forward.10} parent=0 // pred_fallthru
    _
  // Predicated region
  $region22: #{cnn_vae_forward.10} parent=0 // pred_check
    _
  $region23: #{cnn_vae_forward.10} parent=0 // pred_check_branch
    %30 = sbr.rel (0) target = $region25
  $region24: #{cnn_vae_forward.10} parent=0 // pred_region
    _
  $region25: #{cnn_vae_forward.10} parent=0 // pred_fallthru
    _
  // Predicated region
  $region26: #{cnn_vae_forward.10} parent=0 // pred_check
    _
  $region27: #{cnn_vae_forward.10} parent=0 // pred_check_branch
    %32 = sbr.rel (0) target = $region29
  $region28: #{cnn_vae_forward.10} parent=0 // pred_region
    _
  $region29: #{cnn_vae_forward.10} parent=0 // pred_fallthru
    _
  // Predicated region
  $region30: #{cnn_vae_forward.10} parent=0 // pred_check
    _
  $region31: #{cnn_vae_forward.10} parent=0 // pred_check_branch
    %34 = sbr.rel (0) target = $region33
  $region32: #{cnn_vae_forward.10} parent=0 // pred_region
    _
  $region33: #{cnn_vae_forward.10} parent=0 // pred_fallthru
    _
  // Predicated region
  $region34: #{cnn_vae_forward.10} parent=0 // pred_check
    _
  $region35: #{cnn_vae_forward.10} parent=0 // pred_check_branch
    %36 = sbr.rel (0) target = $region37
  $region36: #{cnn_vae_forward.10} parent=0 // pred_region
    _
  $region37: #{cnn_vae_forward.10} parent=0 // pred_fallthru
    _
  // Predicated region
  $region38: #{cnn_vae_forward.10} parent=0 // pred_check
    _
  $region39: #{cnn_vae_forward.10} parent=0 // pred_check_branch
    %38 = sbr.rel (0) target = $region41
  $region40: #{cnn_vae_forward.10} parent=0 // pred_region
    _
  $region41: #{cnn_vae_forward.10} parent=0 // pred_fallthru
    _
  // Predicated region
  $region42: #{cnn_vae_forward.10} parent=0 // pred_check
    _
  $region43: #{cnn_vae_forward.10} parent=0 // pred_check_branch
    %40 = sbr.rel (0) target = $region45
  $region44: #{cnn_vae_forward.10} parent=0 // pred_region
    _
  $region45: #{cnn_vae_forward.10} parent=0 // pred_fallthru
    _
  // Predicated region
  $region46: #{cnn_vae_forward.10} parent=0 // pred_check
    _
  $region47: #{cnn_vae_forward.10} parent=0 // pred_check_branch
    %42 = sbr.rel (0) target = $region49
  $region48: #{cnn_vae_forward.10} parent=0 // pred_region
    _
  $region49: #{cnn_vae_forward.10} parent=0 // pred_fallthru
    _
  %v44 = vld [vmem:[%s0] sm:$0x7]
  %v45 = vld [vmem:[%s2] sm:$0xf]
  %v46 = vld [vmem:[%s2 + $0x4] sm:$0xf]
  %v47 = vld [vmem:[%s2 + $0x8] sm:$0xf]
  %v48 = vld [vmem:[%s2 + $0xc] sm:$0xf]
  %v49 = vld [vmem:[%s2 + $0x10] sm:$0xf]
  %v50 = vld [vmem:[%s2 + $0x14] sm:$0xf]
  %v51 = vld [vmem:[%s2 + $0x18] sm:$0xf]
  %v52 = vld [vmem:[%s2 + $0x1c] sm:$0xf]
  %v53 = vld [vmem:[%s2 + $0x20] sm:$0xf]
  %v54 = vld [vmem:[%s2 + $0x24] sm:$0xf]
  %v55 = vld [vmem:[%s2 + $0x28] sm:$0xf]
  %v56 = vld [vmem:[%s2 + $0x2c] sm:$0xf]
  %v57 = vld [vmem:[%s2 + $0x30] sm:$0xf]
  %v58 = vld [vmem:[%s2 + $0x34] sm:$0xf]
  %v59 = vld [vmem:[%s2 + $0x38] sm:$0xf]
  %v60 = vld [vmem:[%s2 + $0x3c] sm:$0xf]
  %v61 = vld [vmem:[%s2 + $0x40] sm:$0xf]
  %v62 = vld [vmem:[%s2 + $0x44] sm:$0xf]
  %v63 = vld [vmem:[%s2 + $0x48] sm:$0xf]
  %v64 = vld [vmem:[%s2 + $0x4c] sm:$0xf]
  %v65 = vld [vmem:[%s2 + $0x50] sm:$0xf]
  %v66 = vld [vmem:[%s2 + $0x54] sm:$0xf]
  %v67 = vld [vmem:[%s2 + $0x58] sm:$0xf]
  %v68 = vld [vmem:[%s2 + $0x5c] sm:$0xf]
  %v69 = vld [vmem:[%s2 + $0x60] sm:$0xf]
  %v70 = vld [vmem:[%s2 + $0x64] sm:$0xf]
  %v71 = vld [vmem:[%s2 + $0x68] sm:$0xf]
  %v72 = vld [vmem:[%s2 + $0x6c] sm:$0xf]
  %v73 = vld [vmem:[%s2 + $0x70] sm:$0xf]
  %v74 = vld [vmem:[%s2 + $0x74] sm:$0xf]
  %v75 = vld [vmem:[%s2 + $0x78] sm:$0xf]
  %v76 = vld [vmem:[%s2 + $0x7c] sm:$0xf]
  %v77 = vld [vmem:[%s2 + $0x80] sm:$0xf]
  %v78 = vld [vmem:[%s2 + $0x84] sm:$0xf]
  %v79 = vld [vmem:[%s2 + $0x88] sm:$0xf]
  %v80 = vld [vmem:[%s2 + $0x8c] sm:$0xf]
  %v81 = vld [vmem:[%s3] sm:$0x1]
  %v83 = vlaneseq
  %v84 = vshrl.u32 %v83, 7
  %v85 = vsub.s32 0, %v84
  %v86 = vrot.slane %v81, %v85
  %v90 = vunpack.c.l.s4 1966171168
  %v91 = vunpack.c.0.s8 %v90
  %v92 = vlaneseq
  %v93 = vshrl.u32 %v92, 7
  %v94 = vsub.s32 %v91, %v93
  %v95 = vrot.slane %v44, %v94
  %v96 = vcombine.high %v95, %v95
  %v98 = vunpack.c.l.s4 1966171168
  %v99 = vunpack.c.0.s8 %v98
  %v100 = vlaneseq
  %v101 = vshrl.u32 %v100, 7
  %v102 = vsub.s32 %v99, %v101
  %v103 = vrot.slane %v95, %v102
  %v105 = vunpack.c.l.s4 1966171168
  %v106 = vunpack.c.0.s8 %v105
  %v107 = vlaneseq
  %v108 = vshrl.u32 %v107, 7
  %v109 = vsub.s32 %v106, %v108
  %v110 = vrot.slane %v96, %v109
  %v111 = vcombine.high %v103, %v103
  %v150 = vunpack.c.l.b16 %v45
  %v151 = vunpack.c.l.b16 %v46
  %v152 = vunpack.c.l.b16 %v47
  %v153 = vunpack.c.l.b16 %v48
  %v154 = vunpack.c.l.b16 %v49
  %v155 = vunpack.c.l.b16 %v50
  %v156 = vunpack.c.l.b16 %v51
  %v157 = vunpack.c.l.b16 %v52
  %v158 = vunpack.c.l.b16 %v53
  %v159 = vunpack.c.l.b16 %v54
  %v160 = vunpack.c.l.b16 %v55
  %v161 = vunpack.c.l.b16 %v56
  %v162 = vunpack.c.l.b16 %v57
  %v163 = vunpack.c.l.b16 %v58
  %v164 = vunpack.c.l.b16 %v59
  %v165 = vunpack.c.l.b16 %v60
  %v166 = vunpack.c.l.b16 %v61
  %v167 = vunpack.c.l.b16 %v62
  %v168 = vunpack.c.l.b16 %v63
  %v169 = vunpack.c.l.b16 %v64
  %v170 = vunpack.c.l.b16 %v65
  %v171 = vunpack.c.l.b16 %v66
  %v172 = vunpack.c.l.b16 %v67
  %v173 = vunpack.c.l.b16 %v68
  %v174 = vunpack.c.l.b16 %v69
  %v175 = vunpack.c.l.b16 %v70
  %v176 = vunpack.c.l.b16 %v71
  %v177 = vunpack.c.l.b16 %v72
  %v178 = vunpack.c.l.b16 %v73
  %v179 = vunpack.c.l.b16 %v74
  %v180 = vunpack.c.l.b16 %v75
  %v181 = vunpack.c.l.b16 %v76
  %v182 = vunpack.c.l.b16 %v77
  %v183 = vunpack.c.l.b16 %v78
  %v184 = vunpack.c.l.b16 %v79
  %v185 = vunpack.c.l.b16 %v80
  %v186 = vpack.c.b16 %v151, %v150
  %v187 = vpack.c.b16 %v153, %v152
  %v188 = vpack.c.b16 %v155, %v154
  %v189 = vpack.c.b16 %v157, %v156
  %v190 = vpack.c.b16 %v159, %v158
  %v191 = vpack.c.b16 %v161, %v160
  %v192 = vpack.c.b16 %v163, %v162
  %v193 = vpack.c.b16 %v165, %v164
  %v194 = vpack.c.b16 %v167, %v166
  %v195 = vpack.c.b16 %v169, %v168
  %v196 = vpack.c.b16 %v171, %v170
  %v197 = vpack.c.b16 %v173, %v172
  %v198 = vpack.c.b16 %v175, %v174
  %v199 = vpack.c.b16 %v177, %v176
  %v200 = vpack.c.b16 %v179, %v178
  %v201 = vpack.c.b16 %v181, %v180
  %v202 = vpack.c.b16 %v183, %v182
  %v203 = vpack.c.b16 %v185, %v184
  %vm222 = vcmask 261120
  %v224 = vsel %vm222, %v111, 0
  %226 = vmatprep.subr.bf16.mxu0 0
  %227 = vmatpush1.bf16.msra.mxu0 %v186
  %228 = vmatprep.subr.bf16.mxu0 0
  %229 = vmatpush1.bf16.msra.mxu0 %v187
  %230 = vmatprep.subr.bf16.mxu0 0
  %231 = vmatpush1.bf16.msra.mxu0 %v188
  %232 = vmatprep.subr.bf16.mxu0 0
  %233 = vmatpush1.bf16.msra.mxu0 %v189
  %234 = vmatprep.subr.bf16.mxu0 0
  %235 = vmatpush1.bf16.msra.mxu0 %v190
  %236 = vmatprep.subr.bf16.mxu0 0
  %237 = vmatpush1.bf16.msra.mxu0 %v191
  %238 = vmatprep.subr.bf16.mxu0 0
  %239 = vmatpush1.bf16.msra.mxu0 %v192
  %240 = vmatprep.subr.bf16.mxu0 0
  %241 = vmatpush1.bf16.msra.mxu0 %v193
  %242 = vmatprep.subr.bf16.mxu0 0
  %243 = vmatpush1.bf16.msra.mxu0 %v194
  %244 = vmatprep.subr.bf16.mxu0 0
  %245 = vmatpush1.bf16.msra.mxu0 %v195
  %246 = vmatprep.subr.bf16.mxu0 0
  %247 = vmatpush1.bf16.msra.mxu0 %v196
  %248 = vmatprep.subr.bf16.mxu0 0
  %249 = vmatpush1.bf16.msra.mxu0 %v197
  %250 = vmatprep.subr.bf16.mxu0 0
  %251 = vmatpush1.bf16.msra.mxu0 %v198
  %252 = vmatprep.subr.bf16.mxu0 0
  %253 = vmatpush1.bf16.msra.mxu0 %v199
  %254 = vmatprep.subr.bf16.mxu0 0
  %255 = vmatpush1.bf16.msra.mxu0 %v200
  %256 = vmatprep.subr.bf16.mxu0 0
  %257 = vmatpush1.bf16.msra.mxu0 %v201
  %258 = vmatprep.mubr.bf16.mxu0 %v110
  %259 = vmatmul.mubr.bf16.gmra.mrb[0].mxu0 %v103
  %v260 = vpop.f32.mrb[0].mxu0
  %v261 = vadd.f32 %v86, %v260
  %v262 = vpop.f32.mrb[0].mxu0
  %v263 = vpop.f32.mrb[0].mxu0
  %v264 = vpop.f32.mrb[0].mxu0
  %265 = vdwg.mxu0
  %266 = vmatprep.subr.bf16.mxu0 0
  %267 = vmatpush1.bf16.msra.mxu0 %v202
  %268 = vmatprep.subr.bf16.mxu0 0
  %269 = vmatpush1.bf16.msra.mxu0 %v203
  %270 = vmatprep.subr.bf16.mxu0 0
  %271 = vmatpush1.bf16.msra.mxu0 0
  %272 = vmatprep.subr.bf16.mxu0 0
  %273 = vmatpush1.bf16.msra.mxu0 0
  %274 = vmatprep.subr.bf16.mxu0 0
  %275 = vmatpush1.bf16.msra.mxu0 0
  %276 = vmatprep.subr.bf16.mxu0 0
  %277 = vmatpush1.bf16.msra.mxu0 0
  %278 = vmatprep.subr.bf16.mxu0 0
  %279 = vmatpush1.bf16.msra.mxu0 0
  %280 = vmatprep.subr.bf16.mxu0 0
  %281 = vmatpush1.bf16.msra.mxu0 0
  %282 = vmatprep.subr.bf16.mxu0 0
  %283 = vmatpush1.bf16.msra.mxu0 0
  %284 = vmatprep.subr.bf16.mxu0 0
  %285 = vmatpush1.bf16.msra.mxu0 0
  %286 = vmatprep.subr.bf16.mxu0 0
  %287 = vmatpush1.bf16.msra.mxu0 0
  %288 = vmatprep.subr.bf16.mxu0 0
  %289 = vmatpush1.bf16.msra.mxu0 0
  %290 = vmatprep.subr.bf16.mxu0 0
  %291 = vmatpush1.bf16.msra.mxu0 0
  %292 = vmatprep.subr.bf16.mxu0 0
  %293 = vmatpush1.bf16.msra.mxu0 0
  %294 = vmatprep.subr.bf16.mxu0 0
  %295 = vmatpush1.bf16.msra.mxu0 0
  %296 = vmatprep.subr.bf16.mxu0 0
  %297 = vmatpush1.bf16.msra.mxu0 0
  %298 = vmatprep.mubr.bf16.mxu0 0
  %299 = vmatmul.mubr.bf16.gmra.mrb[0].mxu0 %v224
  %v300 = vpop.f32.mrb[0].mxu0
  %v301 = vadd.f32 %v261, %v300
  %v302 = vpop.f32.mrb[0].mxu0
  %v303 = vpop.f32.mrb[0].mxu0
  %v304 = vpop.f32.mrb[0].mxu0
  %305 = vdwg.mxu0
  %v306 = vmax.f32 %v301, 0.0
  %v307 = vpack.c.bf16 %v306, %v306
  %v308 = vld [vmem:[%s4] sm:$0xf]
  %v309 = vld [vmem:[%s4 + $0x4] sm:$0xf]
  %v310 = vld [vmem:[%s4 + $0x8] sm:$0xf]
  %v311 = vld [vmem:[%s4 + $0xc] sm:$0xf]
  %v312 = vld [vmem:[%s4 + $0x10] sm:$0xf]
  %v313 = vld [vmem:[%s4 + $0x14] sm:$0xf]
  %v314 = vld [vmem:[%s4 + $0x18] sm:$0xf]
  %v315 = vld [vmem:[%s4 + $0x1c] sm:$0xf]
  %v316 = vld [vmem:[%s5] sm:$0x1]
  %v318 = vlaneseq
  %v319 = vshrl.u32 %v318, 7
  %v320 = vsub.s32 0, %v319
  %v321 = vrot.slane %v316, %v320
  %v331 = vunpack.c.l.b16 %v308
  %v332 = vunpack.c.l.b16 %v309
  %v333 = vunpack.c.l.b16 %v310
  %v334 = vunpack.c.l.b16 %v311
  %v335 = vunpack.c.l.b16 %v312
  %v336 = vunpack.c.l.b16 %v313
  %v337 = vunpack.c.l.b16 %v314
  %v338 = vunpack.c.l.b16 %v315
  %v339 = vpack.c.b16 %v332, %v331
  %v340 = vpack.c.b16 %v334, %v333
  %v341 = vpack.c.b16 %v336, %v335
  %v342 = vpack.c.b16 %v338, %v337
  %vm347 = vcmask 523264
  %v349 = vsel %vm347, %v307, 0
  %351 = vmatprep.subr.bf16.mxu0 0
  %352 = vmatpush1.bf16.msra.mxu0 %v339
  %353 = vmatprep.subr.bf16.mxu0 0
  %354 = vmatpush1.bf16.msra.mxu0 %v340
  %355 = vmatprep.subr.bf16.mxu0 0
  %356 = vmatpush1.bf16.msra.mxu0 %v341
  %357 = vmatprep.subr.bf16.mxu0 0
  %358 = vmatpush1.bf16.msra.mxu0 %v342
  %359 = vmatprep.subr.bf16.mxu0 0
  %360 = vmatpush1.bf16.msra.mxu0 0
  %361 = vmatprep.subr.bf16.mxu0 0
  %362 = vmatpush1.bf16.msra.mxu0 0
  %363 = vmatprep.subr.bf16.mxu0 0
  %364 = vmatpush1.bf16.msra.mxu0 0
  %365 = vmatprep.subr.bf16.mxu0 0
  %366 = vmatpush1.bf16.msra.mxu0 0
  %367 = vmatprep.subr.bf16.mxu0 0
  %368 = vmatpush1.bf16.msra.mxu0 0
  %369 = vmatprep.subr.bf16.mxu0 0
  %370 = vmatpush1.bf16.msra.mxu0 0
  %371 = vmatprep.subr.bf16.mxu0 0
  %372 = vmatpush1.bf16.msra.mxu0 0
  %373 = vmatprep.subr.bf16.mxu0 0
  %374 = vmatpush1.bf16.msra.mxu0 0
  %375 = vmatprep.subr.bf16.mxu0 0
  %376 = vmatpush1.bf16.msra.mxu0 0
  %377 = vmatprep.subr.bf16.mxu0 0
  %378 = vmatpush1.bf16.msra.mxu0 0
  %379 = vmatprep.subr.bf16.mxu0 0
  %380 = vmatpush1.bf16.msra.mxu0 0
  %381 = vmatprep.subr.bf16.mxu0 0
  %382 = vmatpush1.bf16.msra.mxu0 0
  %383 = vmatprep.mubr.bf16.mxu0 0
  %384 = vmatmul.mubr.bf16.gmra.mrb[0].mxu0 %v349
  %v385 = vpop.f32.mrb[0].mxu0
  %v386 = vadd.f32 %v321, %v385
  %v387 = vpop.f32.mrb[0].mxu0
  %v388 = vpop.f32.mrb[0].mxu0
  %v389 = vpop.f32.mrb[0].mxu0
  %390 = vdwg.mxu0
  %v391 = vpack.c.bf16 %v386, %v386
  %v392 = vld [vmem:[%s6] sm:$0xf]
  %v393 = vld [vmem:[%s6 + $0x4] sm:$0xf]
  %v394 = vld [vmem:[%s6 + $0x8] sm:$0xf]
  %v395 = vld [vmem:[%s6 + $0xc] sm:$0xf]
  %v396 = vld [vmem:[%s7] sm:$0x1]
  %v398 = vlaneseq
  %v399 = vshrl.u32 %v398, 7
  %v400 = vsub.s32 0, %v399
  %v401 = vrot.slane %v396, %v400
  %v407 = vunpack.c.l.b16 %v392
  %v408 = vunpack.c.l.b16 %v393
  %v409 = vunpack.c.l.b16 %v394
  %v410 = vunpack.c.l.b16 %v395
  %v411 = vpack.c.b16 %v408, %v407
  %v412 = vpack.c.b16 %v410, %v409
  %v416 = vsel %vm222, %v391, 0
  %418 = vmatprep.subr.bf16.mxu0 0
  %419 = vmatpush1.bf16.msra.mxu0 %v411
  %420 = vmatprep.subr.bf16.mxu0 0
  %421 = vmatpush1.bf16.msra.mxu0 %v412
  %422 = vmatprep.subr.bf16.mxu0 0
  %423 = vmatpush1.bf16.msra.mxu0 0
  %424 = vmatprep.subr.bf16.mxu0 0
  %425 = vmatpush1.bf16.msra.mxu0 0
  %426 = vmatprep.subr.bf16.mxu0 0
  %427 = vmatpush1.bf16.msra.mxu0 0
  %428 = vmatprep.subr.bf16.mxu0 0
  %429 = vmatpush1.bf16.msra.mxu0 0
  %430 = vmatprep.subr.bf16.mxu0 0
  %431 = vmatpush1.bf16.msra.mxu0 0
  %432 = vmatprep.subr.bf16.mxu0 0
  %433 = vmatpush1.bf16.msra.mxu0 0
  %434 = vmatprep.subr.bf16.mxu0 0
  %435 = vmatpush1.bf16.msra.mxu0 0
  %436 = vmatprep.subr.bf16.mxu0 0
  %437 = vmatpush1.bf16.msra.mxu0 0
  %438 = vmatprep.subr.bf16.mxu0 0
  %439 = vmatpush1.bf16.msra.mxu0 0
  %440 = vmatprep.subr.bf16.mxu0 0
  %441 = vmatpush1.bf16.msra.mxu0 0
  %442 = vmatprep.subr.bf16.mxu0 0
  %443 = vmatpush1.bf16.msra.mxu0 0
  %444 = vmatprep.subr.bf16.mxu0 0
  %445 = vmatpush1.bf16.msra.mxu0 0
  %446 = vmatprep.subr.bf16.mxu0 0
  %447 = vmatpush1.bf16.msra.mxu0 0
  %448 = vmatprep.subr.bf16.mxu0 0
  %449 = vmatpush1.bf16.msra.mxu0 0
  %450 = vmatprep.mubr.bf16.mxu0 0
  %451 = vmatmul.mubr.bf16.gmra.mrb[0].mxu0 %v416
  %v452 = vpop.f32.mrb[0].mxu0
  %v453 = vadd.f32 %v401, %v452
  %v454 = vpop.f32.mrb[0].mxu0
  %v455 = vpop.f32.mrb[0].mxu0
  %v456 = vpop.f32.mrb[0].mxu0
  %457 = vdwg.mxu0
  %vm458 = vcmask 58368
  %459 = vst.msk [vmem:[%s13] sm:$0x3] %vm458, %v453
  %v460 = vld [vmem:[%s1] sm:$0x3]
  %v461 = vmul.f32 %v453, 0.5
  %v462 = vmul.f32 %v461, 1.442695
  %v463 = vpow.pop %v462
  %v464 = vmul.f32 %v460, %v463
  %v465 = vadd.f32 %v464, %v453
  %v466 = vpack.c.bf16 %v465, %v465
  %v467 = vld [vmem:[%s8] sm:$0xf]
  %v468 = vld [vmem:[%s9] sm:$0x1]
  %v470 = vlaneseq
  %v471 = vshrl.u32 %v470, 7
  %v472 = vsub.s32 0, %v471
  %v473 = vrot.slane %v468, %v472
  %vm475 = vcmask 64512
  %v477 = vsel %vm475, %v466, 0
  %vm479 = vcmask 1043456
  %v481 = vsel %vm479, %v467, 0
  %483 = vmatprep.subr.bf16.mxu0 0
  %484 = vmatpush1.bf16.msra.mxu0 %v481
  %485 = vmatprep.subr.bf16.mxu0 0
  %486 = vmatpush1.bf16.msra.mxu0 0
  %487 = vmatprep.subr.bf16.mxu0 0
  %488 = vmatpush1.bf16.msra.mxu0 0
  %489 = vmatprep.subr.bf16.mxu0 0
  %490 = vmatpush1.bf16.msra.mxu0 0
  %491 = vmatprep.subr.bf16.mxu0 0
  %492 = vmatpush1.bf16.msra.mxu0 0
  %493 = vmatprep.subr.bf16.mxu0 0
  %494 = vmatpush1.bf16.msra.mxu0 0
  %495 = vmatprep.subr.bf16.mxu0 0
  %496 = vmatpush1.bf16.msra.mxu0 0
  %497 = vmatprep.subr.bf16.mxu0 0
  %498 = vmatpush1.bf16.msra.mxu0 0
  %499 = vmatprep.subr.bf16.mxu0 0
  %500 = vmatpush1.bf16.msra.mxu0 0
  %501 = vmatprep.subr.bf16.mxu0 0
  %502 = vmatpush1.bf16.msra.mxu0 0
  %503 = vmatprep.subr.bf16.mxu0 0
  %504 = vmatpush1.bf16.msra.mxu0 0
  %505 = vmatprep.subr.bf16.mxu0 0
  %506 = vmatpush1.bf16.msra.mxu0 0
  %507 = vmatprep.subr.bf16.mxu0 0
  %508 = vmatpush1.bf16.msra.mxu0 0
  %509 = vmatprep.subr.bf16.mxu0 0
  %510 = vmatpush1.bf16.msra.mxu0 0
  %511 = vmatprep.subr.bf16.mxu0 0
  %512 = vmatpush1.bf16.msra.mxu0 0
  %513 = vmatprep.subr.bf16.mxu0 0
  %514 = vmatpush1.bf16.msra.mxu0 0
  %515 = vmatprep.mubr.bf16.mxu0 0
  %516 = vmatmul.mubr.bf16.gmra.mrb[0].mxu0 %v477
  %v517 = vpop.f32.mrb[0].mxu0
  %v518 = vadd.f32 %v473, %v517
  %v519 = vpop.f32.mrb[0].mxu0
  %v520 = vpop.f32.mrb[0].mxu0
  %v521 = vpop.f32.mrb[0].mxu0
  %522 = vdwg.mxu0
  %v523 = vmax.f32 %v518, 0.0
  %v524 = vpack.c.bf16 %v523, %v523
  %v525 = vld [vmem:[%s10] sm:$0xff]
  %v526 = vld [vmem:[%s10 + $0x8] sm:$0xf]
  %v527 = vld [vmem:[%s10 + $0xc] sm:$0xff]
  %v528 = vld [vmem:[%s10 + $0x14] sm:$0xf]
  %v529 = vld [vmem:[%s10 + $0x18] sm:$0xff]
  %v530 = vld [vmem:[%s10 + $0x20] sm:$0xf]
  %v531 = vld [vmem:[%s10 + $0x24] sm:$0xff]
  %v532 = vld [vmem:[%s10 + $0x2c] sm:$0xf]
  %v533 = vld [vmem:[%s10 + $0x30] sm:$0xff]
  %v534 = vld [vmem:[%s10 + $0x38] sm:$0xf]
  %v535 = vld [vmem:[%s10 + $0x3c] sm:$0xff]
  %v536 = vld [vmem:[%s10 + $0x44] sm:$0xf]
  %v537 = vld [vmem:[%s10 + $0x48] sm:$0xff]
  %v538 = vld [vmem:[%s10 + $0x50] sm:$0xf]
  %v539 = vld [vmem:[%s10 + $0x54] sm:$0xff]
  %v540 = vld [vmem:[%s10 + $0x5c] sm:$0xf]
  %v541 = vld [vmem:[%s11] sm:$0x7]
  %v543 = vlaneseq
  %v544 = vshrl.u32 %v543, 7
  %v545 = vsub.s32 0, %v544
  %v546 = vrot.slane %v541, %v545
  %v547 = vlaneseq
  %v548 = vshrl.u32 %v547, 7
  %v549 = vsub.s32 1, %v548
  %v550 = vrot.slane %v541, %v549
  %v551 = vlaneseq
  %v552 = vshrl.u32 %v551, 7
  %v553 = vsub.s32 2, %v552
  %v554 = vrot.slane %v541, %v553
  %v574 = vunpack.c.l.b16 %v525
  %v575 = vunpack.c.h.b16 %v525
  %v576 = vunpack.c.l.b16 %v526
  %v577 = vunpack.c.l.b16 %v527
  %v578 = vunpack.c.h.b16 %v527
  %v579 = vunpack.c.l.b16 %v528
  %v580 = vunpack.c.l.b16 %v529
  %v581 = vunpack.c.h.b16 %v529
  %v582 = vunpack.c.l.b16 %v530
  %v583 = vunpack.c.l.b16 %v531
  %v584 = vunpack.c.h.b16 %v531
  %v585 = vunpack.c.l.b16 %v532
  %v586 = vunpack.c.l.b16 %v533
  %v587 = vunpack.c.h.b16 %v533
  %v588 = vunpack.c.l.b16 %v534
  %v589 = vunpack.c.l.b16 %v535
  %v590 = vunpack.c.h.b16 %v535
  %v591 = vunpack.c.l.b16 %v536
  %v592 = vunpack.c.l.b16 %v537
  %v593 = vunpack.c.h.b16 %v537
  %v594 = vunpack.c.l.b16 %v538
  %v595 = vunpack.c.l.b16 %v539
  %v596 = vunpack.c.h.b16 %v539
  %v597 = vunpack.c.l.b16 %v540
  %v598 = vpack.c.b16 %v577, %v574
  %v599 = vpack.c.b16 %v578, %v575
  %v600 = vpack.c.b16 %v579, %v576
  %v601 = vpack.c.b16 %v583, %v580
  %v602 = vpack.c.b16 %v584, %v581
  %v603 = vpack.c.b16 %v585, %v582
  %v604 = vpack.c.b16 %v589, %v586
  %v605 = vpack.c.b16 %v590, %v587
  %v606 = vpack.c.b16 %v591, %v588
  %v607 = vpack.c.b16 %v595, %v592
  %v608 = vpack.c.b16 %v596, %v593
  %v609 = vpack.c.b16 %v597, %v594
  %v623 = vsel %vm347, %v524, 0
  %625 = vmatprep.subr.bf16.mxu0 %v599
  %626 = vmatpush1.bf16.msra.mxu0 %v598
  %627 = vmatprep.subr.bf16.mxu0 %v602
  %628 = vmatpush1.bf16.msra.mxu0 %v601
  %629 = vmatprep.subr.bf16.mxu0 %v605
  %630 = vmatpush1.bf16.msra.mxu0 %v604
  %631 = vmatprep.subr.bf16.mxu0 %v608
  %632 = vmatpush1.bf16.msra.mxu0 %v607
  %633 = vmatprep.subr.bf16.mxu0 0
  %634 = vmatpush1.bf16.msra.mxu0 0
  %635 = vmatprep.subr.bf16.mxu0 0
  %636 = vmatpush1.bf16.msra.mxu0 0
  %637 = vmatprep.subr.bf16.mxu0 0
  %638 = vmatpush1.bf16.msra.mxu0 0
  %639 = vmatprep.subr.bf16.mxu0 0
  %640 = vmatpush1.bf16.msra.mxu0 0
  %641 = vmatprep.subr.bf16.mxu0 0
  %642 = vmatpush1.bf16.msra.mxu0 0
  %643 = vmatprep.subr.bf16.mxu0 0
  %644 = vmatpush1.bf16.msra.mxu0 0
  %645 = vmatprep.subr.bf16.mxu0 0
  %646 = vmatpush1.bf16.msra.mxu0 0
  %647 = vmatprep.subr.bf16.mxu0 0
  %648 = vmatpush1.bf16.msra.mxu0 0
  %649 = vmatprep.subr.bf16.mxu0 0
  %650 = vmatpush1.bf16.msra.mxu0 0
  %651 = vmatprep.subr.bf16.mxu0 0
  %652 = vmatpush1.bf16.msra.mxu0 0
  %653 = vmatprep.subr.bf16.mxu0 0
  %654 = vmatpush1.bf16.msra.mxu0 0
  %655 = vmatprep.subr.bf16.mxu0 0
  %656 = vmatpush1.bf16.msra.mxu0 0
  %657 = vmatprep.mubr.bf16.mxu0 0
  %658 = vmatmul.mubr.bf16.gmra.mrb[0].mxu0 %v623
  %v659 = vpop.f32.mrb[0].mxu0
  %v660 = vadd.f32 %v546, %v659
  %v661 = vpop.f32.mrb[0].mxu0
  %v662 = vadd.f32 %v550, %v661
  %v663 = vpop.f32.mrb[0].mxu0
  %v664 = vpop.f32.mrb[0].mxu0
  %665 = vdwg.mxu0
  %666 = vmatprep.subr.bf16.mxu0 0
  %667 = vmatpush1.bf16.msra.mxu0 %v600
  %668 = vmatprep.subr.bf16.mxu0 0
  %669 = vmatpush1.bf16.msra.mxu0 %v603
  %670 = vmatprep.subr.bf16.mxu0 0
  %671 = vmatpush1.bf16.msra.mxu0 %v606
  %672 = vmatprep.subr.bf16.mxu0 0
  %673 = vmatpush1.bf16.msra.mxu0 %v609
  %674 = vmatprep.subr.bf16.mxu0 0
  %675 = vmatpush1.bf16.msra.mxu0 0
  %676 = vmatprep.subr.bf16.mxu0 0
  %677 = vmatpush1.bf16.msra.mxu0 0
  %678 = vmatprep.subr.bf16.mxu0 0
  %679 = vmatpush1.bf16.msra.mxu0 0
  %680 = vmatprep.subr.bf16.mxu0 0
  %681 = vmatpush1.bf16.msra.mxu0 0
  %682 = vmatprep.subr.bf16.mxu0 0
  %683 = vmatpush1.bf16.msra.mxu0 0
  %684 = vmatprep.subr.bf16.mxu0 0
  %685 = vmatpush1.bf16.msra.mxu0 0
  %686 = vmatprep.subr.bf16.mxu0 0
  %687 = vmatpush1.bf16.msra.mxu0 0
  %688 = vmatprep.subr.bf16.mxu0 0
  %689 = vmatpush1.bf16.msra.mxu0 0
  %690 = vmatprep.subr.bf16.mxu0 0
  %691 = vmatpush1.bf16.msra.mxu0 0
  %692 = vmatprep.subr.bf16.mxu0 0
  %693 = vmatpush1.bf16.msra.mxu0 0
  %694 = vmatprep.subr.bf16.mxu0 0
  %695 = vmatpush1.bf16.msra.mxu0 0
  %696 = vmatprep.subr.bf16.mxu0 0
  %697 = vmatpush1.bf16.msra.mxu0 0
  %698 = vmatprep.mubr.bf16.mxu0 0
  %699 = vmatmul.mubr.bf16.gmra.mrb[0].mxu0 %v623
  %v700 = vpop.f32.mrb[0].mxu0
  %v701 = vadd.f32 %v554, %v700
  %v702 = vpop.f32.mrb[0].mxu0
  %v703 = vpop.f32.mrb[0].mxu0
  %v704 = vpop.f32.mrb[0].mxu0
  %705 = vdwg.mxu0
  %v706 = vmax.f32 %v660, 0.0
  %v707 = vmax.f32 %v662, 0.0
  %v708 = vmax.f32 %v701, 0.0
  %v709 = vpack.c.bf16 %v706, %v706
  %v710 = vpack.c.bf16 %v707, %v707
  %v711 = vpack.c.bf16 %v708, %v708
  %v715 = vcombine.low %v709, %v710
  %v717 = vunpack.c.l.s4 1966171168
  %v718 = vunpack.c.0.s8 %v717
  %v719 = vlaneseq
  %v720 = vshrl.u32 %v719, 7
  %v721 = vsub.s32 %v718, %v720
  %v722 = vrot.slane %v715, %v721
  %v724 = vunpack.c.l.s4 1966171168
  %v725 = vunpack.c.0.s8 %v724
  %v726 = vlaneseq
  %v727 = vshrl.u32 %v726, 7
  %v728 = vsub.s32 %v725, %v727
  %v729 = vrot.slane %v711, %v728
  %v730 = vcombine.low %v722, %v729
  %v732 = vunpack.c.l.s4 1966171168
  %v733 = vunpack.c.0.s8 %v732
  %v734 = vlaneseq
  %v735 = vshrl.u32 %v734, 7
  %v736 = vsub.s32 %v733, %v735
  %v737 = vrot.slane %v730, %v736
  %vm739 = vcmask 1040384
  %vm740 = vcmask 1041409
  %vm741 = vmor %vm740, %vm739
  %vm742 = vcmask 256002
  %vm743 = vmor %vm742, %vm741
  %744 = vst.msk [vmem:[%s12] sm:$0x7] %vm743, %v737
  // Predicated region
  $region50: #{cnn_vae_forward.10} parent=0 // pred_check
    _
  $region51: #{cnn_vae_forward.10} parent=0 // pred_check_branch
    %746 = sbr.rel (0) target = $region53
  $region52: #{cnn_vae_forward.10} parent=0 // pred_region
    _
  $region53: #{cnn_vae_forward.10} parent=0 // pred_fallthru
    _
  // Predicated region
  $region54: #{cnn_vae_forward.10} parent=0 // pred_check
    _
  $region55: #{cnn_vae_forward.10} parent=0 // pred_check_branch
    %748 = sbr.rel (0) target = $region57
  $region56: #{cnn_vae_forward.10} parent=0 // pred_region
    _
  $region57: #{cnn_vae_forward.10} parent=0 // pred_fallthru
    _
  // Predicated region
  $region58: #{cnn_vae_forward.10} parent=0 // pred_check
    _
  $region59: #{cnn_vae_forward.10} parent=0 // pred_check_branch
    %750 = sbr.rel (0) target = $region61
  $region60: #{cnn_vae_forward.10} parent=0 // pred_region
    _
  $region61: #{cnn_vae_forward.10} parent=0 // pred_fallthru
    _
  // Predicated region
  $region62: #{cnn_vae_forward.10} parent=0 // pred_check
    _
  $region63: #{cnn_vae_forward.10} parent=0 // pred_check_branch
    %752 = sbr.rel (0) target = $region65
  $region64: #{cnn_vae_forward.10} parent=0 // pred_region
    _
  $region65: #{cnn_vae_forward.10} parent=0 // pred_fallthru
    _

// kernel: cnn_vae_forward.11
$region0: #{cnn_vae_forward.11}
  #allocation0 [shape = 'u32[]', space=smem, size = 0x4, offset = 0x4, fixed_abs, tag = 'smem constant byte address 0x4 - core index']
  #allocation1 [shape = 'u32[144,128]{1,0:T(1,128)}', space=vmem, size = 0x12000, scoped, tag = 'internal scratch']
  %s0 = inlined_call_operand.vmem [shape: bf16[98,288], index: 0, kind: input, shape index: {}]
  %s1 = inlined_call_operand.vmem [shape: bf16[288,16], index: 1, kind: input, shape index: {}]
  %s2 = inlined_call_operand.vmem [shape: f32[1,16], index: 2, kind: input, shape index: {}]
  %s3 = inlined_call_operand.vmem [shape: bf16[98,16], index: 3, kind: output, shape index: {}]
  %s4 = sld [smem:[#allocation0]]
  $region22: #{cnn_vae_forward.11} parent=0
    _
  %s6 = ssub.s32 1, %s4
  %s7 = scalar_select 0, %s6, %s4
  // Predicated region
  $region2: #{cnn_vae_forward.11} parent=0 // pred_check
    _
  $region3: #{cnn_vae_forward.11} parent=0 // pred_check_branch
    %9 = sbr.rel (0) target = $region5
  $region4: #{cnn_vae_forward.11} parent=0 // pred_region
    _
  $region5: #{cnn_vae_forward.11} parent=0 // pred_fallthru
    _
  // Predicated region
  $region6: #{cnn_vae_forward.11} parent=0 // pred_check
    _
  $region7: #{cnn_vae_forward.11} parent=0 // pred_check_branch
    %11 = sbr.rel (0) target = $region9
  $region8: #{cnn_vae_forward.11} parent=0 // pred_region
    _
  $region9: #{cnn_vae_forward.11} parent=0 // pred_fallthru
    _
  // Predicated region
  $region10: #{cnn_vae_forward.11} parent=0 // pred_check
    _
  $region11: #{cnn_vae_forward.11} parent=0 // pred_check_branch
    %13 = sbr.rel (0) target = $region13
  $region12: #{cnn_vae_forward.11} parent=0 // pred_region
    _
  $region13: #{cnn_vae_forward.11} parent=0 // pred_fallthru
    _
  %v15 = vld [vmem:[%s0] sm:$0xff]
  %v16 = vld [vmem:[%s0 + $0x8] sm:$0xf]
  %v17 = vld [vmem:[%s0 + $0xc] sm:$0xff]
  %v18 = vld [vmem:[%s0 + $0x14] sm:$0xf]
  %v19 = vld [vmem:[%s0 + $0x18] sm:$0xff]
  %v20 = vld [vmem:[%s0 + $0x20] sm:$0xf]
  %v21 = vld [vmem:[%s0 + $0x24] sm:$0xff]
  %v22 = vld [vmem:[%s0 + $0x2c] sm:$0xf]
  %v23 = vld [vmem:[%s0 + $0x30] sm:$0xff]
  %v24 = vld [vmem:[%s0 + $0x38] sm:$0xf]
  %v25 = vld [vmem:[%s0 + $0x3c] sm:$0xff]
  %v26 = vld [vmem:[%s0 + $0x44] sm:$0xf]
  %v27 = vld [vmem:[%s0 + $0x48] sm:$0xff]
  %v28 = vld [vmem:[%s0 + $0x50] sm:$0xf]
  %v29 = vld [vmem:[%s0 + $0x54] sm:$0xff]
  %v30 = vld [vmem:[%s0 + $0x5c] sm:$0xf]
  %v31 = vld [vmem:[%s0 + $0x60] sm:$0xff]
  %v32 = vld [vmem:[%s0 + $0x68] sm:$0xf]
  %v33 = vld [vmem:[%s0 + $0x6c] sm:$0xff]
  %v34 = vld [vmem:[%s0 + $0x74] sm:$0xf]
  %v35 = vld [vmem:[%s0 + $0x78] sm:$0xff]
  %v36 = vld [vmem:[%s0 + $0x80] sm:$0xf]
  %v37 = vld [vmem:[%s0 + $0x84] sm:$0xff]
  %v38 = vld [vmem:[%s0 + $0x8c] sm:$0xf]
  %v39 = vld [vmem:[%s0 + $0x90] sm:$0x11]
  %v40 = vld [vmem:[%s0 + $0x98] sm:$0x1]
  %v41 = vld [vmem:[%s1] sm:$0xf]
  %v42 = vld [vmem:[%s1 + $0x4] sm:$0xf]
  %v43 = vld [vmem:[%s1 + $0x8] sm:$0xf]
  %v44 = vld [vmem:[%s1 + $0xc] sm:$0xf]
  %v45 = vld [vmem:[%s1 + $0x10] sm:$0xf]
  %v46 = vld [vmem:[%s1 + $0x14] sm:$0xf]
  %v47 = vld [vmem:[%s1 + $0x18] sm:$0xf]
  %v48 = vld [vmem:[%s1 + $0x1c] sm:$0xf]
  %v49 = vld [vmem:[%s1 + $0x20] sm:$0xf]
  %v50 = vld [vmem:[%s1 + $0x24] sm:$0xf]
  %v51 = vld [vmem:[%s1 + $0x28] sm:$0xf]
  %v52 = vld [vmem:[%s1 + $0x2c] sm:$0xf]
  %v53 = vld [vmem:[%s1 + $0x30] sm:$0xf]
  %v54 = vld [vmem:[%s1 + $0x34] sm:$0xf]
  %v55 = vld [vmem:[%s1 + $0x38] sm:$0xf]
  %v56 = vld [vmem:[%s1 + $0x3c] sm:$0xf]
  %v57 = vld [vmem:[%s1 + $0x40] sm:$0xf]
  %v58 = vld [vmem:[%s1 + $0x44] sm:$0xf]
  %v59 = vld [vmem:[%s1 + $0x48] sm:$0xf]
  %v60 = vld [vmem:[%s1 + $0x4c] sm:$0xf]
  %v61 = vld [vmem:[%s1 + $0x50] sm:$0xf]
  %v62 = vld [vmem:[%s1 + $0x54] sm:$0xf]
  %v63 = vld [vmem:[%s1 + $0x58] sm:$0xf]
  %v64 = vld [vmem:[%s1 + $0x5c] sm:$0xf]
  %v65 = vld [vmem:[%s1 + $0x60] sm:$0xf]
  %v66 = vld [vmem:[%s1 + $0x64] sm:$0xf]
  %v67 = vld [vmem:[%s1 + $0x68] sm:$0xf]
  %v68 = vld [vmem:[%s1 + $0x6c] sm:$0xf]
  %v69 = vld [vmem:[%s1 + $0x70] sm:$0xf]
  %v70 = vld [vmem:[%s1 + $0x74] sm:$0xf]
  %v71 = vld [vmem:[%s1 + $0x78] sm:$0xf]
  %v72 = vld [vmem:[%s1 + $0x7c] sm:$0xf]
  %v73 = vld [vmem:[%s1 + $0x80] sm:$0xf]
  %v74 = vld [vmem:[%s1 + $0x84] sm:$0xf]
  %v75 = vld [vmem:[%s1 + $0x88] sm:$0xf]
  %v76 = vld [vmem:[%s1 + $0x8c] sm:$0xf]
  %v77 = vld [vmem:[%s2] sm:$0x1]
  %v79 = vlaneseq
  %v80 = vshrl.u32 %v79, 7
  %v81 = vsub.s32 0, %v80
  %v82 = vrot.slane %v77, %v81
  %v110 = vunpack.c.l.b16 %v15
  %v111 = vunpack.c.h.b16 %v15
  %v112 = vunpack.c.l.b16 %v16
  %v113 = vunpack.c.l.b16 %v17
  %v114 = vunpack.c.h.b16 %v17
  %v115 = vunpack.c.l.b16 %v18
  %v116 = vunpack.c.l.b16 %v19
  %v117 = vunpack.c.h.b16 %v19
  %v118 = vunpack.c.l.b16 %v20
  %v119 = vunpack.c.l.b16 %v21
  %v120 = vunpack.c.h.b16 %v21
  %v121 = vunpack.c.l.b16 %v22
  %v122 = vunpack.c.l.b16 %v23
  %v123 = vunpack.c.h.b16 %v23
  %v124 = vunpack.c.l.b16 %v24
  %v125 = vunpack.c.l.b16 %v25
  %v126 = vunpack.c.h.b16 %v25
  %v127 = vunpack.c.l.b16 %v26
  %v128 = vunpack.c.l.b16 %v27
  %v129 = vunpack.c.h.b16 %v27
  %v130 = vunpack.c.l.b16 %v28
  %v131 = vunpack.c.l.b16 %v29
  %v132 = vunpack.c.h.b16 %v29
  %v133 = vunpack.c.l.b16 %v30
  %v134 = vunpack.c.l.b16 %v31
  %v135 = vunpack.c.h.b16 %v31
  %v136 = vunpack.c.l.b16 %v32
  %v137 = vunpack.c.l.b16 %v33
  %v138 = vunpack.c.h.b16 %v33
  %v139 = vunpack.c.l.b16 %v34
  %v140 = vunpack.c.l.b16 %v35
  %v141 = vunpack.c.h.b16 %v35
  %v142 = vunpack.c.l.b16 %v36
  %v143 = vunpack.c.l.b16 %v37
  %v144 = vunpack.c.h.b16 %v37
  %v145 = vunpack.c.l.b16 %v38
  %v146 = vunpack.c.l.b16 %v39
  %v147 = vunpack.c.h.b16 %v39
  %v148 = vunpack.c.l.b16 %v40
  %v149 = vpack.c.b16 %v113, %v110
  %v150 = vpack.c.b16 %v114, %v111
  %v151 = vpack.c.b16 %v115, %v112
  %v152 = vpack.c.b16 %v119, %v116
  %v153 = vpack.c.b16 %v120, %v117
  %v154 = vpack.c.b16 %v121, %v118
  %v155 = vpack.c.b16 %v125, %v122
  %v156 = vpack.c.b16 %v126, %v123
  %v157 = vpack.c.b16 %v127, %v124
  %v158 = vpack.c.b16 %v131, %v128
  %v159 = vpack.c.b16 %v132, %v129
  %v160 = vpack.c.b16 %v133, %v130
  %v161 = vpack.c.b16 %v137, %v134
  %v162 = vpack.c.b16 %v138, %v135
  %v163 = vpack.c.b16 %v139, %v136
  %v164 = vpack.c.b16 %v143, %v140
  %v165 = vpack.c.b16 %v144, %v141
  %v166 = vpack.c.b16 %v145, %v142
  %v167 = vpack.c.b16 %v146, %v146
  %v168 = vpack.c.b16 %v147, %v147
  %v169 = vpack.c.b16 %v148, %v148
  %v220 = vunpack.c.l.b16 %v41
  %v221 = vunpack.c.l.b16 %v42
  %v222 = vunpack.c.l.b16 %v43
  %v223 = vunpack.c.l.b16 %v44
  %v224 = vunpack.c.l.b16 %v45
  %v225 = vunpack.c.l.b16 %v46
  %v226 = vunpack.c.l.b16 %v47
  %v227 = vunpack.c.l.b16 %v48
  %v228 = vunpack.c.l.b16 %v49
  %v229 = vunpack.c.l.b16 %v50
  %v230 = vunpack.c.l.b16 %v51
  %v231 = vunpack.c.l.b16 %v52
  %v232 = vunpack.c.l.b16 %v53
  %v233 = vunpack.c.l.b16 %v54
  %v234 = vunpack.c.l.b16 %v55
  %v235 = vunpack.c.l.b16 %v56
  %v236 = vunpack.c.l.b16 %v57
  %v237 = vunpack.c.l.b16 %v58
  %v238 = vunpack.c.l.b16 %v59
  %v239 = vunpack.c.l.b16 %v60
  %v240 = vunpack.c.l.b16 %v61
  %v241 = vunpack.c.l.b16 %v62
  %v242 = vunpack.c.l.b16 %v63
  %v243 = vunpack.c.l.b16 %v64
  %v244 = vunpack.c.l.b16 %v65
  %v245 = vunpack.c.l.b16 %v66
  %v246 = vunpack.c.l.b16 %v67
  %v247 = vunpack.c.l.b16 %v68
  %v248 = vunpack.c.l.b16 %v69
  %v249 = vunpack.c.l.b16 %v70
  %v250 = vunpack.c.l.b16 %v71
  %v251 = vunpack.c.l.b16 %v72
  %v252 = vunpack.c.l.b16 %v73
  %v253 = vunpack.c.l.b16 %v74
  %v254 = vunpack.c.l.b16 %v75
  %v255 = vunpack.c.l.b16 %v76
  %v256 = vpack.c.b16 %v221, %v220
  %v257 = vpack.c.b16 %v223, %v222
  %v258 = vpack.c.b16 %v225, %v224
  %v259 = vpack.c.b16 %v227, %v226
  %v260 = vpack.c.b16 %v229, %v228
  %v261 = vpack.c.b16 %v231, %v230
  %v262 = vpack.c.b16 %v233, %v232
  %v263 = vpack.c.b16 %v235, %v234
  %v264 = vpack.c.b16 %v237, %v236
  %v265 = vpack.c.b16 %v239, %v238
  %v266 = vpack.c.b16 %v241, %v240
  %v267 = vpack.c.b16 %v243, %v242
  %v268 = vpack.c.b16 %v245, %v244
  %v269 = vpack.c.b16 %v247, %v246
  %v270 = vpack.c.b16 %v249, %v248
  %v271 = vpack.c.b16 %v251, %v250
  %v272 = vpack.c.b16 %v253, %v252
  %v273 = vpack.c.b16 %v255, %v254
  %vm292 = vcmask 261120
  %v294 = vsel %vm292, %v151, 0
  %v297 = vsel %vm292, %v154, 0
  %v300 = vsel %vm292, %v157, 0
  %v303 = vsel %vm292, %v160, 0
  %v306 = vsel %vm292, %v163, 0
  %v309 = vsel %vm292, %v166, 0
  %v312 = vsel %vm292, %v169, 0
  %314 = vmatprep.subr.bf16.mxu0 0
  %315 = vmatpush1.bf16.msra.mxu0 %v256
  %316 = vmatprep.subr.bf16.mxu0 0
  %317 = vmatpush1.bf16.msra.mxu0 %v257
  %318 = vmatprep.subr.bf16.mxu0 0
  %319 = vmatpush1.bf16.msra.mxu0 %v258
  %320 = vmatprep.subr.bf16.mxu0 0
  %321 = vmatpush1.bf16.msra.mxu0 %v259
  %322 = vmatprep.subr.bf16.mxu0 0
  %323 = vmatpush1.bf16.msra.mxu0 %v260
  %324 = vmatprep.subr.bf16.mxu0 0
  %325 = vmatpush1.bf16.msra.mxu0 %v261
  %326 = vmatprep.subr.bf16.mxu0 0
  %327 = vmatpush1.bf16.msra.mxu0 %v262
  %328 = vmatprep.subr.bf16.mxu0 0
  %329 = vmatpush1.bf16.msra.mxu0 %v263
  %330 = vmatprep.subr.bf16.mxu0 0
  %331 = vmatpush1.bf16.msra.mxu0 %v264
  %332 = vmatprep.subr.bf16.mxu0 0
  %333 = vmatpush1.bf16.msra.mxu0 %v265
  %334 = vmatprep.subr.bf16.mxu0 0
  %335 = vmatpush1.bf16.msra.mxu0 %v266
  %336 = vmatprep.subr.bf16.mxu0 0
  %337 = vmatpush1.bf16.msra.mxu0 %v267
  %338 = vmatprep.subr.bf16.mxu0 0
  %339 = vmatpush1.bf16.msra.mxu0 %v268
  %340 = vmatprep.subr.bf16.mxu0 0
  %341 = vmatpush1.bf16.msra.mxu0 %v269
  %342 = vmatprep.subr.bf16.mxu0 0
  %343 = vmatpush1.bf16.msra.mxu0 %v270
  %344 = vmatprep.subr.bf16.mxu0 0
  %345 = vmatpush1.bf16.msra.mxu0 %v271
  %346 = vmatprep.mubr.bf16.mxu0 %v150
  %347 = vmatmul.mubr.bf16.gmra.mrb[0].mxu0 %v149
  %v348 = vpop.f32.mrb[0].mxu0
  %v349 = vadd.f32 %v82, %v348
  %v350 = vpop.f32.mrb[0].mxu0
  %v351 = vpop.f32.mrb[0].mxu0
  %v352 = vadd.f32 %v82, %v351
  %v353 = vpop.f32.mrb[0].mxu0
  %354 = vmatprep.mubr.bf16.mxu0 %v153
  %355 = vmatmul.mubr.bf16.gmra.mrb[0].mxu0 %v152
  %v356 = vpop.f32.mrb[0].mxu0
  %v357 = vadd.f32 %v82, %v356
  %v358 = vpop.f32.mrb[0].mxu0
  %v359 = vpop.f32.mrb[0].mxu0
  %v360 = vadd.f32 %v82, %v359
  %v361 = vpop.f32.mrb[0].mxu0
  %362 = vmatprep.mubr.bf16.mxu0 %v156
  %363 = vmatmul.mubr.bf16.gmra.mrb[0].mxu0 %v155
  %v364 = vpop.f32.mrb[0].mxu0
  %v365 = vadd.f32 %v82, %v364
  %v366 = vpop.f32.mrb[0].mxu0
  %v367 = vpop.f32.mrb[0].mxu0
  %v368 = vadd.f32 %v82, %v367
  %v369 = vpop.f32.mrb[0].mxu0
  %370 = vmatprep.mubr.bf16.mxu0 %v159
  %371 = vmatmul.mubr.bf16.gmra.mrb[0].mxu0 %v158
  %v372 = vpop.f32.mrb[0].mxu0
  %v373 = vadd.f32 %v82, %v372
  %v374 = vpop.f32.mrb[0].mxu0
  %v375 = vpop.f32.mrb[0].mxu0
  %v376 = vadd.f32 %v82, %v375
  %v377 = vpop.f32.mrb[0].mxu0
  %378 = vmatprep.mubr.bf16.mxu0 %v162
  %379 = vmatmul.mubr.bf16.gmra.mrb[0].mxu0 %v161
  %v380 = vpop.f32.mrb[0].mxu0
  %v381 = vadd.f32 %v82, %v380
  %v382 = vpop.f32.mrb[0].mxu0
  %v383 = vpop.f32.mrb[0].mxu0
  %v384 = vadd.f32 %v82, %v383
  %v385 = vpop.f32.mrb[0].mxu0
  %386 = vmatprep.mubr.bf16.mxu0 %v165
  %387 = vmatmul.mubr.bf16.gmra.mrb[0].mxu0 %v164
  %v388 = vpop.f32.mrb[0].mxu0
  %v389 = vadd.f32 %v82, %v388
  %v390 = vpop.f32.mrb[0].mxu0
  %v391 = vpop.f32.mrb[0].mxu0
  %v392 = vadd.f32 %v82, %v391
  %v393 = vpop.f32.mrb[0].mxu0
  %394 = vmatprep.mubr.bf16.mxu0 %v168
  %395 = vmatmul.mubr.bf16.gmra.mrb[0].mxu0 %v167
  %v396 = vpop.f32.mrb[0].mxu0
  %v397 = vadd.f32 %v82, %v396
  %v398 = vpop.f32.mrb[0].mxu0
  %v399 = vpop.f32.mrb[0].mxu0
  %v400 = vpop.f32.mrb[0].mxu0
  %401 = vdwg.mxu0
  %402 = vmatprep.subr.bf16.mxu0 0
  %403 = vmatpush1.bf16.msra.mxu0 %v272
  %404 = vmatprep.subr.bf16.mxu0 0
  %405 = vmatpush1.bf16.msra.mxu0 %v273
  %406 = vmatprep.subr.bf16.mxu0 0
  %407 = vmatpush1.bf16.msra.mxu0 0
  %408 = vmatprep.subr.bf16.mxu0 0
  %409 = vmatpush1.bf16.msra.mxu0 0
  %410 = vmatprep.subr.bf16.mxu0 0
  %411 = vmatpush1.bf16.msra.mxu0 0
  %412 = vmatprep.subr.bf16.mxu0 0
  %413 = vmatpush1.bf16.msra.mxu0 0
  %414 = vmatprep.subr.bf16.mxu0 0
  %415 = vmatpush1.bf16.msra.mxu0 0
  %416 = vmatprep.subr.bf16.mxu0 0
  %417 = vmatpush1.bf16.msra.mxu0 0
  %418 = vmatprep.subr.bf16.mxu0 0
  %419 = vmatpush1.bf16.msra.mxu0 0
  %420 = vmatprep.subr.bf16.mxu0 0
  %421 = vmatpush1.bf16.msra.mxu0 0
  %422 = vmatprep.subr.bf16.mxu0 0
  %423 = vmatpush1.bf16.msra.mxu0 0
  %424 = vmatprep.subr.bf16.mxu0 0
  %425 = vmatpush1.bf16.msra.mxu0 0
  %426 = vmatprep.subr.bf16.mxu0 0
  %427 = vmatpush1.bf16.msra.mxu0 0
  %428 = vmatprep.subr.bf16.mxu0 0
  %429 = vmatpush1.bf16.msra.mxu0 0
  %430 = vmatprep.subr.bf16.mxu0 0
  %431 = vmatpush1.bf16.msra.mxu0 0
  %432 = vmatprep.subr.bf16.mxu0 0
  %433 = vmatpush1.bf16.msra.mxu0 0
  %434 = vmatprep.mubr.bf16.mxu0 0
  %435 = vmatmul.mubr.bf16.gmra.mrb[0].mxu0 %v294
  %v436 = vpop.f32.mrb[0].mxu0
  %v437 = vadd.f32 %v349, %v436
  %v438 = vpop.f32.mrb[0].mxu0
  %v439 = vpop.f32.mrb[0].mxu0
  %v440 = vadd.f32 %v352, %v439
  %v441 = vpop.f32.mrb[0].mxu0
  %442 = vmatprep.mubr.bf16.mxu0 0
  %443 = vmatmul.mubr.bf16.gmra.mrb[0].mxu0 %v297
  %v444 = vpop.f32.mrb[0].mxu0
  %v445 = vadd.f32 %v357, %v444
  %v446 = vpop.f32.mrb[0].mxu0
  %v447 = vpop.f32.mrb[0].mxu0
  %v448 = vadd.f32 %v360, %v447
  %v449 = vpop.f32.mrb[0].mxu0
  %450 = vmatprep.mubr.bf16.mxu0 0
  %451 = vmatmul.mubr.bf16.gmra.mrb[0].mxu0 %v300
  %v452 = vpop.f32.mrb[0].mxu0
  %v453 = vadd.f32 %v365, %v452
  %v454 = vpop.f32.mrb[0].mxu0
  %v455 = vpop.f32.mrb[0].mxu0
  %v456 = vadd.f32 %v368, %v455
  %v457 = vpop.f32.mrb[0].mxu0
  %458 = vmatprep.mubr.bf16.mxu0 0
  %459 = vmatmul.mubr.bf16.gmra.mrb[0].mxu0 %v303
  %v460 = vpop.f32.mrb[0].mxu0
  %v461 = vadd.f32 %v373, %v460
  %v462 = vpop.f32.mrb[0].mxu0
  %v463 = vpop.f32.mrb[0].mxu0
  %v464 = vadd.f32 %v376, %v463
  %v465 = vpop.f32.mrb[0].mxu0
  %466 = vmatprep.mubr.bf16.mxu0 0
  %467 = vmatmul.mubr.bf16.gmra.mrb[0].mxu0 %v306
  %v468 = vpop.f32.mrb[0].mxu0
  %v469 = vadd.f32 %v381, %v468
  %v470 = vpop.f32.mrb[0].mxu0
  %v471 = vpop.f32.mrb[0].mxu0
  %v472 = vadd.f32 %v384, %v471
  %v473 = vpop.f32.mrb[0].mxu0
  %474 = vmatprep.mubr.bf16.mxu0 0
  %475 = vmatmul.mubr.bf16.gmra.mrb[0].mxu0 %v309
  %v476 = vpop.f32.mrb[0].mxu0
  %v477 = vadd.f32 %v389, %v476
  %v478 = vpop.f32.mrb[0].mxu0
  %v479 = vpop.f32.mrb[0].mxu0
  %v480 = vadd.f32 %v392, %v479
  %v481 = vpop.f32.mrb[0].mxu0
  %482 = vmatprep.mubr.bf16.mxu0 0
  %483 = vmatmul.mubr.bf16.gmra.mrb[0].mxu0 %v312
  %v484 = vpop.f32.mrb[0].mxu0
  %v485 = vadd.f32 %v397, %v484
  %v486 = vpop.f32.mrb[0].mxu0
  %v487 = vpop.f32.mrb[0].mxu0
  %v488 = vpop.f32.mrb[0].mxu0
  %489 = vdwg.mxu0
  %v490 = vmax.f32 %v437, 0.0
  %v491 = vmax.f32 %v440, 0.0
  %v492 = vmax.f32 %v445, 0.0
  %v493 = vmax.f32 %v448, 0.0
  %v494 = vmax.f32 %v453, 0.0
  %v495 = vmax.f32 %v456, 0.0
  %v496 = vmax.f32 %v461, 0.0
  %v497 = vmax.f32 %v464, 0.0
  %v498 = vmax.f32 %v469, 0.0
  %v499 = vmax.f32 %v472, 0.0
  %v500 = vmax.f32 %v477, 0.0
  %v501 = vmax.f32 %v480, 0.0
  %v502 = vmax.f32 %v485, 0.0
  %v503 = vpack.c.bf16 %v491, %v490
  %v504 = vpack.c.bf16 %v493, %v492
  %v505 = vpack.c.bf16 %v495, %v494
  %v506 = vpack.c.bf16 %v497, %v496
  %v507 = vpack.c.bf16 %v499, %v498
  %v508 = vpack.c.bf16 %v501, %v500
  %v509 = vpack.c.bf16 %v502, %v502
  %v517 = vunpack.c.l.b16 %v503
  %v518 = vunpack.c.h.b16 %v503
  %v519 = vunpack.c.l.b16 %v504
  %v520 = vunpack.c.h.b16 %v504
  %v521 = vunpack.c.l.b16 %v505
  %v522 = vunpack.c.h.b16 %v505
  %v523 = vunpack.c.l.b16 %v506
  %v524 = vunpack.c.h.b16 %v506
  %v525 = vunpack.c.l.b16 %v507
  %v526 = vunpack.c.h.b16 %v507
  %v527 = vunpack.c.l.b16 %v508
  %v528 = vunpack.c.h.b16 %v508
  %v529 = vunpack.c.l.b16 %v509
  %v530 = vpack.c.b16 %v517, %v517
  %v531 = vpack.c.b16 %v518, %v518
  %v532 = vpack.c.b16 %v519, %v519
  %v533 = vpack.c.b16 %v520, %v520
  %v534 = vpack.c.b16 %v521, %v521
  %v535 = vpack.c.b16 %v522, %v522
  %v536 = vpack.c.b16 %v523, %v523
  %v537 = vpack.c.b16 %v524, %v524
  %v538 = vpack.c.b16 %v525, %v525
  %v539 = vpack.c.b16 %v526, %v526
  %v540 = vpack.c.b16 %v527, %v527
  %v541 = vpack.c.b16 %v528, %v528
  %v542 = vpack.c.b16 %v529, %v529
  %vm556 = vcmask 125952
  %557 = vst.msk [vmem:[%s3] sm:$0xf] %vm556, %v530
  %558 = vst.msk [vmem:[%s3 + $0x4] sm:$0xf] %vm556, %v531
  %559 = vst.msk [vmem:[%s3 + $0x8] sm:$0xf] %vm556, %v532
  %560 = vst.msk [vmem:[%s3 + $0xc] sm:$0xf] %vm556, %v533
  %561 = vst.msk [vmem:[%s3 + $0x10] sm:$0xf] %vm556, %v534
  %562 = vst.msk [vmem:[%s3 + $0x14] sm:$0xf] %vm556, %v535
  %563 = vst.msk [vmem:[%s3 + $0x18] sm:$0xf] %vm556, %v536
  %564 = vst.msk [vmem:[%s3 + $0x1c] sm:$0xf] %vm556, %v537
  %565 = vst.msk [vmem:[%s3 + $0x20] sm:$0xf] %vm556, %v538
  %566 = vst.msk [vmem:[%s3 + $0x24] sm:$0xf] %vm556, %v539
  %567 = vst.msk [vmem:[%s3 + $0x28] sm:$0xf] %vm556, %v540
  %568 = vst.msk [vmem:[%s3 + $0x2c] sm:$0xf] %vm556, %v541
  %vm569 = vcmask 122880
  %570 = vst.msk [vmem:[%s3 + $0x30] sm:$0x1] %vm569, %v542
  // Predicated region
  $region14: #{cnn_vae_forward.11} parent=0 // pred_check
    _
  $region15: #{cnn_vae_forward.11} parent=0 // pred_check_branch
    %572 = sbr.rel (0) target = $region17
  $region16: #{cnn_vae_forward.11} parent=0 // pred_region
    _
  $region17: #{cnn_vae_forward.11} parent=0 // pred_fallthru
    _
  // Predicated region
  $region18: #{cnn_vae_forward.11} parent=0 // pred_check
    _
  $region19: #{cnn_vae_forward.11} parent=0 // pred_check_branch
    %574 = sbr.rel (0) target = $region21
  $region20: #{cnn_vae_forward.11} parent=0 // pred_region
    _
  $region21: #{cnn_vae_forward.11} parent=0 // pred_fallthru
    _

// kernel: cnn_vae_forward.12
$region0: #{cnn_vae_forward.12}
  #allocation0 [shape = 'u32[]', space=smem, size = 0x4, offset = 0x4, fixed_abs, tag = 'smem constant byte address 0x4 - core index']
  #allocation1 [shape = 'u32[144,128]{1,0:T(1,128)}', space=vmem, size = 0x12000, scoped, tag = 'internal scratch']
  %s0 = inlined_call_operand.vmem [shape: bf16[392,144], index: 0, kind: input, shape index: {}]
  %s1 = inlined_call_operand.vmem [shape: bf16[144,8], index: 1, kind: input, shape index: {}]
  %s2 = inlined_call_operand.vmem [shape: f32[1,8], index: 2, kind: input, shape index: {}]
  %s3 = inlined_call_operand.vmem [shape: bf16[392,8], index: 3, kind: output, shape index: {}]
  %s4 = sld [smem:[#allocation0]]
  $region22: #{cnn_vae_forward.12} parent=0
    _
  %s6 = ssub.s32 1, %s4
  %s7 = scalar_select 0, %s6, %s4
  // Predicated region
  $region2: #{cnn_vae_forward.12} parent=0 // pred_check
    _
  $region3: #{cnn_vae_forward.12} parent=0 // pred_check_branch
    %9 = sbr.rel (0) target = $region5
  $region4: #{cnn_vae_forward.12} parent=0 // pred_region
    _
  $region5: #{cnn_vae_forward.12} parent=0 // pred_fallthru
    _
  // Predicated region
  $region6: #{cnn_vae_forward.12} parent=0 // pred_check
    _
  $region7: #{cnn_vae_forward.12} parent=0 // pred_check_branch
    %11 = sbr.rel (0) target = $region9
  $region8: #{cnn_vae_forward.12} parent=0 // pred_region
    _
  $region9: #{cnn_vae_forward.12} parent=0 // pred_fallthru
    _
  // Predicated region
  $region10: #{cnn_vae_forward.12} parent=0 // pred_check
    _
  $region11: #{cnn_vae_forward.12} parent=0 // pred_check_branch
    %13 = sbr.rel (0) target = $region13
  $region12: #{cnn_vae_forward.12} parent=0 // pred_region
    _
  $region13: #{cnn_vae_forward.12} parent=0 // pred_fallthru
    _
  %v15 = vld [vmem:[%s0] sm:$0xff]
  %v16 = vld [vmem:[%s0 + $0x8] sm:$0xff]
  %v17 = vld [vmem:[%s0 + $0x10] sm:$0xff]
  %v18 = vld [vmem:[%s0 + $0x18] sm:$0xff]
  %v19 = vld [vmem:[%s0 + $0x20] sm:$0xff]
  %v20 = vld [vmem:[%s0 + $0x28] sm:$0xff]
  %v21 = vld [vmem:[%s0 + $0x30] sm:$0xff]
  %v22 = vld [vmem:[%s0 + $0x38] sm:$0xff]
  %v23 = vld [vmem:[%s0 + $0x40] sm:$0xff]
  %v24 = vld [vmem:[%s0 + $0x48] sm:$0xff]
  %v25 = vld [vmem:[%s0 + $0x50] sm:$0xff]
  %v26 = vld [vmem:[%s0 + $0x58] sm:$0xff]
  %v27 = vld [vmem:[%s0 + $0x60] sm:$0xff]
  %v28 = vld [vmem:[%s0 + $0x68] sm:$0xff]
  %v29 = vld [vmem:[%s0 + $0x70] sm:$0xff]
  %v30 = vld [vmem:[%s0 + $0x78] sm:$0xff]
  %v31 = vld [vmem:[%s0 + $0x80] sm:$0xff]
  %v32 = vld [vmem:[%s0 + $0x88] sm:$0xff]
  %v33 = vld [vmem:[%s0 + $0x90] sm:$0xff]
  %v34 = vld [vmem:[%s0 + $0x98] sm:$0xff]
  %v35 = vld [vmem:[%s0 + $0xa0] sm:$0xff]
  %v36 = vld [vmem:[%s0 + $0xa8] sm:$0xff]
  %v37 = vld [vmem:[%s0 + $0xb0] sm:$0xff]
  %v38 = vld [vmem:[%s0 + $0xb8] sm:$0xff]
  %v39 = vld [vmem:[%s0 + $0xc0] sm:$0xff]
  %v40 = vld [vmem:[%s0 + $0xc8] sm:$0xff]
  %v41 = vld [vmem:[%s0 + $0xd0] sm:$0xff]
  %v42 = vld [vmem:[%s0 + $0xd8] sm:$0xff]
  %v43 = vld [vmem:[%s0 + $0xe0] sm:$0xff]
  %v44 = vld [vmem:[%s0 + $0xe8] sm:$0xff]
  %v45 = vld [vmem:[%s0 + $0xf0] sm:$0xff]
  %v46 = vld [vmem:[%s0 + $0xf8] sm:$0xff]
  %v47 = vld [vmem:[%s0 + $0x100] sm:$0xff]
  %v48 = vld [vmem:[%s0 + $0x108] sm:$0xff]
  %v49 = vld [vmem:[%s0 + $0x110] sm:$0xff]
  %v50 = vld [vmem:[%s0 + $0x118] sm:$0xff]
  %v51 = vld [vmem:[%s0 + $0x120] sm:$0xff]
  %v52 = vld [vmem:[%s0 + $0x128] sm:$0xff]
  %v53 = vld [vmem:[%s0 + $0x130] sm:$0xff]
  %v54 = vld [vmem:[%s0 + $0x138] sm:$0xff]
  %v55 = vld [vmem:[%s0 + $0x140] sm:$0xff]
  %v56 = vld [vmem:[%s0 + $0x148] sm:$0xff]
  %v57 = vld [vmem:[%s0 + $0x150] sm:$0xff]
  %v58 = vld [vmem:[%s0 + $0x158] sm:$0xff]
  %v59 = vld [vmem:[%s0 + $0x160] sm:$0xff]
  %v60 = vld [vmem:[%s0 + $0x168] sm:$0xff]
  %v61 = vld [vmem:[%s0 + $0x170] sm:$0xff]
  %v62 = vld [vmem:[%s0 + $0x178] sm:$0xff]
  %v63 = vld [vmem:[%s0 + $0x180] sm:$0xff]
  %v64 = vld [vmem:[%s1] sm:$0xf]
  %v65 = vld [vmem:[%s1 + $0x4] sm:$0xf]
  %v66 = vld [vmem:[%s1 + $0x8] sm:$0xf]
  %v67 = vld [vmem:[%s1 + $0xc] sm:$0xf]
  %v68 = vld [vmem:[%s1 + $0x10] sm:$0xf]
  %v69 = vld [vmem:[%s1 + $0x14] sm:$0xf]
  %v70 = vld [vmem:[%s1 + $0x18] sm:$0xf]
  %v71 = vld [vmem:[%s1 + $0x1c] sm:$0xf]
  %v72 = vld [vmem:[%s1 + $0x20] sm:$0xf]
  %v73 = vld [vmem:[%s1 + $0x24] sm:$0xf]
  %v74 = vld [vmem:[%s1 + $0x28] sm:$0xf]
  %v75 = vld [vmem:[%s1 + $0x2c] sm:$0xf]
  %v76 = vld [vmem:[%s1 + $0x30] sm:$0xf]
  %v77 = vld [vmem:[%s1 + $0x34] sm:$0xf]
  %v78 = vld [vmem:[%s1 + $0x38] sm:$0xf]
  %v79 = vld [vmem:[%s1 + $0x3c] sm:$0xf]
  %v80 = vld [vmem:[%s1 + $0x40] sm:$0xf]
  %v81 = vld [vmem:[%s1 + $0x44] sm:$0xf]
  %v82 = vld [vmem:[%s2] sm:$0x1]
  %v84 = vlaneseq
  %v85 = vshrl.u32 %v84, 7
  %v86 = vsub.s32 0, %v85
  %v87 = vrot.slane %v82, %v86
  %v138 = vunpack.c.l.b16 %v15
  %v139 = vunpack.c.h.b16 %v15
  %v140 = vunpack.c.l.b16 %v16
  %v141 = vunpack.c.h.b16 %v16
  %v142 = vunpack.c.l.b16 %v17
  %v143 = vunpack.c.h.b16 %v17
  %v144 = vunpack.c.l.b16 %v18
  %v145 = vunpack.c.h.b16 %v18
  %v146 = vunpack.c.l.b16 %v19
  %v147 = vunpack.c.h.b16 %v19
  %v148 = vunpack.c.l.b16 %v20
  %v149 = vunpack.c.h.b16 %v20
  %v150 = vunpack.c.l.b16 %v21
  %v151 = vunpack.c.h.b16 %v21
  %v152 = vunpack.c.l.b16 %v22
  %v153 = vunpack.c.h.b16 %v22
  %v154 = vunpack.c.l.b16 %v23
  %v155 = vunpack.c.h.b16 %v23
  %v156 = vunpack.c.l.b16 %v24
  %v157 = vunpack.c.h.b16 %v24
  %v158 = vunpack.c.l.b16 %v25
  %v159 = vunpack.c.h.b16 %v25
  %v160 = vunpack.c.l.b16 %v26
  %v161 = vunpack.c.h.b16 %v26
  %v162 = vunpack.c.l.b16 %v27
  %v163 = vunpack.c.h.b16 %v27
  %v164 = vunpack.c.l.b16 %v28
  %v165 = vunpack.c.h.b16 %v28
  %v166 = vunpack.c.l.b16 %v29
  %v167 = vunpack.c.h.b16 %v29
  %v168 = vunpack.c.l.b16 %v30
  %v169 = vunpack.c.h.b16 %v30
  %v170 = vunpack.c.l.b16 %v31
  %v171 = vunpack.c.h.b16 %v31
  %v172 = vunpack.c.l.b16 %v32
  %v173 = vunpack.c.h.b16 %v32
  %v174 = vunpack.c.l.b16 %v33
  %v175 = vunpack.c.h.b16 %v33
  %v176 = vunpack.c.l.b16 %v34
  %v177 = vunpack.c.h.b16 %v34
  %v178 = vunpack.c.l.b16 %v35
  %v179 = vunpack.c.h.b16 %v35
  %v180 = vunpack.c.l.b16 %v36
  %v181 = vunpack.c.h.b16 %v36
  %v182 = vunpack.c.l.b16 %v37
  %v183 = vunpack.c.h.b16 %v37
  %v184 = vunpack.c.l.b16 %v38
  %v185 = vunpack.c.h.b16 %v38
  %v186 = vunpack.c.l.b16 %v39
  %v187 = vunpack.c.h.b16 %v39
  %v188 = vunpack.c.l.b16 %v40
  %v189 = vunpack.c.h.b16 %v40
  %v190 = vunpack.c.l.b16 %v41
  %v191 = vunpack.c.h.b16 %v41
  %v192 = vunpack.c.l.b16 %v42
  %v193 = vunpack.c.h.b16 %v42
  %v194 = vunpack.c.l.b16 %v43
  %v195 = vunpack.c.h.b16 %v43
  %v196 = vunpack.c.l.b16 %v44
  %v197 = vunpack.c.h.b16 %v44
  %v198 = vunpack.c.l.b16 %v45
  %v199 = vunpack.c.h.b16 %v45
  %v200 = vunpack.c.l.b16 %v46
  %v201 = vunpack.c.h.b16 %v46
  %v202 = vunpack.c.l.b16 %v47
  %v203 = vunpack.c.h.b16 %v47
  %v204 = vunpack.c.l.b16 %v48
  %v205 = vunpack.c.h.b16 %v48
  %v206 = vunpack.c.l.b16 %v49
  %v207 = vunpack.c.h.b16 %v49
  %v208 = vunpack.c.l.b16 %v50
  %v209 = vunpack.c.h.b16 %v50
  %v210 = vunpack.c.l.b16 %v51
  %v211 = vunpack.c.h.b16 %v51
  %v212 = vunpack.c.l.b16 %v52
  %v213 = vunpack.c.h.b16 %v52
  %v214 = vunpack.c.l.b16 %v53
  %v215 = vunpack.c.h.b16 %v53
  %v216 = vunpack.c.l.b16 %v54
  %v217 = vunpack.c.h.b16 %v54
  %v218 = vunpack.c.l.b16 %v55
  %v219 = vunpack.c.h.b16 %v55
  %v220 = vunpack.c.l.b16 %v56
  %v221 = vunpack.c.h.b16 %v56
  %v222 = vunpack.c.l.b16 %v57
  %v223 = vunpack.c.h.b16 %v57
  %v224 = vunpack.c.l.b16 %v58
  %v225 = vunpack.c.h.b16 %v58
  %v226 = vunpack.c.l.b16 %v59
  %v227 = vunpack.c.h.b16 %v59
  %v228 = vunpack.c.l.b16 %v60
  %v229 = vunpack.c.h.b16 %v60
  %v230 = vunpack.c.l.b16 %v61
  %v231 = vunpack.c.h.b16 %v61
  %v232 = vunpack.c.l.b16 %v62
  %v233 = vunpack.c.h.b16 %v62
  %v234 = vunpack.c.l.b16 %v63
  %v235 = vunpack.c.h.b16 %v63
  %v236 = vpack.c.b16 %v140, %v138
  %v237 = vpack.c.b16 %v141, %v139
  %v238 = vpack.c.b16 %v144, %v142
  %v239 = vpack.c.b16 %v145, %v143
  %v240 = vpack.c.b16 %v148, %v146
  %v241 = vpack.c.b16 %v149, %v147
  %v242 = vpack.c.b16 %v152, %v150
  %v243 = vpack.c.b16 %v153, %v151
  %v244 = vpack.c.b16 %v156, %v154
  %v245 = vpack.c.b16 %v157, %v155
  %v246 = vpack.c.b16 %v160, %v158
  %v247 = vpack.c.b16 %v161, %v159
  %v248 = vpack.c.b16 %v164, %v162
  %v249 = vpack.c.b16 %v165, %v163
  %v250 = vpack.c.b16 %v168, %v166
  %v251 = vpack.c.b16 %v169, %v167
  %v252 = vpack.c.b16 %v172, %v170
  %v253 = vpack.c.b16 %v173, %v171
  %v254 = vpack.c.b16 %v176, %v174
  %v255 = vpack.c.b16 %v177, %v175
  %v256 = vpack.c.b16 %v180, %v178
  %v257 = vpack.c.b16 %v181, %v179
  %v258 = vpack.c.b16 %v184, %v182
  %v259 = vpack.c.b16 %v185, %v183
  %v260 = vpack.c.b16 %v188, %v186
  %v261 = vpack.c.b16 %v189, %v187
  %v262 = vpack.c.b16 %v192, %v190
  %v263 = vpack.c.b16 %v193, %v191
  %v264 = vpack.c.b16 %v196, %v194
  %v265 = vpack.c.b16 %v197, %v195
  %v266 = vpack.c.b16 %v200, %v198
  %v267 = vpack.c.b16 %v201, %v199
  %v268 = vpack.c.b16 %v204, %v202
  %v269 = vpack.c.b16 %v205, %v203
  %v270 = vpack.c.b16 %v208, %v206
  %v271 = vpack.c.b16 %v209, %v207
  %v272 = vpack.c.b16 %v212, %v210
  %v273 = vpack.c.b16 %v213, %v211
  %v274 = vpack.c.b16 %v216, %v214
  %v275 = vpack.c.b16 %v217, %v215
  %v276 = vpack.c.b16 %v220, %v218
  %v277 = vpack.c.b16 %v221, %v219
  %v278 = vpack.c.b16 %v224, %v222
  %v279 = vpack.c.b16 %v225, %v223
  %v280 = vpack.c.b16 %v228, %v226
  %v281 = vpack.c.b16 %v229, %v227
  %v282 = vpack.c.b16 %v232, %v230
  %v283 = vpack.c.b16 %v233, %v231
  %v284 = vpack.c.b16 %v234, %v234
  %v285 = vpack.c.b16 %v235, %v235
  %v329 = vunpack.c.l.b16 %v64
  %v330 = vunpack.c.l.b16 %v65
  %v331 = vunpack.c.l.b16 %v66
  %v332 = vunpack.c.l.b16 %v67
  %v333 = vunpack.c.l.b16 %v68
  %v334 = vunpack.c.l.b16 %v69
  %v335 = vunpack.c.l.b16 %v70
  %v336 = vunpack.c.l.b16 %v71
  %v337 = vunpack.c.l.b16 %v72
  %v338 = vunpack.c.l.b16 %v73
  %v339 = vunpack.c.l.b16 %v74
  %v340 = vunpack.c.l.b16 %v75
  %v341 = vunpack.c.l.b16 %v76
  %v342 = vunpack.c.l.b16 %v77
  %v343 = vunpack.c.l.b16 %v78
  %v344 = vunpack.c.l.b16 %v79
  %v345 = vunpack.c.l.b16 %v80
  %v346 = vunpack.c.l.b16 %v81
  %v347 = vpack.c.b16 %v330, %v329
  %v348 = vpack.c.b16 %v332, %v331
  %v349 = vpack.c.b16 %v334, %v333
  %v350 = vpack.c.b16 %v336, %v335
  %v351 = vpack.c.b16 %v338, %v337
  %v352 = vpack.c.b16 %v340, %v339
  %v353 = vpack.c.b16 %v342, %v341
  %v354 = vpack.c.b16 %v344, %v343
  %v355 = vpack.c.b16 %v346, %v345
  %vm365 = vcmask 130048
  %v367 = vsel %vm365, %v237, 0
  %v370 = vsel %vm365, %v239, 0
  %v373 = vsel %vm365, %v241, 0
  %v376 = vsel %vm365, %v243, 0
  %v379 = vsel %vm365, %v245, 0
  %v382 = vsel %vm365, %v247, 0
  %v385 = vsel %vm365, %v249, 0
  %v388 = vsel %vm365, %v251, 0
  %v391 = vsel %vm365, %v253, 0
  %v394 = vsel %vm365, %v255, 0
  %v397 = vsel %vm365, %v257, 0
  %v400 = vsel %vm365, %v259, 0
  %v403 = vsel %vm365, %v261, 0
  %v406 = vsel %vm365, %v263, 0
  %v409 = vsel %vm365, %v265, 0
  %v412 = vsel %vm365, %v267, 0
  %v415 = vsel %vm365, %v269, 0
  %v418 = vsel %vm365, %v271, 0
  %v421 = vsel %vm365, %v273, 0
  %v424 = vsel %vm365, %v275, 0
  %v427 = vsel %vm365, %v277, 0
  %v430 = vsel %vm365, %v279, 0
  %v433 = vsel %vm365, %v281, 0
  %v436 = vsel %vm365, %v283, 0
  %v439 = vsel %vm365, %v285, 0
  %441 = vmatprep.subr.bf16.mxu0 0
  %442 = vmatpush1.bf16.msra.mxu0 %v347
  %443 = vmatprep.subr.bf16.mxu0 0
  %444 = vmatpush1.bf16.msra.mxu0 %v348
  %445 = vmatprep.subr.bf16.mxu0 0
  %446 = vmatpush1.bf16.msra.mxu0 %v349
  %447 = vmatprep.subr.bf16.mxu0 0
  %448 = vmatpush1.bf16.msra.mxu0 %v350
  %449 = vmatprep.subr.bf16.mxu0 0
  %450 = vmatpush1.bf16.msra.mxu0 %v351
  %451 = vmatprep.subr.bf16.mxu0 0
  %452 = vmatpush1.bf16.msra.mxu0 %v352
  %453 = vmatprep.subr.bf16.mxu0 0
  %454 = vmatpush1.bf16.msra.mxu0 %v353
  %455 = vmatprep.subr.bf16.mxu0 0
  %456 = vmatpush1.bf16.msra.mxu0 %v354
  %457 = vmatprep.subr.bf16.mxu0 0
  %458 = vmatpush1.bf16.msra.mxu0 %v355
  %459 = vmatprep.subr.bf16.mxu0 0
  %460 = vmatpush1.bf16.msra.mxu0 0
  %461 = vmatprep.subr.bf16.mxu0 0
  %462 = vmatpush1.bf16.msra.mxu0 0
  %463 = vmatprep.subr.bf16.mxu0 0
  %464 = vmatpush1.bf16.msra.mxu0 0
  %465 = vmatprep.subr.bf16.mxu0 0
  %466 = vmatpush1.bf16.msra.mxu0 0
  %467 = vmatprep.subr.bf16.mxu0 0
  %468 = vmatpush1.bf16.msra.mxu0 0
  %469 = vmatprep.subr.bf16.mxu0 0
  %470 = vmatpush1.bf16.msra.mxu0 0
  %471 = vmatprep.subr.bf16.mxu0 0
  %472 = vmatpush1.bf16.msra.mxu0 0
  %473 = vmatprep.mubr.bf16.mxu0 %v367
  %474 = vmatmul.mubr.bf16.gmra.mrb[0].mxu0 %v236
  %v475 = vpop.f32.mrb[0].mxu0
  %v476 = vadd.f32 %v87, %v475
  %v477 = vpop.f32.mrb[0].mxu0
  %v478 = vpop.f32.mrb[0].mxu0
  %v479 = vadd.f32 %v87, %v478
  %v480 = vpop.f32.mrb[0].mxu0
  %481 = vmatprep.mubr.bf16.mxu0 %v370
  %482 = vmatmul.mubr.bf16.gmra.mrb[0].mxu0 %v238
  %v483 = vpop.f32.mrb[0].mxu0
  %v484 = vadd.f32 %v87, %v483
  %v485 = vpop.f32.mrb[0].mxu0
  %v486 = vpop.f32.mrb[0].mxu0
  %v487 = vadd.f32 %v87, %v486
  %v488 = vpop.f32.mrb[0].mxu0
  %489 = vmatprep.mubr.bf16.mxu0 %v373
  %490 = vmatmul.mubr.bf16.gmra.mrb[0].mxu0 %v240
  %v491 = vpop.f32.mrb[0].mxu0
  %v492 = vadd.f32 %v87, %v491
  %v493 = vpop.f32.mrb[0].mxu0
  %v494 = vpop.f32.mrb[0].mxu0
  %v495 = vadd.f32 %v87, %v494
  %v496 = vpop.f32.mrb[0].mxu0
  %497 = vmatprep.mubr.bf16.mxu0 %v376
  %498 = vmatmul.mubr.bf16.gmra.mrb[0].mxu0 %v242
  %v499 = vpop.f32.mrb[0].mxu0
  %v500 = vadd.f32 %v87, %v499
  %v501 = vpop.f32.mrb[0].mxu0
  %v502 = vpop.f32.mrb[0].mxu0
  %v503 = vadd.f32 %v87, %v502
  %v504 = vpop.f32.mrb[0].mxu0
  %505 = vmatprep.mubr.bf16.mxu0 %v379
  %506 = vmatmul.mubr.bf16.gmra.mrb[0].mxu0 %v244
  %v507 = vpop.f32.mrb[0].mxu0
  %v508 = vadd.f32 %v87, %v507
  %v509 = vpop.f32.mrb[0].mxu0
  %v510 = vpop.f32.mrb[0].mxu0
  %v511 = vadd.f32 %v87, %v510
  %v512 = vpop.f32.mrb[0].mxu0
  %513 = vmatprep.mubr.bf16.mxu0 %v382
  %514 = vmatmul.mubr.bf16.gmra.mrb[0].mxu0 %v246
  %v515 = vpop.f32.mrb[0].mxu0
  %v516 = vadd.f32 %v87, %v515
  %v517 = vpop.f32.mrb[0].mxu0
  %v518 = vpop.f32.mrb[0].mxu0
  %v519 = vadd.f32 %v87, %v518
  %v520 = vpop.f32.mrb[0].mxu0
  %521 = vmatprep.mubr.bf16.mxu0 %v385
  %522 = vmatmul.mubr.bf16.gmra.mrb[0].mxu0 %v248
  %v523 = vpop.f32.mrb[0].mxu0
  %v524 = vadd.f32 %v87, %v523
  %v525 = vpop.f32.mrb[0].mxu0
  %v526 = vpop.f32.mrb[0].mxu0
  %v527 = vadd.f32 %v87, %v526
  %v528 = vpop.f32.mrb[0].mxu0
  %529 = vmatprep.mubr.bf16.mxu0 %v388
  %530 = vmatmul.mubr.bf16.gmra.mrb[0].mxu0 %v250
  %v531 = vpop.f32.mrb[0].mxu0
  %v532 = vadd.f32 %v87, %v531
  %v533 = vpop.f32.mrb[0].mxu0
  %v534 = vpop.f32.mrb[0].mxu0
  %v535 = vadd.f32 %v87, %v534
  %v536 = vpop.f32.mrb[0].mxu0
  %537 = vmatprep.mubr.bf16.mxu0 %v391
  %538 = vmatmul.mubr.bf16.gmra.mrb[0].mxu0 %v252
  %v539 = vpop.f32.mrb[0].mxu0
  %v540 = vadd.f32 %v87, %v539
  %v541 = vpop.f32.mrb[0].mxu0
  %v542 = vpop.f32.mrb[0].mxu0
  %v543 = vadd.f32 %v87, %v542
  %v544 = vpop.f32.mrb[0].mxu0
  %545 = vmatprep.mubr.bf16.mxu0 %v394
  %546 = vmatmul.mubr.bf16.gmra.mrb[0].mxu0 %v254
  %v547 = vpop.f32.mrb[0].mxu0
  %v548 = vadd.f32 %v87, %v547
  %v549 = vpop.f32.mrb[0].mxu0
  %v550 = vpop.f32.mrb[0].mxu0
  %v551 = vadd.f32 %v87, %v550
  %v552 = vpop.f32.mrb[0].mxu0
  %553 = vmatprep.mubr.bf16.mxu0 %v397
  %554 = vmatmul.mubr.bf16.gmra.mrb[0].mxu0 %v256
  %v555 = vpop.f32.mrb[0].mxu0
  %v556 = vadd.f32 %v87, %v555
  %v557 = vpop.f32.mrb[0].mxu0
  %v558 = vpop.f32.mrb[0].mxu0
  %v559 = vadd.f32 %v87, %v558
  %v560 = vpop.f32.mrb[0].mxu0
  %561 = vmatprep.mubr.bf16.mxu0 %v400
  %562 = vmatmul.mubr.bf16.gmra.mrb[0].mxu0 %v258
  %v563 = vpop.f32.mrb[0].mxu0
  %v564 = vadd.f32 %v87, %v563
  %v565 = vpop.f32.mrb[0].mxu0
  %v566 = vpop.f32.mrb[0].mxu0
  %v567 = vadd.f32 %v87, %v566
  %v568 = vpop.f32.mrb[0].mxu0
  %569 = vmatprep.mubr.bf16.mxu0 %v403
  %570 = vmatmul.mubr.bf16.gmra.mrb[0].mxu0 %v260
  %v571 = vpop.f32.mrb[0].mxu0
  %v572 = vadd.f32 %v87, %v571
  %v573 = vpop.f32.mrb[0].mxu0
  %v574 = vpop.f32.mrb[0].mxu0
  %v575 = vadd.f32 %v87, %v574
  %v576 = vpop.f32.mrb[0].mxu0
  %577 = vmatprep.mubr.bf16.mxu0 %v406
  %578 = vmatmul.mubr.bf16.gmra.mrb[0].mxu0 %v262
  %v579 = vpop.f32.mrb[0].mxu0
  %v580 = vadd.f32 %v87, %v579
  %v581 = vpop.f32.mrb[0].mxu0
  %v582 = vpop.f32.mrb[0].mxu0
  %v583 = vadd.f32 %v87, %v582
  %v584 = vpop.f32.mrb[0].mxu0
  %585 = vmatprep.mubr.bf16.mxu0 %v409
  %586 = vmatmul.mubr.bf16.gmra.mrb[0].mxu0 %v264
  %v587 = vpop.f32.mrb[0].mxu0
  %v588 = vadd.f32 %v87, %v587
  %v589 = vpop.f32.mrb[0].mxu0
  %v590 = vpop.f32.mrb[0].mxu0
  %v591 = vadd.f32 %v87, %v590
  %v592 = vpop.f32.mrb[0].mxu0
  %593 = vmatprep.mubr.bf16.mxu0 %v412
  %594 = vmatmul.mubr.bf16.gmra.mrb[0].mxu0 %v266
  %v595 = vpop.f32.mrb[0].mxu0
  %v596 = vadd.f32 %v87, %v595
  %v597 = vpop.f32.mrb[0].mxu0
  %v598 = vpop.f32.mrb[0].mxu0
  %v599 = vadd.f32 %v87, %v598
  %v600 = vpop.f32.mrb[0].mxu0
  %601 = vmatprep.mubr.bf16.mxu0 %v415
  %602 = vmatmul.mubr.bf16.gmra.mrb[0].mxu0 %v268
  %v603 = vpop.f32.mrb[0].mxu0
  %v604 = vadd.f32 %v87, %v603
  %v605 = vpop.f32.mrb[0].mxu0
  %v606 = vpop.f32.mrb[0].mxu0
  %v607 = vadd.f32 %v87, %v606
  %v608 = vpop.f32.mrb[0].mxu0
  %609 = vmatprep.mubr.bf16.mxu0 %v418
  %610 = vmatmul.mubr.bf16.gmra.mrb[0].mxu0 %v270
  %v611 = vpop.f32.mrb[0].mxu0
  %v612 = vadd.f32 %v87, %v611
  %v613 = vpop.f32.mrb[0].mxu0
  %v614 = vpop.f32.mrb[0].mxu0
  %v615 = vadd.f32 %v87, %v614
  %v616 = vpop.f32.mrb[0].mxu0
  %617 = vmatprep.mubr.bf16.mxu0 %v421
  %618 = vmatmul.mubr.bf16.gmra.mrb[0].mxu0 %v272
  %v619 = vpop.f32.mrb[0].mxu0
  %v620 = vadd.f32 %v87, %v619
  %v621 = vpop.f32.mrb[0].mxu0
  %v622 = vpop.f32.mrb[0].mxu0
  %v623 = vadd.f32 %v87, %v622
  %v624 = vpop.f32.mrb[0].mxu0
  %625 = vmatprep.mubr.bf16.mxu0 %v424
  %626 = vmatmul.mubr.bf16.gmra.mrb[0].mxu0 %v274
  %v627 = vpop.f32.mrb[0].mxu0
  %v628 = vadd.f32 %v87, %v627
  %v629 = vpop.f32.mrb[0].mxu0
  %v630 = vpop.f32.mrb[0].mxu0
  %v631 = vadd.f32 %v87, %v630
  %v632 = vpop.f32.mrb[0].mxu0
  %633 = vmatprep.mubr.bf16.mxu0 %v427
  %634 = vmatmul.mubr.bf16.gmra.mrb[0].mxu0 %v276
  %v635 = vpop.f32.mrb[0].mxu0
  %v636 = vadd.f32 %v87, %v635
  %v637 = vpop.f32.mrb[0].mxu0
  %v638 = vpop.f32.mrb[0].mxu0
  %v639 = vadd.f32 %v87, %v638
  %v640 = vpop.f32.mrb[0].mxu0
  %641 = vmatprep.mubr.bf16.mxu0 %v430
  %642 = vmatmul.mubr.bf16.gmra.mrb[0].mxu0 %v278
  %v643 = vpop.f32.mrb[0].mxu0
  %v644 = vadd.f32 %v87, %v643
  %v645 = vpop.f32.mrb[0].mxu0
  %v646 = vpop.f32.mrb[0].mxu0
  %v647 = vadd.f32 %v87, %v646
  %v648 = vpop.f32.mrb[0].mxu0
  %649 = vmatprep.mubr.bf16.mxu0 %v433
  %650 = vmatmul.mubr.bf16.gmra.mrb[0].mxu0 %v280
  %v651 = vpop.f32.mrb[0].mxu0
  %v652 = vadd.f32 %v87, %v651
  %v653 = vpop.f32.mrb[0].mxu0
  %v654 = vpop.f32.mrb[0].mxu0
  %v655 = vadd.f32 %v87, %v654
  %v656 = vpop.f32.mrb[0].mxu0
  %657 = vmatprep.mubr.bf16.mxu0 %v436
  %658 = vmatmul.mubr.bf16.gmra.mrb[0].mxu0 %v282
  %v659 = vpop.f32.mrb[0].mxu0
  %v660 = vadd.f32 %v87, %v659
  %v661 = vpop.f32.mrb[0].mxu0
  %v662 = vpop.f32.mrb[0].mxu0
  %v663 = vadd.f32 %v87, %v662
  %v664 = vpop.f32.mrb[0].mxu0
  %665 = vmatprep.mubr.bf16.mxu0 %v439
  %666 = vmatmul.mubr.bf16.gmra.mrb[0].mxu0 %v284
  %v667 = vpop.f32.mrb[0].mxu0
  %v668 = vadd.f32 %v87, %v667
  %v669 = vpop.f32.mrb[0].mxu0
  %v670 = vpop.f32.mrb[0].mxu0
  %v671 = vpop.f32.mrb[0].mxu0
  %672 = vdwg.mxu0
  %v673 = vmax.f32 %v476, 0.0
  %v674 = vmax.f32 %v479, 0.0
  %v675 = vmax.f32 %v484, 0.0
  %v676 = vmax.f32 %v487, 0.0
  %v677 = vmax.f32 %v492, 0.0
  %v678 = vmax.f32 %v495, 0.0
  %v679 = vmax.f32 %v500, 0.0
  %v680 = vmax.f32 %v503, 0.0
  %v681 = vmax.f32 %v508, 0.0
  %v682 = vmax.f32 %v511, 0.0
  %v683 = vmax.f32 %v516, 0.0
  %v684 = vmax.f32 %v519, 0.0
  %v685 = vmax.f32 %v524, 0.0
  %v686 = vmax.f32 %v527, 0.0
  %v687 = vmax.f32 %v532, 0.0
  %v688 = vmax.f32 %v535, 0.0
  %v689 = vmax.f32 %v540, 0.0
  %v690 = vmax.f32 %v543, 0.0
  %v691 = vmax.f32 %v548, 0.0
  %v692 = vmax.f32 %v551, 0.0
  %v693 = vmax.f32 %v556, 0.0
  %v694 = vmax.f32 %v559, 0.0
  %v695 = vmax.f32 %v564, 0.0
  %v696 = vmax.f32 %v567, 0.0
  %v697 = vmax.f32 %v572, 0.0
  %v698 = vmax.f32 %v575, 0.0
  %v699 = vmax.f32 %v580, 0.0
  %v700 = vmax.f32 %v583, 0.0
  %v701 = vmax.f32 %v588, 0.0
  %v702 = vmax.f32 %v591, 0.0
  %v703 = vmax.f32 %v596, 0.0
  %v704 = vmax.f32 %v599, 0.0
  %v705 = vmax.f32 %v604, 0.0
  %v706 = vmax.f32 %v607, 0.0
  %v707 = vmax.f32 %v612, 0.0
  %v708 = vmax.f32 %v615, 0.0
  %v709 = vmax.f32 %v620, 0.0
  %v710 = vmax.f32 %v623, 0.0
  %v711 = vmax.f32 %v628, 0.0
  %v712 = vmax.f32 %v631, 0.0
  %v713 = vmax.f32 %v636, 0.0
  %v714 = vmax.f32 %v639, 0.0
  %v715 = vmax.f32 %v644, 0.0
  %v716 = vmax.f32 %v647, 0.0
  %v717 = vmax.f32 %v652, 0.0
  %v718 = vmax.f32 %v655, 0.0
  %v719 = vmax.f32 %v660, 0.0
  %v720 = vmax.f32 %v663, 0.0
  %v721 = vmax.f32 %v668, 0.0
  %v722 = vpack.c.bf16 %v674, %v673
  %v723 = vpack.c.bf16 %v676, %v675
  %v724 = vpack.c.bf16 %v678, %v677
  %v725 = vpack.c.bf16 %v680, %v679
  %v726 = vpack.c.bf16 %v682, %v681
  %v727 = vpack.c.bf16 %v684, %v683
  %v728 = vpack.c.bf16 %v686, %v685
  %v729 = vpack.c.bf16 %v688, %v687
  %v730 = vpack.c.bf16 %v690, %v689
  %v731 = vpack.c.bf16 %v692, %v691
  %v732 = vpack.c.bf16 %v694, %v693
  %v733 = vpack.c.bf16 %v696, %v695
  %v734 = vpack.c.bf16 %v698, %v697
  %v735 = vpack.c.bf16 %v700, %v699
  %v736 = vpack.c.bf16 %v702, %v701
  %v737 = vpack.c.bf16 %v704, %v703
  %v738 = vpack.c.bf16 %v706, %v705
  %v739 = vpack.c.bf16 %v708, %v707
  %v740 = vpack.c.bf16 %v710, %v709
  %v741 = vpack.c.bf16 %v712, %v711
  %v742 = vpack.c.bf16 %v714, %v713
  %v743 = vpack.c.bf16 %v716, %v715
  %v744 = vpack.c.bf16 %v718, %v717
  %v745 = vpack.c.bf16 %v720, %v719
  %v746 = vpack.c.bf16 %v721, %v721
  %v772 = vunpack.c.l.b16 %v722
  %v773 = vunpack.c.h.b16 %v722
  %v774 = vunpack.c.l.b16 %v723
  %v775 = vunpack.c.h.b16 %v723
  %v776 = vunpack.c.l.b16 %v724
  %v777 = vunpack.c.h.b16 %v724
  %v778 = vunpack.c.l.b16 %v725
  %v779 = vunpack.c.h.b16 %v725
  %v780 = vunpack.c.l.b16 %v726
  %v781 = vunpack.c.h.b16 %v726
  %v782 = vunpack.c.l.b16 %v727
  %v783 = vunpack.c.h.b16 %v727
  %v784 = vunpack.c.l.b16 %v728
  %v785 = vunpack.c.h.b16 %v728
  %v786 = vunpack.c.l.b16 %v729
  %v787 = vunpack.c.h.b16 %v729
  %v788 = vunpack.c.l.b16 %v730
  %v789 = vunpack.c.h.b16 %v730
  %v790 = vunpack.c.l.b16 %v731
  %v791 = vunpack.c.h.b16 %v731
  %v792 = vunpack.c.l.b16 %v732
  %v793 = vunpack.c.h.b16 %v732
  %v794 = vunpack.c.l.b16 %v733
  %v795 = vunpack.c.h.b16 %v733
  %v796 = vunpack.c.l.b16 %v734
  %v797 = vunpack.c.h.b16 %v734
  %v798 = vunpack.c.l.b16 %v735
  %v799 = vunpack.c.h.b16 %v735
  %v800 = vunpack.c.l.b16 %v736
  %v801 = vunpack.c.h.b16 %v736
  %v802 = vunpack.c.l.b16 %v737
  %v803 = vunpack.c.h.b16 %v737
  %v804 = vunpack.c.l.b16 %v738
  %v805 = vunpack.c.h.b16 %v738
  %v806 = vunpack.c.l.b16 %v739
  %v807 = vunpack.c.h.b16 %v739
  %v808 = vunpack.c.l.b16 %v740
  %v809 = vunpack.c.h.b16 %v740
  %v810 = vunpack.c.l.b16 %v741
  %v811 = vunpack.c.h.b16 %v741
  %v812 = vunpack.c.l.b16 %v742
  %v813 = vunpack.c.h.b16 %v742
  %v814 = vunpack.c.l.b16 %v743
  %v815 = vunpack.c.h.b16 %v743
  %v816 = vunpack.c.l.b16 %v744
  %v817 = vunpack.c.h.b16 %v744
  %v818 = vunpack.c.l.b16 %v745
  %v819 = vunpack.c.h.b16 %v745
  %v820 = vunpack.c.l.b16 %v746
  %v821 = vpack.c.b16 %v772, %v772
  %v822 = vpack.c.b16 %v773, %v773
  %v823 = vpack.c.b16 %v774, %v774
  %v824 = vpack.c.b16 %v775, %v775
  %v825 = vpack.c.b16 %v776, %v776
  %v826 = vpack.c.b16 %v777, %v777
  %v827 = vpack.c.b16 %v778, %v778
  %v828 = vpack.c.b16 %v779, %v779
  %v829 = vpack.c.b16 %v780, %v780
  %v830 = vpack.c.b16 %v781, %v781
  %v831 = vpack.c.b16 %v782, %v782
  %v832 = vpack.c.b16 %v783, %v783
  %v833 = vpack.c.b16 %v784, %v784
  %v834 = vpack.c.b16 %v785, %v785
  %v835 = vpack.c.b16 %v786, %v786
  %v836 = vpack.c.b16 %v787, %v787
  %v837 = vpack.c.b16 %v788, %v788
  %v838 = vpack.c.b16 %v789, %v789
  %v839 = vpack.c.b16 %v790, %v790
  %v840 = vpack.c.b16 %v791, %v791
  %v841 = vpack.c.b16 %v792, %v792
  %v842 = vpack.c.b16 %v793, %v793
  %v843 = vpack.c.b16 %v794, %v794
  %v844 = vpack.c.b16 %v795, %v795
  %v845 = vpack.c.b16 %v796, %v796
  %v846 = vpack.c.b16 %v797, %v797
  %v847 = vpack.c.b16 %v798, %v798
  %v848 = vpack.c.b16 %v799, %v799
  %v849 = vpack.c.b16 %v800, %v800
  %v850 = vpack.c.b16 %v801, %v801
  %v851 = vpack.c.b16 %v802, %v802
  %v852 = vpack.c.b16 %v803, %v803
  %v853 = vpack.c.b16 %v804, %v804
  %v854 = vpack.c.b16 %v805, %v805
  %v855 = vpack.c.b16 %v806, %v806
  %v856 = vpack.c.b16 %v807, %v807
  %v857 = vpack.c.b16 %v808, %v808
  %v858 = vpack.c.b16 %v809, %v809
  %v859 = vpack.c.b16 %v810, %v810
  %v860 = vpack.c.b16 %v811, %v811
  %v861 = vpack.c.b16 %v812, %v812
  %v862 = vpack.c.b16 %v813, %v813
  %v863 = vpack.c.b16 %v814, %v814
  %v864 = vpack.c.b16 %v815, %v815
  %v865 = vpack.c.b16 %v816, %v816
  %v866 = vpack.c.b16 %v817, %v817
  %v867 = vpack.c.b16 %v818, %v818
  %v868 = vpack.c.b16 %v819, %v819
  %v869 = vpack.c.b16 %v820, %v820
  %vm919 = vcmask 60416
  %920 = vst.msk [vmem:[%s3] sm:$0xf] %vm919, %v821
  %921 = vst.msk [vmem:[%s3 + $0x4] sm:$0xf] %vm919, %v822
  %922 = vst.msk [vmem:[%s3 + $0x8] sm:$0xf] %vm919, %v823
  %923 = vst.msk [vmem:[%s3 + $0xc] sm:$0xf] %vm919, %v824
  %924 = vst.msk [vmem:[%s3 + $0x10] sm:$0xf] %vm919, %v825
  %925 = vst.msk [vmem:[%s3 + $0x14] sm:$0xf] %vm919, %v826
  %926 = vst.msk [vmem:[%s3 + $0x18] sm:$0xf] %vm919, %v827
  %927 = vst.msk [vmem:[%s3 + $0x1c] sm:$0xf] %vm919, %v828
  %928 = vst.msk [vmem:[%s3 + $0x20] sm:$0xf] %vm919, %v829
  %929 = vst.msk [vmem:[%s3 + $0x24] sm:$0xf] %vm919, %v830
  %930 = vst.msk [vmem:[%s3 + $0x28] sm:$0xf] %vm919, %v831
  %931 = vst.msk [vmem:[%s3 + $0x2c] sm:$0xf] %vm919, %v832
  %932 = vst.msk [vmem:[%s3 + $0x30] sm:$0xf] %vm919, %v833
  %933 = vst.msk [vmem:[%s3 + $0x34] sm:$0xf] %vm919, %v834
  %934 = vst.msk [vmem:[%s3 + $0x38] sm:$0xf] %vm919, %v835
  %935 = vst.msk [vmem:[%s3 + $0x3c] sm:$0xf] %vm919, %v836
  %936 = vst.msk [vmem:[%s3 + $0x40] sm:$0xf] %vm919, %v837
  %937 = vst.msk [vmem:[%s3 + $0x44] sm:$0xf] %vm919, %v838
  %938 = vst.msk [vmem:[%s3 + $0x48] sm:$0xf] %vm919, %v839
  %939 = vst.msk [vmem:[%s3 + $0x4c] sm:$0xf] %vm919, %v840
  %940 = vst.msk [vmem:[%s3 + $0x50] sm:$0xf] %vm919, %v841
  %941 = vst.msk [vmem:[%s3 + $0x54] sm:$0xf] %vm919, %v842
  %942 = vst.msk [vmem:[%s3 + $0x58] sm:$0xf] %vm919, %v843
  %943 = vst.msk [vmem:[%s3 + $0x5c] sm:$0xf] %vm919, %v844
  %944 = vst.msk [vmem:[%s3 + $0x60] sm:$0xf] %vm919, %v845
  %945 = vst.msk [vmem:[%s3 + $0x64] sm:$0xf] %vm919, %v846
  %946 = vst.msk [vmem:[%s3 + $0x68] sm:$0xf] %vm919, %v847
  %947 = vst.msk [vmem:[%s3 + $0x6c] sm:$0xf] %vm919, %v848
  %948 = vst.msk [vmem:[%s3 + $0x70] sm:$0xf] %vm919, %v849
  %949 = vst.msk [vmem:[%s3 + $0x74] sm:$0xf] %vm919, %v850
  %950 = vst.msk [vmem:[%s3 + $0x78] sm:$0xf] %vm919, %v851
  %951 = vst.msk [vmem:[%s3 + $0x7c] sm:$0xf] %vm919, %v852
  %952 = vst.msk [vmem:[%s3 + $0x80] sm:$0xf] %vm919, %v853
  %953 = vst.msk [vmem:[%s3 + $0x84] sm:$0xf] %vm919, %v854
  %954 = vst.msk [vmem:[%s3 + $0x88] sm:$0xf] %vm919, %v855
  %955 = vst.msk [vmem:[%s3 + $0x8c] sm:$0xf] %vm919, %v856
  %956 = vst.msk [vmem:[%s3 + $0x90] sm:$0xf] %vm919, %v857
  %957 = vst.msk [vmem:[%s3 + $0x94] sm:$0xf] %vm919, %v858
  %958 = vst.msk [vmem:[%s3 + $0x98] sm:$0xf] %vm919, %v859
  %959 = vst.msk [vmem:[%s3 + $0x9c] sm:$0xf] %vm919, %v860
  %960 = vst.msk [vmem:[%s3 + $0xa0] sm:$0xf] %vm919, %v861
  %961 = vst.msk [vmem:[%s3 + $0xa4] sm:$0xf] %vm919, %v862
  %962 = vst.msk [vmem:[%s3 + $0xa8] sm:$0xf] %vm919, %v863
  %963 = vst.msk [vmem:[%s3 + $0xac] sm:$0xf] %vm919, %v864
  %964 = vst.msk [vmem:[%s3 + $0xb0] sm:$0xf] %vm919, %v865
  %965 = vst.msk [vmem:[%s3 + $0xb4] sm:$0xf] %vm919, %v866
  %966 = vst.msk [vmem:[%s3 + $0xb8] sm:$0xf] %vm919, %v867
  %967 = vst.msk [vmem:[%s3 + $0xbc] sm:$0xf] %vm919, %v868
  %968 = vst.msk [vmem:[%s3 + $0xc0] sm:$0xf] %vm919, %v869
  // Predicated region
  $region14: #{cnn_vae_forward.12} parent=0 // pred_check
    _
  $region15: #{cnn_vae_forward.12} parent=0 // pred_check_branch
    %970 = sbr.rel (0) target = $region17
  $region16: #{cnn_vae_forward.12} parent=0 // pred_region
    _
  $region17: #{cnn_vae_forward.12} parent=0 // pred_fallthru
    _
  // Predicated region
  $region18: #{cnn_vae_forward.12} parent=0 // pred_check
    _
  $region19: #{cnn_vae_forward.12} parent=0 // pred_check_branch
    %972 = sbr.rel (0) target = $region21
  $region20: #{cnn_vae_forward.12} parent=0 // pred_region
    _
  $region21: #{cnn_vae_forward.12} parent=0 // pred_fallthru
    _

// kernel: cnn_vae_forward.13
$region0: #{cnn_vae_forward.13}
  #allocation0 [shape = 'u32[]', space=smem, size = 0x4, offset = 0x4, fixed_abs, tag = 'smem constant byte address 0x4 - core index']
  #allocation1 [shape = 'u32[144,128]{1,0:T(1,128)}', space=vmem, size = 0x12000, scoped, tag = 'internal scratch']
  #allocation2 [shape = 'f32[1,1]{1,0:T(1,128)S(1)}', space=vmem, size = 0x200, scoped, tag = 'scoped memory for cnn_vae_forward.13']
  %s0 = inlined_call_operand.vmem [shape: bf16[1568,72], index: 0, kind: input, shape index: {}]
  %s1 = inlined_call_operand.vmem [shape: bf16[72,1], index: 1, kind: input, shape index: {}]
  %s2 = inlined_call_operand.<no memory space> [shape: f32[1,1], index: 2, kind: input, shape index: {}]
  %s3 = inlined_call_operand.vmem [shape: f32[1568,1], index: 3, kind: output, shape index: {}]
  %s4 = sld [smem:[#allocation0]]
  $region22: #{cnn_vae_forward.13} parent=0
    _
  %s6 = ssub.s32 1, %s4
  %s7 = scalar_select 0, %s6, %s4
  %v8 = vstv %s2
  %9 = vst [vmem:[#allocation2] sm:$0x1] %v8
  // Predicated region
  $region2: #{cnn_vae_forward.13} parent=0 // pred_check
    _
  $region3: #{cnn_vae_forward.13} parent=0 // pred_check_branch
    %11 = sbr.rel (0) target = $region5
  $region4: #{cnn_vae_forward.13} parent=0 // pred_region
    _
  $region5: #{cnn_vae_forward.13} parent=0 // pred_fallthru
    _
  // Predicated region
  $region6: #{cnn_vae_forward.13} parent=0 // pred_check
    _
  $region7: #{cnn_vae_forward.13} parent=0 // pred_check_branch
    %13 = sbr.rel (0) target = $region9
  $region8: #{cnn_vae_forward.13} parent=0 // pred_region
    _
  $region9: #{cnn_vae_forward.13} parent=0 // pred_fallthru
    _
  // Predicated region
  $region10: #{cnn_vae_forward.13} parent=0 // pred_check
    _
  $region11: #{cnn_vae_forward.13} parent=0 // pred_check_branch
    %15 = sbr.rel (0) target = $region13
  $region12: #{cnn_vae_forward.13} parent=0 // pred_region
    _
  $region13: #{cnn_vae_forward.13} parent=0 // pred_fallthru
    _
  %v17 = vld [vmem:[%s0] sm:$0xf]
  %v18 = vld [vmem:[%s0 + $0x4] sm:$0xf]
  %v19 = vld [vmem:[%s0 + $0x8] sm:$0xf]
  %v20 = vld [vmem:[%s0 + $0xc] sm:$0xf]
  %v21 = vld [vmem:[%s0 + $0x10] sm:$0xf]
  %v22 = vld [vmem:[%s0 + $0x14] sm:$0xf]
  %v23 = vld [vmem:[%s0 + $0x18] sm:$0xf]
  %v24 = vld [vmem:[%s0 + $0x1c] sm:$0xf]
  %v25 = vld [vmem:[%s0 + $0x20] sm:$0xf]
  %v26 = vld [vmem:[%s0 + $0x24] sm:$0xf]
  %v27 = vld [vmem:[%s0 + $0x28] sm:$0xf]
  %v28 = vld [vmem:[%s0 + $0x2c] sm:$0xf]
  %v29 = vld [vmem:[%s0 + $0x30] sm:$0xf]
  %v30 = vld [vmem:[%s0 + $0x34] sm:$0xf]
  %v31 = vld [vmem:[%s0 + $0x38] sm:$0xf]
  %v32 = vld [vmem:[%s0 + $0x3c] sm:$0xf]
  %v33 = vld [vmem:[%s0 + $0x40] sm:$0xf]
  %v34 = vld [vmem:[%s0 + $0x44] sm:$0xf]
  %v35 = vld [vmem:[%s0 + $0x48] sm:$0xf]
  %v36 = vld [vmem:[%s0 + $0x4c] sm:$0xf]
  %v37 = vld [vmem:[%s0 + $0x50] sm:$0xf]
  %v38 = vld [vmem:[%s0 + $0x54] sm:$0xf]
  %v39 = vld [vmem:[%s0 + $0x58] sm:$0xf]
  %v40 = vld [vmem:[%s0 + $0x5c] sm:$0xf]
  %v41 = vld [vmem:[%s0 + $0x60] sm:$0xf]
  %v42 = vld [vmem:[%s0 + $0x64] sm:$0xf]
  %v43 = vld [vmem:[%s0 + $0x68] sm:$0xf]
  %v44 = vld [vmem:[%s0 + $0x6c] sm:$0xf]
  %v45 = vld [vmem:[%s0 + $0x70] sm:$0xf]
  %v46 = vld [vmem:[%s0 + $0x74] sm:$0xf]
  %v47 = vld [vmem:[%s0 + $0x78] sm:$0xf]
  %v48 = vld [vmem:[%s0 + $0x7c] sm:$0xf]
  %v49 = vld [vmem:[%s0 + $0x80] sm:$0xf]
  %v50 = vld [vmem:[%s0 + $0x84] sm:$0xf]
  %v51 = vld [vmem:[%s0 + $0x88] sm:$0xf]
  %v52 = vld [vmem:[%s0 + $0x8c] sm:$0xf]
  %v53 = vld [vmem:[%s0 + $0x90] sm:$0xf]
  %v54 = vld [vmem:[%s0 + $0x94] sm:$0xf]
  %v55 = vld [vmem:[%s0 + $0x98] sm:$0xf]
  %v56 = vld [vmem:[%s0 + $0x9c] sm:$0xf]
  %v57 = vld [vmem:[%s0 + $0xa0] sm:$0xf]
  %v58 = vld [vmem:[%s0 + $0xa4] sm:$0xf]
  %v59 = vld [vmem:[%s0 + $0xa8] sm:$0xf]
  %v60 = vld [vmem:[%s0 + $0xac] sm:$0xf]
  %v61 = vld [vmem:[%s0 + $0xb0] sm:$0xf]
  %v62 = vld [vmem:[%s0 + $0xb4] sm:$0xf]
  %v63 = vld [vmem:[%s0 + $0xb8] sm:$0xf]
  %v64 = vld [vmem:[%s0 + $0xbc] sm:$0xf]
  %v65 = vld [vmem:[%s0 + $0xc0] sm:$0xf]
  %v66 = vld [vmem:[%s0 + $0xc4] sm:$0xf]
  %v67 = vld [vmem:[%s0 + $0xc8] sm:$0xf]
  %v68 = vld [vmem:[%s0 + $0xcc] sm:$0xf]
  %v69 = vld [vmem:[%s0 + $0xd0] sm:$0xf]
  %v70 = vld [vmem:[%s0 + $0xd4] sm:$0xf]
  %v71 = vld [vmem:[%s0 + $0xd8] sm:$0xf]
  %v72 = vld [vmem:[%s0 + $0xdc] sm:$0xf]
  %v73 = vld [vmem:[%s0 + $0xe0] sm:$0xf]
  %v74 = vld [vmem:[%s0 + $0xe4] sm:$0xf]
  %v75 = vld [vmem:[%s0 + $0xe8] sm:$0xf]
  %v76 = vld [vmem:[%s0 + $0xec] sm:$0xf]
  %v77 = vld [vmem:[%s0 + $0xf0] sm:$0xf]
  %v78 = vld [vmem:[%s0 + $0xf4] sm:$0xf]
  %v79 = vld [vmem:[%s0 + $0xf8] sm:$0xf]
  %v80 = vld [vmem:[%s0 + $0xfc] sm:$0xf]
  %v81 = vld [vmem:[%s0 + $0x100] sm:$0xf]
  %v82 = vld [vmem:[%s0 + $0x104] sm:$0xf]
  %v83 = vld [vmem:[%s0 + $0x108] sm:$0xf]
  %v84 = vld [vmem:[%s0 + $0x10c] sm:$0xf]
  %v85 = vld [vmem:[%s0 + $0x110] sm:$0xf]
  %v86 = vld [vmem:[%s0 + $0x114] sm:$0xf]
  %v87 = vld [vmem:[%s0 + $0x118] sm:$0xf]
  %v88 = vld [vmem:[%s0 + $0x11c] sm:$0xf]
  %v89 = vld [vmem:[%s0 + $0x120] sm:$0xf]
  %v90 = vld [vmem:[%s0 + $0x124] sm:$0xf]
  %v91 = vld [vmem:[%s0 + $0x128] sm:$0xf]
  %v92 = vld [vmem:[%s0 + $0x12c] sm:$0xf]
  %v93 = vld [vmem:[%s0 + $0x130] sm:$0xf]
  %v94 = vld [vmem:[%s0 + $0x134] sm:$0xf]
  %v95 = vld [vmem:[%s0 + $0x138] sm:$0xf]
  %v96 = vld [vmem:[%s0 + $0x13c] sm:$0xf]
  %v97 = vld [vmem:[%s0 + $0x140] sm:$0xf]
  %v98 = vld [vmem:[%s0 + $0x144] sm:$0xf]
  %v99 = vld [vmem:[%s0 + $0x148] sm:$0xf]
  %v100 = vld [vmem:[%s0 + $0x14c] sm:$0xf]
  %v101 = vld [vmem:[%s0 + $0x150] sm:$0xf]
  %v102 = vld [vmem:[%s0 + $0x154] sm:$0xf]
  %v103 = vld [vmem:[%s0 + $0x158] sm:$0xf]
  %v104 = vld [vmem:[%s0 + $0x15c] sm:$0xf]
  %v105 = vld [vmem:[%s0 + $0x160] sm:$0xf]
  %v106 = vld [vmem:[%s0 + $0x164] sm:$0xf]
  %v107 = vld [vmem:[%s0 + $0x168] sm:$0xf]
  %v108 = vld [vmem:[%s0 + $0x16c] sm:$0xf]
  %v109 = vld [vmem:[%s0 + $0x170] sm:$0xf]
  %v110 = vld [vmem:[%s0 + $0x174] sm:$0xf]
  %v111 = vld [vmem:[%s0 + $0x178] sm:$0xf]
  %v112 = vld [vmem:[%s0 + $0x17c] sm:$0xf]
  %v113 = vld [vmem:[%s0 + $0x180] sm:$0xf]
  %v114 = vld [vmem:[%s0 + $0x184] sm:$0xf]
  %v115 = vld [vmem:[%s0 + $0x188] sm:$0xf]
  %v116 = vld [vmem:[%s0 + $0x18c] sm:$0xf]
  %v117 = vld [vmem:[%s0 + $0x190] sm:$0xf]
  %v118 = vld [vmem:[%s0 + $0x194] sm:$0xf]
  %v119 = vld [vmem:[%s0 + $0x198] sm:$0xf]
  %v120 = vld [vmem:[%s0 + $0x19c] sm:$0xf]
  %v121 = vld [vmem:[%s0 + $0x1a0] sm:$0xf]
  %v122 = vld [vmem:[%s0 + $0x1a4] sm:$0xf]
  %v123 = vld [vmem:[%s0 + $0x1a8] sm:$0xf]
  %v124 = vld [vmem:[%s0 + $0x1ac] sm:$0xf]
  %v125 = vld [vmem:[%s0 + $0x1b0] sm:$0xf]
  %v126 = vld [vmem:[%s0 + $0x1b4] sm:$0xf]
  %v127 = vld [vmem:[%s0 + $0x1b8] sm:$0xf]
  %v128 = vld [vmem:[%s0 + $0x1bc] sm:$0xf]
  %v129 = vld [vmem:[%s0 + $0x1c0] sm:$0xf]
  %v130 = vld [vmem:[%s0 + $0x1c4] sm:$0xf]
  %v131 = vld [vmem:[%s0 + $0x1c8] sm:$0xf]
  %v132 = vld [vmem:[%s0 + $0x1cc] sm:$0xf]
  %v133 = vld [vmem:[%s0 + $0x1d0] sm:$0xf]
  %v134 = vld [vmem:[%s0 + $0x1d4] sm:$0xf]
  %v135 = vld [vmem:[%s0 + $0x1d8] sm:$0xf]
  %v136 = vld [vmem:[%s0 + $0x1dc] sm:$0xf]
  %v137 = vld [vmem:[%s0 + $0x1e0] sm:$0xf]
  %v138 = vld [vmem:[%s0 + $0x1e4] sm:$0xf]
  %v139 = vld [vmem:[%s0 + $0x1e8] sm:$0xf]
  %v140 = vld [vmem:[%s0 + $0x1ec] sm:$0xf]
  %v141 = vld [vmem:[%s0 + $0x1f0] sm:$0xf]
  %v142 = vld [vmem:[%s0 + $0x1f4] sm:$0xf]
  %v143 = vld [vmem:[%s0 + $0x1f8] sm:$0xf]
  %v144 = vld [vmem:[%s0 + $0x1fc] sm:$0xf]
  %v145 = vld [vmem:[%s0 + $0x200] sm:$0xf]
  %v146 = vld [vmem:[%s0 + $0x204] sm:$0xf]
  %v147 = vld [vmem:[%s0 + $0x208] sm:$0xf]
  %v148 = vld [vmem:[%s0 + $0x20c] sm:$0xf]
  %v149 = vld [vmem:[%s0 + $0x210] sm:$0xf]
  %v150 = vld [vmem:[%s0 + $0x214] sm:$0xf]
  %v151 = vld [vmem:[%s0 + $0x218] sm:$0xf]
  %v152 = vld [vmem:[%s0 + $0x21c] sm:$0xf]
  %v153 = vld [vmem:[%s0 + $0x220] sm:$0xf]
  %v154 = vld [vmem:[%s0 + $0x224] sm:$0xf]
  %v155 = vld [vmem:[%s0 + $0x228] sm:$0xf]
  %v156 = vld [vmem:[%s0 + $0x22c] sm:$0xf]
  %v157 = vld [vmem:[%s0 + $0x230] sm:$0xf]
  %v158 = vld [vmem:[%s0 + $0x234] sm:$0xf]
  %v159 = vld [vmem:[%s0 + $0x238] sm:$0xf]
  %v160 = vld [vmem:[%s0 + $0x23c] sm:$0xf]
  %v161 = vld [vmem:[%s0 + $0x240] sm:$0xf]
  %v162 = vld [vmem:[%s0 + $0x244] sm:$0xf]
  %v163 = vld [vmem:[%s0 + $0x248] sm:$0xf]
  %v164 = vld [vmem:[%s0 + $0x24c] sm:$0xf]
  %v165 = vld [vmem:[%s0 + $0x250] sm:$0xf]
  %v166 = vld [vmem:[%s0 + $0x254] sm:$0xf]
  %v167 = vld [vmem:[%s0 + $0x258] sm:$0xf]
  %v168 = vld [vmem:[%s0 + $0x25c] sm:$0xf]
  %v169 = vld [vmem:[%s0 + $0x260] sm:$0xf]
  %v170 = vld [vmem:[%s0 + $0x264] sm:$0xf]
  %v171 = vld [vmem:[%s0 + $0x268] sm:$0xf]
  %v172 = vld [vmem:[%s0 + $0x26c] sm:$0xf]
  %v173 = vld [vmem:[%s0 + $0x270] sm:$0xf]
  %v174 = vld [vmem:[%s0 + $0x274] sm:$0xf]
  %v175 = vld [vmem:[%s0 + $0x278] sm:$0xf]
  %v176 = vld [vmem:[%s0 + $0x27c] sm:$0xf]
  %v177 = vld [vmem:[%s0 + $0x280] sm:$0xf]
  %v178 = vld [vmem:[%s0 + $0x284] sm:$0xf]
  %v179 = vld [vmem:[%s0 + $0x288] sm:$0xf]
  %v180 = vld [vmem:[%s0 + $0x28c] sm:$0xf]
  %v181 = vld [vmem:[%s0 + $0x290] sm:$0xf]
  %v182 = vld [vmem:[%s0 + $0x294] sm:$0xf]
  %v183 = vld [vmem:[%s0 + $0x298] sm:$0xf]
  %v184 = vld [vmem:[%s0 + $0x29c] sm:$0xf]
  %v185 = vld [vmem:[%s0 + $0x2a0] sm:$0xf]
  %v186 = vld [vmem:[%s0 + $0x2a4] sm:$0xf]
  %v187 = vld [vmem:[%s0 + $0x2a8] sm:$0xf]
  %v188 = vld [vmem:[%s0 + $0x2ac] sm:$0xf]
  %v189 = vld [vmem:[%s0 + $0x2b0] sm:$0xf]
  %v190 = vld [vmem:[%s0 + $0x2b4] sm:$0xf]
  %v191 = vld [vmem:[%s0 + $0x2b8] sm:$0xf]
  %v192 = vld [vmem:[%s0 + $0x2bc] sm:$0xf]
  %v193 = vld [vmem:[%s0 + $0x2c0] sm:$0xf]
  %v194 = vld [vmem:[%s0 + $0x2c4] sm:$0xf]
  %v195 = vld [vmem:[%s0 + $0x2c8] sm:$0xf]
  %v196 = vld [vmem:[%s0 + $0x2cc] sm:$0xf]
  %v197 = vld [vmem:[%s0 + $0x2d0] sm:$0xf]
  %v198 = vld [vmem:[%s0 + $0x2d4] sm:$0xf]
  %v199 = vld [vmem:[%s0 + $0x2d8] sm:$0xf]
  %v200 = vld [vmem:[%s0 + $0x2dc] sm:$0xf]
  %v201 = vld [vmem:[%s0 + $0x2e0] sm:$0xf]
  %v202 = vld [vmem:[%s0 + $0x2e4] sm:$0xf]
  %v203 = vld [vmem:[%s0 + $0x2e8] sm:$0xf]
  %v204 = vld [vmem:[%s0 + $0x2ec] sm:$0xf]
  %v205 = vld [vmem:[%s0 + $0x2f0] sm:$0xf]
  %v206 = vld [vmem:[%s0 + $0x2f4] sm:$0xf]
  %v207 = vld [vmem:[%s0 + $0x2f8] sm:$0xf]
  %v208 = vld [vmem:[%s0 + $0x2fc] sm:$0xf]
  %v209 = vld [vmem:[%s0 + $0x300] sm:$0xf]
  %v210 = vld [vmem:[%s0 + $0x304] sm:$0xf]
  %v211 = vld [vmem:[%s0 + $0x308] sm:$0xf]
  %v212 = vld [vmem:[%s0 + $0x30c] sm:$0xf]
  %v213 = vld [vmem:[%s1] sm:$0xf]
  %v214 = vld [vmem:[%s1 + $0x4] sm:$0xf]
  %v215 = vld [vmem:[%s1 + $0x8] sm:$0xf]
  %v216 = vld [vmem:[%s1 + $0xc] sm:$0xf]
  %v217 = vld [vmem:[%s1 + $0x10] sm:$0xf]
  %v218 = vld [vmem:[%s1 + $0x14] sm:$0xf]
  %v219 = vld [vmem:[%s1 + $0x18] sm:$0xf]
  %v220 = vld [vmem:[%s1 + $0x1c] sm:$0xf]
  %v221 = vld [vmem:[%s1 + $0x20] sm:$0xf]
  %v222 = vld [vmem:[#allocation2] sm:$0x1]
  %v224 = vlaneseq
  %v225 = vshrl.u32 %v224, 7
  %v226 = vsub.s32 0, %v225
  %v227 = vrot.slane %v222, %v226
  %v425 = vunpack.c.l.b16 %v17
  %v426 = vunpack.c.l.b16 %v18
  %v427 = vunpack.c.l.b16 %v19
  %v428 = vunpack.c.l.b16 %v20
  %v429 = vunpack.c.l.b16 %v21
  %v430 = vunpack.c.l.b16 %v22
  %v431 = vunpack.c.l.b16 %v23
  %v432 = vunpack.c.l.b16 %v24
  %v433 = vunpack.c.l.b16 %v25
  %v434 = vunpack.c.l.b16 %v26
  %v435 = vunpack.c.l.b16 %v27
  %v436 = vunpack.c.l.b16 %v28
  %v437 = vunpack.c.l.b16 %v29
  %v438 = vunpack.c.l.b16 %v30
  %v439 = vunpack.c.l.b16 %v31
  %v440 = vunpack.c.l.b16 %v32
  %v441 = vunpack.c.l.b16 %v33
  %v442 = vunpack.c.l.b16 %v34
  %v443 = vunpack.c.l.b16 %v35
  %v444 = vunpack.c.l.b16 %v36
  %v445 = vunpack.c.l.b16 %v37
  %v446 = vunpack.c.l.b16 %v38
  %v447 = vunpack.c.l.b16 %v39
  %v448 = vunpack.c.l.b16 %v40
  %v449 = vunpack.c.l.b16 %v41
  %v450 = vunpack.c.l.b16 %v42
  %v451 = vunpack.c.l.b16 %v43
  %v452 = vunpack.c.l.b16 %v44
  %v453 = vunpack.c.l.b16 %v45
  %v454 = vunpack.c.l.b16 %v46
  %v455 = vunpack.c.l.b16 %v47
  %v456 = vunpack.c.l.b16 %v48
  %v457 = vunpack.c.l.b16 %v49
  %v458 = vunpack.c.l.b16 %v50
  %v459 = vunpack.c.l.b16 %v51
  %v460 = vunpack.c.l.b16 %v52
  %v461 = vunpack.c.l.b16 %v53
  %v462 = vunpack.c.l.b16 %v54
  %v463 = vunpack.c.l.b16 %v55
  %v464 = vunpack.c.l.b16 %v56
  %v465 = vunpack.c.l.b16 %v57
  %v466 = vunpack.c.l.b16 %v58
  %v467 = vunpack.c.l.b16 %v59
  %v468 = vunpack.c.l.b16 %v60
  %v469 = vunpack.c.l.b16 %v61
  %v470 = vunpack.c.l.b16 %v62
  %v471 = vunpack.c.l.b16 %v63
  %v472 = vunpack.c.l.b16 %v64
  %v473 = vunpack.c.l.b16 %v65
  %v474 = vunpack.c.l.b16 %v66
  %v475 = vunpack.c.l.b16 %v67
  %v476 = vunpack.c.l.b16 %v68
  %v477 = vunpack.c.l.b16 %v69
  %v478 = vunpack.c.l.b16 %v70
  %v479 = vunpack.c.l.b16 %v71
  %v480 = vunpack.c.l.b16 %v72
  %v481 = vunpack.c.l.b16 %v73
  %v482 = vunpack.c.l.b16 %v74
  %v483 = vunpack.c.l.b16 %v75
  %v484 = vunpack.c.l.b16 %v76
  %v485 = vunpack.c.l.b16 %v77
  %v486 = vunpack.c.l.b16 %v78
  %v487 = vunpack.c.l.b16 %v79
  %v488 = vunpack.c.l.b16 %v80
  %v489 = vunpack.c.l.b16 %v81
  %v490 = vunpack.c.l.b16 %v82
  %v491 = vunpack.c.l.b16 %v83
  %v492 = vunpack.c.l.b16 %v84
  %v493 = vunpack.c.l.b16 %v85
  %v494 = vunpack.c.l.b16 %v86
  %v495 = vunpack.c.l.b16 %v87
  %v496 = vunpack.c.l.b16 %v88
  %v497 = vunpack.c.l.b16 %v89
  %v498 = vunpack.c.l.b16 %v90
  %v499 = vunpack.c.l.b16 %v91
  %v500 = vunpack.c.l.b16 %v92
  %v501 = vunpack.c.l.b16 %v93
  %v502 = vunpack.c.l.b16 %v94
  %v503 = vunpack.c.l.b16 %v95
  %v504 = vunpack.c.l.b16 %v96
  %v505 = vunpack.c.l.b16 %v97
  %v506 = vunpack.c.l.b16 %v98
  %v507 = vunpack.c.l.b16 %v99
  %v508 = vunpack.c.l.b16 %v100
  %v509 = vunpack.c.l.b16 %v101
  %v510 = vunpack.c.l.b16 %v102
  %v511 = vunpack.c.l.b16 %v103
  %v512 = vunpack.c.l.b16 %v104
  %v513 = vunpack.c.l.b16 %v105
  %v514 = vunpack.c.l.b16 %v106
  %v515 = vunpack.c.l.b16 %v107
  %v516 = vunpack.c.l.b16 %v108
  %v517 = vunpack.c.l.b16 %v109
  %v518 = vunpack.c.l.b16 %v110
  %v519 = vunpack.c.l.b16 %v111
  %v520 = vunpack.c.l.b16 %v112
  %v521 = vunpack.c.l.b16 %v113
  %v522 = vunpack.c.l.b16 %v114
  %v523 = vunpack.c.l.b16 %v115
  %v524 = vunpack.c.l.b16 %v116
  %v525 = vunpack.c.l.b16 %v117
  %v526 = vunpack.c.l.b16 %v118
  %v527 = vunpack.c.l.b16 %v119
  %v528 = vunpack.c.l.b16 %v120
  %v529 = vunpack.c.l.b16 %v121
  %v530 = vunpack.c.l.b16 %v122
  %v531 = vunpack.c.l.b16 %v123
  %v532 = vunpack.c.l.b16 %v124
  %v533 = vunpack.c.l.b16 %v125
  %v534 = vunpack.c.l.b16 %v126
  %v535 = vunpack.c.l.b16 %v127
  %v536 = vunpack.c.l.b16 %v128
  %v537 = vunpack.c.l.b16 %v129
  %v538 = vunpack.c.l.b16 %v130
  %v539 = vunpack.c.l.b16 %v131
  %v540 = vunpack.c.l.b16 %v132
  %v541 = vunpack.c.l.b16 %v133
  %v542 = vunpack.c.l.b16 %v134
  %v543 = vunpack.c.l.b16 %v135
  %v544 = vunpack.c.l.b16 %v136
  %v545 = vunpack.c.l.b16 %v137
  %v546 = vunpack.c.l.b16 %v138
  %v547 = vunpack.c.l.b16 %v139
  %v548 = vunpack.c.l.b16 %v140
  %v549 = vunpack.c.l.b16 %v141
  %v550 = vunpack.c.l.b16 %v142
  %v551 = vunpack.c.l.b16 %v143
  %v552 = vunpack.c.l.b16 %v144
  %v553 = vunpack.c.l.b16 %v145
  %v554 = vunpack.c.l.b16 %v146
  %v555 = vunpack.c.l.b16 %v147
  %v556 = vunpack.c.l.b16 %v148
  %v557 = vunpack.c.l.b16 %v149
  %v558 = vunpack.c.l.b16 %v150
  %v559 = vunpack.c.l.b16 %v151
  %v560 = vunpack.c.l.b16 %v152
  %v561 = vunpack.c.l.b16 %v153
  %v562 = vunpack.c.l.b16 %v154
  %v563 = vunpack.c.l.b16 %v155
  %v564 = vunpack.c.l.b16 %v156
  %v565 = vunpack.c.l.b16 %v157
  %v566 = vunpack.c.l.b16 %v158
  %v567 = vunpack.c.l.b16 %v159
  %v568 = vunpack.c.l.b16 %v160
  %v569 = vunpack.c.l.b16 %v161
  %v570 = vunpack.c.l.b16 %v162
  %v571 = vunpack.c.l.b16 %v163
  %v572 = vunpack.c.l.b16 %v164
  %v573 = vunpack.c.l.b16 %v165
  %v574 = vunpack.c.l.b16 %v166
  %v575 = vunpack.c.l.b16 %v167
  %v576 = vunpack.c.l.b16 %v168
  %v577 = vunpack.c.l.b16 %v169
  %v578 = vunpack.c.l.b16 %v170
  %v579 = vunpack.c.l.b16 %v171
  %v580 = vunpack.c.l.b16 %v172
  %v581 = vunpack.c.l.b16 %v173
  %v582 = vunpack.c.l.b16 %v174
  %v583 = vunpack.c.l.b16 %v175
  %v584 = vunpack.c.l.b16 %v176
  %v585 = vunpack.c.l.b16 %v177
  %v586 = vunpack.c.l.b16 %v178
  %v587 = vunpack.c.l.b16 %v179
  %v588 = vunpack.c.l.b16 %v180
  %v589 = vunpack.c.l.b16 %v181
  %v590 = vunpack.c.l.b16 %v182
  %v591 = vunpack.c.l.b16 %v183
  %v592 = vunpack.c.l.b16 %v184
  %v593 = vunpack.c.l.b16 %v185
  %v594 = vunpack.c.l.b16 %v186
  %v595 = vunpack.c.l.b16 %v187
  %v596 = vunpack.c.l.b16 %v188
  %v597 = vunpack.c.l.b16 %v189
  %v598 = vunpack.c.l.b16 %v190
  %v599 = vunpack.c.l.b16 %v191
  %v600 = vunpack.c.l.b16 %v192
  %v601 = vunpack.c.l.b16 %v193
  %v602 = vunpack.c.l.b16 %v194
  %v603 = vunpack.c.l.b16 %v195
  %v604 = vunpack.c.l.b16 %v196
  %v605 = vunpack.c.l.b16 %v197
  %v606 = vunpack.c.l.b16 %v198
  %v607 = vunpack.c.l.b16 %v199
  %v608 = vunpack.c.l.b16 %v200
  %v609 = vunpack.c.l.b16 %v201
  %v610 = vunpack.c.l.b16 %v202
  %v611 = vunpack.c.l.b16 %v203
  %v612 = vunpack.c.l.b16 %v204
  %v613 = vunpack.c.l.b16 %v205
  %v614 = vunpack.c.l.b16 %v206
  %v615 = vunpack.c.l.b16 %v207
  %v616 = vunpack.c.l.b16 %v208
  %v617 = vunpack.c.l.b16 %v209
  %v618 = vunpack.c.l.b16 %v210
  %v619 = vunpack.c.l.b16 %v211
  %v620 = vunpack.c.l.b16 %v212
  %v621 = vpack.c.b16 %v426, %v425
  %v622 = vpack.c.b16 %v428, %v427
  %v623 = vpack.c.b16 %v430, %v429
  %v624 = vpack.c.b16 %v432, %v431
  %v625 = vpack.c.b16 %v434, %v433
  %v626 = vpack.c.b16 %v436, %v435
  %v627 = vpack.c.b16 %v438, %v437
  %v628 = vpack.c.b16 %v440, %v439
  %v629 = vpack.c.b16 %v442, %v441
  %v630 = vpack.c.b16 %v444, %v443
  %v631 = vpack.c.b16 %v446, %v445
  %v632 = vpack.c.b16 %v448, %v447
  %v633 = vpack.c.b16 %v450, %v449
  %v634 = vpack.c.b16 %v452, %v451
  %v635 = vpack.c.b16 %v454, %v453
  %v636 = vpack.c.b16 %v456, %v455
  %v637 = vpack.c.b16 %v458, %v457
  %v638 = vpack.c.b16 %v460, %v459
  %v639 = vpack.c.b16 %v462, %v461
  %v640 = vpack.c.b16 %v464, %v463
  %v641 = vpack.c.b16 %v466, %v465
  %v642 = vpack.c.b16 %v468, %v467
  %v643 = vpack.c.b16 %v470, %v469
  %v644 = vpack.c.b16 %v472, %v471
  %v645 = vpack.c.b16 %v474, %v473
  %v646 = vpack.c.b16 %v476, %v475
  %v647 = vpack.c.b16 %v478, %v477
  %v648 = vpack.c.b16 %v480, %v479
  %v649 = vpack.c.b16 %v482, %v481
  %v650 = vpack.c.b16 %v484, %v483
  %v651 = vpack.c.b16 %v486, %v485
  %v652 = vpack.c.b16 %v488, %v487
  %v653 = vpack.c.b16 %v490, %v489
  %v654 = vpack.c.b16 %v492, %v491
  %v655 = vpack.c.b16 %v494, %v493
  %v656 = vpack.c.b16 %v496, %v495
  %v657 = vpack.c.b16 %v498, %v497
  %v658 = vpack.c.b16 %v500, %v499
  %v659 = vpack.c.b16 %v502, %v501
  %v660 = vpack.c.b16 %v504, %v503
  %v661 = vpack.c.b16 %v506, %v505
  %v662 = vpack.c.b16 %v508, %v507
  %v663 = vpack.c.b16 %v510, %v509
  %v664 = vpack.c.b16 %v512, %v511
  %v665 = vpack.c.b16 %v514, %v513
  %v666 = vpack.c.b16 %v516, %v515
  %v667 = vpack.c.b16 %v518, %v517
  %v668 = vpack.c.b16 %v520, %v519
  %v669 = vpack.c.b16 %v522, %v521
  %v670 = vpack.c.b16 %v524, %v523
  %v671 = vpack.c.b16 %v526, %v525
  %v672 = vpack.c.b16 %v528, %v527
  %v673 = vpack.c.b16 %v530, %v529
  %v674 = vpack.c.b16 %v532, %v531
  %v675 = vpack.c.b16 %v534, %v533
  %v676 = vpack.c.b16 %v536, %v535
  %v677 = vpack.c.b16 %v538, %v537
  %v678 = vpack.c.b16 %v540, %v539
  %v679 = vpack.c.b16 %v542, %v541
  %v680 = vpack.c.b16 %v544, %v543
  %v681 = vpack.c.b16 %v546, %v545
  %v682 = vpack.c.b16 %v548, %v547
  %v683 = vpack.c.b16 %v550, %v549
  %v684 = vpack.c.b16 %v552, %v551
  %v685 = vpack.c.b16 %v554, %v553
  %v686 = vpack.c.b16 %v556, %v555
  %v687 = vpack.c.b16 %v558, %v557
  %v688 = vpack.c.b16 %v560, %v559
  %v689 = vpack.c.b16 %v562, %v561
  %v690 = vpack.c.b16 %v564, %v563
  %v691 = vpack.c.b16 %v566, %v565
  %v692 = vpack.c.b16 %v568, %v567
  %v693 = vpack.c.b16 %v570, %v569
  %v694 = vpack.c.b16 %v572, %v571
  %v695 = vpack.c.b16 %v574, %v573
  %v696 = vpack.c.b16 %v576, %v575
  %v697 = vpack.c.b16 %v578, %v577
  %v698 = vpack.c.b16 %v580, %v579
  %v699 = vpack.c.b16 %v582, %v581
  %v700 = vpack.c.b16 %v584, %v583
  %v701 = vpack.c.b16 %v586, %v585
  %v702 = vpack.c.b16 %v588, %v587
  %v703 = vpack.c.b16 %v590, %v589
  %v704 = vpack.c.b16 %v592, %v591
  %v705 = vpack.c.b16 %v594, %v593
  %v706 = vpack.c.b16 %v596, %v595
  %v707 = vpack.c.b16 %v598, %v597
  %v708 = vpack.c.b16 %v600, %v599
  %v709 = vpack.c.b16 %v602, %v601
  %v710 = vpack.c.b16 %v604, %v603
  %v711 = vpack.c.b16 %v606, %v605
  %v712 = vpack.c.b16 %v608, %v607
  %v713 = vpack.c.b16 %v610, %v609
  %v714 = vpack.c.b16 %v612, %v611
  %v715 = vpack.c.b16 %v614, %v613
  %v716 = vpack.c.b16 %v616, %v615
  %v717 = vpack.c.b16 %v618, %v617
  %v718 = vpack.c.b16 %v620, %v619
  %v728 = vunpack.c.l.b16 %v213
  %v729 = vunpack.c.l.b16 %v214
  %v730 = vunpack.c.l.b16 %v215
  %v731 = vunpack.c.l.b16 %v216
  %v732 = vunpack.c.l.b16 %v217
  %v733 = vunpack.c.l.b16 %v218
  %v734 = vunpack.c.l.b16 %v219
  %v735 = vunpack.c.l.b16 %v220
  %v736 = vunpack.c.l.b16 %v221
  %v737 = vpack.c.b16 %v729, %v728
  %v738 = vpack.c.b16 %v731, %v730
  %v739 = vpack.c.b16 %v733, %v732
  %v740 = vpack.c.b16 %v735, %v734
  %v741 = vpack.c.b16 %v736, %v736
  %vm746 = vcmask 588800
  %v748 = vsel %vm746, %v621, 0
  %v751 = vsel %vm746, %v622, 0
  %v754 = vsel %vm746, %v623, 0
  %v757 = vsel %vm746, %v624, 0
  %v760 = vsel %vm746, %v625, 0
  %v763 = vsel %vm746, %v626, 0
  %v766 = vsel %vm746, %v627, 0
  %v769 = vsel %vm746, %v628, 0
  %v772 = vsel %vm746, %v629, 0
  %v775 = vsel %vm746, %v630, 0
  %v778 = vsel %vm746, %v631, 0
  %v781 = vsel %vm746, %v632, 0
  %v784 = vsel %vm746, %v633, 0
  %v787 = vsel %vm746, %v634, 0
  %v790 = vsel %vm746, %v635, 0
  %v793 = vsel %vm746, %v636, 0
  %v796 = vsel %vm746, %v637, 0
  %v799 = vsel %vm746, %v638, 0
  %v802 = vsel %vm746, %v639, 0
  %v805 = vsel %vm746, %v640, 0
  %v808 = vsel %vm746, %v641, 0
  %v811 = vsel %vm746, %v642, 0
  %v814 = vsel %vm746, %v643, 0
  %v817 = vsel %vm746, %v644, 0
  %v820 = vsel %vm746, %v645, 0
  %v823 = vsel %vm746, %v646, 0
  %v826 = vsel %vm746, %v647, 0
  %v829 = vsel %vm746, %v648, 0
  %v832 = vsel %vm746, %v649, 0
  %v835 = vsel %vm746, %v650, 0
  %v838 = vsel %vm746, %v651, 0
  %v841 = vsel %vm746, %v652, 0
  %v844 = vsel %vm746, %v653, 0
  %v847 = vsel %vm746, %v654, 0
  %v850 = vsel %vm746, %v655, 0
  %v853 = vsel %vm746, %v656, 0
  %v856 = vsel %vm746, %v657, 0
  %v859 = vsel %vm746, %v658, 0
  %v862 = vsel %vm746, %v659, 0
  %v865 = vsel %vm746, %v660, 0
  %v868 = vsel %vm746, %v661, 0
  %v871 = vsel %vm746, %v662, 0
  %v874 = vsel %vm746, %v663, 0
  %v877 = vsel %vm746, %v664, 0
  %v880 = vsel %vm746, %v665, 0
  %v883 = vsel %vm746, %v666, 0
  %v886 = vsel %vm746, %v667, 0
  %v889 = vsel %vm746, %v668, 0
  %v892 = vsel %vm746, %v669, 0
  %v895 = vsel %vm746, %v670, 0
  %v898 = vsel %vm746, %v671, 0
  %v901 = vsel %vm746, %v672, 0
  %v904 = vsel %vm746, %v673, 0
  %v907 = vsel %vm746, %v674, 0
  %v910 = vsel %vm746, %v675, 0
  %v913 = vsel %vm746, %v676, 0
  %v916 = vsel %vm746, %v677, 0
  %v919 = vsel %vm746, %v678, 0
  %v922 = vsel %vm746, %v679, 0
  %v925 = vsel %vm746, %v680, 0
  %v928 = vsel %vm746, %v681, 0
  %v931 = vsel %vm746, %v682, 0
  %v934 = vsel %vm746, %v683, 0
  %v937 = vsel %vm746, %v684, 0
  %v940 = vsel %vm746, %v685, 0
  %v943 = vsel %vm746, %v686, 0
  %v946 = vsel %vm746, %v687, 0
  %v949 = vsel %vm746, %v688, 0
  %v952 = vsel %vm746, %v689, 0
  %v955 = vsel %vm746, %v690, 0
  %v958 = vsel %vm746, %v691, 0
  %v961 = vsel %vm746, %v692, 0
  %v964 = vsel %vm746, %v693, 0
  %v967 = vsel %vm746, %v694, 0
  %v970 = vsel %vm746, %v695, 0
  %v973 = vsel %vm746, %v696, 0
  %v976 = vsel %vm746, %v697, 0
  %v979 = vsel %vm746, %v698, 0
  %v982 = vsel %vm746, %v699, 0
  %v985 = vsel %vm746, %v700, 0
  %v988 = vsel %vm746, %v701, 0
  %v991 = vsel %vm746, %v702, 0
  %v994 = vsel %vm746, %v703, 0
  %v997 = vsel %vm746, %v704, 0
  %v1000 = vsel %vm746, %v705, 0
  %v1003 = vsel %vm746, %v706, 0
  %v1006 = vsel %vm746, %v707, 0
  %v1009 = vsel %vm746, %v708, 0
  %v1012 = vsel %vm746, %v709, 0
  %v1015 = vsel %vm746, %v710, 0
  %v1018 = vsel %vm746, %v711, 0
  %v1021 = vsel %vm746, %v712, 0
  %v1024 = vsel %vm746, %v713, 0
  %v1027 = vsel %vm746, %v714, 0
  %v1030 = vsel %vm746, %v715, 0
  %v1033 = vsel %vm746, %v716, 0
  %v1036 = vsel %vm746, %v717, 0
  %v1039 = vsel %vm746, %v718, 0
  %vm1041 = vcmask 1043456
  %v1043 = vsel %vm1041, %v741, 0
  %1045 = vmatprep.subr.bf16.mxu0 0
  %1046 = vmatpush1.bf16.msra.mxu0 %v737
  %1047 = vmatprep.subr.bf16.mxu0 0
  %1048 = vmatpush1.bf16.msra.mxu0 %v738
  %1049 = vmatprep.subr.bf16.mxu0 0
  %1050 = vmatpush1.bf16.msra.mxu0 %v739
  %1051 = vmatprep.subr.bf16.mxu0 0
  %1052 = vmatpush1.bf16.msra.mxu0 %v740
  %1053 = vmatprep.subr.bf16.mxu0 0
  %1054 = vmatpush1.bf16.msra.mxu0 %v1043
  %1055 = vmatprep.subr.bf16.mxu0 0
  %1056 = vmatpush1.bf16.msra.mxu0 0
  %1057 = vmatprep.subr.bf16.mxu0 0
  %1058 = vmatpush1.bf16.msra.mxu0 0
  %1059 = vmatprep.subr.bf16.mxu0 0
  %1060 = vmatpush1.bf16.msra.mxu0 0
  %1061 = vmatprep.subr.bf16.mxu0 0
  %1062 = vmatpush1.bf16.msra.mxu0 0
  %1063 = vmatprep.subr.bf16.mxu0 0
  %1064 = vmatpush1.bf16.msra.mxu0 0
  %1065 = vmatprep.subr.bf16.mxu0 0
  %1066 = vmatpush1.bf16.msra.mxu0 0
  %1067 = vmatprep.subr.bf16.mxu0 0
  %1068 = vmatpush1.bf16.msra.mxu0 0
  %1069 = vmatprep.subr.bf16.mxu0 0
  %1070 = vmatpush1.bf16.msra.mxu0 0
  %1071 = vmatprep.subr.bf16.mxu0 0
  %1072 = vmatpush1.bf16.msra.mxu0 0
  %1073 = vmatprep.subr.bf16.mxu0 0
  %1074 = vmatpush1.bf16.msra.mxu0 0
  %1075 = vmatprep.subr.bf16.mxu0 0
  %1076 = vmatpush1.bf16.msra.mxu0 0
  %1077 = vmatprep.mubr.bf16.mxu0 0
  %1078 = vmatmul.mubr.bf16.gmra.mrb[0].mxu0 %v748
  %v1079 = vpop.f32.mrb[0].mxu0
  %v1080 = vadd.f32 %v227, %v1079
  %v1081 = vpop.f32.mrb[0].mxu0
  %v1082 = vpop.f32.mrb[0].mxu0
  %v1083 = vadd.f32 %v227, %v1082
  %v1084 = vpop.f32.mrb[0].mxu0
  %1085 = vmatprep.mubr.bf16.mxu0 0
  %1086 = vmatmul.mubr.bf16.gmra.mrb[0].mxu0 %v751
  %v1087 = vpop.f32.mrb[0].mxu0
  %v1088 = vadd.f32 %v227, %v1087
  %v1089 = vpop.f32.mrb[0].mxu0
  %v1090 = vpop.f32.mrb[0].mxu0
  %v1091 = vadd.f32 %v227, %v1090
  %v1092 = vpop.f32.mrb[0].mxu0
  %1093 = vmatprep.mubr.bf16.mxu0 0
  %1094 = vmatmul.mubr.bf16.gmra.mrb[0].mxu0 %v754
  %v1095 = vpop.f32.mrb[0].mxu0
  %v1096 = vadd.f32 %v227, %v1095
  %v1097 = vpop.f32.mrb[0].mxu0
  %v1098 = vpop.f32.mrb[0].mxu0
  %v1099 = vadd.f32 %v227, %v1098
  %v1100 = vpop.f32.mrb[0].mxu0
  %1101 = vmatprep.mubr.bf16.mxu0 0
  %1102 = vmatmul.mubr.bf16.gmra.mrb[0].mxu0 %v757
  %v1103 = vpop.f32.mrb[0].mxu0
  %v1104 = vadd.f32 %v227, %v1103
  %v1105 = vpop.f32.mrb[0].mxu0
  %v1106 = vpop.f32.mrb[0].mxu0
  %v1107 = vadd.f32 %v227, %v1106
  %v1108 = vpop.f32.mrb[0].mxu0
  %1109 = vmatprep.mubr.bf16.mxu0 0
  %1110 = vmatmul.mubr.bf16.gmra.mrb[0].mxu0 %v760
  %v1111 = vpop.f32.mrb[0].mxu0
  %v1112 = vadd.f32 %v227, %v1111
  %v1113 = vpop.f32.mrb[0].mxu0
  %v1114 = vpop.f32.mrb[0].mxu0
  %v1115 = vadd.f32 %v227, %v1114
  %v1116 = vpop.f32.mrb[0].mxu0
  %1117 = vmatprep.mubr.bf16.mxu0 0
  %1118 = vmatmul.mubr.bf16.gmra.mrb[0].mxu0 %v763
  %v1119 = vpop.f32.mrb[0].mxu0
  %v1120 = vadd.f32 %v227, %v1119
  %v1121 = vpop.f32.mrb[0].mxu0
  %v1122 = vpop.f32.mrb[0].mxu0
  %v1123 = vadd.f32 %v227, %v1122
  %v1124 = vpop.f32.mrb[0].mxu0
  %1125 = vmatprep.mubr.bf16.mxu0 0
  %1126 = vmatmul.mubr.bf16.gmra.mrb[0].mxu0 %v766
  %v1127 = vpop.f32.mrb[0].mxu0
  %v1128 = vadd.f32 %v227, %v1127
  %v1129 = vpop.f32.mrb[0].mxu0
  %v1130 = vpop.f32.mrb[0].mxu0
  %v1131 = vadd.f32 %v227, %v1130
  %v1132 = vpop.f32.mrb[0].mxu0
  %1133 = vmatprep.mubr.bf16.mxu0 0
  %1134 = vmatmul.mubr.bf16.gmra.mrb[0].mxu0 %v769
  %v1135 = vpop.f32.mrb[0].mxu0
  %v1136 = vadd.f32 %v227, %v1135
  %v1137 = vpop.f32.mrb[0].mxu0
  %v1138 = vpop.f32.mrb[0].mxu0
  %v1139 = vadd.f32 %v227, %v1138
  %v1140 = vpop.f32.mrb[0].mxu0
  %1141 = vmatprep.mubr.bf16.mxu0 0
  %1142 = vmatmul.mubr.bf16.gmra.mrb[0].mxu0 %v772
  %v1143 = vpop.f32.mrb[0].mxu0
  %v1144 = vadd.f32 %v227, %v1143
  %v1145 = vpop.f32.mrb[0].mxu0
  %v1146 = vpop.f32.mrb[0].mxu0
  %v1147 = vadd.f32 %v227, %v1146
  %v1148 = vpop.f32.mrb[0].mxu0
  %1149 = vmatprep.mubr.bf16.mxu0 0
  %1150 = vmatmul.mubr.bf16.gmra.mrb[0].mxu0 %v775
  %v1151 = vpop.f32.mrb[0].mxu0
  %v1152 = vadd.f32 %v227, %v1151
  %v1153 = vpop.f32.mrb[0].mxu0
  %v1154 = vpop.f32.mrb[0].mxu0
  %v1155 = vadd.f32 %v227, %v1154
  %v1156 = vpop.f32.mrb[0].mxu0
  %1157 = vmatprep.mubr.bf16.mxu0 0
  %1158 = vmatmul.mubr.bf16.gmra.mrb[0].mxu0 %v778
  %v1159 = vpop.f32.mrb[0].mxu0
  %v1160 = vadd.f32 %v227, %v1159
  %v1161 = vpop.f32.mrb[0].mxu0
  %v1162 = vpop.f32.mrb[0].mxu0
  %v1163 = vadd.f32 %v227, %v1162
  %v1164 = vpop.f32.mrb[0].mxu0
  %1165 = vmatprep.mubr.bf16.mxu0 0
  %1166 = vmatmul.mubr.bf16.gmra.mrb[0].mxu0 %v781
  %v1167 = vpop.f32.mrb[0].mxu0
  %v1168 = vadd.f32 %v227, %v1167
  %v1169 = vpop.f32.mrb[0].mxu0
  %v1170 = vpop.f32.mrb[0].mxu0
  %v1171 = vadd.f32 %v227, %v1170
  %v1172 = vpop.f32.mrb[0].mxu0
  %1173 = vmatprep.mubr.bf16.mxu0 0
  %1174 = vmatmul.mubr.bf16.gmra.mrb[0].mxu0 %v784
  %v1175 = vpop.f32.mrb[0].mxu0
  %v1176 = vadd.f32 %v227, %v1175
  %v1177 = vpop.f32.mrb[0].mxu0
  %v1178 = vpop.f32.mrb[0].mxu0
  %v1179 = vadd.f32 %v227, %v1178
  %v1180 = vpop.f32.mrb[0].mxu0
  %1181 = vmatprep.mubr.bf16.mxu0 0
  %1182 = vmatmul.mubr.bf16.gmra.mrb[0].mxu0 %v787
  %v1183 = vpop.f32.mrb[0].mxu0
  %v1184 = vadd.f32 %v227, %v1183
  %v1185 = vpop.f32.mrb[0].mxu0
  %v1186 = vpop.f32.mrb[0].mxu0
  %v1187 = vadd.f32 %v227, %v1186
  %v1188 = vpop.f32.mrb[0].mxu0
  %1189 = vmatprep.mubr.bf16.mxu0 0
  %1190 = vmatmul.mubr.bf16.gmra.mrb[0].mxu0 %v790
  %v1191 = vpop.f32.mrb[0].mxu0
  %v1192 = vadd.f32 %v227, %v1191
  %v1193 = vpop.f32.mrb[0].mxu0
  %v1194 = vpop.f32.mrb[0].mxu0
  %v1195 = vadd.f32 %v227, %v1194
  %v1196 = vpop.f32.mrb[0].mxu0
  %1197 = vmatprep.mubr.bf16.mxu0 0
  %1198 = vmatmul.mubr.bf16.gmra.mrb[0].mxu0 %v793
  %v1199 = vpop.f32.mrb[0].mxu0
  %v1200 = vadd.f32 %v227, %v1199
  %v1201 = vpop.f32.mrb[0].mxu0
  %v1202 = vpop.f32.mrb[0].mxu0
  %v1203 = vadd.f32 %v227, %v1202
  %v1204 = vpop.f32.mrb[0].mxu0
  %1205 = vmatprep.mubr.bf16.mxu0 0
  %1206 = vmatmul.mubr.bf16.gmra.mrb[0].mxu0 %v796
  %v1207 = vpop.f32.mrb[0].mxu0
  %v1208 = vadd.f32 %v227, %v1207
  %v1209 = vpop.f32.mrb[0].mxu0
  %v1210 = vpop.f32.mrb[0].mxu0
  %v1211 = vadd.f32 %v227, %v1210
  %v1212 = vpop.f32.mrb[0].mxu0
  %1213 = vmatprep.mubr.bf16.mxu0 0
  %1214 = vmatmul.mubr.bf16.gmra.mrb[0].mxu0 %v799
  %v1215 = vpop.f32.mrb[0].mxu0
  %v1216 = vadd.f32 %v227, %v1215
  %v1217 = vpop.f32.mrb[0].mxu0
  %v1218 = vpop.f32.mrb[0].mxu0
  %v1219 = vadd.f32 %v227, %v1218
  %v1220 = vpop.f32.mrb[0].mxu0
  %1221 = vmatprep.mubr.bf16.mxu0 0
  %1222 = vmatmul.mubr.bf16.gmra.mrb[0].mxu0 %v802
  %v1223 = vpop.f32.mrb[0].mxu0
  %v1224 = vadd.f32 %v227, %v1223
  %v1225 = vpop.f32.mrb[0].mxu0
  %v1226 = vpop.f32.mrb[0].mxu0
  %v1227 = vadd.f32 %v227, %v1226
  %v1228 = vpop.f32.mrb[0].mxu0
  %1229 = vmatprep.mubr.bf16.mxu0 0
  %1230 = vmatmul.mubr.bf16.gmra.mrb[0].mxu0 %v805
  %v1231 = vpop.f32.mrb[0].mxu0
  %v1232 = vadd.f32 %v227, %v1231
  %v1233 = vpop.f32.mrb[0].mxu0
  %v1234 = vpop.f32.mrb[0].mxu0
  %v1235 = vadd.f32 %v227, %v1234
  %v1236 = vpop.f32.mrb[0].mxu0
  %1237 = vmatprep.mubr.bf16.mxu0 0
  %1238 = vmatmul.mubr.bf16.gmra.mrb[0].mxu0 %v808
  %v1239 = vpop.f32.mrb[0].mxu0
  %v1240 = vadd.f32 %v227, %v1239
  %v1241 = vpop.f32.mrb[0].mxu0
  %v1242 = vpop.f32.mrb[0].mxu0
  %v1243 = vadd.f32 %v227, %v1242
  %v1244 = vpop.f32.mrb[0].mxu0
  %1245 = vmatprep.mubr.bf16.mxu0 0
  %1246 = vmatmul.mubr.bf16.gmra.mrb[0].mxu0 %v811
  %v1247 = vpop.f32.mrb[0].mxu0
  %v1248 = vadd.f32 %v227, %v1247
  %v1249 = vpop.f32.mrb[0].mxu0
  %v1250 = vpop.f32.mrb[0].mxu0
  %v1251 = vadd.f32 %v227, %v1250
  %v1252 = vpop.f32.mrb[0].mxu0
  %1253 = vmatprep.mubr.bf16.mxu0 0
  %1254 = vmatmul.mubr.bf16.gmra.mrb[0].mxu0 %v814
  %v1255 = vpop.f32.mrb[0].mxu0
  %v1256 = vadd.f32 %v227, %v1255
  %v1257 = vpop.f32.mrb[0].mxu0
  %v1258 = vpop.f32.mrb[0].mxu0
  %v1259 = vadd.f32 %v227, %v1258
  %v1260 = vpop.f32.mrb[0].mxu0
  %1261 = vmatprep.mubr.bf16.mxu0 0
  %1262 = vmatmul.mubr.bf16.gmra.mrb[0].mxu0 %v817
  %v1263 = vpop.f32.mrb[0].mxu0
  %v1264 = vadd.f32 %v227, %v1263
  %v1265 = vpop.f32.mrb[0].mxu0
  %v1266 = vpop.f32.mrb[0].mxu0
  %v1267 = vadd.f32 %v227, %v1266
  %v1268 = vpop.f32.mrb[0].mxu0
  %1269 = vmatprep.mubr.bf16.mxu0 0
  %1270 = vmatmul.mubr.bf16.gmra.mrb[0].mxu0 %v820
  %v1271 = vpop.f32.mrb[0].mxu0
  %v1272 = vadd.f32 %v227, %v1271
  %v1273 = vpop.f32.mrb[0].mxu0
  %v1274 = vpop.f32.mrb[0].mxu0
  %v1275 = vadd.f32 %v227, %v1274
  %v1276 = vpop.f32.mrb[0].mxu0
  %1277 = vmatprep.mubr.bf16.mxu0 0
  %1278 = vmatmul.mubr.bf16.gmra.mrb[0].mxu0 %v823
  %v1279 = vpop.f32.mrb[0].mxu0
  %v1280 = vadd.f32 %v227, %v1279
  %v1281 = vpop.f32.mrb[0].mxu0
  %v1282 = vpop.f32.mrb[0].mxu0
  %v1283 = vadd.f32 %v227, %v1282
  %v1284 = vpop.f32.mrb[0].mxu0
  %1285 = vmatprep.mubr.bf16.mxu0 0
  %1286 = vmatmul.mubr.bf16.gmra.mrb[0].mxu0 %v826
  %v1287 = vpop.f32.mrb[0].mxu0
  %v1288 = vadd.f32 %v227, %v1287
  %v1289 = vpop.f32.mrb[0].mxu0
  %v1290 = vpop.f32.mrb[0].mxu0
  %v1291 = vadd.f32 %v227, %v1290
  %v1292 = vpop.f32.mrb[0].mxu0
  %1293 = vmatprep.mubr.bf16.mxu0 0
  %1294 = vmatmul.mubr.bf16.gmra.mrb[0].mxu0 %v829
  %v1295 = vpop.f32.mrb[0].mxu0
  %v1296 = vadd.f32 %v227, %v1295
  %v1297 = vpop.f32.mrb[0].mxu0
  %v1298 = vpop.f32.mrb[0].mxu0
  %v1299 = vadd.f32 %v227, %v1298
  %v1300 = vpop.f32.mrb[0].mxu0
  %1301 = vmatprep.mubr.bf16.mxu0 0
  %1302 = vmatmul.mubr.bf16.gmra.mrb[0].mxu0 %v832
  %v1303 = vpop.f32.mrb[0].mxu0
  %v1304 = vadd.f32 %v227, %v1303
  %v1305 = vpop.f32.mrb[0].mxu0
  %v1306 = vpop.f32.mrb[0].mxu0
  %v1307 = vadd.f32 %v227, %v1306
  %v1308 = vpop.f32.mrb[0].mxu0
  %1309 = vmatprep.mubr.bf16.mxu0 0
  %1310 = vmatmul.mubr.bf16.gmra.mrb[0].mxu0 %v835
  %v1311 = vpop.f32.mrb[0].mxu0
  %v1312 = vadd.f32 %v227, %v1311
  %v1313 = vpop.f32.mrb[0].mxu0
  %v1314 = vpop.f32.mrb[0].mxu0
  %v1315 = vadd.f32 %v227, %v1314
  %v1316 = vpop.f32.mrb[0].mxu0
  %1317 = vmatprep.mubr.bf16.mxu0 0
  %1318 = vmatmul.mubr.bf16.gmra.mrb[0].mxu0 %v838
  %v1319 = vpop.f32.mrb[0].mxu0
  %v1320 = vadd.f32 %v227, %v1319
  %v1321 = vpop.f32.mrb[0].mxu0
  %v1322 = vpop.f32.mrb[0].mxu0
  %v1323 = vadd.f32 %v227, %v1322
  %v1324 = vpop.f32.mrb[0].mxu0
  %1325 = vmatprep.mubr.bf16.mxu0 0
  %1326 = vmatmul.mubr.bf16.gmra.mrb[0].mxu0 %v841
  %v1327 = vpop.f32.mrb[0].mxu0
  %v1328 = vadd.f32 %v227, %v1327
  %v1329 = vpop.f32.mrb[0].mxu0
  %v1330 = vpop.f32.mrb[0].mxu0
  %v1331 = vadd.f32 %v227, %v1330
  %v1332 = vpop.f32.mrb[0].mxu0
  %1333 = vmatprep.mubr.bf16.mxu0 0
  %1334 = vmatmul.mubr.bf16.gmra.mrb[0].mxu0 %v844
  %v1335 = vpop.f32.mrb[0].mxu0
  %v1336 = vadd.f32 %v227, %v1335
  %v1337 = vpop.f32.mrb[0].mxu0
  %v1338 = vpop.f32.mrb[0].mxu0
  %v1339 = vadd.f32 %v227, %v1338
  %v1340 = vpop.f32.mrb[0].mxu0
  %1341 = vmatprep.mubr.bf16.mxu0 0
  %1342 = vmatmul.mubr.bf16.gmra.mrb[0].mxu0 %v847
  %v1343 = vpop.f32.mrb[0].mxu0
  %v1344 = vadd.f32 %v227, %v1343
  %v1345 = vpop.f32.mrb[0].mxu0
  %v1346 = vpop.f32.mrb[0].mxu0
  %v1347 = vadd.f32 %v227, %v1346
  %v1348 = vpop.f32.mrb[0].mxu0
  %1349 = vmatprep.mubr.bf16.mxu0 0
  %1350 = vmatmul.mubr.bf16.gmra.mrb[0].mxu0 %v850
  %v1351 = vpop.f32.mrb[0].mxu0
  %v1352 = vadd.f32 %v227, %v1351
  %v1353 = vpop.f32.mrb[0].mxu0
  %v1354 = vpop.f32.mrb[0].mxu0
  %v1355 = vadd.f32 %v227, %v1354
  %v1356 = vpop.f32.mrb[0].mxu0
  %1357 = vmatprep.mubr.bf16.mxu0 0
  %1358 = vmatmul.mubr.bf16.gmra.mrb[0].mxu0 %v853
  %v1359 = vpop.f32.mrb[0].mxu0
  %v1360 = vadd.f32 %v227, %v1359
  %v1361 = vpop.f32.mrb[0].mxu0
  %v1362 = vpop.f32.mrb[0].mxu0
  %v1363 = vadd.f32 %v227, %v1362
  %v1364 = vpop.f32.mrb[0].mxu0
  %1365 = vmatprep.mubr.bf16.mxu0 0
  %1366 = vmatmul.mubr.bf16.gmra.mrb[0].mxu0 %v856
  %v1367 = vpop.f32.mrb[0].mxu0
  %v1368 = vadd.f32 %v227, %v1367
  %v1369 = vpop.f32.mrb[0].mxu0
  %v1370 = vpop.f32.mrb[0].mxu0
  %v1371 = vadd.f32 %v227, %v1370
  %v1372 = vpop.f32.mrb[0].mxu0
  %1373 = vmatprep.mubr.bf16.mxu0 0
  %1374 = vmatmul.mubr.bf16.gmra.mrb[0].mxu0 %v859
  %v1375 = vpop.f32.mrb[0].mxu0
  %v1376 = vadd.f32 %v227, %v1375
  %v1377 = vpop.f32.mrb[0].mxu0
  %v1378 = vpop.f32.mrb[0].mxu0
  %v1379 = vadd.f32 %v227, %v1378
  %v1380 = vpop.f32.mrb[0].mxu0
  %1381 = vmatprep.mubr.bf16.mxu0 0
  %1382 = vmatmul.mubr.bf16.gmra.mrb[0].mxu0 %v862
  %v1383 = vpop.f32.mrb[0].mxu0
  %v1384 = vadd.f32 %v227, %v1383
  %v1385 = vpop.f32.mrb[0].mxu0
  %v1386 = vpop.f32.mrb[0].mxu0
  %v1387 = vadd.f32 %v227, %v1386
  %v1388 = vpop.f32.mrb[0].mxu0
  %1389 = vmatprep.mubr.bf16.mxu0 0
  %1390 = vmatmul.mubr.bf16.gmra.mrb[0].mxu0 %v865
  %v1391 = vpop.f32.mrb[0].mxu0
  %v1392 = vadd.f32 %v227, %v1391
  %v1393 = vpop.f32.mrb[0].mxu0
  %v1394 = vpop.f32.mrb[0].mxu0
  %v1395 = vadd.f32 %v227, %v1394
  %v1396 = vpop.f32.mrb[0].mxu0
  %1397 = vmatprep.mubr.bf16.mxu0 0
  %1398 = vmatmul.mubr.bf16.gmra.mrb[0].mxu0 %v868
  %v1399 = vpop.f32.mrb[0].mxu0
  %v1400 = vadd.f32 %v227, %v1399
  %v1401 = vpop.f32.mrb[0].mxu0
  %v1402 = vpop.f32.mrb[0].mxu0
  %v1403 = vadd.f32 %v227, %v1402
  %v1404 = vpop.f32.mrb[0].mxu0
  %1405 = vmatprep.mubr.bf16.mxu0 0
  %1406 = vmatmul.mubr.bf16.gmra.mrb[0].mxu0 %v871
  %v1407 = vpop.f32.mrb[0].mxu0
  %v1408 = vadd.f32 %v227, %v1407
  %v1409 = vpop.f32.mrb[0].mxu0
  %v1410 = vpop.f32.mrb[0].mxu0
  %v1411 = vadd.f32 %v227, %v1410
  %v1412 = vpop.f32.mrb[0].mxu0
  %1413 = vmatprep.mubr.bf16.mxu0 0
  %1414 = vmatmul.mubr.bf16.gmra.mrb[0].mxu0 %v874
  %v1415 = vpop.f32.mrb[0].mxu0
  %v1416 = vadd.f32 %v227, %v1415
  %v1417 = vpop.f32.mrb[0].mxu0
  %v1418 = vpop.f32.mrb[0].mxu0
  %v1419 = vadd.f32 %v227, %v1418
  %v1420 = vpop.f32.mrb[0].mxu0
  %1421 = vmatprep.mubr.bf16.mxu0 0
  %1422 = vmatmul.mubr.bf16.gmra.mrb[0].mxu0 %v877
  %v1423 = vpop.f32.mrb[0].mxu0
  %v1424 = vadd.f32 %v227, %v1423
  %v1425 = vpop.f32.mrb[0].mxu0
  %v1426 = vpop.f32.mrb[0].mxu0
  %v1427 = vadd.f32 %v227, %v1426
  %v1428 = vpop.f32.mrb[0].mxu0
  %1429 = vmatprep.mubr.bf16.mxu0 0
  %1430 = vmatmul.mubr.bf16.gmra.mrb[0].mxu0 %v880
  %v1431 = vpop.f32.mrb[0].mxu0
  %v1432 = vadd.f32 %v227, %v1431
  %v1433 = vpop.f32.mrb[0].mxu0
  %v1434 = vpop.f32.mrb[0].mxu0
  %v1435 = vadd.f32 %v227, %v1434
  %v1436 = vpop.f32.mrb[0].mxu0
  %1437 = vmatprep.mubr.bf16.mxu0 0
  %1438 = vmatmul.mubr.bf16.gmra.mrb[0].mxu0 %v883
  %v1439 = vpop.f32.mrb[0].mxu0
  %v1440 = vadd.f32 %v227, %v1439
  %v1441 = vpop.f32.mrb[0].mxu0
  %v1442 = vpop.f32.mrb[0].mxu0
  %v1443 = vadd.f32 %v227, %v1442
  %v1444 = vpop.f32.mrb[0].mxu0
  %1445 = vmatprep.mubr.bf16.mxu0 0
  %1446 = vmatmul.mubr.bf16.gmra.mrb[0].mxu0 %v886
  %v1447 = vpop.f32.mrb[0].mxu0
  %v1448 = vadd.f32 %v227, %v1447
  %v1449 = vpop.f32.mrb[0].mxu0
  %v1450 = vpop.f32.mrb[0].mxu0
  %v1451 = vadd.f32 %v227, %v1450
  %v1452 = vpop.f32.mrb[0].mxu0
  %1453 = vmatprep.mubr.bf16.mxu0 0
  %1454 = vmatmul.mubr.bf16.gmra.mrb[0].mxu0 %v889
  %v1455 = vpop.f32.mrb[0].mxu0
  %v1456 = vadd.f32 %v227, %v1455
  %v1457 = vpop.f32.mrb[0].mxu0
  %v1458 = vpop.f32.mrb[0].mxu0
  %v1459 = vadd.f32 %v227, %v1458
  %v1460 = vpop.f32.mrb[0].mxu0
  %1461 = vmatprep.mubr.bf16.mxu0 0
  %1462 = vmatmul.mubr.bf16.gmra.mrb[0].mxu0 %v892
  %v1463 = vpop.f32.mrb[0].mxu0
  %v1464 = vadd.f32 %v227, %v1463
  %v1465 = vpop.f32.mrb[0].mxu0
  %v1466 = vpop.f32.mrb[0].mxu0
  %v1467 = vadd.f32 %v227, %v1466
  %v1468 = vpop.f32.mrb[0].mxu0
  %1469 = vmatprep.mubr.bf16.mxu0 0
  %1470 = vmatmul.mubr.bf16.gmra.mrb[0].mxu0 %v895
  %v1471 = vpop.f32.mrb[0].mxu0
  %v1472 = vadd.f32 %v227, %v1471
  %v1473 = vpop.f32.mrb[0].mxu0
  %v1474 = vpop.f32.mrb[0].mxu0
  %v1475 = vadd.f32 %v227, %v1474
  %v1476 = vpop.f32.mrb[0].mxu0
  %1477 = vmatprep.mubr.bf16.mxu0 0
  %1478 = vmatmul.mubr.bf16.gmra.mrb[0].mxu0 %v898
  %v1479 = vpop.f32.mrb[0].mxu0
  %v1480 = vadd.f32 %v227, %v1479
  %v1481 = vpop.f32.mrb[0].mxu0
  %v1482 = vpop.f32.mrb[0].mxu0
  %v1483 = vadd.f32 %v227, %v1482
  %v1484 = vpop.f32.mrb[0].mxu0
  %1485 = vmatprep.mubr.bf16.mxu0 0
  %1486 = vmatmul.mubr.bf16.gmra.mrb[0].mxu0 %v901
  %v1487 = vpop.f32.mrb[0].mxu0
  %v1488 = vadd.f32 %v227, %v1487
  %v1489 = vpop.f32.mrb[0].mxu0
  %v1490 = vpop.f32.mrb[0].mxu0
  %v1491 = vadd.f32 %v227, %v1490
  %v1492 = vpop.f32.mrb[0].mxu0
  %1493 = vmatprep.mubr.bf16.mxu0 0
  %1494 = vmatmul.mubr.bf16.gmra.mrb[0].mxu0 %v904
  %v1495 = vpop.f32.mrb[0].mxu0
  %v1496 = vadd.f32 %v227, %v1495
  %v1497 = vpop.f32.mrb[0].mxu0
  %v1498 = vpop.f32.mrb[0].mxu0
  %v1499 = vadd.f32 %v227, %v1498
  %v1500 = vpop.f32.mrb[0].mxu0
  %1501 = vmatprep.mubr.bf16.mxu0 0
  %1502 = vmatmul.mubr.bf16.gmra.mrb[0].mxu0 %v907
  %v1503 = vpop.f32.mrb[0].mxu0
  %v1504 = vadd.f32 %v227, %v1503
  %v1505 = vpop.f32.mrb[0].mxu0
  %v1506 = vpop.f32.mrb[0].mxu0
  %v1507 = vadd.f32 %v227, %v1506
  %v1508 = vpop.f32.mrb[0].mxu0
  %1509 = vmatprep.mubr.bf16.mxu0 0
  %1510 = vmatmul.mubr.bf16.gmra.mrb[0].mxu0 %v910
  %v1511 = vpop.f32.mrb[0].mxu0
  %v1512 = vadd.f32 %v227, %v1511
  %v1513 = vpop.f32.mrb[0].mxu0
  %v1514 = vpop.f32.mrb[0].mxu0
  %v1515 = vadd.f32 %v227, %v1514
  %v1516 = vpop.f32.mrb[0].mxu0
  %1517 = vmatprep.mubr.bf16.mxu0 0
  %1518 = vmatmul.mubr.bf16.gmra.mrb[0].mxu0 %v913
  %v1519 = vpop.f32.mrb[0].mxu0
  %v1520 = vadd.f32 %v227, %v1519
  %v1521 = vpop.f32.mrb[0].mxu0
  %v1522 = vpop.f32.mrb[0].mxu0
  %v1523 = vadd.f32 %v227, %v1522
  %v1524 = vpop.f32.mrb[0].mxu0
  %1525 = vmatprep.mubr.bf16.mxu0 0
  %1526 = vmatmul.mubr.bf16.gmra.mrb[0].mxu0 %v916
  %v1527 = vpop.f32.mrb[0].mxu0
  %v1528 = vadd.f32 %v227, %v1527
  %v1529 = vpop.f32.mrb[0].mxu0
  %v1530 = vpop.f32.mrb[0].mxu0
  %v1531 = vadd.f32 %v227, %v1530
  %v1532 = vpop.f32.mrb[0].mxu0
  %1533 = vmatprep.mubr.bf16.mxu0 0
  %1534 = vmatmul.mubr.bf16.gmra.mrb[0].mxu0 %v919
  %v1535 = vpop.f32.mrb[0].mxu0
  %v1536 = vadd.f32 %v227, %v1535
  %v1537 = vpop.f32.mrb[0].mxu0
  %v1538 = vpop.f32.mrb[0].mxu0
  %v1539 = vadd.f32 %v227, %v1538
  %v1540 = vpop.f32.mrb[0].mxu0
  %1541 = vmatprep.mubr.bf16.mxu0 0
  %1542 = vmatmul.mubr.bf16.gmra.mrb[0].mxu0 %v922
  %v1543 = vpop.f32.mrb[0].mxu0
  %v1544 = vadd.f32 %v227, %v1543
  %v1545 = vpop.f32.mrb[0].mxu0
  %v1546 = vpop.f32.mrb[0].mxu0
  %v1547 = vadd.f32 %v227, %v1546
  %v1548 = vpop.f32.mrb[0].mxu0
  %1549 = vmatprep.mubr.bf16.mxu0 0
  %1550 = vmatmul.mubr.bf16.gmra.mrb[0].mxu0 %v925
  %v1551 = vpop.f32.mrb[0].mxu0
  %v1552 = vadd.f32 %v227, %v1551
  %v1553 = vpop.f32.mrb[0].mxu0
  %v1554 = vpop.f32.mrb[0].mxu0
  %v1555 = vadd.f32 %v227, %v1554
  %v1556 = vpop.f32.mrb[0].mxu0
  %1557 = vmatprep.mubr.bf16.mxu0 0
  %1558 = vmatmul.mubr.bf16.gmra.mrb[0].mxu0 %v928
  %v1559 = vpop.f32.mrb[0].mxu0
  %v1560 = vadd.f32 %v227, %v1559
  %v1561 = vpop.f32.mrb[0].mxu0
  %v1562 = vpop.f32.mrb[0].mxu0
  %v1563 = vadd.f32 %v227, %v1562
  %v1564 = vpop.f32.mrb[0].mxu0
  %1565 = vmatprep.mubr.bf16.mxu0 0
  %1566 = vmatmul.mubr.bf16.gmra.mrb[0].mxu0 %v931
  %v1567 = vpop.f32.mrb[0].mxu0
  %v1568 = vadd.f32 %v227, %v1567
  %v1569 = vpop.f32.mrb[0].mxu0
  %v1570 = vpop.f32.mrb[0].mxu0
  %v1571 = vadd.f32 %v227, %v1570
  %v1572 = vpop.f32.mrb[0].mxu0
  %1573 = vmatprep.mubr.bf16.mxu0 0
  %1574 = vmatmul.mubr.bf16.gmra.mrb[0].mxu0 %v934
  %v1575 = vpop.f32.mrb[0].mxu0
  %v1576 = vadd.f32 %v227, %v1575
  %v1577 = vpop.f32.mrb[0].mxu0
  %v1578 = vpop.f32.mrb[0].mxu0
  %v1579 = vadd.f32 %v227, %v1578
  %v1580 = vpop.f32.mrb[0].mxu0
  %1581 = vmatprep.mubr.bf16.mxu0 0
  %1582 = vmatmul.mubr.bf16.gmra.mrb[0].mxu0 %v937
  %v1583 = vpop.f32.mrb[0].mxu0
  %v1584 = vadd.f32 %v227, %v1583
  %v1585 = vpop.f32.mrb[0].mxu0
  %v1586 = vpop.f32.mrb[0].mxu0
  %v1587 = vadd.f32 %v227, %v1586
  %v1588 = vpop.f32.mrb[0].mxu0
  %1589 = vmatprep.mubr.bf16.mxu0 0
  %1590 = vmatmul.mubr.bf16.gmra.mrb[0].mxu0 %v940
  %v1591 = vpop.f32.mrb[0].mxu0
  %v1592 = vadd.f32 %v227, %v1591
  %v1593 = vpop.f32.mrb[0].mxu0
  %v1594 = vpop.f32.mrb[0].mxu0
  %v1595 = vadd.f32 %v227, %v1594
  %v1596 = vpop.f32.mrb[0].mxu0
  %1597 = vmatprep.mubr.bf16.mxu0 0
  %1598 = vmatmul.mubr.bf16.gmra.mrb[0].mxu0 %v943
  %v1599 = vpop.f32.mrb[0].mxu0
  %v1600 = vadd.f32 %v227, %v1599
  %v1601 = vpop.f32.mrb[0].mxu0
  %v1602 = vpop.f32.mrb[0].mxu0
  %v1603 = vadd.f32 %v227, %v1602
  %v1604 = vpop.f32.mrb[0].mxu0
  %1605 = vmatprep.mubr.bf16.mxu0 0
  %1606 = vmatmul.mubr.bf16.gmra.mrb[0].mxu0 %v946
  %v1607 = vpop.f32.mrb[0].mxu0
  %v1608 = vadd.f32 %v227, %v1607
  %v1609 = vpop.f32.mrb[0].mxu0
  %v1610 = vpop.f32.mrb[0].mxu0
  %v1611 = vadd.f32 %v227, %v1610
  %v1612 = vpop.f32.mrb[0].mxu0
  %1613 = vmatprep.mubr.bf16.mxu0 0
  %1614 = vmatmul.mubr.bf16.gmra.mrb[0].mxu0 %v949
  %v1615 = vpop.f32.mrb[0].mxu0
  %v1616 = vadd.f32 %v227, %v1615
  %v1617 = vpop.f32.mrb[0].mxu0
  %v1618 = vpop.f32.mrb[0].mxu0
  %v1619 = vadd.f32 %v227, %v1618
  %v1620 = vpop.f32.mrb[0].mxu0
  %1621 = vmatprep.mubr.bf16.mxu0 0
  %1622 = vmatmul.mubr.bf16.gmra.mrb[0].mxu0 %v952
  %v1623 = vpop.f32.mrb[0].mxu0
  %v1624 = vadd.f32 %v227, %v1623
  %v1625 = vpop.f32.mrb[0].mxu0
  %v1626 = vpop.f32.mrb[0].mxu0
  %v1627 = vadd.f32 %v227, %v1626
  %v1628 = vpop.f32.mrb[0].mxu0
  %1629 = vmatprep.mubr.bf16.mxu0 0
  %1630 = vmatmul.mubr.bf16.gmra.mrb[0].mxu0 %v955
  %v1631 = vpop.f32.mrb[0].mxu0
  %v1632 = vadd.f32 %v227, %v1631
  %v1633 = vpop.f32.mrb[0].mxu0
  %v1634 = vpop.f32.mrb[0].mxu0
  %v1635 = vadd.f32 %v227, %v1634
  %v1636 = vpop.f32.mrb[0].mxu0
  %1637 = vmatprep.mubr.bf16.mxu0 0
  %1638 = vmatmul.mubr.bf16.gmra.mrb[0].mxu0 %v958
  %v1639 = vpop.f32.mrb[0].mxu0
  %v1640 = vadd.f32 %v227, %v1639
  %v1641 = vpop.f32.mrb[0].mxu0
  %v1642 = vpop.f32.mrb[0].mxu0
  %v1643 = vadd.f32 %v227, %v1642
  %v1644 = vpop.f32.mrb[0].mxu0
  %1645 = vmatprep.mubr.bf16.mxu0 0
  %1646 = vmatmul.mubr.bf16.gmra.mrb[0].mxu0 %v961
  %v1647 = vpop.f32.mrb[0].mxu0
  %v1648 = vadd.f32 %v227, %v1647
  %v1649 = vpop.f32.mrb[0].mxu0
  %v1650 = vpop.f32.mrb[0].mxu0
  %v1651 = vadd.f32 %v227, %v1650
  %v1652 = vpop.f32.mrb[0].mxu0
  %1653 = vmatprep.mubr.bf16.mxu0 0
  %1654 = vmatmul.mubr.bf16.gmra.mrb[0].mxu0 %v964
  %v1655 = vpop.f32.mrb[0].mxu0
  %v1656 = vadd.f32 %v227, %v1655
  %v1657 = vpop.f32.mrb[0].mxu0
  %v1658 = vpop.f32.mrb[0].mxu0
  %v1659 = vadd.f32 %v227, %v1658
  %v1660 = vpop.f32.mrb[0].mxu0
  %1661 = vmatprep.mubr.bf16.mxu0 0
  %1662 = vmatmul.mubr.bf16.gmra.mrb[0].mxu0 %v967
  %v1663 = vpop.f32.mrb[0].mxu0
  %v1664 = vadd.f32 %v227, %v1663
  %v1665 = vpop.f32.mrb[0].mxu0
  %v1666 = vpop.f32.mrb[0].mxu0
  %v1667 = vadd.f32 %v227, %v1666
  %v1668 = vpop.f32.mrb[0].mxu0
  %1669 = vmatprep.mubr.bf16.mxu0 0
  %1670 = vmatmul.mubr.bf16.gmra.mrb[0].mxu0 %v970
  %v1671 = vpop.f32.mrb[0].mxu0
  %v1672 = vadd.f32 %v227, %v1671
  %v1673 = vpop.f32.mrb[0].mxu0
  %v1674 = vpop.f32.mrb[0].mxu0
  %v1675 = vadd.f32 %v227, %v1674
  %v1676 = vpop.f32.mrb[0].mxu0
  %1677 = vmatprep.mubr.bf16.mxu0 0
  %1678 = vmatmul.mubr.bf16.gmra.mrb[0].mxu0 %v973
  %v1679 = vpop.f32.mrb[0].mxu0
  %v1680 = vadd.f32 %v227, %v1679
  %v1681 = vpop.f32.mrb[0].mxu0
  %v1682 = vpop.f32.mrb[0].mxu0
  %v1683 = vadd.f32 %v227, %v1682
  %v1684 = vpop.f32.mrb[0].mxu0
  %1685 = vmatprep.mubr.bf16.mxu0 0
  %1686 = vmatmul.mubr.bf16.gmra.mrb[0].mxu0 %v976
  %v1687 = vpop.f32.mrb[0].mxu0
  %v1688 = vadd.f32 %v227, %v1687
  %v1689 = vpop.f32.mrb[0].mxu0
  %v1690 = vpop.f32.mrb[0].mxu0
  %v1691 = vadd.f32 %v227, %v1690
  %v1692 = vpop.f32.mrb[0].mxu0
  %1693 = vmatprep.mubr.bf16.mxu0 0
  %1694 = vmatmul.mubr.bf16.gmra.mrb[0].mxu0 %v979
  %v1695 = vpop.f32.mrb[0].mxu0
  %v1696 = vadd.f32 %v227, %v1695
  %v1697 = vpop.f32.mrb[0].mxu0
  %v1698 = vpop.f32.mrb[0].mxu0
  %v1699 = vadd.f32 %v227, %v1698
  %v1700 = vpop.f32.mrb[0].mxu0
  %1701 = vmatprep.mubr.bf16.mxu0 0
  %1702 = vmatmul.mubr.bf16.gmra.mrb[0].mxu0 %v982
  %v1703 = vpop.f32.mrb[0].mxu0
  %v1704 = vadd.f32 %v227, %v1703
  %v1705 = vpop.f32.mrb[0].mxu0
  %v1706 = vpop.f32.mrb[0].mxu0
  %v1707 = vadd.f32 %v227, %v1706
  %v1708 = vpop.f32.mrb[0].mxu0
  %1709 = vmatprep.mubr.bf16.mxu0 0
  %1710 = vmatmul.mubr.bf16.gmra.mrb[0].mxu0 %v985
  %v1711 = vpop.f32.mrb[0].mxu0
  %v1712 = vadd.f32 %v227, %v1711
  %v1713 = vpop.f32.mrb[0].mxu0
  %v1714 = vpop.f32.mrb[0].mxu0
  %v1715 = vadd.f32 %v227, %v1714
  %v1716 = vpop.f32.mrb[0].mxu0
  %1717 = vmatprep.mubr.bf16.mxu0 0
  %1718 = vmatmul.mubr.bf16.gmra.mrb[0].mxu0 %v988
  %v1719 = vpop.f32.mrb[0].mxu0
  %v1720 = vadd.f32 %v227, %v1719
  %v1721 = vpop.f32.mrb[0].mxu0
  %v1722 = vpop.f32.mrb[0].mxu0
  %v1723 = vadd.f32 %v227, %v1722
  %v1724 = vpop.f32.mrb[0].mxu0
  %1725 = vmatprep.mubr.bf16.mxu0 0
  %1726 = vmatmul.mubr.bf16.gmra.mrb[0].mxu0 %v991
  %v1727 = vpop.f32.mrb[0].mxu0
  %v1728 = vadd.f32 %v227, %v1727
  %v1729 = vpop.f32.mrb[0].mxu0
  %v1730 = vpop.f32.mrb[0].mxu0
  %v1731 = vadd.f32 %v227, %v1730
  %v1732 = vpop.f32.mrb[0].mxu0
  %1733 = vmatprep.mubr.bf16.mxu0 0
  %1734 = vmatmul.mubr.bf16.gmra.mrb[0].mxu0 %v994
  %v1735 = vpop.f32.mrb[0].mxu0
  %v1736 = vadd.f32 %v227, %v1735
  %v1737 = vpop.f32.mrb[0].mxu0
  %v1738 = vpop.f32.mrb[0].mxu0
  %v1739 = vadd.f32 %v227, %v1738
  %v1740 = vpop.f32.mrb[0].mxu0
  %1741 = vmatprep.mubr.bf16.mxu0 0
  %1742 = vmatmul.mubr.bf16.gmra.mrb[0].mxu0 %v997
  %v1743 = vpop.f32.mrb[0].mxu0
  %v1744 = vadd.f32 %v227, %v1743
  %v1745 = vpop.f32.mrb[0].mxu0
  %v1746 = vpop.f32.mrb[0].mxu0
  %v1747 = vadd.f32 %v227, %v1746
  %v1748 = vpop.f32.mrb[0].mxu0
  %1749 = vmatprep.mubr.bf16.mxu0 0
  %1750 = vmatmul.mubr.bf16.gmra.mrb[0].mxu0 %v1000
  %v1751 = vpop.f32.mrb[0].mxu0
  %v1752 = vadd.f32 %v227, %v1751
  %v1753 = vpop.f32.mrb[0].mxu0
  %v1754 = vpop.f32.mrb[0].mxu0
  %v1755 = vadd.f32 %v227, %v1754
  %v1756 = vpop.f32.mrb[0].mxu0
  %1757 = vmatprep.mubr.bf16.mxu0 0
  %1758 = vmatmul.mubr.bf16.gmra.mrb[0].mxu0 %v1003
  %v1759 = vpop.f32.mrb[0].mxu0
  %v1760 = vadd.f32 %v227, %v1759
  %v1761 = vpop.f32.mrb[0].mxu0
  %v1762 = vpop.f32.mrb[0].mxu0
  %v1763 = vadd.f32 %v227, %v1762
  %v1764 = vpop.f32.mrb[0].mxu0
  %1765 = vmatprep.mubr.bf16.mxu0 0
  %1766 = vmatmul.mubr.bf16.gmra.mrb[0].mxu0 %v1006
  %v1767 = vpop.f32.mrb[0].mxu0
  %v1768 = vadd.f32 %v227, %v1767
  %v1769 = vpop.f32.mrb[0].mxu0
  %v1770 = vpop.f32.mrb[0].mxu0
  %v1771 = vadd.f32 %v227, %v1770
  %v1772 = vpop.f32.mrb[0].mxu0
  %1773 = vmatprep.mubr.bf16.mxu0 0
  %1774 = vmatmul.mubr.bf16.gmra.mrb[0].mxu0 %v1009
  %v1775 = vpop.f32.mrb[0].mxu0
  %v1776 = vadd.f32 %v227, %v1775
  %v1777 = vpop.f32.mrb[0].mxu0
  %v1778 = vpop.f32.mrb[0].mxu0
  %v1779 = vadd.f32 %v227, %v1778
  %v1780 = vpop.f32.mrb[0].mxu0
  %1781 = vmatprep.mubr.bf16.mxu0 0
  %1782 = vmatmul.mubr.bf16.gmra.mrb[0].mxu0 %v1012
  %v1783 = vpop.f32.mrb[0].mxu0
  %v1784 = vadd.f32 %v227, %v1783
  %v1785 = vpop.f32.mrb[0].mxu0
  %v1786 = vpop.f32.mrb[0].mxu0
  %v1787 = vadd.f32 %v227, %v1786
  %v1788 = vpop.f32.mrb[0].mxu0
  %1789 = vmatprep.mubr.bf16.mxu0 0
  %1790 = vmatmul.mubr.bf16.gmra.mrb[0].mxu0 %v1015
  %v1791 = vpop.f32.mrb[0].mxu0
  %v1792 = vadd.f32 %v227, %v1791
  %v1793 = vpop.f32.mrb[0].mxu0
  %v1794 = vpop.f32.mrb[0].mxu0
  %v1795 = vadd.f32 %v227, %v1794
  %v1796 = vpop.f32.mrb[0].mxu0
  %1797 = vmatprep.mubr.bf16.mxu0 0
  %1798 = vmatmul.mubr.bf16.gmra.mrb[0].mxu0 %v1018
  %v1799 = vpop.f32.mrb[0].mxu0
  %v1800 = vadd.f32 %v227, %v1799
  %v1801 = vpop.f32.mrb[0].mxu0
  %v1802 = vpop.f32.mrb[0].mxu0
  %v1803 = vadd.f32 %v227, %v1802
  %v1804 = vpop.f32.mrb[0].mxu0
  %1805 = vmatprep.mubr.bf16.mxu0 0
  %1806 = vmatmul.mubr.bf16.gmra.mrb[0].mxu0 %v1021
  %v1807 = vpop.f32.mrb[0].mxu0
  %v1808 = vadd.f32 %v227, %v1807
  %v1809 = vpop.f32.mrb[0].mxu0
  %v1810 = vpop.f32.mrb[0].mxu0
  %v1811 = vadd.f32 %v227, %v1810
  %v1812 = vpop.f32.mrb[0].mxu0
  %1813 = vmatprep.mubr.bf16.mxu0 0
  %1814 = vmatmul.mubr.bf16.gmra.mrb[0].mxu0 %v1024
  %v1815 = vpop.f32.mrb[0].mxu0
  %v1816 = vadd.f32 %v227, %v1815
  %v1817 = vpop.f32.mrb[0].mxu0
  %v1818 = vpop.f32.mrb[0].mxu0
  %v1819 = vadd.f32 %v227, %v1818
  %v1820 = vpop.f32.mrb[0].mxu0
  %1821 = vmatprep.mubr.bf16.mxu0 0
  %1822 = vmatmul.mubr.bf16.gmra.mrb[0].mxu0 %v1027
  %v1823 = vpop.f32.mrb[0].mxu0
  %v1824 = vadd.f32 %v227, %v1823
  %v1825 = vpop.f32.mrb[0].mxu0
  %v1826 = vpop.f32.mrb[0].mxu0
  %v1827 = vadd.f32 %v227, %v1826
  %v1828 = vpop.f32.mrb[0].mxu0
  %1829 = vmatprep.mubr.bf16.mxu0 0
  %1830 = vmatmul.mubr.bf16.gmra.mrb[0].mxu0 %v1030
  %v1831 = vpop.f32.mrb[0].mxu0
  %v1832 = vadd.f32 %v227, %v1831
  %v1833 = vpop.f32.mrb[0].mxu0
  %v1834 = vpop.f32.mrb[0].mxu0
  %v1835 = vadd.f32 %v227, %v1834
  %v1836 = vpop.f32.mrb[0].mxu0
  %1837 = vmatprep.mubr.bf16.mxu0 0
  %1838 = vmatmul.mubr.bf16.gmra.mrb[0].mxu0 %v1033
  %v1839 = vpop.f32.mrb[0].mxu0
  %v1840 = vadd.f32 %v227, %v1839
  %v1841 = vpop.f32.mrb[0].mxu0
  %v1842 = vpop.f32.mrb[0].mxu0
  %v1843 = vadd.f32 %v227, %v1842
  %v1844 = vpop.f32.mrb[0].mxu0
  %1845 = vmatprep.mubr.bf16.mxu0 0
  %1846 = vmatmul.mubr.bf16.gmra.mrb[0].mxu0 %v1036
  %v1847 = vpop.f32.mrb[0].mxu0
  %v1848 = vadd.f32 %v227, %v1847
  %v1849 = vpop.f32.mrb[0].mxu0
  %v1850 = vpop.f32.mrb[0].mxu0
  %v1851 = vadd.f32 %v227, %v1850
  %v1852 = vpop.f32.mrb[0].mxu0
  %1853 = vmatprep.mubr.bf16.mxu0 0
  %1854 = vmatmul.mubr.bf16.gmra.mrb[0].mxu0 %v1039
  %v1855 = vpop.f32.mrb[0].mxu0
  %v1856 = vadd.f32 %v227, %v1855
  %v1857 = vpop.f32.mrb[0].mxu0
  %v1858 = vpop.f32.mrb[0].mxu0
  %v1859 = vadd.f32 %v227, %v1858
  %v1860 = vpop.f32.mrb[0].mxu0
  %1861 = vdwg.mxu0
  %v1862 = vsub.f32 0.0, %v1080
  %v1863 = vsub.f32 0.0, %v1083
  %v1864 = vsub.f32 0.0, %v1088
  %v1865 = vsub.f32 0.0, %v1091
  %v1866 = vsub.f32 0.0, %v1096
  %v1867 = vsub.f32 0.0, %v1099
  %v1868 = vsub.f32 0.0, %v1104
  %v1869 = vsub.f32 0.0, %v1107
  %v1870 = vsub.f32 0.0, %v1112
  %v1871 = vsub.f32 0.0, %v1115
  %v1872 = vsub.f32 0.0, %v1120
  %v1873 = vsub.f32 0.0, %v1123
  %v1874 = vsub.f32 0.0, %v1128
  %v1875 = vsub.f32 0.0, %v1131
  %v1876 = vsub.f32 0.0, %v1136
  %v1877 = vsub.f32 0.0, %v1139
  %v1878 = vsub.f32 0.0, %v1144
  %v1879 = vsub.f32 0.0, %v1147
  %v1880 = vsub.f32 0.0, %v1152
  %v1881 = vsub.f32 0.0, %v1155
  %v1882 = vsub.f32 0.0, %v1160
  %v1883 = vsub.f32 0.0, %v1163
  %v1884 = vsub.f32 0.0, %v1168
  %v1885 = vsub.f32 0.0, %v1171
  %v1886 = vsub.f32 0.0, %v1176
  %v1887 = vsub.f32 0.0, %v1179
  %v1888 = vsub.f32 0.0, %v1184
  %v1889 = vsub.f32 0.0, %v1187
  %v1890 = vsub.f32 0.0, %v1192
  %v1891 = vsub.f32 0.0, %v1195
  %v1892 = vsub.f32 0.0, %v1200
  %v1893 = vsub.f32 0.0, %v1203
  %v1894 = vsub.f32 0.0, %v1208
  %v1895 = vsub.f32 0.0, %v1211
  %v1896 = vsub.f32 0.0, %v1216
  %v1897 = vsub.f32 0.0, %v1219
  %v1898 = vsub.f32 0.0, %v1224
  %v1899 = vsub.f32 0.0, %v1227
  %v1900 = vsub.f32 0.0, %v1232
  %v1901 = vsub.f32 0.0, %v1235
  %v1902 = vsub.f32 0.0, %v1240
  %v1903 = vsub.f32 0.0, %v1243
  %v1904 = vsub.f32 0.0, %v1248
  %v1905 = vsub.f32 0.0, %v1251
  %v1906 = vsub.f32 0.0, %v1256
  %v1907 = vsub.f32 0.0, %v1259
  %v1908 = vsub.f32 0.0, %v1264
  %v1909 = vsub.f32 0.0, %v1267
  %v1910 = vsub.f32 0.0, %v1272
  %v1911 = vsub.f32 0.0, %v1275
  %v1912 = vsub.f32 0.0, %v1280
  %v1913 = vsub.f32 0.0, %v1283
  %v1914 = vsub.f32 0.0, %v1288
  %v1915 = vsub.f32 0.0, %v1291
  %v1916 = vsub.f32 0.0, %v1296
  %v1917 = vsub.f32 0.0, %v1299
  %v1918 = vsub.f32 0.0, %v1304
  %v1919 = vsub.f32 0.0, %v1307
  %v1920 = vsub.f32 0.0, %v1312
  %v1921 = vsub.f32 0.0, %v1315
  %v1922 = vsub.f32 0.0, %v1320
  %v1923 = vsub.f32 0.0, %v1323
  %v1924 = vsub.f32 0.0, %v1328
  %v1925 = vsub.f32 0.0, %v1331
  %v1926 = vsub.f32 0.0, %v1336
  %v1927 = vsub.f32 0.0, %v1339
  %v1928 = vsub.f32 0.0, %v1344
  %v1929 = vsub.f32 0.0, %v1347
  %v1930 = vsub.f32 0.0, %v1352
  %v1931 = vsub.f32 0.0, %v1355
  %v1932 = vsub.f32 0.0, %v1360
  %v1933 = vsub.f32 0.0, %v1363
  %v1934 = vsub.f32 0.0, %v1368
  %v1935 = vsub.f32 0.0, %v1371
  %v1936 = vsub.f32 0.0, %v1376
  %v1937 = vsub.f32 0.0, %v1379
  %v1938 = vsub.f32 0.0, %v1384
  %v1939 = vsub.f32 0.0, %v1387
  %v1940 = vsub.f32 0.0, %v1392
  %v1941 = vsub.f32 0.0, %v1395
  %v1942 = vsub.f32 0.0, %v1400
  %v1943 = vsub.f32 0.0, %v1403
  %v1944 = vsub.f32 0.0, %v1408
  %v1945 = vsub.f32 0.0, %v1411
  %v1946 = vsub.f32 0.0, %v1416
  %v1947 = vsub.f32 0.0, %v1419
  %v1948 = vsub.f32 0.0, %v1424
  %v1949 = vsub.f32 0.0, %v1427
  %v1950 = vsub.f32 0.0, %v1432
  %v1951 = vsub.f32 0.0, %v1435
  %v1952 = vsub.f32 0.0, %v1440
  %v1953 = vsub.f32 0.0, %v1443
  %v1954 = vsub.f32 0.0, %v1448
  %v1955 = vsub.f32 0.0, %v1451
  %v1956 = vsub.f32 0.0, %v1456
  %v1957 = vsub.f32 0.0, %v1459
  %v1958 = vsub.f32 0.0, %v1464
  %v1959 = vsub.f32 0.0, %v1467
  %v1960 = vsub.f32 0.0, %v1472
  %v1961 = vsub.f32 0.0, %v1475
  %v1962 = vsub.f32 0.0, %v1480
  %v1963 = vsub.f32 0.0, %v1483
  %v1964 = vsub.f32 0.0, %v1488
  %v1965 = vsub.f32 0.0, %v1491
  %v1966 = vsub.f32 0.0, %v1496
  %v1967 = vsub.f32 0.0, %v1499
  %v1968 = vsub.f32 0.0, %v1504
  %v1969 = vsub.f32 0.0, %v1507
  %v1970 = vsub.f32 0.0, %v1512
  %v1971 = vsub.f32 0.0, %v1515
  %v1972 = vsub.f32 0.0, %v1520
  %v1973 = vsub.f32 0.0, %v1523
  %v1974 = vsub.f32 0.0, %v1528
  %v1975 = vsub.f32 0.0, %v1531
  %v1976 = vsub.f32 0.0, %v1536
  %v1977 = vsub.f32 0.0, %v1539
  %v1978 = vsub.f32 0.0, %v1544
  %v1979 = vsub.f32 0.0, %v1547
  %v1980 = vsub.f32 0.0, %v1552
  %v1981 = vsub.f32 0.0, %v1555
  %v1982 = vsub.f32 0.0, %v1560
  %v1983 = vsub.f32 0.0, %v1563
  %v1984 = vsub.f32 0.0, %v1568
  %v1985 = vsub.f32 0.0, %v1571
  %v1986 = vsub.f32 0.0, %v1576
  %v1987 = vsub.f32 0.0, %v1579
  %v1988 = vsub.f32 0.0, %v1584
  %v1989 = vsub.f32 0.0, %v1587
  %v1990 = vsub.f32 0.0, %v1592
  %v1991 = vsub.f32 0.0, %v1595
  %v1992 = vsub.f32 0.0, %v1600
  %v1993 = vsub.f32 0.0, %v1603
  %v1994 = vsub.f32 0.0, %v1608
  %v1995 = vsub.f32 0.0, %v1611
  %v1996 = vsub.f32 0.0, %v1616
  %v1997 = vsub.f32 0.0, %v1619
  %v1998 = vsub.f32 0.0, %v1624
  %v1999 = vsub.f32 0.0, %v1627
  %v2000 = vsub.f32 0.0, %v1632
  %v2001 = vsub.f32 0.0, %v1635
  %v2002 = vsub.f32 0.0, %v1640
  %v2003 = vsub.f32 0.0, %v1643
  %v2004 = vsub.f32 0.0, %v1648
  %v2005 = vsub.f32 0.0, %v1651
  %v2006 = vsub.f32 0.0, %v1656
  %v2007 = vsub.f32 0.0, %v1659
  %v2008 = vsub.f32 0.0, %v1664
  %v2009 = vsub.f32 0.0, %v1667
  %v2010 = vsub.f32 0.0, %v1672
  %v2011 = vsub.f32 0.0, %v1675
  %v2012 = vsub.f32 0.0, %v1680
  %v2013 = vsub.f32 0.0, %v1683
  %v2014 = vsub.f32 0.0, %v1688
  %v2015 = vsub.f32 0.0, %v1691
  %v2016 = vsub.f32 0.0, %v1696
  %v2017 = vsub.f32 0.0, %v1699
  %v2018 = vsub.f32 0.0, %v1704
  %v2019 = vsub.f32 0.0, %v1707
  %v2020 = vsub.f32 0.0, %v1712
  %v2021 = vsub.f32 0.0, %v1715
  %v2022 = vsub.f32 0.0, %v1720
  %v2023 = vsub.f32 0.0, %v1723
  %v2024 = vsub.f32 0.0, %v1728
  %v2025 = vsub.f32 0.0, %v1731
  %v2026 = vsub.f32 0.0, %v1736
  %v2027 = vsub.f32 0.0, %v1739
  %v2028 = vsub.f32 0.0, %v1744
  %v2029 = vsub.f32 0.0, %v1747
  %v2030 = vsub.f32 0.0, %v1752
  %v2031 = vsub.f32 0.0, %v1755
  %v2032 = vsub.f32 0.0, %v1760
  %v2033 = vsub.f32 0.0, %v1763
  %v2034 = vsub.f32 0.0, %v1768
  %v2035 = vsub.f32 0.0, %v1771
  %v2036 = vsub.f32 0.0, %v1776
  %v2037 = vsub.f32 0.0, %v1779
  %v2038 = vsub.f32 0.0, %v1784
  %v2039 = vsub.f32 0.0, %v1787
  %v2040 = vsub.f32 0.0, %v1792
  %v2041 = vsub.f32 0.0, %v1795
  %v2042 = vsub.f32 0.0, %v1800
  %v2043 = vsub.f32 0.0, %v1803
  %v2044 = vsub.f32 0.0, %v1808
  %v2045 = vsub.f32 0.0, %v1811
  %v2046 = vsub.f32 0.0, %v1816
  %v2047 = vsub.f32 0.0, %v1819
  %v2048 = vsub.f32 0.0, %v1824
  %v2049 = vsub.f32 0.0, %v1827
  %v2050 = vsub.f32 0.0, %v1832
  %v2051 = vsub.f32 0.0, %v1835
  %v2052 = vsub.f32 0.0, %v1840
  %v2053 = vsub.f32 0.0, %v1843
  %v2054 = vsub.f32 0.0, %v1848
  %v2055 = vsub.f32 0.0, %v1851
  %v2056 = vsub.f32 0.0, %v1856
  %v2057 = vsub.f32 0.0, %v1859
  %v2058 = vmul.f32 %v1862, 1.442695
  %v2059 = vpow.pop %v2058
  %v2060 = vmul.f32 %v1863, 1.442695
  %v2061 = vpow.pop %v2060
  %v2062 = vmul.f32 %v1864, 1.442695
  %v2063 = vpow.pop %v2062
  %v2064 = vmul.f32 %v1865, 1.442695
  %v2065 = vpow.pop %v2064
  %v2066 = vmul.f32 %v1866, 1.442695
  %v2067 = vpow.pop %v2066
  %v2068 = vmul.f32 %v1867, 1.442695
  %v2069 = vpow.pop %v2068
  %v2070 = vmul.f32 %v1868, 1.442695
  %v2071 = vpow.pop %v2070
  %v2072 = vmul.f32 %v1869, 1.442695
  %v2073 = vpow.pop %v2072
  %v2074 = vmul.f32 %v1870, 1.442695
  %v2075 = vpow.pop %v2074
  %v2076 = vmul.f32 %v1871, 1.442695
  %v2077 = vpow.pop %v2076
  %v2078 = vmul.f32 %v1872, 1.442695
  %v2079 = vpow.pop %v2078
  %v2080 = vmul.f32 %v1873, 1.442695
  %v2081 = vpow.pop %v2080
  %v2082 = vmul.f32 %v1874, 1.442695
  %v2083 = vpow.pop %v2082
  %v2084 = vmul.f32 %v1875, 1.442695
  %v2085 = vpow.pop %v2084
  %v2086 = vmul.f32 %v1876, 1.442695
  %v2087 = vpow.pop %v2086
  %v2088 = vmul.f32 %v1877, 1.442695
  %v2089 = vpow.pop %v2088
  %v2090 = vmul.f32 %v1878, 1.442695
  %v2091 = vpow.pop %v2090
  %v2092 = vmul.f32 %v1879, 1.442695
  %v2093 = vpow.pop %v2092
  %v2094 = vmul.f32 %v1880, 1.442695
  %v2095 = vpow.pop %v2094
  %v2096 = vmul.f32 %v1881, 1.442695
  %v2097 = vpow.pop %v2096
  %v2098 = vmul.f32 %v1882, 1.442695
  %v2099 = vpow.pop %v2098
  %v2100 = vmul.f32 %v1883, 1.442695
  %v2101 = vpow.pop %v2100
  %v2102 = vmul.f32 %v1884, 1.442695
  %v2103 = vpow.pop %v2102
  %v2104 = vmul.f32 %v1885, 1.442695
  %v2105 = vpow.pop %v2104
  %v2106 = vmul.f32 %v1886, 1.442695
  %v2107 = vpow.pop %v2106
  %v2108 = vmul.f32 %v1887, 1.442695
  %v2109 = vpow.pop %v2108
  %v2110 = vmul.f32 %v1888, 1.442695
  %v2111 = vpow.pop %v2110
  %v2112 = vmul.f32 %v1889, 1.442695
  %v2113 = vpow.pop %v2112
  %v2114 = vmul.f32 %v1890, 1.442695
  %v2115 = vpow.pop %v2114
  %v2116 = vmul.f32 %v1891, 1.442695
  %v2117 = vpow.pop %v2116
  %v2118 = vmul.f32 %v1892, 1.442695
  %v2119 = vpow.pop %v2118
  %v2120 = vmul.f32 %v1893, 1.442695
  %v2121 = vpow.pop %v2120
  %v2122 = vmul.f32 %v1894, 1.442695
  %v2123 = vpow.pop %v2122
  %v2124 = vmul.f32 %v1895, 1.442695
  %v2125 = vpow.pop %v2124
  %v2126 = vmul.f32 %v1896, 1.442695
  %v2127 = vpow.pop %v2126
  %v2128 = vmul.f32 %v1897, 1.442695
  %v2129 = vpow.pop %v2128
  %v2130 = vmul.f32 %v1898, 1.442695
  %v2131 = vpow.pop %v2130
  %v2132 = vmul.f32 %v1899, 1.442695
  %v2133 = vpow.pop %v2132
  %v2134 = vmul.f32 %v1900, 1.442695
  %v2135 = vpow.pop %v2134
  %v2136 = vmul.f32 %v1901, 1.442695
  %v2137 = vpow.pop %v2136
  %v2138 = vmul.f32 %v1902, 1.442695
  %v2139 = vpow.pop %v2138
  %v2140 = vmul.f32 %v1903, 1.442695
  %v2141 = vpow.pop %v2140
  %v2142 = vmul.f32 %v1904, 1.442695
  %v2143 = vpow.pop %v2142
  %v2144 = vmul.f32 %v1905, 1.442695
  %v2145 = vpow.pop %v2144
  %v2146 = vmul.f32 %v1906, 1.442695
  %v2147 = vpow.pop %v2146
  %v2148 = vmul.f32 %v1907, 1.442695
  %v2149 = vpow.pop %v2148
  %v2150 = vmul.f32 %v1908, 1.442695
  %v2151 = vpow.pop %v2150
  %v2152 = vmul.f32 %v1909, 1.442695
  %v2153 = vpow.pop %v2152
  %v2154 = vmul.f32 %v1910, 1.442695
  %v2155 = vpow.pop %v2154
  %v2156 = vmul.f32 %v1911, 1.442695
  %v2157 = vpow.pop %v2156
  %v2158 = vmul.f32 %v1912, 1.442695
  %v2159 = vpow.pop %v2158
  %v2160 = vmul.f32 %v1913, 1.442695
  %v2161 = vpow.pop %v2160
  %v2162 = vmul.f32 %v1914, 1.442695
  %v2163 = vpow.pop %v2162
  %v2164 = vmul.f32 %v1915, 1.442695
  %v2165 = vpow.pop %v2164
  %v2166 = vmul.f32 %v1916, 1.442695
  %v2167 = vpow.pop %v2166
  %v2168 = vmul.f32 %v1917, 1.442695
  %v2169 = vpow.pop %v2168
  %v2170 = vmul.f32 %v1918, 1.442695
  %v2171 = vpow.pop %v2170
  %v2172 = vmul.f32 %v1919, 1.442695
  %v2173 = vpow.pop %v2172
  %v2174 = vmul.f32 %v1920, 1.442695
  %v2175 = vpow.pop %v2174
  %v2176 = vmul.f32 %v1921, 1.442695
  %v2177 = vpow.pop %v2176
  %v2178 = vmul.f32 %v1922, 1.442695
  %v2179 = vpow.pop %v2178
  %v2180 = vmul.f32 %v1923, 1.442695
  %v2181 = vpow.pop %v2180
  %v2182 = vmul.f32 %v1924, 1.442695
  %v2183 = vpow.pop %v2182
  %v2184 = vmul.f32 %v1925, 1.442695
  %v2185 = vpow.pop %v2184
  %v2186 = vmul.f32 %v1926, 1.442695
  %v2187 = vpow.pop %v2186
  %v2188 = vmul.f32 %v1927, 1.442695
  %v2189 = vpow.pop %v2188
  %v2190 = vmul.f32 %v1928, 1.442695
  %v2191 = vpow.pop %v2190
  %v2192 = vmul.f32 %v1929, 1.442695
  %v2193 = vpow.pop %v2192
  %v2194 = vmul.f32 %v1930, 1.442695
  %v2195 = vpow.pop %v2194
  %v2196 = vmul.f32 %v1931, 1.442695
  %v2197 = vpow.pop %v2196
  %v2198 = vmul.f32 %v1932, 1.442695
  %v2199 = vpow.pop %v2198
  %v2200 = vmul.f32 %v1933, 1.442695
  %v2201 = vpow.pop %v2200
  %v2202 = vmul.f32 %v1934, 1.442695
  %v2203 = vpow.pop %v2202
  %v2204 = vmul.f32 %v1935, 1.442695
  %v2205 = vpow.pop %v2204
  %v2206 = vmul.f32 %v1936, 1.442695
  %v2207 = vpow.pop %v2206
  %v2208 = vmul.f32 %v1937, 1.442695
  %v2209 = vpow.pop %v2208
  %v2210 = vmul.f32 %v1938, 1.442695
  %v2211 = vpow.pop %v2210
  %v2212 = vmul.f32 %v1939, 1.442695
  %v2213 = vpow.pop %v2212
  %v2214 = vmul.f32 %v1940, 1.442695
  %v2215 = vpow.pop %v2214
  %v2216 = vmul.f32 %v1941, 1.442695
  %v2217 = vpow.pop %v2216
  %v2218 = vmul.f32 %v1942, 1.442695
  %v2219 = vpow.pop %v2218
  %v2220 = vmul.f32 %v1943, 1.442695
  %v2221 = vpow.pop %v2220
  %v2222 = vmul.f32 %v1944, 1.442695
  %v2223 = vpow.pop %v2222
  %v2224 = vmul.f32 %v1945, 1.442695
  %v2225 = vpow.pop %v2224
  %v2226 = vmul.f32 %v1946, 1.442695
  %v2227 = vpow.pop %v2226
  %v2228 = vmul.f32 %v1947, 1.442695
  %v2229 = vpow.pop %v2228
  %v2230 = vmul.f32 %v1948, 1.442695
  %v2231 = vpow.pop %v2230
  %v2232 = vmul.f32 %v1949, 1.442695
  %v2233 = vpow.pop %v2232
  %v2234 = vmul.f32 %v1950, 1.442695
  %v2235 = vpow.pop %v2234
  %v2236 = vmul.f32 %v1951, 1.442695
  %v2237 = vpow.pop %v2236
  %v2238 = vmul.f32 %v1952, 1.442695
  %v2239 = vpow.pop %v2238
  %v2240 = vmul.f32 %v1953, 1.442695
  %v2241 = vpow.pop %v2240
  %v2242 = vmul.f32 %v1954, 1.442695
  %v2243 = vpow.pop %v2242
  %v2244 = vmul.f32 %v1955, 1.442695
  %v2245 = vpow.pop %v2244
  %v2246 = vmul.f32 %v1956, 1.442695
  %v2247 = vpow.pop %v2246
  %v2248 = vmul.f32 %v1957, 1.442695
  %v2249 = vpow.pop %v2248
  %v2250 = vmul.f32 %v1958, 1.442695
  %v2251 = vpow.pop %v2250
  %v2252 = vmul.f32 %v1959, 1.442695
  %v2253 = vpow.pop %v2252
  %v2254 = vmul.f32 %v1960, 1.442695
  %v2255 = vpow.pop %v2254
  %v2256 = vmul.f32 %v1961, 1.442695
  %v2257 = vpow.pop %v2256
  %v2258 = vmul.f32 %v1962, 1.442695
  %v2259 = vpow.pop %v2258
  %v2260 = vmul.f32 %v1963, 1.442695
  %v2261 = vpow.pop %v2260
  %v2262 = vmul.f32 %v1964, 1.442695
  %v2263 = vpow.pop %v2262
  %v2264 = vmul.f32 %v1965, 1.442695
  %v2265 = vpow.pop %v2264
  %v2266 = vmul.f32 %v1966, 1.442695
  %v2267 = vpow.pop %v2266
  %v2268 = vmul.f32 %v1967, 1.442695
  %v2269 = vpow.pop %v2268
  %v2270 = vmul.f32 %v1968, 1.442695
  %v2271 = vpow.pop %v2270
  %v2272 = vmul.f32 %v1969, 1.442695
  %v2273 = vpow.pop %v2272
  %v2274 = vmul.f32 %v1970, 1.442695
  %v2275 = vpow.pop %v2274
  %v2276 = vmul.f32 %v1971, 1.442695
  %v2277 = vpow.pop %v2276
  %v2278 = vmul.f32 %v1972, 1.442695
  %v2279 = vpow.pop %v2278
  %v2280 = vmul.f32 %v1973, 1.442695
  %v2281 = vpow.pop %v2280
  %v2282 = vmul.f32 %v1974, 1.442695
  %v2283 = vpow.pop %v2282
  %v2284 = vmul.f32 %v1975, 1.442695
  %v2285 = vpow.pop %v2284
  %v2286 = vmul.f32 %v1976, 1.442695
  %v2287 = vpow.pop %v2286
  %v2288 = vmul.f32 %v1977, 1.442695
  %v2289 = vpow.pop %v2288
  %v2290 = vmul.f32 %v1978, 1.442695
  %v2291 = vpow.pop %v2290
  %v2292 = vmul.f32 %v1979, 1.442695
  %v2293 = vpow.pop %v2292
  %v2294 = vmul.f32 %v1980, 1.442695
  %v2295 = vpow.pop %v2294
  %v2296 = vmul.f32 %v1981, 1.442695
  %v2297 = vpow.pop %v2296
  %v2298 = vmul.f32 %v1982, 1.442695
  %v2299 = vpow.pop %v2298
  %v2300 = vmul.f32 %v1983, 1.442695
  %v2301 = vpow.pop %v2300
  %v2302 = vmul.f32 %v1984, 1.442695
  %v2303 = vpow.pop %v2302
  %v2304 = vmul.f32 %v1985, 1.442695
  %v2305 = vpow.pop %v2304
  %v2306 = vmul.f32 %v1986, 1.442695
  %v2307 = vpow.pop %v2306
  %v2308 = vmul.f32 %v1987, 1.442695
  %v2309 = vpow.pop %v2308
  %v2310 = vmul.f32 %v1988, 1.442695
  %v2311 = vpow.pop %v2310
  %v2312 = vmul.f32 %v1989, 1.442695
  %v2313 = vpow.pop %v2312
  %v2314 = vmul.f32 %v1990, 1.442695
  %v2315 = vpow.pop %v2314
  %v2316 = vmul.f32 %v1991, 1.442695
  %v2317 = vpow.pop %v2316
  %v2318 = vmul.f32 %v1992, 1.442695
  %v2319 = vpow.pop %v2318
  %v2320 = vmul.f32 %v1993, 1.442695
  %v2321 = vpow.pop %v2320
  %v2322 = vmul.f32 %v1994, 1.442695
  %v2323 = vpow.pop %v2322
  %v2324 = vmul.f32 %v1995, 1.442695
  %v2325 = vpow.pop %v2324
  %v2326 = vmul.f32 %v1996, 1.442695
  %v2327 = vpow.pop %v2326
  %v2328 = vmul.f32 %v1997, 1.442695
  %v2329 = vpow.pop %v2328
  %v2330 = vmul.f32 %v1998, 1.442695
  %v2331 = vpow.pop %v2330
  %v2332 = vmul.f32 %v1999, 1.442695
  %v2333 = vpow.pop %v2332
  %v2334 = vmul.f32 %v2000, 1.442695
  %v2335 = vpow.pop %v2334
  %v2336 = vmul.f32 %v2001, 1.442695
  %v2337 = vpow.pop %v2336
  %v2338 = vmul.f32 %v2002, 1.442695
  %v2339 = vpow.pop %v2338
  %v2340 = vmul.f32 %v2003, 1.442695
  %v2341 = vpow.pop %v2340
  %v2342 = vmul.f32 %v2004, 1.442695
  %v2343 = vpow.pop %v2342
  %v2344 = vmul.f32 %v2005, 1.442695
  %v2345 = vpow.pop %v2344
  %v2346 = vmul.f32 %v2006, 1.442695
  %v2347 = vpow.pop %v2346
  %v2348 = vmul.f32 %v2007, 1.442695
  %v2349 = vpow.pop %v2348
  %v2350 = vmul.f32 %v2008, 1.442695
  %v2351 = vpow.pop %v2350
  %v2352 = vmul.f32 %v2009, 1.442695
  %v2353 = vpow.pop %v2352
  %v2354 = vmul.f32 %v2010, 1.442695
  %v2355 = vpow.pop %v2354
  %v2356 = vmul.f32 %v2011, 1.442695
  %v2357 = vpow.pop %v2356
  %v2358 = vmul.f32 %v2012, 1.442695
  %v2359 = vpow.pop %v2358
  %v2360 = vmul.f32 %v2013, 1.442695
  %v2361 = vpow.pop %v2360
  %v2362 = vmul.f32 %v2014, 1.442695
  %v2363 = vpow.pop %v2362
  %v2364 = vmul.f32 %v2015, 1.442695
  %v2365 = vpow.pop %v2364
  %v2366 = vmul.f32 %v2016, 1.442695
  %v2367 = vpow.pop %v2366
  %v2368 = vmul.f32 %v2017, 1.442695
  %v2369 = vpow.pop %v2368
  %v2370 = vmul.f32 %v2018, 1.442695
  %v2371 = vpow.pop %v2370
  %v2372 = vmul.f32 %v2019, 1.442695
  %v2373 = vpow.pop %v2372
  %v2374 = vmul.f32 %v2020, 1.442695
  %v2375 = vpow.pop %v2374
  %v2376 = vmul.f32 %v2021, 1.442695
  %v2377 = vpow.pop %v2376
  %v2378 = vmul.f32 %v2022, 1.442695
  %v2379 = vpow.pop %v2378
  %v2380 = vmul.f32 %v2023, 1.442695
  %v2381 = vpow.pop %v2380
  %v2382 = vmul.f32 %v2024, 1.442695
  %v2383 = vpow.pop %v2382
  %v2384 = vmul.f32 %v2025, 1.442695
  %v2385 = vpow.pop %v2384
  %v2386 = vmul.f32 %v2026, 1.442695
  %v2387 = vpow.pop %v2386
  %v2388 = vmul.f32 %v2027, 1.442695
  %v2389 = vpow.pop %v2388
  %v2390 = vmul.f32 %v2028, 1.442695
  %v2391 = vpow.pop %v2390
  %v2392 = vmul.f32 %v2029, 1.442695
  %v2393 = vpow.pop %v2392
  %v2394 = vmul.f32 %v2030, 1.442695
  %v2395 = vpow.pop %v2394
  %v2396 = vmul.f32 %v2031, 1.442695
  %v2397 = vpow.pop %v2396
  %v2398 = vmul.f32 %v2032, 1.442695
  %v2399 = vpow.pop %v2398
  %v2400 = vmul.f32 %v2033, 1.442695
  %v2401 = vpow.pop %v2400
  %v2402 = vmul.f32 %v2034, 1.442695
  %v2403 = vpow.pop %v2402
  %v2404 = vmul.f32 %v2035, 1.442695
  %v2405 = vpow.pop %v2404
  %v2406 = vmul.f32 %v2036, 1.442695
  %v2407 = vpow.pop %v2406
  %v2408 = vmul.f32 %v2037, 1.442695
  %v2409 = vpow.pop %v2408
  %v2410 = vmul.f32 %v2038, 1.442695
  %v2411 = vpow.pop %v2410
  %v2412 = vmul.f32 %v2039, 1.442695
  %v2413 = vpow.pop %v2412
  %v2414 = vmul.f32 %v2040, 1.442695
  %v2415 = vpow.pop %v2414
  %v2416 = vmul.f32 %v2041, 1.442695
  %v2417 = vpow.pop %v2416
  %v2418 = vmul.f32 %v2042, 1.442695
  %v2419 = vpow.pop %v2418
  %v2420 = vmul.f32 %v2043, 1.442695
  %v2421 = vpow.pop %v2420
  %v2422 = vmul.f32 %v2044, 1.442695
  %v2423 = vpow.pop %v2422
  %v2424 = vmul.f32 %v2045, 1.442695
  %v2425 = vpow.pop %v2424
  %v2426 = vmul.f32 %v2046, 1.442695
  %v2427 = vpow.pop %v2426
  %v2428 = vmul.f32 %v2047, 1.442695
  %v2429 = vpow.pop %v2428
  %v2430 = vmul.f32 %v2048, 1.442695
  %v2431 = vpow.pop %v2430
  %v2432 = vmul.f32 %v2049, 1.442695
  %v2433 = vpow.pop %v2432
  %v2434 = vmul.f32 %v2050, 1.442695
  %v2435 = vpow.pop %v2434
  %v2436 = vmul.f32 %v2051, 1.442695
  %v2437 = vpow.pop %v2436
  %v2438 = vmul.f32 %v2052, 1.442695
  %v2439 = vpow.pop %v2438
  %v2440 = vmul.f32 %v2053, 1.442695
  %v2441 = vpow.pop %v2440
  %v2442 = vmul.f32 %v2054, 1.442695
  %v2443 = vpow.pop %v2442
  %v2444 = vmul.f32 %v2055, 1.442695
  %v2445 = vpow.pop %v2444
  %v2446 = vmul.f32 %v2056, 1.442695
  %v2447 = vpow.pop %v2446
  %v2448 = vmul.f32 %v2057, 1.442695
  %v2449 = vpow.pop %v2448
  %v2450 = vadd.f32 %v2059, 1.0
  %v2451 = vadd.f32 %v2061, 1.0
  %v2452 = vadd.f32 %v2063, 1.0
  %v2453 = vadd.f32 %v2065, 1.0
  %v2454 = vadd.f32 %v2067, 1.0
  %v2455 = vadd.f32 %v2069, 1.0
  %v2456 = vadd.f32 %v2071, 1.0
  %v2457 = vadd.f32 %v2073, 1.0
  %v2458 = vadd.f32 %v2075, 1.0
  %v2459 = vadd.f32 %v2077, 1.0
  %v2460 = vadd.f32 %v2079, 1.0
  %v2461 = vadd.f32 %v2081, 1.0
  %v2462 = vadd.f32 %v2083, 1.0
  %v2463 = vadd.f32 %v2085, 1.0
  %v2464 = vadd.f32 %v2087, 1.0
  %v2465 = vadd.f32 %v2089, 1.0
  %v2466 = vadd.f32 %v2091, 1.0
  %v2467 = vadd.f32 %v2093, 1.0
  %v2468 = vadd.f32 %v2095, 1.0
  %v2469 = vadd.f32 %v2097, 1.0
  %v2470 = vadd.f32 %v2099, 1.0
  %v2471 = vadd.f32 %v2101, 1.0
  %v2472 = vadd.f32 %v2103, 1.0
  %v2473 = vadd.f32 %v2105, 1.0
  %v2474 = vadd.f32 %v2107, 1.0
  %v2475 = vadd.f32 %v2109, 1.0
  %v2476 = vadd.f32 %v2111, 1.0
  %v2477 = vadd.f32 %v2113, 1.0
  %v2478 = vadd.f32 %v2115, 1.0
  %v2479 = vadd.f32 %v2117, 1.0
  %v2480 = vadd.f32 %v2119, 1.0
  %v2481 = vadd.f32 %v2121, 1.0
  %v2482 = vadd.f32 %v2123, 1.0
  %v2483 = vadd.f32 %v2125, 1.0
  %v2484 = vadd.f32 %v2127, 1.0
  %v2485 = vadd.f32 %v2129, 1.0
  %v2486 = vadd.f32 %v2131, 1.0
  %v2487 = vadd.f32 %v2133, 1.0
  %v2488 = vadd.f32 %v2135, 1.0
  %v2489 = vadd.f32 %v2137, 1.0
  %v2490 = vadd.f32 %v2139, 1.0
  %v2491 = vadd.f32 %v2141, 1.0
  %v2492 = vadd.f32 %v2143, 1.0
  %v2493 = vadd.f32 %v2145, 1.0
  %v2494 = vadd.f32 %v2147, 1.0
  %v2495 = vadd.f32 %v2149, 1.0
  %v2496 = vadd.f32 %v2151, 1.0
  %v2497 = vadd.f32 %v2153, 1.0
  %v2498 = vadd.f32 %v2155, 1.0
  %v2499 = vadd.f32 %v2157, 1.0
  %v2500 = vadd.f32 %v2159, 1.0
  %v2501 = vadd.f32 %v2161, 1.0
  %v2502 = vadd.f32 %v2163, 1.0
  %v2503 = vadd.f32 %v2165, 1.0
  %v2504 = vadd.f32 %v2167, 1.0
  %v2505 = vadd.f32 %v2169, 1.0
  %v2506 = vadd.f32 %v2171, 1.0
  %v2507 = vadd.f32 %v2173, 1.0
  %v2508 = vadd.f32 %v2175, 1.0
  %v2509 = vadd.f32 %v2177, 1.0
  %v2510 = vadd.f32 %v2179, 1.0
  %v2511 = vadd.f32 %v2181, 1.0
  %v2512 = vadd.f32 %v2183, 1.0
  %v2513 = vadd.f32 %v2185, 1.0
  %v2514 = vadd.f32 %v2187, 1.0
  %v2515 = vadd.f32 %v2189, 1.0
  %v2516 = vadd.f32 %v2191, 1.0
  %v2517 = vadd.f32 %v2193, 1.0
  %v2518 = vadd.f32 %v2195, 1.0
  %v2519 = vadd.f32 %v2197, 1.0
  %v2520 = vadd.f32 %v2199, 1.0
  %v2521 = vadd.f32 %v2201, 1.0
  %v2522 = vadd.f32 %v2203, 1.0
  %v2523 = vadd.f32 %v2205, 1.0
  %v2524 = vadd.f32 %v2207, 1.0
  %v2525 = vadd.f32 %v2209, 1.0
  %v2526 = vadd.f32 %v2211, 1.0
  %v2527 = vadd.f32 %v2213, 1.0
  %v2528 = vadd.f32 %v2215, 1.0
  %v2529 = vadd.f32 %v2217, 1.0
  %v2530 = vadd.f32 %v2219, 1.0
  %v2531 = vadd.f32 %v2221, 1.0
  %v2532 = vadd.f32 %v2223, 1.0
  %v2533 = vadd.f32 %v2225, 1.0
  %v2534 = vadd.f32 %v2227, 1.0
  %v2535 = vadd.f32 %v2229, 1.0
  %v2536 = vadd.f32 %v2231, 1.0
  %v2537 = vadd.f32 %v2233, 1.0
  %v2538 = vadd.f32 %v2235, 1.0
  %v2539 = vadd.f32 %v2237, 1.0
  %v2540 = vadd.f32 %v2239, 1.0
  %v2541 = vadd.f32 %v2241, 1.0
  %v2542 = vadd.f32 %v2243, 1.0
  %v2543 = vadd.f32 %v2245, 1.0
  %v2544 = vadd.f32 %v2247, 1.0
  %v2545 = vadd.f32 %v2249, 1.0
  %v2546 = vadd.f32 %v2251, 1.0
  %v2547 = vadd.f32 %v2253, 1.0
  %v2548 = vadd.f32 %v2255, 1.0
  %v2549 = vadd.f32 %v2257, 1.0
  %v2550 = vadd.f32 %v2259, 1.0
  %v2551 = vadd.f32 %v2261, 1.0
  %v2552 = vadd.f32 %v2263, 1.0
  %v2553 = vadd.f32 %v2265, 1.0
  %v2554 = vadd.f32 %v2267, 1.0
  %v2555 = vadd.f32 %v2269, 1.0
  %v2556 = vadd.f32 %v2271, 1.0
  %v2557 = vadd.f32 %v2273, 1.0
  %v2558 = vadd.f32 %v2275, 1.0
  %v2559 = vadd.f32 %v2277, 1.0
  %v2560 = vadd.f32 %v2279, 1.0
  %v2561 = vadd.f32 %v2281, 1.0
  %v2562 = vadd.f32 %v2283, 1.0
  %v2563 = vadd.f32 %v2285, 1.0
  %v2564 = vadd.f32 %v2287, 1.0
  %v2565 = vadd.f32 %v2289, 1.0
  %v2566 = vadd.f32 %v2291, 1.0
  %v2567 = vadd.f32 %v2293, 1.0
  %v2568 = vadd.f32 %v2295, 1.0
  %v2569 = vadd.f32 %v2297, 1.0
  %v2570 = vadd.f32 %v2299, 1.0
  %v2571 = vadd.f32 %v2301, 1.0
  %v2572 = vadd.f32 %v2303, 1.0
  %v2573 = vadd.f32 %v2305, 1.0
  %v2574 = vadd.f32 %v2307, 1.0
  %v2575 = vadd.f32 %v2309, 1.0
  %v2576 = vadd.f32 %v2311, 1.0
  %v2577 = vadd.f32 %v2313, 1.0
  %v2578 = vadd.f32 %v2315, 1.0
  %v2579 = vadd.f32 %v2317, 1.0
  %v2580 = vadd.f32 %v2319, 1.0
  %v2581 = vadd.f32 %v2321, 1.0
  %v2582 = vadd.f32 %v2323, 1.0
  %v2583 = vadd.f32 %v2325, 1.0
  %v2584 = vadd.f32 %v2327, 1.0
  %v2585 = vadd.f32 %v2329, 1.0
  %v2586 = vadd.f32 %v2331, 1.0
  %v2587 = vadd.f32 %v2333, 1.0
  %v2588 = vadd.f32 %v2335, 1.0
  %v2589 = vadd.f32 %v2337, 1.0
  %v2590 = vadd.f32 %v2339, 1.0
  %v2591 = vadd.f32 %v2341, 1.0
  %v2592 = vadd.f32 %v2343, 1.0
  %v2593 = vadd.f32 %v2345, 1.0
  %v2594 = vadd.f32 %v2347, 1.0
  %v2595 = vadd.f32 %v2349, 1.0
  %v2596 = vadd.f32 %v2351, 1.0
  %v2597 = vadd.f32 %v2353, 1.0
  %v2598 = vadd.f32 %v2355, 1.0
  %v2599 = vadd.f32 %v2357, 1.0
  %v2600 = vadd.f32 %v2359, 1.0
  %v2601 = vadd.f32 %v2361, 1.0
  %v2602 = vadd.f32 %v2363, 1.0
  %v2603 = vadd.f32 %v2365, 1.0
  %v2604 = vadd.f32 %v2367, 1.0
  %v2605 = vadd.f32 %v2369, 1.0
  %v2606 = vadd.f32 %v2371, 1.0
  %v2607 = vadd.f32 %v2373, 1.0
  %v2608 = vadd.f32 %v2375, 1.0
  %v2609 = vadd.f32 %v2377, 1.0
  %v2610 = vadd.f32 %v2379, 1.0
  %v2611 = vadd.f32 %v2381, 1.0
  %v2612 = vadd.f32 %v2383, 1.0
  %v2613 = vadd.f32 %v2385, 1.0
  %v2614 = vadd.f32 %v2387, 1.0
  %v2615 = vadd.f32 %v2389, 1.0
  %v2616 = vadd.f32 %v2391, 1.0
  %v2617 = vadd.f32 %v2393, 1.0
  %v2618 = vadd.f32 %v2395, 1.0
  %v2619 = vadd.f32 %v2397, 1.0
  %v2620 = vadd.f32 %v2399, 1.0
  %v2621 = vadd.f32 %v2401, 1.0
  %v2622 = vadd.f32 %v2403, 1.0
  %v2623 = vadd.f32 %v2405, 1.0
  %v2624 = vadd.f32 %v2407, 1.0
  %v2625 = vadd.f32 %v2409, 1.0
  %v2626 = vadd.f32 %v2411, 1.0
  %v2627 = vadd.f32 %v2413, 1.0
  %v2628 = vadd.f32 %v2415, 1.0
  %v2629 = vadd.f32 %v2417, 1.0
  %v2630 = vadd.f32 %v2419, 1.0
  %v2631 = vadd.f32 %v2421, 1.0
  %v2632 = vadd.f32 %v2423, 1.0
  %v2633 = vadd.f32 %v2425, 1.0
  %v2634 = vadd.f32 %v2427, 1.0
  %v2635 = vadd.f32 %v2429, 1.0
  %v2636 = vadd.f32 %v2431, 1.0
  %v2637 = vadd.f32 %v2433, 1.0
  %v2638 = vadd.f32 %v2435, 1.0
  %v2639 = vadd.f32 %v2437, 1.0
  %v2640 = vadd.f32 %v2439, 1.0
  %v2641 = vadd.f32 %v2441, 1.0
  %v2642 = vadd.f32 %v2443, 1.0
  %v2643 = vadd.f32 %v2445, 1.0
  %v2644 = vadd.f32 %v2447, 1.0
  %v2645 = vadd.f32 %v2449, 1.0
  %v2646 = vrcp.pop %v2450
  %v2647 = vrcp.pop %v2451
  %v2648 = vrcp.pop %v2452
  %v2649 = vrcp.pop %v2453
  %v2650 = vrcp.pop %v2454
  %v2651 = vrcp.pop %v2455
  %v2652 = vrcp.pop %v2456
  %v2653 = vrcp.pop %v2457
  %v2654 = vrcp.pop %v2458
  %v2655 = vrcp.pop %v2459
  %v2656 = vrcp.pop %v2460
  %v2657 = vrcp.pop %v2461
  %v2658 = vrcp.pop %v2462
  %v2659 = vrcp.pop %v2463
  %v2660 = vrcp.pop %v2464
  %v2661 = vrcp.pop %v2465
  %v2662 = vrcp.pop %v2466
  %v2663 = vrcp.pop %v2467
  %v2664 = vrcp.pop %v2468
  %v2665 = vrcp.pop %v2469
  %v2666 = vrcp.pop %v2470
  %v2667 = vrcp.pop %v2471
  %v2668 = vrcp.pop %v2472
  %v2669 = vrcp.pop %v2473
  %v2670 = vrcp.pop %v2474
  %v2671 = vrcp.pop %v2475
  %v2672 = vrcp.pop %v2476
  %v2673 = vrcp.pop %v2477
  %v2674 = vrcp.pop %v2478
  %v2675 = vrcp.pop %v2479
  %v2676 = vrcp.pop %v2480
  %v2677 = vrcp.pop %v2481
  %v2678 = vrcp.pop %v2482
  %v2679 = vrcp.pop %v2483
  %v2680 = vrcp.pop %v2484
  %v2681 = vrcp.pop %v2485
  %v2682 = vrcp.pop %v2486
  %v2683 = vrcp.pop %v2487
  %v2684 = vrcp.pop %v2488
  %v2685 = vrcp.pop %v2489
  %v2686 = vrcp.pop %v2490
  %v2687 = vrcp.pop %v2491
  %v2688 = vrcp.pop %v2492
  %v2689 = vrcp.pop %v2493
  %v2690 = vrcp.pop %v2494
  %v2691 = vrcp.pop %v2495
  %v2692 = vrcp.pop %v2496
  %v2693 = vrcp.pop %v2497
  %v2694 = vrcp.pop %v2498
  %v2695 = vrcp.pop %v2499
  %v2696 = vrcp.pop %v2500
  %v2697 = vrcp.pop %v2501
  %v2698 = vrcp.pop %v2502
  %v2699 = vrcp.pop %v2503
  %v2700 = vrcp.pop %v2504
  %v2701 = vrcp.pop %v2505
  %v2702 = vrcp.pop %v2506
  %v2703 = vrcp.pop %v2507
  %v2704 = vrcp.pop %v2508
  %v2705 = vrcp.pop %v2509
  %v2706 = vrcp.pop %v2510
  %v2707 = vrcp.pop %v2511
  %v2708 = vrcp.pop %v2512
  %v2709 = vrcp.pop %v2513
  %v2710 = vrcp.pop %v2514
  %v2711 = vrcp.pop %v2515
  %v2712 = vrcp.pop %v2516
  %v2713 = vrcp.pop %v2517
  %v2714 = vrcp.pop %v2518
  %v2715 = vrcp.pop %v2519
  %v2716 = vrcp.pop %v2520
  %v2717 = vrcp.pop %v2521
  %v2718 = vrcp.pop %v2522
  %v2719 = vrcp.pop %v2523
  %v2720 = vrcp.pop %v2524
  %v2721 = vrcp.pop %v2525
  %v2722 = vrcp.pop %v2526
  %v2723 = vrcp.pop %v2527
  %v2724 = vrcp.pop %v2528
  %v2725 = vrcp.pop %v2529
  %v2726 = vrcp.pop %v2530
  %v2727 = vrcp.pop %v2531
  %v2728 = vrcp.pop %v2532
  %v2729 = vrcp.pop %v2533
  %v2730 = vrcp.pop %v2534
  %v2731 = vrcp.pop %v2535
  %v2732 = vrcp.pop %v2536
  %v2733 = vrcp.pop %v2537
  %v2734 = vrcp.pop %v2538
  %v2735 = vrcp.pop %v2539
  %v2736 = vrcp.pop %v2540
  %v2737 = vrcp.pop %v2541
  %v2738 = vrcp.pop %v2542
  %v2739 = vrcp.pop %v2543
  %v2740 = vrcp.pop %v2544
  %v2741 = vrcp.pop %v2545
  %v2742 = vrcp.pop %v2546
  %v2743 = vrcp.pop %v2547
  %v2744 = vrcp.pop %v2548
  %v2745 = vrcp.pop %v2549
  %v2746 = vrcp.pop %v2550
  %v2747 = vrcp.pop %v2551
  %v2748 = vrcp.pop %v2552
  %v2749 = vrcp.pop %v2553
  %v2750 = vrcp.pop %v2554
  %v2751 = vrcp.pop %v2555
  %v2752 = vrcp.pop %v2556
  %v2753 = vrcp.pop %v2557
  %v2754 = vrcp.pop %v2558
  %v2755 = vrcp.pop %v2559
  %v2756 = vrcp.pop %v2560
  %v2757 = vrcp.pop %v2561
  %v2758 = vrcp.pop %v2562
  %v2759 = vrcp.pop %v2563
  %v2760 = vrcp.pop %v2564
  %v2761 = vrcp.pop %v2565
  %v2762 = vrcp.pop %v2566
  %v2763 = vrcp.pop %v2567
  %v2764 = vrcp.pop %v2568
  %v2765 = vrcp.pop %v2569
  %v2766 = vrcp.pop %v2570
  %v2767 = vrcp.pop %v2571
  %v2768 = vrcp.pop %v2572
  %v2769 = vrcp.pop %v2573
  %v2770 = vrcp.pop %v2574
  %v2771 = vrcp.pop %v2575
  %v2772 = vrcp.pop %v2576
  %v2773 = vrcp.pop %v2577
  %v2774 = vrcp.pop %v2578
  %v2775 = vrcp.pop %v2579
  %v2776 = vrcp.pop %v2580
  %v2777 = vrcp.pop %v2581
  %v2778 = vrcp.pop %v2582
  %v2779 = vrcp.pop %v2583
  %v2780 = vrcp.pop %v2584
  %v2781 = vrcp.pop %v2585
  %v2782 = vrcp.pop %v2586
  %v2783 = vrcp.pop %v2587
  %v2784 = vrcp.pop %v2588
  %v2785 = vrcp.pop %v2589
  %v2786 = vrcp.pop %v2590
  %v2787 = vrcp.pop %v2591
  %v2788 = vrcp.pop %v2592
  %v2789 = vrcp.pop %v2593
  %v2790 = vrcp.pop %v2594
  %v2791 = vrcp.pop %v2595
  %v2792 = vrcp.pop %v2596
  %v2793 = vrcp.pop %v2597
  %v2794 = vrcp.pop %v2598
  %v2795 = vrcp.pop %v2599
  %v2796 = vrcp.pop %v2600
  %v2797 = vrcp.pop %v2601
  %v2798 = vrcp.pop %v2602
  %v2799 = vrcp.pop %v2603
  %v2800 = vrcp.pop %v2604
  %v2801 = vrcp.pop %v2605
  %v2802 = vrcp.pop %v2606
  %v2803 = vrcp.pop %v2607
  %v2804 = vrcp.pop %v2608
  %v2805 = vrcp.pop %v2609
  %v2806 = vrcp.pop %v2610
  %v2807 = vrcp.pop %v2611
  %v2808 = vrcp.pop %v2612
  %v2809 = vrcp.pop %v2613
  %v2810 = vrcp.pop %v2614
  %v2811 = vrcp.pop %v2615
  %v2812 = vrcp.pop %v2616
  %v2813 = vrcp.pop %v2617
  %v2814 = vrcp.pop %v2618
  %v2815 = vrcp.pop %v2619
  %v2816 = vrcp.pop %v2620
  %v2817 = vrcp.pop %v2621
  %v2818 = vrcp.pop %v2622
  %v2819 = vrcp.pop %v2623
  %v2820 = vrcp.pop %v2624
  %v2821 = vrcp.pop %v2625
  %v2822 = vrcp.pop %v2626
  %v2823 = vrcp.pop %v2627
  %v2824 = vrcp.pop %v2628
  %v2825 = vrcp.pop %v2629
  %v2826 = vrcp.pop %v2630
  %v2827 = vrcp.pop %v2631
  %v2828 = vrcp.pop %v2632
  %v2829 = vrcp.pop %v2633
  %v2830 = vrcp.pop %v2634
  %v2831 = vrcp.pop %v2635
  %v2832 = vrcp.pop %v2636
  %v2833 = vrcp.pop %v2637
  %v2834 = vrcp.pop %v2638
  %v2835 = vrcp.pop %v2639
  %v2836 = vrcp.pop %v2640
  %v2837 = vrcp.pop %v2641
  %v2838 = vrcp.pop %v2642
  %v2839 = vrcp.pop %v2643
  %v2840 = vrcp.pop %v2644
  %v2841 = vrcp.pop %v2645
  %v2842 = vmax.f32 %v2646, 0.0
  %v2843 = vmax.f32 %v2647, 0.0
  %v2844 = vmax.f32 %v2648, 0.0
  %v2845 = vmax.f32 %v2649, 0.0
  %v2846 = vmax.f32 %v2650, 0.0
  %v2847 = vmax.f32 %v2651, 0.0
  %v2848 = vmax.f32 %v2652, 0.0
  %v2849 = vmax.f32 %v2653, 0.0
  %v2850 = vmax.f32 %v2654, 0.0
  %v2851 = vmax.f32 %v2655, 0.0
  %v2852 = vmax.f32 %v2656, 0.0
  %v2853 = vmax.f32 %v2657, 0.0
  %v2854 = vmax.f32 %v2658, 0.0
  %v2855 = vmax.f32 %v2659, 0.0
  %v2856 = vmax.f32 %v2660, 0.0
  %v2857 = vmax.f32 %v2661, 0.0
  %v2858 = vmax.f32 %v2662, 0.0
  %v2859 = vmax.f32 %v2663, 0.0
  %v2860 = vmax.f32 %v2664, 0.0
  %v2861 = vmax.f32 %v2665, 0.0
  %v2862 = vmax.f32 %v2666, 0.0
  %v2863 = vmax.f32 %v2667, 0.0
  %v2864 = vmax.f32 %v2668, 0.0
  %v2865 = vmax.f32 %v2669, 0.0
  %v2866 = vmax.f32 %v2670, 0.0
  %v2867 = vmax.f32 %v2671, 0.0
  %v2868 = vmax.f32 %v2672, 0.0
  %v2869 = vmax.f32 %v2673, 0.0
  %v2870 = vmax.f32 %v2674, 0.0
  %v2871 = vmax.f32 %v2675, 0.0
  %v2872 = vmax.f32 %v2676, 0.0
  %v2873 = vmax.f32 %v2677, 0.0
  %v2874 = vmax.f32 %v2678, 0.0
  %v2875 = vmax.f32 %v2679, 0.0
  %v2876 = vmax.f32 %v2680, 0.0
  %v2877 = vmax.f32 %v2681, 0.0
  %v2878 = vmax.f32 %v2682, 0.0
  %v2879 = vmax.f32 %v2683, 0.0
  %v2880 = vmax.f32 %v2684, 0.0
  %v2881 = vmax.f32 %v2685, 0.0
  %v2882 = vmax.f32 %v2686, 0.0
  %v2883 = vmax.f32 %v2687, 0.0
  %v2884 = vmax.f32 %v2688, 0.0
  %v2885 = vmax.f32 %v2689, 0.0
  %v2886 = vmax.f32 %v2690, 0.0
  %v2887 = vmax.f32 %v2691, 0.0
  %v2888 = vmax.f32 %v2692, 0.0
  %v2889 = vmax.f32 %v2693, 0.0
  %v2890 = vmax.f32 %v2694, 0.0
  %v2891 = vmax.f32 %v2695, 0.0
  %v2892 = vmax.f32 %v2696, 0.0
  %v2893 = vmax.f32 %v2697, 0.0
  %v2894 = vmax.f32 %v2698, 0.0
  %v2895 = vmax.f32 %v2699, 0.0
  %v2896 = vmax.f32 %v2700, 0.0
  %v2897 = vmax.f32 %v2701, 0.0
  %v2898 = vmax.f32 %v2702, 0.0
  %v2899 = vmax.f32 %v2703, 0.0
  %v2900 = vmax.f32 %v2704, 0.0
  %v2901 = vmax.f32 %v2705, 0.0
  %v2902 = vmax.f32 %v2706, 0.0
  %v2903 = vmax.f32 %v2707, 0.0
  %v2904 = vmax.f32 %v2708, 0.0
  %v2905 = vmax.f32 %v2709, 0.0
  %v2906 = vmax.f32 %v2710, 0.0
  %v2907 = vmax.f32 %v2711, 0.0
  %v2908 = vmax.f32 %v2712, 0.0
  %v2909 = vmax.f32 %v2713, 0.0
  %v2910 = vmax.f32 %v2714, 0.0
  %v2911 = vmax.f32 %v2715, 0.0
  %v2912 = vmax.f32 %v2716, 0.0
  %v2913 = vmax.f32 %v2717, 0.0
  %v2914 = vmax.f32 %v2718, 0.0
  %v2915 = vmax.f32 %v2719, 0.0
  %v2916 = vmax.f32 %v2720, 0.0
  %v2917 = vmax.f32 %v2721, 0.0
  %v2918 = vmax.f32 %v2722, 0.0
  %v2919 = vmax.f32 %v2723, 0.0
  %v2920 = vmax.f32 %v2724, 0.0
  %v2921 = vmax.f32 %v2725, 0.0
  %v2922 = vmax.f32 %v2726, 0.0
  %v2923 = vmax.f32 %v2727, 0.0
  %v2924 = vmax.f32 %v2728, 0.0
  %v2925 = vmax.f32 %v2729, 0.0
  %v2926 = vmax.f32 %v2730, 0.0
  %v2927 = vmax.f32 %v2731, 0.0
  %v2928 = vmax.f32 %v2732, 0.0
  %v2929 = vmax.f32 %v2733, 0.0
  %v2930 = vmax.f32 %v2734, 0.0
  %v2931 = vmax.f32 %v2735, 0.0
  %v2932 = vmax.f32 %v2736, 0.0
  %v2933 = vmax.f32 %v2737, 0.0
  %v2934 = vmax.f32 %v2738, 0.0
  %v2935 = vmax.f32 %v2739, 0.0
  %v2936 = vmax.f32 %v2740, 0.0
  %v2937 = vmax.f32 %v2741, 0.0
  %v2938 = vmax.f32 %v2742, 0.0
  %v2939 = vmax.f32 %v2743, 0.0
  %v2940 = vmax.f32 %v2744, 0.0
  %v2941 = vmax.f32 %v2745, 0.0
  %v2942 = vmax.f32 %v2746, 0.0
  %v2943 = vmax.f32 %v2747, 0.0
  %v2944 = vmax.f32 %v2748, 0.0
  %v2945 = vmax.f32 %v2749, 0.0
  %v2946 = vmax.f32 %v2750, 0.0
  %v2947 = vmax.f32 %v2751, 0.0
  %v2948 = vmax.f32 %v2752, 0.0
  %v2949 = vmax.f32 %v2753, 0.0
  %v2950 = vmax.f32 %v2754, 0.0
  %v2951 = vmax.f32 %v2755, 0.0
  %v2952 = vmax.f32 %v2756, 0.0
  %v2953 = vmax.f32 %v2757, 0.0
  %v2954 = vmax.f32 %v2758, 0.0
  %v2955 = vmax.f32 %v2759, 0.0
  %v2956 = vmax.f32 %v2760, 0.0
  %v2957 = vmax.f32 %v2761, 0.0
  %v2958 = vmax.f32 %v2762, 0.0
  %v2959 = vmax.f32 %v2763, 0.0
  %v2960 = vmax.f32 %v2764, 0.0
  %v2961 = vmax.f32 %v2765, 0.0
  %v2962 = vmax.f32 %v2766, 0.0
  %v2963 = vmax.f32 %v2767, 0.0
  %v2964 = vmax.f32 %v2768, 0.0
  %v2965 = vmax.f32 %v2769, 0.0
  %v2966 = vmax.f32 %v2770, 0.0
  %v2967 = vmax.f32 %v2771, 0.0
  %v2968 = vmax.f32 %v2772, 0.0
  %v2969 = vmax.f32 %v2773, 0.0
  %v2970 = vmax.f32 %v2774, 0.0
  %v2971 = vmax.f32 %v2775, 0.0
  %v2972 = vmax.f32 %v2776, 0.0
  %v2973 = vmax.f32 %v2777, 0.0
  %v2974 = vmax.f32 %v2778, 0.0
  %v2975 = vmax.f32 %v2779, 0.0
  %v2976 = vmax.f32 %v2780, 0.0
  %v2977 = vmax.f32 %v2781, 0.0
  %v2978 = vmax.f32 %v2782, 0.0
  %v2979 = vmax.f32 %v2783, 0.0
  %v2980 = vmax.f32 %v2784, 0.0
  %v2981 = vmax.f32 %v2785, 0.0
  %v2982 = vmax.f32 %v2786, 0.0
  %v2983 = vmax.f32 %v2787, 0.0
  %v2984 = vmax.f32 %v2788, 0.0
  %v2985 = vmax.f32 %v2789, 0.0
  %v2986 = vmax.f32 %v2790, 0.0
  %v2987 = vmax.f32 %v2791, 0.0
  %v2988 = vmax.f32 %v2792, 0.0
  %v2989 = vmax.f32 %v2793, 0.0
  %v2990 = vmax.f32 %v2794, 0.0
  %v2991 = vmax.f32 %v2795, 0.0
  %v2992 = vmax.f32 %v2796, 0.0
  %v2993 = vmax.f32 %v2797, 0.0
  %v2994 = vmax.f32 %v2798, 0.0
  %v2995 = vmax.f32 %v2799, 0.0
  %v2996 = vmax.f32 %v2800, 0.0
  %v2997 = vmax.f32 %v2801, 0.0
  %v2998 = vmax.f32 %v2802, 0.0
  %v2999 = vmax.f32 %v2803, 0.0
  %v3000 = vmax.f32 %v2804, 0.0
  %v3001 = vmax.f32 %v2805, 0.0
  %v3002 = vmax.f32 %v2806, 0.0
  %v3003 = vmax.f32 %v2807, 0.0
  %v3004 = vmax.f32 %v2808, 0.0
  %v3005 = vmax.f32 %v2809, 0.0
  %v3006 = vmax.f32 %v2810, 0.0
  %v3007 = vmax.f32 %v2811, 0.0
  %v3008 = vmax.f32 %v2812, 0.0
  %v3009 = vmax.f32 %v2813, 0.0
  %v3010 = vmax.f32 %v2814, 0.0
  %v3011 = vmax.f32 %v2815, 0.0
  %v3012 = vmax.f32 %v2816, 0.0
  %v3013 = vmax.f32 %v2817, 0.0
  %v3014 = vmax.f32 %v2818, 0.0
  %v3015 = vmax.f32 %v2819, 0.0
  %v3016 = vmax.f32 %v2820, 0.0
  %v3017 = vmax.f32 %v2821, 0.0
  %v3018 = vmax.f32 %v2822, 0.0
  %v3019 = vmax.f32 %v2823, 0.0
  %v3020 = vmax.f32 %v2824, 0.0
  %v3021 = vmax.f32 %v2825, 0.0
  %v3022 = vmax.f32 %v2826, 0.0
  %v3023 = vmax.f32 %v2827, 0.0
  %v3024 = vmax.f32 %v2828, 0.0
  %v3025 = vmax.f32 %v2829, 0.0
  %v3026 = vmax.f32 %v2830, 0.0
  %v3027 = vmax.f32 %v2831, 0.0
  %v3028 = vmax.f32 %v2832, 0.0
  %v3029 = vmax.f32 %v2833, 0.0
  %v3030 = vmax.f32 %v2834, 0.0
  %v3031 = vmax.f32 %v2835, 0.0
  %v3032 = vmax.f32 %v2836, 0.0
  %v3033 = vmax.f32 %v2837, 0.0
  %v3034 = vmax.f32 %v2838, 0.0
  %v3035 = vmax.f32 %v2839, 0.0
  %v3036 = vmax.f32 %v2840, 0.0
  %v3037 = vmax.f32 %v2841, 0.0
  %v3038 = vmin.f32 %v2842, 1.0
  %v3039 = vmin.f32 %v2843, 1.0
  %v3040 = vmin.f32 %v2844, 1.0
  %v3041 = vmin.f32 %v2845, 1.0
  %v3042 = vmin.f32 %v2846, 1.0
  %v3043 = vmin.f32 %v2847, 1.0
  %v3044 = vmin.f32 %v2848, 1.0
  %v3045 = vmin.f32 %v2849, 1.0
  %v3046 = vmin.f32 %v2850, 1.0
  %v3047 = vmin.f32 %v2851, 1.0
  %v3048 = vmin.f32 %v2852, 1.0
  %v3049 = vmin.f32 %v2853, 1.0
  %v3050 = vmin.f32 %v2854, 1.0
  %v3051 = vmin.f32 %v2855, 1.0
  %v3052 = vmin.f32 %v2856, 1.0
  %v3053 = vmin.f32 %v2857, 1.0
  %v3054 = vmin.f32 %v2858, 1.0
  %v3055 = vmin.f32 %v2859, 1.0
  %v3056 = vmin.f32 %v2860, 1.0
  %v3057 = vmin.f32 %v2861, 1.0
  %v3058 = vmin.f32 %v2862, 1.0
  %v3059 = vmin.f32 %v2863, 1.0
  %v3060 = vmin.f32 %v2864, 1.0
  %v3061 = vmin.f32 %v2865, 1.0
  %v3062 = vmin.f32 %v2866, 1.0
  %v3063 = vmin.f32 %v2867, 1.0
  %v3064 = vmin.f32 %v2868, 1.0
  %v3065 = vmin.f32 %v2869, 1.0
  %v3066 = vmin.f32 %v2870, 1.0
  %v3067 = vmin.f32 %v2871, 1.0
  %v3068 = vmin.f32 %v2872, 1.0
  %v3069 = vmin.f32 %v2873, 1.0
  %v3070 = vmin.f32 %v2874, 1.0
  %v3071 = vmin.f32 %v2875, 1.0
  %v3072 = vmin.f32 %v2876, 1.0
  %v3073 = vmin.f32 %v2877, 1.0
  %v3074 = vmin.f32 %v2878, 1.0
  %v3075 = vmin.f32 %v2879, 1.0
  %v3076 = vmin.f32 %v2880, 1.0
  %v3077 = vmin.f32 %v2881, 1.0
  %v3078 = vmin.f32 %v2882, 1.0
  %v3079 = vmin.f32 %v2883, 1.0
  %v3080 = vmin.f32 %v2884, 1.0
  %v3081 = vmin.f32 %v2885, 1.0
  %v3082 = vmin.f32 %v2886, 1.0
  %v3083 = vmin.f32 %v2887, 1.0
  %v3084 = vmin.f32 %v2888, 1.0
  %v3085 = vmin.f32 %v2889, 1.0
  %v3086 = vmin.f32 %v2890, 1.0
  %v3087 = vmin.f32 %v2891, 1.0
  %v3088 = vmin.f32 %v2892, 1.0
  %v3089 = vmin.f32 %v2893, 1.0
  %v3090 = vmin.f32 %v2894, 1.0
  %v3091 = vmin.f32 %v2895, 1.0
  %v3092 = vmin.f32 %v2896, 1.0
  %v3093 = vmin.f32 %v2897, 1.0
  %v3094 = vmin.f32 %v2898, 1.0
  %v3095 = vmin.f32 %v2899, 1.0
  %v3096 = vmin.f32 %v2900, 1.0
  %v3097 = vmin.f32 %v2901, 1.0
  %v3098 = vmin.f32 %v2902, 1.0
  %v3099 = vmin.f32 %v2903, 1.0
  %v3100 = vmin.f32 %v2904, 1.0
  %v3101 = vmin.f32 %v2905, 1.0
  %v3102 = vmin.f32 %v2906, 1.0
  %v3103 = vmin.f32 %v2907, 1.0
  %v3104 = vmin.f32 %v2908, 1.0
  %v3105 = vmin.f32 %v2909, 1.0
  %v3106 = vmin.f32 %v2910, 1.0
  %v3107 = vmin.f32 %v2911, 1.0
  %v3108 = vmin.f32 %v2912, 1.0
  %v3109 = vmin.f32 %v2913, 1.0
  %v3110 = vmin.f32 %v2914, 1.0
  %v3111 = vmin.f32 %v2915, 1.0
  %v3112 = vmin.f32 %v2916, 1.0
  %v3113 = vmin.f32 %v2917, 1.0
  %v3114 = vmin.f32 %v2918, 1.0
  %v3115 = vmin.f32 %v2919, 1.0
  %v3116 = vmin.f32 %v2920, 1.0
  %v3117 = vmin.f32 %v2921, 1.0
  %v3118 = vmin.f32 %v2922, 1.0
  %v3119 = vmin.f32 %v2923, 1.0
  %v3120 = vmin.f32 %v2924, 1.0
  %v3121 = vmin.f32 %v2925, 1.0
  %v3122 = vmin.f32 %v2926, 1.0
  %v3123 = vmin.f32 %v2927, 1.0
  %v3124 = vmin.f32 %v2928, 1.0
  %v3125 = vmin.f32 %v2929, 1.0
  %v3126 = vmin.f32 %v2930, 1.0
  %v3127 = vmin.f32 %v2931, 1.0
  %v3128 = vmin.f32 %v2932, 1.0
  %v3129 = vmin.f32 %v2933, 1.0
  %v3130 = vmin.f32 %v2934, 1.0
  %v3131 = vmin.f32 %v2935, 1.0
  %v3132 = vmin.f32 %v2936, 1.0
  %v3133 = vmin.f32 %v2937, 1.0
  %v3134 = vmin.f32 %v2938, 1.0
  %v3135 = vmin.f32 %v2939, 1.0
  %v3136 = vmin.f32 %v2940, 1.0
  %v3137 = vmin.f32 %v2941, 1.0
  %v3138 = vmin.f32 %v2942, 1.0
  %v3139 = vmin.f32 %v2943, 1.0
  %v3140 = vmin.f32 %v2944, 1.0
  %v3141 = vmin.f32 %v2945, 1.0
  %v3142 = vmin.f32 %v2946, 1.0
  %v3143 = vmin.f32 %v2947, 1.0
  %v3144 = vmin.f32 %v2948, 1.0
  %v3145 = vmin.f32 %v2949, 1.0
  %v3146 = vmin.f32 %v2950, 1.0
  %v3147 = vmin.f32 %v2951, 1.0
  %v3148 = vmin.f32 %v2952, 1.0
  %v3149 = vmin.f32 %v2953, 1.0
  %v3150 = vmin.f32 %v2954, 1.0
  %v3151 = vmin.f32 %v2955, 1.0
  %v3152 = vmin.f32 %v2956, 1.0
  %v3153 = vmin.f32 %v2957, 1.0
  %v3154 = vmin.f32 %v2958, 1.0
  %v3155 = vmin.f32 %v2959, 1.0
  %v3156 = vmin.f32 %v2960, 1.0
  %v3157 = vmin.f32 %v2961, 1.0
  %v3158 = vmin.f32 %v2962, 1.0
  %v3159 = vmin.f32 %v2963, 1.0
  %v3160 = vmin.f32 %v2964, 1.0
  %v3161 = vmin.f32 %v2965, 1.0
  %v3162 = vmin.f32 %v2966, 1.0
  %v3163 = vmin.f32 %v2967, 1.0
  %v3164 = vmin.f32 %v2968, 1.0
  %v3165 = vmin.f32 %v2969, 1.0
  %v3166 = vmin.f32 %v2970, 1.0
  %v3167 = vmin.f32 %v2971, 1.0
  %v3168 = vmin.f32 %v2972, 1.0
  %v3169 = vmin.f32 %v2973, 1.0
  %v3170 = vmin.f32 %v2974, 1.0
  %v3171 = vmin.f32 %v2975, 1.0
  %v3172 = vmin.f32 %v2976, 1.0
  %v3173 = vmin.f32 %v2977, 1.0
  %v3174 = vmin.f32 %v2978, 1.0
  %v3175 = vmin.f32 %v2979, 1.0
  %v3176 = vmin.f32 %v2980, 1.0
  %v3177 = vmin.f32 %v2981, 1.0
  %v3178 = vmin.f32 %v2982, 1.0
  %v3179 = vmin.f32 %v2983, 1.0
  %v3180 = vmin.f32 %v2984, 1.0
  %v3181 = vmin.f32 %v2985, 1.0
  %v3182 = vmin.f32 %v2986, 1.0
  %v3183 = vmin.f32 %v2987, 1.0
  %v3184 = vmin.f32 %v2988, 1.0
  %v3185 = vmin.f32 %v2989, 1.0
  %v3186 = vmin.f32 %v2990, 1.0
  %v3187 = vmin.f32 %v2991, 1.0
  %v3188 = vmin.f32 %v2992, 1.0
  %v3189 = vmin.f32 %v2993, 1.0
  %v3190 = vmin.f32 %v2994, 1.0
  %v3191 = vmin.f32 %v2995, 1.0
  %v3192 = vmin.f32 %v2996, 1.0
  %v3193 = vmin.f32 %v2997, 1.0
  %v3194 = vmin.f32 %v2998, 1.0
  %v3195 = vmin.f32 %v2999, 1.0
  %v3196 = vmin.f32 %v3000, 1.0
  %v3197 = vmin.f32 %v3001, 1.0
  %v3198 = vmin.f32 %v3002, 1.0
  %v3199 = vmin.f32 %v3003, 1.0
  %v3200 = vmin.f32 %v3004, 1.0
  %v3201 = vmin.f32 %v3005, 1.0
  %v3202 = vmin.f32 %v3006, 1.0
  %v3203 = vmin.f32 %v3007, 1.0
  %v3204 = vmin.f32 %v3008, 1.0
  %v3205 = vmin.f32 %v3009, 1.0
  %v3206 = vmin.f32 %v3010, 1.0
  %v3207 = vmin.f32 %v3011, 1.0
  %v3208 = vmin.f32 %v3012, 1.0
  %v3209 = vmin.f32 %v3013, 1.0
  %v3210 = vmin.f32 %v3014, 1.0
  %v3211 = vmin.f32 %v3015, 1.0
  %v3212 = vmin.f32 %v3016, 1.0
  %v3213 = vmin.f32 %v3017, 1.0
  %v3214 = vmin.f32 %v3018, 1.0
  %v3215 = vmin.f32 %v3019, 1.0
  %v3216 = vmin.f32 %v3020, 1.0
  %v3217 = vmin.f32 %v3021, 1.0
  %v3218 = vmin.f32 %v3022, 1.0
  %v3219 = vmin.f32 %v3023, 1.0
  %v3220 = vmin.f32 %v3024, 1.0
  %v3221 = vmin.f32 %v3025, 1.0
  %v3222 = vmin.f32 %v3026, 1.0
  %v3223 = vmin.f32 %v3027, 1.0
  %v3224 = vmin.f32 %v3028, 1.0
  %v3225 = vmin.f32 %v3029, 1.0
  %v3226 = vmin.f32 %v3030, 1.0
  %v3227 = vmin.f32 %v3031, 1.0
  %v3228 = vmin.f32 %v3032, 1.0
  %v3229 = vmin.f32 %v3033, 1.0
  %v3230 = vmin.f32 %v3034, 1.0
  %v3231 = vmin.f32 %v3035, 1.0
  %v3232 = vmin.f32 %v3036, 1.0
  %v3233 = vmin.f32 %v3037, 1.0
  %vm3234 = vcmask 7168
  %3235 = vst.msk [vmem:[%s3] sm:$0xff] %vm3234, %v3038
  %3236 = vst.msk [vmem:[%s3 + $0x8] sm:$0xff] %vm3234, %v3039
  %3237 = vst.msk [vmem:[%s3 + $0x10] sm:$0xff] %vm3234, %v3040
  %3238 = vst.msk [vmem:[%s3 + $0x18] sm:$0xff] %vm3234, %v3041
  %3239 = vst.msk [vmem:[%s3 + $0x20] sm:$0xff] %vm3234, %v3042
  %3240 = vst.msk [vmem:[%s3 + $0x28] sm:$0xff] %vm3234, %v3043
  %3241 = vst.msk [vmem:[%s3 + $0x30] sm:$0xff] %vm3234, %v3044
  %3242 = vst.msk [vmem:[%s3 + $0x38] sm:$0xff] %vm3234, %v3045
  %3243 = vst.msk [vmem:[%s3 + $0x40] sm:$0xff] %vm3234, %v3046
  %3244 = vst.msk [vmem:[%s3 + $0x48] sm:$0xff] %vm3234, %v3047
  %3245 = vst.msk [vmem:[%s3 + $0x50] sm:$0xff] %vm3234, %v3048
  %3246 = vst.msk [vmem:[%s3 + $0x58] sm:$0xff] %vm3234, %v3049
  %3247 = vst.msk [vmem:[%s3 + $0x60] sm:$0xff] %vm3234, %v3050
  %3248 = vst.msk [vmem:[%s3 + $0x68] sm:$0xff] %vm3234, %v3051
  %3249 = vst.msk [vmem:[%s3 + $0x70] sm:$0xff] %vm3234, %v3052
  %3250 = vst.msk [vmem:[%s3 + $0x78] sm:$0xff] %vm3234, %v3053
  %3251 = vst.msk [vmem:[%s3 + $0x80] sm:$0xff] %vm3234, %v3054
  %3252 = vst.msk [vmem:[%s3 + $0x88] sm:$0xff] %vm3234, %v3055
  %3253 = vst.msk [vmem:[%s3 + $0x90] sm:$0xff] %vm3234, %v3056
  %3254 = vst.msk [vmem:[%s3 + $0x98] sm:$0xff] %vm3234, %v3057
  %3255 = vst.msk [vmem:[%s3 + $0xa0] sm:$0xff] %vm3234, %v3058
  %3256 = vst.msk [vmem:[%s3 + $0xa8] sm:$0xff] %vm3234, %v3059
  %3257 = vst.msk [vmem:[%s3 + $0xb0] sm:$0xff] %vm3234, %v3060
  %3258 = vst.msk [vmem:[%s3 + $0xb8] sm:$0xff] %vm3234, %v3061
  %3259 = vst.msk [vmem:[%s3 + $0xc0] sm:$0xff] %vm3234, %v3062
  %3260 = vst.msk [vmem:[%s3 + $0xc8] sm:$0xff] %vm3234, %v3063
  %3261 = vst.msk [vmem:[%s3 + $0xd0] sm:$0xff] %vm3234, %v3064
  %3262 = vst.msk [vmem:[%s3 + $0xd8] sm:$0xff] %vm3234, %v3065
  %3263 = vst.msk [vmem:[%s3 + $0xe0] sm:$0xff] %vm3234, %v3066
  %3264 = vst.msk [vmem:[%s3 + $0xe8] sm:$0xff] %vm3234, %v3067
  %3265 = vst.msk [vmem:[%s3 + $0xf0] sm:$0xff] %vm3234, %v3068
  %3266 = vst.msk [vmem:[%s3 + $0xf8] sm:$0xff] %vm3234, %v3069
  %3267 = vst.msk [vmem:[%s3 + $0x100] sm:$0xff] %vm3234, %v3070
  %3268 = vst.msk [vmem:[%s3 + $0x108] sm:$0xff] %vm3234, %v3071
  %3269 = vst.msk [vmem:[%s3 + $0x110] sm:$0xff] %vm3234, %v3072
  %3270 = vst.msk [vmem:[%s3 + $0x118] sm:$0xff] %vm3234, %v3073
  %3271 = vst.msk [vmem:[%s3 + $0x120] sm:$0xff] %vm3234, %v3074
  %3272 = vst.msk [vmem:[%s3 + $0x128] sm:$0xff] %vm3234, %v3075
  %3273 = vst.msk [vmem:[%s3 + $0x130] sm:$0xff] %vm3234, %v3076
  %3274 = vst.msk [vmem:[%s3 + $0x138] sm:$0xff] %vm3234, %v3077
  %3275 = vst.msk [vmem:[%s3 + $0x140] sm:$0xff] %vm3234, %v3078
  %3276 = vst.msk [vmem:[%s3 + $0x148] sm:$0xff] %vm3234, %v3079
  %3277 = vst.msk [vmem:[%s3 + $0x150] sm:$0xff] %vm3234, %v3080
  %3278 = vst.msk [vmem:[%s3 + $0x158] sm:$0xff] %vm3234, %v3081
  %3279 = vst.msk [vmem:[%s3 + $0x160] sm:$0xff] %vm3234, %v3082
  %3280 = vst.msk [vmem:[%s3 + $0x168] sm:$0xff] %vm3234, %v3083
  %3281 = vst.msk [vmem:[%s3 + $0x170] sm:$0xff] %vm3234, %v3084
  %3282 = vst.msk [vmem:[%s3 + $0x178] sm:$0xff] %vm3234, %v3085
  %3283 = vst.msk [vmem:[%s3 + $0x180] sm:$0xff] %vm3234, %v3086
  %3284 = vst.msk [vmem:[%s3 + $0x188] sm:$0xff] %vm3234, %v3087
  %3285 = vst.msk [vmem:[%s3 + $0x190] sm:$0xff] %vm3234, %v3088
  %3286 = vst.msk [vmem:[%s3 + $0x198] sm:$0xff] %vm3234, %v3089
  %3287 = vst.msk [vmem:[%s3 + $0x1a0] sm:$0xff] %vm3234, %v3090
  %3288 = vst.msk [vmem:[%s3 + $0x1a8] sm:$0xff] %vm3234, %v3091
  %3289 = vst.msk [vmem:[%s3 + $0x1b0] sm:$0xff] %vm3234, %v3092
  %3290 = vst.msk [vmem:[%s3 + $0x1b8] sm:$0xff] %vm3234, %v3093
  %3291 = vst.msk [vmem:[%s3 + $0x1c0] sm:$0xff] %vm3234, %v3094
  %3292 = vst.msk [vmem:[%s3 + $0x1c8] sm:$0xff] %vm3234, %v3095
  %3293 = vst.msk [vmem:[%s3 + $0x1d0] sm:$0xff] %vm3234, %v3096
  %3294 = vst.msk [vmem:[%s3 + $0x1d8] sm:$0xff] %vm3234, %v3097
  %3295 = vst.msk [vmem:[%s3 + $0x1e0] sm:$0xff] %vm3234, %v3098
  %3296 = vst.msk [vmem:[%s3 + $0x1e8] sm:$0xff] %vm3234, %v3099
  %3297 = vst.msk [vmem:[%s3 + $0x1f0] sm:$0xff] %vm3234, %v3100
  %3298 = vst.msk [vmem:[%s3 + $0x1f8] sm:$0xff] %vm3234, %v3101
  %3299 = vst.msk [vmem:[%s3 + $0x200] sm:$0xff] %vm3234, %v3102
  %3300 = vst.msk [vmem:[%s3 + $0x208] sm:$0xff] %vm3234, %v3103
  %3301 = vst.msk [vmem:[%s3 + $0x210] sm:$0xff] %vm3234, %v3104
  %3302 = vst.msk [vmem:[%s3 + $0x218] sm:$0xff] %vm3234, %v3105
  %3303 = vst.msk [vmem:[%s3 + $0x220] sm:$0xff] %vm3234, %v3106
  %3304 = vst.msk [vmem:[%s3 + $0x228] sm:$0xff] %vm3234, %v3107
  %3305 = vst.msk [vmem:[%s3 + $0x230] sm:$0xff] %vm3234, %v3108
  %3306 = vst.msk [vmem:[%s3 + $0x238] sm:$0xff] %vm3234, %v3109
  %3307 = vst.msk [vmem:[%s3 + $0x240] sm:$0xff] %vm3234, %v3110
  %3308 = vst.msk [vmem:[%s3 + $0x248] sm:$0xff] %vm3234, %v3111
  %3309 = vst.msk [vmem:[%s3 + $0x250] sm:$0xff] %vm3234, %v3112
  %3310 = vst.msk [vmem:[%s3 + $0x258] sm:$0xff] %vm3234, %v3113
  %3311 = vst.msk [vmem:[%s3 + $0x260] sm:$0xff] %vm3234, %v3114
  %3312 = vst.msk [vmem:[%s3 + $0x268] sm:$0xff] %vm3234, %v3115
  %3313 = vst.msk [vmem:[%s3 + $0x270] sm:$0xff] %vm3234, %v3116
  %3314 = vst.msk [vmem:[%s3 + $0x278] sm:$0xff] %vm3234, %v3117
  %3315 = vst.msk [vmem:[%s3 + $0x280] sm:$0xff] %vm3234, %v3118
  %3316 = vst.msk [vmem:[%s3 + $0x288] sm:$0xff] %vm3234, %v3119
  %3317 = vst.msk [vmem:[%s3 + $0x290] sm:$0xff] %vm3234, %v3120
  %3318 = vst.msk [vmem:[%s3 + $0x298] sm:$0xff] %vm3234, %v3121
  %3319 = vst.msk [vmem:[%s3 + $0x2a0] sm:$0xff] %vm3234, %v3122
  %3320 = vst.msk [vmem:[%s3 + $0x2a8] sm:$0xff] %vm3234, %v3123
  %3321 = vst.msk [vmem:[%s3 + $0x2b0] sm:$0xff] %vm3234, %v3124
  %3322 = vst.msk [vmem:[%s3 + $0x2b8] sm:$0xff] %vm3234, %v3125
  %3323 = vst.msk [vmem:[%s3 + $0x2c0] sm:$0xff] %vm3234, %v3126
  %3324 = vst.msk [vmem:[%s3 + $0x2c8] sm:$0xff] %vm3234, %v3127
  %3325 = vst.msk [vmem:[%s3 + $0x2d0] sm:$0xff] %vm3234, %v3128
  %3326 = vst.msk [vmem:[%s3 + $0x2d8] sm:$0xff] %vm3234, %v3129
  %3327 = vst.msk [vmem:[%s3 + $0x2e0] sm:$0xff] %vm3234, %v3130
  %3328 = vst.msk [vmem:[%s3 + $0x2e8] sm:$0xff] %vm3234, %v3131
  %3329 = vst.msk [vmem:[%s3 + $0x2f0] sm:$0xff] %vm3234, %v3132
  %3330 = vst.msk [vmem:[%s3 + $0x2f8] sm:$0xff] %vm3234, %v3133
  %3331 = vst.msk [vmem:[%s3 + $0x300] sm:$0xff] %vm3234, %v3134
  %3332 = vst.msk [vmem:[%s3 + $0x308] sm:$0xff] %vm3234, %v3135
  %3333 = vst.msk [vmem:[%s3 + $0x310] sm:$0xff] %vm3234, %v3136
  %3334 = vst.msk [vmem:[%s3 + $0x318] sm:$0xff] %vm3234, %v3137
  %3335 = vst.msk [vmem:[%s3 + $0x320] sm:$0xff] %vm3234, %v3138
  %3336 = vst.msk [vmem:[%s3 + $0x328] sm:$0xff] %vm3234, %v3139
  %3337 = vst.msk [vmem:[%s3 + $0x330] sm:$0xff] %vm3234, %v3140
  %3338 = vst.msk [vmem:[%s3 + $0x338] sm:$0xff] %vm3234, %v3141
  %3339 = vst.msk [vmem:[%s3 + $0x340] sm:$0xff] %vm3234, %v3142
  %3340 = vst.msk [vmem:[%s3 + $0x348] sm:$0xff] %vm3234, %v3143
  %3341 = vst.msk [vmem:[%s3 + $0x350] sm:$0xff] %vm3234, %v3144
  %3342 = vst.msk [vmem:[%s3 + $0x358] sm:$0xff] %vm3234, %v3145
  %3343 = vst.msk [vmem:[%s3 + $0x360] sm:$0xff] %vm3234, %v3146
  %3344 = vst.msk [vmem:[%s3 + $0x368] sm:$0xff] %vm3234, %v3147
  %3345 = vst.msk [vmem:[%s3 + $0x370] sm:$0xff] %vm3234, %v3148
  %3346 = vst.msk [vmem:[%s3 + $0x378] sm:$0xff] %vm3234, %v3149
  %3347 = vst.msk [vmem:[%s3 + $0x380] sm:$0xff] %vm3234, %v3150
  %3348 = vst.msk [vmem:[%s3 + $0x388] sm:$0xff] %vm3234, %v3151
  %3349 = vst.msk [vmem:[%s3 + $0x390] sm:$0xff] %vm3234, %v3152
  %3350 = vst.msk [vmem:[%s3 + $0x398] sm:$0xff] %vm3234, %v3153
  %3351 = vst.msk [vmem:[%s3 + $0x3a0] sm:$0xff] %vm3234, %v3154
  %3352 = vst.msk [vmem:[%s3 + $0x3a8] sm:$0xff] %vm3234, %v3155
  %3353 = vst.msk [vmem:[%s3 + $0x3b0] sm:$0xff] %vm3234, %v3156
  %3354 = vst.msk [vmem:[%s3 + $0x3b8] sm:$0xff] %vm3234, %v3157
  %3355 = vst.msk [vmem:[%s3 + $0x3c0] sm:$0xff] %vm3234, %v3158
  %3356 = vst.msk [vmem:[%s3 + $0x3c8] sm:$0xff] %vm3234, %v3159
  %3357 = vst.msk [vmem:[%s3 + $0x3d0] sm:$0xff] %vm3234, %v3160
  %3358 = vst.msk [vmem:[%s3 + $0x3d8] sm:$0xff] %vm3234, %v3161
  %3359 = vst.msk [vmem:[%s3 + $0x3e0] sm:$0xff] %vm3234, %v3162
  %3360 = vst.msk [vmem:[%s3 + $0x3e8] sm:$0xff] %vm3234, %v3163
  %3361 = vst.msk [vmem:[%s3 + $0x3f0] sm:$0xff] %vm3234, %v3164
  %3362 = vst.msk [vmem:[%s3 + $0x3f8] sm:$0xff] %vm3234, %v3165
  %3363 = vst.msk [vmem:[%s3 + $0x400] sm:$0xff] %vm3234, %v3166
  %3364 = vst.msk [vmem:[%s3 + $0x408] sm:$0xff] %vm3234, %v3167
  %3365 = vst.msk [vmem:[%s3 + $0x410] sm:$0xff] %vm3234, %v3168
  %3366 = vst.msk [vmem:[%s3 + $0x418] sm:$0xff] %vm3234, %v3169
  %3367 = vst.msk [vmem:[%s3 + $0x420] sm:$0xff] %vm3234, %v3170
  %3368 = vst.msk [vmem:[%s3 + $0x428] sm:$0xff] %vm3234, %v3171
  %3369 = vst.msk [vmem:[%s3 + $0x430] sm:$0xff] %vm3234, %v3172
  %3370 = vst.msk [vmem:[%s3 + $0x438] sm:$0xff] %vm3234, %v3173
  %3371 = vst.msk [vmem:[%s3 + $0x440] sm:$0xff] %vm3234, %v3174
  %3372 = vst.msk [vmem:[%s3 + $0x448] sm:$0xff] %vm3234, %v3175
  %3373 = vst.msk [vmem:[%s3 + $0x450] sm:$0xff] %vm3234, %v3176
  %3374 = vst.msk [vmem:[%s3 + $0x458] sm:$0xff] %vm3234, %v3177
  %3375 = vst.msk [vmem:[%s3 + $0x460] sm:$0xff] %vm3234, %v3178
  %3376 = vst.msk [vmem:[%s3 + $0x468] sm:$0xff] %vm3234, %v3179
  %3377 = vst.msk [vmem:[%s3 + $0x470] sm:$0xff] %vm3234, %v3180
  %3378 = vst.msk [vmem:[%s3 + $0x478] sm:$0xff] %vm3234, %v3181
  %3379 = vst.msk [vmem:[%s3 + $0x480] sm:$0xff] %vm3234, %v3182
  %3380 = vst.msk [vmem:[%s3 + $0x488] sm:$0xff] %vm3234, %v3183
  %3381 = vst.msk [vmem:[%s3 + $0x490] sm:$0xff] %vm3234, %v3184
  %3382 = vst.msk [vmem:[%s3 + $0x498] sm:$0xff] %vm3234, %v3185
  %3383 = vst.msk [vmem:[%s3 + $0x4a0] sm:$0xff] %vm3234, %v3186
  %3384 = vst.msk [vmem:[%s3 + $0x4a8] sm:$0xff] %vm3234, %v3187
  %3385 = vst.msk [vmem:[%s3 + $0x4b0] sm:$0xff] %vm3234, %v3188
  %3386 = vst.msk [vmem:[%s3 + $0x4b8] sm:$0xff] %vm3234, %v3189
  %3387 = vst.msk [vmem:[%s3 + $0x4c0] sm:$0xff] %vm3234, %v3190
  %3388 = vst.msk [vmem:[%s3 + $0x4c8] sm:$0xff] %vm3234, %v3191
  %3389 = vst.msk [vmem:[%s3 + $0x4d0] sm:$0xff] %vm3234, %v3192
  %3390 = vst.msk [vmem:[%s3 + $0x4d8] sm:$0xff] %vm3234, %v3193
  %3391 = vst.msk [vmem:[%s3 + $0x4e0] sm:$0xff] %vm3234, %v3194
  %3392 = vst.msk [vmem:[%s3 + $0x4e8] sm:$0xff] %vm3234, %v3195
  %3393 = vst.msk [vmem:[%s3 + $0x4f0] sm:$0xff] %vm3234, %v3196
  %3394 = vst.msk [vmem:[%s3 + $0x4f8] sm:$0xff] %vm3234, %v3197
  %3395 = vst.msk [vmem:[%s3 + $0x500] sm:$0xff] %vm3234, %v3198
  %3396 = vst.msk [vmem:[%s3 + $0x508] sm:$0xff] %vm3234, %v3199
  %3397 = vst.msk [vmem:[%s3 + $0x510] sm:$0xff] %vm3234, %v3200
  %3398 = vst.msk [vmem:[%s3 + $0x518] sm:$0xff] %vm3234, %v3201
  %3399 = vst.msk [vmem:[%s3 + $0x520] sm:$0xff] %vm3234, %v3202
  %3400 = vst.msk [vmem:[%s3 + $0x528] sm:$0xff] %vm3234, %v3203
  %3401 = vst.msk [vmem:[%s3 + $0x530] sm:$0xff] %vm3234, %v3204
  %3402 = vst.msk [vmem:[%s3 + $0x538] sm:$0xff] %vm3234, %v3205
  %3403 = vst.msk [vmem:[%s3 + $0x540] sm:$0xff] %vm3234, %v3206
  %3404 = vst.msk [vmem:[%s3 + $0x548] sm:$0xff] %vm3234, %v3207
  %3405 = vst.msk [vmem:[%s3 + $0x550] sm:$0xff] %vm3234, %v3208
  %3406 = vst.msk [vmem:[%s3 + $0x558] sm:$0xff] %vm3234, %v3209
  %3407 = vst.msk [vmem:[%s3 + $0x560] sm:$0xff] %vm3234, %v3210
  %3408 = vst.msk [vmem:[%s3 + $0x568] sm:$0xff] %vm3234, %v3211
  %3409 = vst.msk [vmem:[%s3 + $0x570] sm:$0xff] %vm3234, %v3212
  %3410 = vst.msk [vmem:[%s3 + $0x578] sm:$0xff] %vm3234, %v3213
  %3411 = vst.msk [vmem:[%s3 + $0x580] sm:$0xff] %vm3234, %v3214
  %3412 = vst.msk [vmem:[%s3 + $0x588] sm:$0xff] %vm3234, %v3215
  %3413 = vst.msk [vmem:[%s3 + $0x590] sm:$0xff] %vm3234, %v3216
  %3414 = vst.msk [vmem:[%s3 + $0x598] sm:$0xff] %vm3234, %v3217
  %3415 = vst.msk [vmem:[%s3 + $0x5a0] sm:$0xff] %vm3234, %v3218
  %3416 = vst.msk [vmem:[%s3 + $0x5a8] sm:$0xff] %vm3234, %v3219
  %3417 = vst.msk [vmem:[%s3 + $0x5b0] sm:$0xff] %vm3234, %v3220
  %3418 = vst.msk [vmem:[%s3 + $0x5b8] sm:$0xff] %vm3234, %v3221
  %3419 = vst.msk [vmem:[%s3 + $0x5c0] sm:$0xff] %vm3234, %v3222
  %3420 = vst.msk [vmem:[%s3 + $0x5c8] sm:$0xff] %vm3234, %v3223
  %3421 = vst.msk [vmem:[%s3 + $0x5d0] sm:$0xff] %vm3234, %v3224
  %3422 = vst.msk [vmem:[%s3 + $0x5d8] sm:$0xff] %vm3234, %v3225
  %3423 = vst.msk [vmem:[%s3 + $0x5e0] sm:$0xff] %vm3234, %v3226
  %3424 = vst.msk [vmem:[%s3 + $0x5e8] sm:$0xff] %vm3234, %v3227
  %3425 = vst.msk [vmem:[%s3 + $0x5f0] sm:$0xff] %vm3234, %v3228
  %3426 = vst.msk [vmem:[%s3 + $0x5f8] sm:$0xff] %vm3234, %v3229
  %3427 = vst.msk [vmem:[%s3 + $0x600] sm:$0xff] %vm3234, %v3230
  %3428 = vst.msk [vmem:[%s3 + $0x608] sm:$0xff] %vm3234, %v3231
  %3429 = vst.msk [vmem:[%s3 + $0x610] sm:$0xff] %vm3234, %v3232
  %3430 = vst.msk [vmem:[%s3 + $0x618] sm:$0xff] %vm3234, %v3233
  // Predicated region
  $region14: #{cnn_vae_forward.13} parent=0 // pred_check
    _
  $region15: #{cnn_vae_forward.13} parent=0 // pred_check_branch
    %3432 = sbr.rel (0) target = $region17
  $region16: #{cnn_vae_forward.13} parent=0 // pred_region
    _
  $region17: #{cnn_vae_forward.13} parent=0 // pred_fallthru
    _
  // Predicated region
  $region18: #{cnn_vae_forward.13} parent=0 // pred_check
    _
  $region19: #{cnn_vae_forward.13} parent=0 // pred_check_branch
    %3434 = sbr.rel (0) target = $region21
  $region20: #{cnn_vae_forward.13} parent=0 // pred_region
    _
  $region21: #{cnn_vae_forward.13} parent=0 // pred_fallthru
    _

</llo_original>
